<compile_context>
chip_gen: v7x
topology: tpu7x:2x2x1
jax: 0.10.0
libtpu: 0.0.40
codegen_flags: <defaults>
</compile_context>

<pallas_src>
import functools
import math

import jax
import jax.numpy as jnp
from jax.experimental import pallas as pl
from jax.experimental.pallas import tpu as pltpu

EPS = 1e-5
LANES = 128
VMEM_LIMIT = 32 * 1024 * 1024   # safe scoped-VMEM budget on v5e / v6e / v7x


def _round_up(x, m):
    return (x + m - 1) // m * m


# ----------------------------------------------------------------------------
# Kernels
# ----------------------------------------------------------------------------
def conv_stats_kernel(x_ref, w_ref, y_ref, s_ref, *, H, W):
    """3x3 pad=1 conv as shift-and-matmul over the 9 taps, fused with the
    per-channel sum / sum-of-squares partials needed for BatchNorm batch stats.

    x_ref: (H+2, W+2, Cin_p) bf16  spatially padded input, one image.
    w_ref: (9, Cin_p, Cout_p) bf16 weight slices, resident across the grid.
    y_ref: (H*W, Cout_p)      bf16 pre-BN conv output.
    s_ref: (2, Cout_p)        f32  [sum; sum of squares] over this image.
    """
    cin = x_ref.shape[-1]
    hw = H * W
    acc = None
    for dy in range(3):
        for dx in range(3):
            xs = x_ref[dy:dy + H, dx:dx + W, :].reshape(hw, cin)   # bf16
            part = jnp.dot(xs, w_ref[dy * 3 + dx],
                           preferred_element_type=jnp.float32)     # f32 acc
            acc = part if acc is None else acc + part
    y_ref[...] = acc.astype(y_ref.dtype)
    s_ref[0:1, :] = jnp.sum(acc, axis=0, keepdims=True)
    s_ref[1:2, :] = jnp.sum(acc * acc, axis=0, keepdims=True)


def bn_relu_pool_kernel(y_ref, scale_ref, shift_ref, o_ref, *, H, W, pool):
    """Folded BatchNorm (y*scale + shift) -> ReLU -> optional fused 2x2 pool.

    y_ref: (H*W, C) bf16.   scale/shift: (1, C) f32 (resident).
    pool=None : o_ref (H*W, C)
    pool='max'/'avg': o_ref (H//2, W//2, C)
    """
    v = y_ref[...].astype(jnp.float32) * scale_ref[...] + shift_ref[...]
    v = jnp.maximum(v, 0.0)                                   # (H*W, C) f32
    if pool is None:
        o_ref[...] = v.astype(o_ref.dtype)
        return
    c = v.shape[-1]
    red = jnp.max if pool == "max" else jnp.sum
    v = red(v.reshape(H * W // 2, 2, c), axis=1)              # pool along W
    v = red(v.reshape(H // 2, 2, W // 2, c), axis=1)          # pool along H
    if pool == "avg":
        v = v * 0.25
    o_ref[...] = v.astype(o_ref.dtype)


def classifier_kernel(x_ref, w1_ref, g_ref, b_ref, w2_ref, b2_ref, o_ref):
    """Linear -> BatchNorm1d (batch stats, folded scale/shift) -> ReLU -> Linear.

    Tiny shapes: single-program, whole-array-resident, f32 throughout.
    linear1 bias omitted (cancelled by the BN mean subtraction; zero-init in
    PyTorch anyway).
    """
    h = jnp.dot(x_ref[...], w1_ref[...], preferred_element_type=jnp.float32)
    mean = jnp.mean(h, axis=0, keepdims=True)
    var = jnp.maximum(jnp.mean(h * h, axis=0, keepdims=True) - mean * mean, 0.0)
    scale = g_ref[...] * jax.lax.rsqrt(var + EPS)
    shift = b_ref[...] - mean * scale
    h = jnp.maximum(h * scale + shift, 0.0)
    o_ref[...] = (
        jnp.dot(h, w2_ref[...], preferred_element_type=jnp.float32) + b2_ref[...]
    )


# ----------------------------------------------------------------------------
# Layer wrapper: Conv3x3 + BatchNorm2d(train) + ReLU (+ fused 2x2 Max/AvgPool)
# ----------------------------------------------------------------------------
def conv_bn_relu_pool(x, p, pool):
    """x: (N, H, W, Cin_p) bf16, channel-padded to a multiple of 128."""
    n, h, w, cin_p = x.shape
    wt = p["w"]                                   # (3, 3, Cin, Cout) f32
    cin, cout = wt.shape[2], wt.shape[3]
    cout_p = _round_up(cout, LANES)

    # Lane-dense, zero-padded bf16 weight slab: (9, Cin_p, Cout_p).
    w9 = jnp.zeros((3, 3, cin_p, cout_p), jnp.float32)
    w9 = w9.at[:, :, :cin, :cout].set(wt)
    w9 = w9.reshape(9, cin_p, cout_p).astype(jnp.bfloat16)
    gamma = jnp.zeros((cout_p,), jnp.float32).at[:cout].set(p["gamma"])
    beta = jnp.zeros((cout_p,), jnp.float32).at[:cout].set(p["beta"])

    hw = h * w
    xp = jnp.pad(x, ((0, 0), (1, 1), (1, 1), (0, 0)))         # conv halo

    flops = 2 * n * hw * 9 * cin_p * cout_p
    bytes_acc = (xp.size * 2 + w9.size * 2
                 + n * hw * cout_p * 2 + n * 2 * cout_p * 4)

    # Pass 1: conv (shift-and-matmul) + BN-stat partials, batch-parallel grid.
    y, s = pl.pallas_call(
        functools.partial(conv_stats_kernel, H=h, W=w),
        out_shape=(jax.ShapeDtypeStruct((n, hw, cout_p), jnp.bfloat16),
                   jax.ShapeDtypeStruct((n, 2, cout_p), jnp.float32)),
        grid=(n,),
        in_specs=[pl.BlockSpec((None, h + 2, w + 2, cin_p),
                               lambda i: (i, 0, 0, 0)),
                  pl.BlockSpec((9, cin_p, cout_p), lambda i: (0, 0, 0))],
        out_specs=(pl.BlockSpec((None, hw, cout_p), lambda i: (i, 0, 0)),
                   pl.BlockSpec((None, 2, cout_p), lambda i: (i, 0, 0))),
        compiler_params=pltpu.CompilerParams(
            dimension_semantics=("parallel",), vmem_limit_bytes=VMEM_LIMIT),
        cost_estimate=pl.CostEstimate(flops=flops, transcendentals=0,
                                      bytes_accessed=bytes_acc),
    )(xp, w9)

    # Global training-mode batch statistics (biased variance), folded into
    # per-channel scale/shift.  Tiny (Cout,)-sized glue; padded channels get
    # scale = shift = 0 so they stay zero.
    tot = jnp.sum(s, axis=0)                      # (2, Cout_p)
    cnt = float(n * hw)
    mean = tot[0] / cnt
    var = jnp.maximum(tot[1] / cnt - mean * mean, 0.0)
    scale = gamma * jax.lax.rsqrt(var + EPS)
    shift = beta - mean * scale

    # Pass 2: normalize + ReLU, with the 2x2 pool fused into the epilogue.
    if pool is None:
        out_shape = jax.ShapeDtypeStruct((n, hw, cout_p), jnp.bfloat16)
        out_spec = pl.BlockSpec((None, hw, cout_p), lambda i: (i, 0, 0))
    else:
        ho, wo = h // 2, w // 2
        out_shape = jax.ShapeDtypeStruct((n, ho, wo, cout_p), jnp.bfloat16)
        out_spec = pl.BlockSpec((None, ho, wo, cout_p), lambda i: (i, 0, 0, 0))

    out = pl.pallas_call(
        functools.partial(bn_relu_pool_kernel, H=h, W=w, pool=pool),
        out_shape=out_shape,
        grid=(n,),
        in_specs=[pl.BlockSpec((None, hw, cout_p), lambda i: (i, 0, 0)),
                  pl.BlockSpec((1, cout_p), lambda i: (0, 0)),
                  pl.BlockSpec((1, cout_p), lambda i: (0, 0))],
        out_specs=out_spec,
        compiler_params=pltpu.CompilerParams(
            dimension_semantics=("parallel",), vmem_limit_bytes=VMEM_LIMIT),
    )(y, scale.reshape(1, cout_p), shift.reshape(1, cout_p))

    if pool is None:
        out = out.reshape(n, h, w, cout_p)
    return out


# ----------------------------------------------------------------------------
# Model
# ----------------------------------------------------------------------------
CFG = [16, 16, "M", 32, 32, "M", 64, 32]   # small stand-in for defaultcfg
NUM_CLASSES = 10


def init_params(key, cfg=CFG, num_classes=NUM_CLASSES, in_channels=3):
    """Mirrors VGG._initialize_weights (conv/linear biases omitted: zero-init
    in PyTorch and cancelled by the following BatchNorm anyway)."""
    convs = []
    cin = in_channels
    for v in cfg[:-1]:
        if v == "M":
            continue
        key, kw = jax.random.split(key)
        std = math.sqrt(2.0 / (3 * 3 * v))
        convs.append(dict(
            w=std * jax.random.normal(kw, (3, 3, cin, v), jnp.float32),
            gamma=jnp.full((v,), 0.5, jnp.float32),   # BatchNorm2d weight = 0.5
            beta=jnp.zeros((v,), jnp.float32),
        ))
        cin = v
    fin, hid = cfg[-2], cfg[-1]
    key, k1, k2 = jax.random.split(key, 3)
    classifier = dict(
        w1=0.01 * jax.random.normal(k1, (fin, hid), jnp.float32),
        gamma=jnp.ones((hid,), jnp.float32),          # BatchNorm1d default init
        beta=jnp.zeros((hid,), jnp.float32),
        w2=0.01 * jax.random.normal(k2, (hid, num_classes), jnp.float32),
        b2=jnp.zeros((num_classes,), jnp.float32),
    )
    return {"features": convs, "classifier": classifier}


def vgg_forward(x_nchw, params, cfg=CFG):
    # NCHW -> NHWC, channel-pad to a lane-dense width, cast to bf16.
    x = jnp.transpose(x_nchw, (0, 2, 3, 1)).astype(jnp.float32)
    cin0 = x.shape[-1]
    cin0_p = _round_up(cin0, LANES)
    x = jnp.pad(x, ((0, 0), (0, 0), (0, 0), (0, cin0_p - cin0)))
    x = x.astype(jnp.bfloat16)

    feat = cfg[:-1]
    assert feat[-1] != "M", "expect the last feature entry to be a conv layer"
    li = 0
    i = 0
    while i < len(feat):
        pool = None
        if i + 1 < len(feat) and feat[i + 1] == "M":
            pool = "max"            # MaxPool2d(2) fused into this layer
            i += 1
        elif i + 1 == len(feat):
            pool = "avg"            # model-level AvgPool2d(2) fused here
        x = conv_bn_relu_pool(x, params["features"][li], pool)
        li += 1
        i += 1

    # x.view(N, -1) in PyTorch NCHW order (real channels only).
    c_last = [v for v in feat if v != "M"][-1]
    xr = x[..., :c_last].astype(jnp.float32)
    xf = jnp.transpose(xr, (0, 3, 1, 2)).reshape(xr.shape[0], -1)

    cp = params["classifier"]
    hid = cp["w1"].shape[1]
    ncls = cp["w2"].shape[1]
    logits = pl.pallas_call(
        classifier_kernel,
        out_shape=jax.ShapeDtypeStruct((xf.shape[0], ncls), jnp.float32),
    )(xf, cp["w1"], cp["gamma"].reshape(1, hid), cp["beta"].reshape(1, hid),
      cp["w2"], cp["b2"].reshape(1, ncls))
    return logits


if __name__ == "__main__":
    key = jax.random.PRNGKey(0)
    kx, kp = jax.random.split(key)
    # batch=2, 3 input channels, 8x8 spatial: two 'M' pools + the final
    # AvgPool2d(2) bring spatial to 1x1, matching the Linear(cfg[-2], cfg[-1])
    # contract of the PyTorch module.
    x = jax.random.normal(kx, (2, 3, 8, 8), jnp.float32)
    params = init_params(kp)

    logits = jax.jit(vgg_forward)(x, params)
    jax.block_until_ready(logits)
    assert logits.shape == (2, NUM_CLASSES)
    assert bool(jnp.all(jnp.isfinite(logits)))
    print("KERNEL_OK")
</pallas_src>

<mosaic_0001>
module attributes {stable_mosaic.version = 11 : i64} {
  func.func @conv_stats_kernel(%arg0: i32, %arg1: memref<1x10x10x128xbf16, #tpu.memory_space<vmem>>, %arg2: memref<9x128x128xbf16, #tpu.memory_space<vmem>>, %arg3: memref<1x64x128xbf16, #tpu.memory_space<vmem>>, %arg4: memref<1x2x128xf32, #tpu.memory_space<vmem>>) attributes {dimension_semantics = [#tpu.dimension_semantics<parallel>], iteration_bounds = array<i64: 2>, scalar_prefetch = 0 : i64, scratch_operands = 0 : i64, tpu.core_type = #tpu.core_type<tc>, window_params = [{transform_indices = @transform_0, window_bounds = array<i64: 1, 10, 10, 128>}, {pipeline_mode = #tpu.pipeline_mode<synchronous>, transform_indices = @transform_1, window_bounds = array<i64: 9, 128, 128>}, {transform_indices = @transform_2, window_bounds = array<i64: 1, 64, 128>}, {transform_indices = @transform_3, window_bounds = array<i64: 1, 2, 128>}]} {
    %c0 = arith.constant 0 : index
    %c0_0 = arith.constant 0 : index
    %c0_1 = arith.constant 0 : index
    %c0_2 = arith.constant 0 : index
    %0 = vector.load %arg1[%c0, %c0_0, %c0_1, %c0_2] : memref<1x10x10x128xbf16, #tpu.memory_space<vmem>>, vector<1x8x8x128xbf16>
    %1 = vector.shape_cast %0 : vector<1x8x8x128xbf16> to vector<8x8x128xbf16>
    %2 = vector.shape_cast %1 : vector<8x8x128xbf16> to vector<64x128xbf16>
    %c0_3 = arith.constant 0 : index
    %c0_4 = arith.constant 0 : index
    %c0_5 = arith.constant 0 : index
    %3 = vector.load %arg2[%c0_3, %c0_4, %c0_5] : memref<9x128x128xbf16, #tpu.memory_space<vmem>>, vector<1x128x128xbf16>
    %4 = vector.shape_cast %3 : vector<1x128x128xbf16> to vector<128x128xbf16>
    %cst = arith.constant dense<0.000000e+00> : vector<64x128xf32>
    %5 = tpu.matmul %2, %4, %cst {dimension_numbers = #tpu.dot_dimension_numbers<[1], [0], [0], [1], [0, 0, 1, 1], [], []>} : vector<64x128xbf16>, vector<128x128xbf16>, vector<64x128xf32> -> vector<64x128xf32>
    %c0_6 = arith.constant 0 : index
    %c0_7 = arith.constant 0 : index
    %c1 = arith.constant 1 : index
    %c0_8 = arith.constant 0 : index
    %6 = vector.load %arg1[%c0_6, %c0_7, %c1, %c0_8] : memref<1x10x10x128xbf16, #tpu.memory_space<vmem>>, vector<1x8x8x128xbf16>
    %7 = vector.shape_cast %6 : vector<1x8x8x128xbf16> to vector<8x8x128xbf16>
    %8 = vector.shape_cast %7 : vector<8x8x128xbf16> to vector<64x128xbf16>
    %c1_9 = arith.constant 1 : index
    %c0_10 = arith.constant 0 : index
    %c0_11 = arith.constant 0 : index
    %9 = vector.load %arg2[%c1_9, %c0_10, %c0_11] : memref<9x128x128xbf16, #tpu.memory_space<vmem>>, vector<1x128x128xbf16>
    %10 = vector.shape_cast %9 : vector<1x128x128xbf16> to vector<128x128xbf16>
    %cst_12 = arith.constant dense<0.000000e+00> : vector<64x128xf32>
    %11 = tpu.matmul %8, %10, %cst_12 {dimension_numbers = #tpu.dot_dimension_numbers<[1], [0], [0], [1], [0, 0, 1, 1], [], []>} : vector<64x128xbf16>, vector<128x128xbf16>, vector<64x128xf32> -> vector<64x128xf32>
    %12 = arith.addf %5, %11 : vector<64x128xf32>
    %c0_13 = arith.constant 0 : index
    %c0_14 = arith.constant 0 : index
    %c2 = arith.constant 2 : index
    %c0_15 = arith.constant 0 : index
    %13 = vector.load %arg1[%c0_13, %c0_14, %c2, %c0_15] : memref<1x10x10x128xbf16, #tpu.memory_space<vmem>>, vector<1x8x8x128xbf16>
    %14 = vector.shape_cast %13 : vector<1x8x8x128xbf16> to vector<8x8x128xbf16>
    %15 = vector.shape_cast %14 : vector<8x8x128xbf16> to vector<64x128xbf16>
    %c2_16 = arith.constant 2 : index
    %c0_17 = arith.constant 0 : index
    %c0_18 = arith.constant 0 : index
    %16 = vector.load %arg2[%c2_16, %c0_17, %c0_18] : memref<9x128x128xbf16, #tpu.memory_space<vmem>>, vector<1x128x128xbf16>
    %17 = vector.shape_cast %16 : vector<1x128x128xbf16> to vector<128x128xbf16>
    %cst_19 = arith.constant dense<0.000000e+00> : vector<64x128xf32>
    %18 = tpu.matmul %15, %17, %cst_19 {dimension_numbers = #tpu.dot_dimension_numbers<[1], [0], [0], [1], [0, 0, 1, 1], [], []>} : vector<64x128xbf16>, vector<128x128xbf16>, vector<64x128xf32> -> vector<64x128xf32>
    %19 = arith.addf %12, %18 : vector<64x128xf32>
    %c0_20 = arith.constant 0 : index
    %c1_21 = arith.constant 1 : index
    %c0_22 = arith.constant 0 : index
    %c0_23 = arith.constant 0 : index
    %20 = vector.load %arg1[%c0_20, %c1_21, %c0_22, %c0_23] : memref<1x10x10x128xbf16, #tpu.memory_space<vmem>>, vector<1x8x8x128xbf16>
    %21 = vector.shape_cast %20 : vector<1x8x8x128xbf16> to vector<8x8x128xbf16>
    %22 = vector.shape_cast %21 : vector<8x8x128xbf16> to vector<64x128xbf16>
    %c3 = arith.constant 3 : index
    %c0_24 = arith.constant 0 : index
    %c0_25 = arith.constant 0 : index
    %23 = vector.load %arg2[%c3, %c0_24, %c0_25] : memref<9x128x128xbf16, #tpu.memory_space<vmem>>, vector<1x128x128xbf16>
    %24 = vector.shape_cast %23 : vector<1x128x128xbf16> to vector<128x128xbf16>
    %cst_26 = arith.constant dense<0.000000e+00> : vector<64x128xf32>
    %25 = tpu.matmul %22, %24, %cst_26 {dimension_numbers = #tpu.dot_dimension_numbers<[1], [0], [0], [1], [0, 0, 1, 1], [], []>} : vector<64x128xbf16>, vector<128x128xbf16>, vector<64x128xf32> -> vector<64x128xf32>
    %26 = arith.addf %19, %25 : vector<64x128xf32>
    %c0_27 = arith.constant 0 : index
    %c1_28 = arith.constant 1 : index
    %c1_29 = arith.constant 1 : index
    %c0_30 = arith.constant 0 : index
    %27 = vector.load %arg1[%c0_27, %c1_28, %c1_29, %c0_30] : memref<1x10x10x128xbf16, #tpu.memory_space<vmem>>, vector<1x8x8x128xbf16>
    %28 = vector.shape_cast %27 : vector<1x8x8x128xbf16> to vector<8x8x128xbf16>
    %29 = vector.shape_cast %28 : vector<8x8x128xbf16> to vector<64x128xbf16>
    %c4 = arith.constant 4 : index
    %c0_31 = arith.constant 0 : index
    %c0_32 = arith.constant 0 : index
    %30 = vector.load %arg2[%c4, %c0_31, %c0_32] : memref<9x128x128xbf16, #tpu.memory_space<vmem>>, vector<1x128x128xbf16>
    %31 = vector.shape_cast %30 : vector<1x128x128xbf16> to vector<128x128xbf16>
    %cst_33 = arith.constant dense<0.000000e+00> : vector<64x128xf32>
    %32 = tpu.matmul %29, %31, %cst_33 {dimension_numbers = #tpu.dot_dimension_numbers<[1], [0], [0], [1], [0, 0, 1, 1], [], []>} : vector<64x128xbf16>, vector<128x128xbf16>, vector<64x128xf32> -> vector<64x128xf32>
    %33 = arith.addf %26, %32 : vector<64x128xf32>
    %c0_34 = arith.constant 0 : index
    %c1_35 = arith.constant 1 : index
    %c2_36 = arith.constant 2 : index
    %c0_37 = arith.constant 0 : index
    %34 = vector.load %arg1[%c0_34, %c1_35, %c2_36, %c0_37] : memref<1x10x10x128xbf16, #tpu.memory_space<vmem>>, vector<1x8x8x128xbf16>
    %35 = vector.shape_cast %34 : vector<1x8x8x128xbf16> to vector<8x8x128xbf16>
    %36 = vector.shape_cast %35 : vector<8x8x128xbf16> to vector<64x128xbf16>
    %c5 = arith.constant 5 : index
    %c0_38 = arith.constant 0 : index
    %c0_39 = arith.constant 0 : index
    %37 = vector.load %arg2[%c5, %c0_38, %c0_39] : memref<9x128x128xbf16, #tpu.memory_space<vmem>>, vector<1x128x128xbf16>
    %38 = vector.shape_cast %37 : vector<1x128x128xbf16> to vector<128x128xbf16>
    %cst_40 = arith.constant dense<0.000000e+00> : vector<64x128xf32>
    %39 = tpu.matmul %36, %38, %cst_40 {dimension_numbers = #tpu.dot_dimension_numbers<[1], [0], [0], [1], [0, 0, 1, 1], [], []>} : vector<64x128xbf16>, vector<128x128xbf16>, vector<64x128xf32> -> vector<64x128xf32>
    %40 = arith.addf %33, %39 : vector<64x128xf32>
    %c0_41 = arith.constant 0 : index
    %c2_42 = arith.constant 2 : index
    %c0_43 = arith.constant 0 : index
    %c0_44 = arith.constant 0 : index
    %41 = vector.load %arg1[%c0_41, %c2_42, %c0_43, %c0_44] : memref<1x10x10x128xbf16, #tpu.memory_space<vmem>>, vector<1x8x8x128xbf16>
    %42 = vector.shape_cast %41 : vector<1x8x8x128xbf16> to vector<8x8x128xbf16>
    %43 = vector.shape_cast %42 : vector<8x8x128xbf16> to vector<64x128xbf16>
    %c6 = arith.constant 6 : index
    %c0_45 = arith.constant 0 : index
    %c0_46 = arith.constant 0 : index
    %44 = vector.load %arg2[%c6, %c0_45, %c0_46] : memref<9x128x128xbf16, #tpu.memory_space<vmem>>, vector<1x128x128xbf16>
    %45 = vector.shape_cast %44 : vector<1x128x128xbf16> to vector<128x128xbf16>
    %cst_47 = arith.constant dense<0.000000e+00> : vector<64x128xf32>
    %46 = tpu.matmul %43, %45, %cst_47 {dimension_numbers = #tpu.dot_dimension_numbers<[1], [0], [0], [1], [0, 0, 1, 1], [], []>} : vector<64x128xbf16>, vector<128x128xbf16>, vector<64x128xf32> -> vector<64x128xf32>
    %47 = arith.addf %40, %46 : vector<64x128xf32>
    %c0_48 = arith.constant 0 : index
    %c2_49 = arith.constant 2 : index
    %c1_50 = arith.constant 1 : index
    %c0_51 = arith.constant 0 : index
    %48 = vector.load %arg1[%c0_48, %c2_49, %c1_50, %c0_51] : memref<1x10x10x128xbf16, #tpu.memory_space<vmem>>, vector<1x8x8x128xbf16>
    %49 = vector.shape_cast %48 : vector<1x8x8x128xbf16> to vector<8x8x128xbf16>
    %50 = vector.shape_cast %49 : vector<8x8x128xbf16> to vector<64x128xbf16>
    %c7 = arith.constant 7 : index
    %c0_52 = arith.constant 0 : index
    %c0_53 = arith.constant 0 : index
    %51 = vector.load %arg2[%c7, %c0_52, %c0_53] : memref<9x128x128xbf16, #tpu.memory_space<vmem>>, vector<1x128x128xbf16>
    %52 = vector.shape_cast %51 : vector<1x128x128xbf16> to vector<128x128xbf16>
    %cst_54 = arith.constant dense<0.000000e+00> : vector<64x128xf32>
    %53 = tpu.matmul %50, %52, %cst_54 {dimension_numbers = #tpu.dot_dimension_numbers<[1], [0], [0], [1], [0, 0, 1, 1], [], []>} : vector<64x128xbf16>, vector<128x128xbf16>, vector<64x128xf32> -> vector<64x128xf32>
    %54 = arith.addf %47, %53 : vector<64x128xf32>
    %c0_55 = arith.constant 0 : index
    %c2_56 = arith.constant 2 : index
    %c2_57 = arith.constant 2 : index
    %c0_58 = arith.constant 0 : index
    %55 = vector.load %arg1[%c0_55, %c2_56, %c2_57, %c0_58] : memref<1x10x10x128xbf16, #tpu.memory_space<vmem>>, vector<1x8x8x128xbf16>
    %56 = vector.shape_cast %55 : vector<1x8x8x128xbf16> to vector<8x8x128xbf16>
    %57 = vector.shape_cast %56 : vector<8x8x128xbf16> to vector<64x128xbf16>
    %c8 = arith.constant 8 : index
    %c0_59 = arith.constant 0 : index
    %c0_60 = arith.constant 0 : index
    %58 = vector.load %arg2[%c8, %c0_59, %c0_60] : memref<9x128x128xbf16, #tpu.memory_space<vmem>>, vector<1x128x128xbf16>
    %59 = vector.shape_cast %58 : vector<1x128x128xbf16> to vector<128x128xbf16>
    %cst_61 = arith.constant dense<0.000000e+00> : vector<64x128xf32>
    %60 = tpu.matmul %57, %59, %cst_61 {dimension_numbers = #tpu.dot_dimension_numbers<[1], [0], [0], [1], [0, 0, 1, 1], [], []>} : vector<64x128xbf16>, vector<128x128xbf16>, vector<64x128xf32> -> vector<64x128xf32>
    %61 = arith.addf %54, %60 : vector<64x128xf32>
    %62 = arith.truncf %61 : vector<64x128xf32> to vector<64x128xbf16>
    %c0_62 = arith.constant 0 : index
    %c0_63 = arith.constant 0 : index
    %c0_64 = arith.constant 0 : index
    %63 = vector.load %arg3[%c0_62, %c0_63, %c0_64] : memref<1x64x128xbf16, #tpu.memory_space<vmem>>, vector<1x64x128xbf16>
    %64 = vector.shape_cast %63 : vector<1x64x128xbf16> to vector<64x128xbf16>
    %65 = vector.shape_cast %62 : vector<64x128xbf16> to vector<1x64x128xbf16>
    tpu.vector_store %arg3[%c0_62, %c0_63, %c0_64], %65 {strides = array<i32>} : memref<1x64x128xbf16, #tpu.memory_space<vmem>>, vector<1x64x128xbf16>,
    %cst_65 = arith.constant dense<0.000000e+00> : vector<128xf32>
    %66 = vector.multi_reduction <add>, %61, %cst_65 [0] : vector<64x128xf32> to vector<128xf32>
    %67 = vector.shape_cast %66 : vector<128xf32> to vector<1x128xf32>
    %c0_66 = arith.constant 0 : index
    %c0_67 = arith.constant 0 : index
    %c0_68 = arith.constant 0 : index
    %68 = vector.load %arg4[%c0_66, %c0_67, %c0_68] : memref<1x2x128xf32, #tpu.memory_space<vmem>>, vector<1x1x128xf32>
    %69 = vector.shape_cast %68 : vector<1x1x128xf32> to vector<1x128xf32>
    %70 = vector.shape_cast %67 : vector<1x128xf32> to vector<1x1x128xf32>
    tpu.vector_store %arg4[%c0_66, %c0_67, %c0_68], %70 {strides = array<i32>} : memref<1x2x128xf32, #tpu.memory_space<vmem>>, vector<1x1x128xf32>,
    %71 = arith.mulf %61, %61 : vector<64x128xf32>
    %cst_69 = arith.constant dense<0.000000e+00> : vector<128xf32>
    %72 = vector.multi_reduction <add>, %71, %cst_69 [0] : vector<64x128xf32> to vector<128xf32>
    %73 = vector.shape_cast %72 : vector<128xf32> to vector<1x128xf32>
    %c0_70 = arith.constant 0 : index
    %c1_71 = arith.constant 1 : index
    %c0_72 = arith.constant 0 : index
    %74 = vector.load %arg4[%c0_70, %c1_71, %c0_72] : memref<1x2x128xf32, #tpu.memory_space<vmem>>, vector<1x1x128xf32>
    %75 = vector.shape_cast %74 : vector<1x1x128xf32> to vector<1x128xf32>
    %76 = vector.shape_cast %73 : vector<1x128xf32> to vector<1x1x128xf32>
    tpu.vector_store %arg4[%c0_70, %c1_71, %c0_72], %76 {strides = array<i32>} : memref<1x2x128xf32, #tpu.memory_space<vmem>>, vector<1x1x128xf32>,
    return
  }
  func.func @transform_0(%arg0: i32) -> (i32, i32, i32, i32) {
    %c0_i32 = arith.constant 0 : i32
    %c0_i32_0 = arith.constant 0 : i32
    %c0_i32_1 = arith.constant 0 : i32
    %c0_i32_2 = arith.constant 0 : i32
    return %arg0, %c0_i32, %c0_i32_0, %c0_i32_1 : i32, i32, i32, i32
  }
  func.func @transform_1(%arg0: i32) -> (i32, i32, i32) {
    %c0_i32 = arith.constant 0 : i32
    %c0_i32_0 = arith.constant 0 : i32
    %c0_i32_1 = arith.constant 0 : i32
    %c0_i32_2 = arith.constant 0 : i32
    return %c0_i32, %c0_i32_0, %c0_i32_1 : i32, i32, i32
  }
  func.func @transform_2(%arg0: i32) -> (i32, i32, i32) {
    %c0_i32 = arith.constant 0 : i32
    %c0_i32_0 = arith.constant 0 : i32
    %c0_i32_1 = arith.constant 0 : i32
    return %arg0, %c0_i32, %c0_i32_0 : i32, i32, i32
  }
  func.func @transform_3(%arg0: i32) -> (i32, i32, i32) {
    %c0_i32 = arith.constant 0 : i32
    %c0_i32_0 = arith.constant 0 : i32
    %c0_i32_1 = arith.constant 0 : i32
    return %arg0, %c0_i32, %c0_i32_0 : i32, i32, i32
  }
}

module attributes {stable_mosaic.version = 11 : i64} {
  func.func @bn_relu_pool_kernel(%arg0: i32, %arg1: memref<1x64x128xbf16, #tpu.memory_space<vmem>>, %arg2: memref<1x128xf32, #tpu.memory_space<vmem>>, %arg3: memref<1x128xf32, #tpu.memory_space<vmem>>, %arg4: memref<1x64x128xbf16, #tpu.memory_space<vmem>>) attributes {dimension_semantics = [#tpu.dimension_semantics<parallel>], iteration_bounds = array<i64: 2>, scalar_prefetch = 0 : i64, scratch_operands = 0 : i64, tpu.core_type = #tpu.core_type<tc>, window_params = [{transform_indices = @transform_0, window_bounds = array<i64: 1, 64, 128>}, {pipeline_mode = #tpu.pipeline_mode<synchronous>, transform_indices = @transform_1, window_bounds = array<i64: 1, 128>}, {pipeline_mode = #tpu.pipeline_mode<synchronous>, transform_indices = @transform_2, window_bounds = array<i64: 1, 128>}, {transform_indices = @transform_3, window_bounds = array<i64: 1, 64, 128>}]} {
    %c0 = arith.constant 0 : index
    %c0_0 = arith.constant 0 : index
    %c0_1 = arith.constant 0 : index
    %0 = vector.load %arg1[%c0, %c0_0, %c0_1] : memref<1x64x128xbf16, #tpu.memory_space<vmem>>, vector<1x64x128xbf16>
    %1 = vector.shape_cast %0 : vector<1x64x128xbf16> to vector<64x128xbf16>
    %2 = arith.extf %1 : vector<64x128xbf16> to vector<64x128xf32>
    %c0_2 = arith.constant 0 : index
    %c0_3 = arith.constant 0 : index
    %3 = vector.load %arg2[%c0_2, %c0_3] : memref<1x128xf32, #tpu.memory_space<vmem>>, vector<1x128xf32>
    %4 = vector.broadcast %3 : vector<1x128xf32> to vector<64x128xf32>
    %5 = arith.mulf %2, %4 : vector<64x128xf32>
    %c0_4 = arith.constant 0 : index
    %c0_5 = arith.constant 0 : index
    %6 = vector.load %arg3[%c0_4, %c0_5] : memref<1x128xf32, #tpu.memory_space<vmem>>, vector<1x128xf32>
    %7 = vector.broadcast %6 : vector<1x128xf32> to vector<64x128xf32>
    %8 = arith.addf %5, %7 : vector<64x128xf32>
    %cst = arith.constant 0.000000e+00 : f32
    %9 = vector.broadcast %cst : f32 to vector<64x128xf32>
    %10 = arith.maximumf %8, %9 : vector<64x128xf32>
    %11 = arith.truncf %10 : vector<64x128xf32> to vector<64x128xbf16>
    %c0_6 = arith.constant 0 : index
    %c0_7 = arith.constant 0 : index
    %c0_8 = arith.constant 0 : index
    %12 = vector.load %arg4[%c0_6, %c0_7, %c0_8] : memref<1x64x128xbf16, #tpu.memory_space<vmem>>, vector<1x64x128xbf16>
    %13 = vector.shape_cast %12 : vector<1x64x128xbf16> to vector<64x128xbf16>
    %14 = vector.shape_cast %11 : vector<64x128xbf16> to vector<1x64x128xbf16>
    tpu.vector_store %arg4[%c0_6, %c0_7, %c0_8], %14 {strides = array<i32>} : memref<1x64x128xbf16, #tpu.memory_space<vmem>>, vector<1x64x128xbf16>,
    return
  }
  func.func @transform_0(%arg0: i32) -> (i32, i32, i32) {
    %c0_i32 = arith.constant 0 : i32
    %c0_i32_0 = arith.constant 0 : i32
    %c0_i32_1 = arith.constant 0 : i32
    return %arg0, %c0_i32, %c0_i32_0 : i32, i32, i32
  }
  func.func @transform_1(%arg0: i32) -> (i32, i32) {
    %c0_i32 = arith.constant 0 : i32
    %c0_i32_0 = arith.constant 0 : i32
    %c0_i32_1 = arith.constant 0 : i32
    return %c0_i32, %c0_i32_0 : i32, i32
  }
  func.func @transform_2(%arg0: i32) -> (i32, i32) {
    %c0_i32 = arith.constant 0 : i32
    %c0_i32_0 = arith.constant 0 : i32
    %c0_i32_1 = arith.constant 0 : i32
    return %c0_i32, %c0_i32_0 : i32, i32
  }
  func.func @transform_3(%arg0: i32) -> (i32, i32, i32) {
    %c0_i32 = arith.constant 0 : i32
    %c0_i32_0 = arith.constant 0 : i32
    %c0_i32_1 = arith.constant 0 : i32
    return %arg0, %c0_i32, %c0_i32_0 : i32, i32, i32
  }
}

module attributes {stable_mosaic.version = 11 : i64} {
  func.func @bn_relu_pool_kernel(%arg0: i32, %arg1: memref<1x64x128xbf16, #tpu.memory_space<vmem>>, %arg2: memref<1x128xf32, #tpu.memory_space<vmem>>, %arg3: memref<1x128xf32, #tpu.memory_space<vmem>>, %arg4: memref<1x4x4x128xbf16, #tpu.memory_space<vmem>>) attributes {dimension_semantics = [#tpu.dimension_semantics<parallel>], iteration_bounds = array<i64: 2>, scalar_prefetch = 0 : i64, scratch_operands = 0 : i64, tpu.core_type = #tpu.core_type<tc>, window_params = [{transform_indices = @transform_0, window_bounds = array<i64: 1, 64, 128>}, {pipeline_mode = #tpu.pipeline_mode<synchronous>, transform_indices = @transform_1, window_bounds = array<i64: 1, 128>}, {pipeline_mode = #tpu.pipeline_mode<synchronous>, transform_indices = @transform_2, window_bounds = array<i64: 1, 128>}, {transform_indices = @transform_3, window_bounds = array<i64: 1, 4, 4, 128>}]} {
    %c0 = arith.constant 0 : index
    %c0_0 = arith.constant 0 : index
    %c0_1 = arith.constant 0 : index
    %0 = vector.load %arg1[%c0, %c0_0, %c0_1] : memref<1x64x128xbf16, #tpu.memory_space<vmem>>, vector<1x64x128xbf16>
    %1 = vector.shape_cast %0 : vector<1x64x128xbf16> to vector<64x128xbf16>
    %2 = arith.extf %1 : vector<64x128xbf16> to vector<64x128xf32>
    %c0_2 = arith.constant 0 : index
    %c0_3 = arith.constant 0 : index
    %3 = vector.load %arg2[%c0_2, %c0_3] : memref<1x128xf32, #tpu.memory_space<vmem>>, vector<1x128xf32>
    %4 = vector.broadcast %3 : vector<1x128xf32> to vector<64x128xf32>
    %5 = arith.mulf %2, %4 : vector<64x128xf32>
    %c0_4 = arith.constant 0 : index
    %c0_5 = arith.constant 0 : index
    %6 = vector.load %arg3[%c0_4, %c0_5] : memref<1x128xf32, #tpu.memory_space<vmem>>, vector<1x128xf32>
    %7 = vector.broadcast %6 : vector<1x128xf32> to vector<64x128xf32>
    %8 = arith.addf %5, %7 : vector<64x128xf32>
    %cst = arith.constant 0.000000e+00 : f32
    %9 = vector.broadcast %cst : f32 to vector<64x128xf32>
    %10 = arith.maximumf %8, %9 : vector<64x128xf32>
    %11 = vector.shape_cast %10 : vector<64x128xf32> to vector<32x2x128xf32>
    %cst_6 = arith.constant dense<0xFF800000> : vector<32x128xf32>
    %12 = vector.multi_reduction <maximumf>, %11, %cst_6 [1] : vector<32x2x128xf32> to vector<32x128xf32>
    %13 = vector.shape_cast %12 : vector<32x128xf32> to vector<4x2x4x128xf32>
    %cst_7 = arith.constant dense<0xFF800000> : vector<4x4x128xf32>
    %14 = vector.multi_reduction <maximumf>, %13, %cst_7 [1] : vector<4x2x4x128xf32> to vector<4x4x128xf32>
    %15 = arith.truncf %14 : vector<4x4x128xf32> to vector<4x4x128xbf16>
    %c0_8 = arith.constant 0 : index
    %c0_9 = arith.constant 0 : index
    %c0_10 = arith.constant 0 : index
    %c0_11 = arith.constant 0 : index
    %16 = vector.load %arg4[%c0_8, %c0_9, %c0_10, %c0_11] : memref<1x4x4x128xbf16, #tpu.memory_space<vmem>>, vector<1x4x4x128xbf16>
    %17 = vector.shape_cast %16 : vector<1x4x4x128xbf16> to vector<4x4x128xbf16>
    %18 = vector.shape_cast %15 : vector<4x4x128xbf16> to vector<1x4x4x128xbf16>
    tpu.vector_store %arg4[%c0_8, %c0_9, %c0_10, %c0_11], %18 {strides = array<i32>} : memref<1x4x4x128xbf16, #tpu.memory_space<vmem>>, vector<1x4x4x128xbf16>,
    return
  }
  func.func @transform_0(%arg0: i32) -> (i32, i32, i32) {
    %c0_i32 = arith.constant 0 : i32
    %c0_i32_0 = arith.constant 0 : i32
    %c0_i32_1 = arith.constant 0 : i32
    return %arg0, %c0_i32, %c0_i32_0 : i32, i32, i32
  }
  func.func @transform_1(%arg0: i32) -> (i32, i32) {
    %c0_i32 = arith.constant 0 : i32
    %c0_i32_0 = arith.constant 0 : i32
    %c0_i32_1 = arith.constant 0 : i32
    return %c0_i32, %c0_i32_0 : i32, i32
  }
  func.func @transform_2(%arg0: i32) -> (i32, i32) {
    %c0_i32 = arith.constant 0 : i32
    %c0_i32_0 = arith.constant 0 : i32
    %c0_i32_1 = arith.constant 0 : i32
    return %c0_i32, %c0_i32_0 : i32, i32
  }
  func.func @transform_3(%arg0: i32) -> (i32, i32, i32, i32) {
    %c0_i32 = arith.constant 0 : i32
    %c0_i32_0 = arith.constant 0 : i32
    %c0_i32_1 = arith.constant 0 : i32
    %c0_i32_2 = arith.constant 0 : i32
    return %arg0, %c0_i32, %c0_i32_0, %c0_i32_1 : i32, i32, i32, i32
  }
}

module attributes {stable_mosaic.version = 11 : i64} {
  func.func @conv_stats_kernel(%arg0: i32, %arg1: memref<1x6x6x128xbf16, #tpu.memory_space<vmem>>, %arg2: memref<9x128x128xbf16, #tpu.memory_space<vmem>>, %arg3: memref<1x16x128xbf16, #tpu.memory_space<vmem>>, %arg4: memref<1x2x128xf32, #tpu.memory_space<vmem>>) attributes {dimension_semantics = [#tpu.dimension_semantics<parallel>], iteration_bounds = array<i64: 2>, scalar_prefetch = 0 : i64, scratch_operands = 0 : i64, tpu.core_type = #tpu.core_type<tc>, window_params = [{transform_indices = @transform_0, window_bounds = array<i64: 1, 6, 6, 128>}, {pipeline_mode = #tpu.pipeline_mode<synchronous>, transform_indices = @transform_1, window_bounds = array<i64: 9, 128, 128>}, {transform_indices = @transform_2, window_bounds = array<i64: 1, 16, 128>}, {transform_indices = @transform_3, window_bounds = array<i64: 1, 2, 128>}]} {
    %c0 = arith.constant 0 : index
    %c0_0 = arith.constant 0 : index
    %c0_1 = arith.constant 0 : index
    %c0_2 = arith.constant 0 : index
    %0 = vector.load %arg1[%c0, %c0_0, %c0_1, %c0_2] : memref<1x6x6x128xbf16, #tpu.memory_space<vmem>>, vector<1x4x4x128xbf16>
    %1 = vector.shape_cast %0 : vector<1x4x4x128xbf16> to vector<4x4x128xbf16>
    %2 = vector.shape_cast %1 : vector<4x4x128xbf16> to vector<16x128xbf16>
    %c0_3 = arith.constant 0 : index
    %c0_4 = arith.constant 0 : index
    %c0_5 = arith.constant 0 : index
    %3 = vector.load %arg2[%c0_3, %c0_4, %c0_5] : memref<9x128x128xbf16, #tpu.memory_space<vmem>>, vector<1x128x128xbf16>
    %4 = vector.shape_cast %3 : vector<1x128x128xbf16> to vector<128x128xbf16>
    %cst = arith.constant dense<0.000000e+00> : vector<16x128xf32>
    %5 = tpu.matmul %2, %4, %cst {dimension_numbers = #tpu.dot_dimension_numbers<[1], [0], [0], [1], [0, 0, 1, 1], [], []>} : vector<16x128xbf16>, vector<128x128xbf16>, vector<16x128xf32> -> vector<16x128xf32>
    %c0_6 = arith.constant 0 : index
    %c0_7 = arith.constant 0 : index
    %c1 = arith.constant 1 : index
    %c0_8 = arith.constant 0 : index
    %6 = vector.load %arg1[%c0_6, %c0_7, %c1, %c0_8] : memref<1x6x6x128xbf16, #tpu.memory_space<vmem>>, vector<1x4x4x128xbf16>
    %7 = vector.shape_cast %6 : vector<1x4x4x128xbf16> to vector<4x4x128xbf16>
    %8 = vector.shape_cast %7 : vector<4x4x128xbf16> to vector<16x128xbf16>
    %c1_9 = arith.constant 1 : index
    %c0_10 = arith.constant 0 : index
    %c0_11 = arith.constant 0 : index
    %9 = vector.load %arg2[%c1_9, %c0_10, %c0_11] : memref<9x128x128xbf16, #tpu.memory_space<vmem>>, vector<1x128x128xbf16>
    %10 = vector.shape_cast %9 : vector<1x128x128xbf16> to vector<128x128xbf16>
    %cst_12 = arith.constant dense<0.000000e+00> : vector<16x128xf32>
    %11 = tpu.matmul %8, %10, %cst_12 {dimension_numbers = #tpu.dot_dimension_numbers<[1], [0], [0], [1], [0, 0, 1, 1], [], []>} : vector<16x128xbf16>, vector<128x128xbf16>, vector<16x128xf32> -> vector<16x128xf32>
    %12 = arith.addf %5, %11 : vector<16x128xf32>
    %c0_13 = arith.constant 0 : index
    %c0_14 = arith.constant 0 : index
    %c2 = arith.constant 2 : index
    %c0_15 = arith.constant 0 : index
    %13 = vector.load %arg1[%c0_13, %c0_14, %c2, %c0_15] : memref<1x6x6x128xbf16, #tpu.memory_space<vmem>>, vector<1x4x4x128xbf16>
    %14 = vector.shape_cast %13 : vector<1x4x4x128xbf16> to vector<4x4x128xbf16>
    %15 = vector.shape_cast %14 : vector<4x4x128xbf16> to vector<16x128xbf16>
    %c2_16 = arith.constant 2 : index
    %c0_17 = arith.constant 0 : index
    %c0_18 = arith.constant 0 : index
    %16 = vector.load %arg2[%c2_16, %c0_17, %c0_18] : memref<9x128x128xbf16, #tpu.memory_space<vmem>>, vector<1x128x128xbf16>
    %17 = vector.shape_cast %16 : vector<1x128x128xbf16> to vector<128x128xbf16>
    %cst_19 = arith.constant dense<0.000000e+00> : vector<16x128xf32>
    %18 = tpu.matmul %15, %17, %cst_19 {dimension_numbers = #tpu.dot_dimension_numbers<[1], [0], [0], [1], [0, 0, 1, 1], [], []>} : vector<16x128xbf16>, vector<128x128xbf16>, vector<16x128xf32> -> vector<16x128xf32>
    %19 = arith.addf %12, %18 : vector<16x128xf32>
    %c0_20 = arith.constant 0 : index
    %c1_21 = arith.constant 1 : index
    %c0_22 = arith.constant 0 : index
    %c0_23 = arith.constant 0 : index
    %20 = vector.load %arg1[%c0_20, %c1_21, %c0_22, %c0_23] : memref<1x6x6x128xbf16, #tpu.memory_space<vmem>>, vector<1x4x4x128xbf16>
    %21 = vector.shape_cast %20 : vector<1x4x4x128xbf16> to vector<4x4x128xbf16>
    %22 = vector.shape_cast %21 : vector<4x4x128xbf16> to vector<16x128xbf16>
    %c3 = arith.constant 3 : index
    %c0_24 = arith.constant 0 : index
    %c0_25 = arith.constant 0 : index
    %23 = vector.load %arg2[%c3, %c0_24, %c0_25] : memref<9x128x128xbf16, #tpu.memory_space<vmem>>, vector<1x128x128xbf16>
    %24 = vector.shape_cast %23 : vector<1x128x128xbf16> to vector<128x128xbf16>
    %cst_26 = arith.constant dense<0.000000e+00> : vector<16x128xf32>
    %25 = tpu.matmul %22, %24, %cst_26 {dimension_numbers = #tpu.dot_dimension_numbers<[1], [0], [0], [1], [0, 0, 1, 1], [], []>} : vector<16x128xbf16>, vector<128x128xbf16>, vector<16x128xf32> -> vector<16x128xf32>
    %26 = arith.addf %19, %25 : vector<16x128xf32>
    %c0_27 = arith.constant 0 : index
    %c1_28 = arith.constant 1 : index
    %c1_29 = arith.constant 1 : index
    %c0_30 = arith.constant 0 : index
    %27 = vector.load %arg1[%c0_27, %c1_28, %c1_29, %c0_30] : memref<1x6x6x128xbf16, #tpu.memory_space<vmem>>, vector<1x4x4x128xbf16>
    %28 = vector.shape_cast %27 : vector<1x4x4x128xbf16> to vector<4x4x128xbf16>
    %29 = vector.shape_cast %28 : vector<4x4x128xbf16> to vector<16x128xbf16>
    %c4 = arith.constant 4 : index
    %c0_31 = arith.constant 0 : index
    %c0_32 = arith.constant 0 : index
    %30 = vector.load %arg2[%c4, %c0_31, %c0_32] : memref<9x128x128xbf16, #tpu.memory_space<vmem>>, vector<1x128x128xbf16>
    %31 = vector.shape_cast %30 : vector<1x128x128xbf16> to vector<128x128xbf16>
    %cst_33 = arith.constant dense<0.000000e+00> : vector<16x128xf32>
    %32 = tpu.matmul %29, %31, %cst_33 {dimension_numbers = #tpu.dot_dimension_numbers<[1], [0], [0], [1], [0, 0, 1, 1], [], []>} : vector<16x128xbf16>, vector<128x128xbf16>, vector<16x128xf32> -> vector<16x128xf32>
    %33 = arith.addf %26, %32 : vector<16x128xf32>
    %c0_34 = arith.constant 0 : index
    %c1_35 = arith.constant 1 : index
    %c2_36 = arith.constant 2 : index
    %c0_37 = arith.constant 0 : index
    %34 = vector.load %arg1[%c0_34, %c1_35, %c2_36, %c0_37] : memref<1x6x6x128xbf16, #tpu.memory_space<vmem>>, vector<1x4x4x128xbf16>
    %35 = vector.shape_cast %34 : vector<1x4x4x128xbf16> to vector<4x4x128xbf16>
    %36 = vector.shape_cast %35 : vector<4x4x128xbf16> to vector<16x128xbf16>
    %c5 = arith.constant 5 : index
    %c0_38 = arith.constant 0 : index
    %c0_39 = arith.constant 0 : index
    %37 = vector.load %arg2[%c5, %c0_38, %c0_39] : memref<9x128x128xbf16, #tpu.memory_space<vmem>>, vector<1x128x128xbf16>
    %38 = vector.shape_cast %37 : vector<1x128x128xbf16> to vector<128x128xbf16>
    %cst_40 = arith.constant dense<0.000000e+00> : vector<16x128xf32>
    %39 = tpu.matmul %36, %38, %cst_40 {dimension_numbers = #tpu.dot_dimension_numbers<[1], [0], [0], [1], [0, 0, 1, 1], [], []>} : vector<16x128xbf16>, vector<128x128xbf16>, vector<16x128xf32> -> vector<16x128xf32>
    %40 = arith.addf %33, %39 : vector<16x128xf32>
    %c0_41 = arith.constant 0 : index
    %c2_42 = arith.constant 2 : index
    %c0_43 = arith.constant 0 : index
    %c0_44 = arith.constant 0 : index
    %41 = vector.load %arg1[%c0_41, %c2_42, %c0_43, %c0_44] : memref<1x6x6x128xbf16, #tpu.memory_space<vmem>>, vector<1x4x4x128xbf16>
    %42 = vector.shape_cast %41 : vector<1x4x4x128xbf16> to vector<4x4x128xbf16>
    %43 = vector.shape_cast %42 : vector<4x4x128xbf16> to vector<16x128xbf16>
    %c6 = arith.constant 6 : index
    %c0_45 = arith.constant 0 : index
    %c0_46 = arith.constant 0 : index
    %44 = vector.load %arg2[%c6, %c0_45, %c0_46] : memref<9x128x128xbf16, #tpu.memory_space<vmem>>, vector<1x128x128xbf16>
    %45 = vector.shape_cast %44 : vector<1x128x128xbf16> to vector<128x128xbf16>
    %cst_47 = arith.constant dense<0.000000e+00> : vector<16x128xf32>
    %46 = tpu.matmul %43, %45, %cst_47 {dimension_numbers = #tpu.dot_dimension_numbers<[1], [0], [0], [1], [0, 0, 1, 1], [], []>} : vector<16x128xbf16>, vector<128x128xbf16>, vector<16x128xf32> -> vector<16x128xf32>
    %47 = arith.addf %40, %46 : vector<16x128xf32>
    %c0_48 = arith.constant 0 : index
    %c2_49 = arith.constant 2 : index
    %c1_50 = arith.constant 1 : index
    %c0_51 = arith.constant 0 : index
    %48 = vector.load %arg1[%c0_48, %c2_49, %c1_50, %c0_51] : memref<1x6x6x128xbf16, #tpu.memory_space<vmem>>, vector<1x4x4x128xbf16>
    %49 = vector.shape_cast %48 : vector<1x4x4x128xbf16> to vector<4x4x128xbf16>
    %50 = vector.shape_cast %49 : vector<4x4x128xbf16> to vector<16x128xbf16>
    %c7 = arith.constant 7 : index
    %c0_52 = arith.constant 0 : index
    %c0_53 = arith.constant 0 : index
    %51 = vector.load %arg2[%c7, %c0_52, %c0_53] : memref<9x128x128xbf16, #tpu.memory_space<vmem>>, vector<1x128x128xbf16>
    %52 = vector.shape_cast %51 : vector<1x128x128xbf16> to vector<128x128xbf16>
    %cst_54 = arith.constant dense<0.000000e+00> : vector<16x128xf32>
    %53 = tpu.matmul %50, %52, %cst_54 {dimension_numbers = #tpu.dot_dimension_numbers<[1], [0], [0], [1], [0, 0, 1, 1], [], []>} : vector<16x128xbf16>, vector<128x128xbf16>, vector<16x128xf32> -> vector<16x128xf32>
    %54 = arith.addf %47, %53 : vector<16x128xf32>
    %c0_55 = arith.constant 0 : index
    %c2_56 = arith.constant 2 : index
    %c2_57 = arith.constant 2 : index
    %c0_58 = arith.constant 0 : index
    %55 = vector.load %arg1[%c0_55, %c2_56, %c2_57, %c0_58] : memref<1x6x6x128xbf16, #tpu.memory_space<vmem>>, vector<1x4x4x128xbf16>
    %56 = vector.shape_cast %55 : vector<1x4x4x128xbf16> to vector<4x4x128xbf16>
    %57 = vector.shape_cast %56 : vector<4x4x128xbf16> to vector<16x128xbf16>
    %c8 = arith.constant 8 : index
    %c0_59 = arith.constant 0 : index
    %c0_60 = arith.constant 0 : index
    %58 = vector.load %arg2[%c8, %c0_59, %c0_60] : memref<9x128x128xbf16, #tpu.memory_space<vmem>>, vector<1x128x128xbf16>
    %59 = vector.shape_cast %58 : vector<1x128x128xbf16> to vector<128x128xbf16>
    %cst_61 = arith.constant dense<0.000000e+00> : vector<16x128xf32>
    %60 = tpu.matmul %57, %59, %cst_61 {dimension_numbers = #tpu.dot_dimension_numbers<[1], [0], [0], [1], [0, 0, 1, 1], [], []>} : vector<16x128xbf16>, vector<128x128xbf16>, vector<16x128xf32> -> vector<16x128xf32>
    %61 = arith.addf %54, %60 : vector<16x128xf32>
    %62 = arith.truncf %61 : vector<16x128xf32> to vector<16x128xbf16>
    %c0_62 = arith.constant 0 : index
    %c0_63 = arith.constant 0 : index
    %c0_64 = arith.constant 0 : index
    %63 = vector.load %arg3[%c0_62, %c0_63, %c0_64] : memref<1x16x128xbf16, #tpu.memory_space<vmem>>, vector<1x16x128xbf16>
    %64 = vector.shape_cast %63 : vector<1x16x128xbf16> to vector<16x128xbf16>
    %65 = vector.shape_cast %62 : vector<16x128xbf16> to vector<1x16x128xbf16>
    tpu.vector_store %arg3[%c0_62, %c0_63, %c0_64], %65 {strides = array<i32>} : memref<1x16x128xbf16, #tpu.memory_space<vmem>>, vector<1x16x128xbf16>,
    %cst_65 = arith.constant dense<0.000000e+00> : vector<128xf32>
    %66 = vector.multi_reduction <add>, %61, %cst_65 [0] : vector<16x128xf32> to vector<128xf32>
    %67 = vector.shape_cast %66 : vector<128xf32> to vector<1x128xf32>
    %c0_66 = arith.constant 0 : index
    %c0_67 = arith.constant 0 : index
    %c0_68 = arith.constant 0 : index
    %68 = vector.load %arg4[%c0_66, %c0_67, %c0_68] : memref<1x2x128xf32, #tpu.memory_space<vmem>>, vector<1x1x128xf32>
    %69 = vector.shape_cast %68 : vector<1x1x128xf32> to vector<1x128xf32>
    %70 = vector.shape_cast %67 : vector<1x128xf32> to vector<1x1x128xf32>
    tpu.vector_store %arg4[%c0_66, %c0_67, %c0_68], %70 {strides = array<i32>} : memref<1x2x128xf32, #tpu.memory_space<vmem>>, vector<1x1x128xf32>,
    %71 = arith.mulf %61, %61 : vector<16x128xf32>
    %cst_69 = arith.constant dense<0.000000e+00> : vector<128xf32>
    %72 = vector.multi_reduction <add>, %71, %cst_69 [0] : vector<16x128xf32> to vector<128xf32>
    %73 = vector.shape_cast %72 : vector<128xf32> to vector<1x128xf32>
    %c0_70 = arith.constant 0 : index
    %c1_71 = arith.constant 1 : index
    %c0_72 = arith.constant 0 : index
    %74 = vector.load %arg4[%c0_70, %c1_71, %c0_72] : memref<1x2x128xf32, #tpu.memory_space<vmem>>, vector<1x1x128xf32>
    %75 = vector.shape_cast %74 : vector<1x1x128xf32> to vector<1x128xf32>
    %76 = vector.shape_cast %73 : vector<1x128xf32> to vector<1x1x128xf32>
    tpu.vector_store %arg4[%c0_70, %c1_71, %c0_72], %76 {strides = array<i32>} : memref<1x2x128xf32, #tpu.memory_space<vmem>>, vector<1x1x128xf32>,
    return
  }
  func.func @transform_0(%arg0: i32) -> (i32, i32, i32, i32) {
    %c0_i32 = arith.constant 0 : i32
    %c0_i32_0 = arith.constant 0 : i32
    %c0_i32_1 = arith.constant 0 : i32
    %c0_i32_2 = arith.constant 0 : i32
    return %arg0, %c0_i32, %c0_i32_0, %c0_i32_1 : i32, i32, i32, i32
  }
  func.func @transform_1(%arg0: i32) -> (i32, i32, i32) {
    %c0_i32 = arith.constant 0 : i32
    %c0_i32_0 = arith.constant 0 : i32
    %c0_i32_1 = arith.constant 0 : i32
    %c0_i32_2 = arith.constant 0 : i32
    return %c0_i32, %c0_i32_0, %c0_i32_1 : i32, i32, i32
  }
  func.func @transform_2(%arg0: i32) -> (i32, i32, i32) {
    %c0_i32 = arith.constant 0 : i32
    %c0_i32_0 = arith.constant 0 : i32
    %c0_i32_1 = arith.constant 0 : i32
    return %arg0, %c0_i32, %c0_i32_0 : i32, i32, i32
  }
  func.func @transform_3(%arg0: i32) -> (i32, i32, i32) {
    %c0_i32 = arith.constant 0 : i32
    %c0_i32_0 = arith.constant 0 : i32
    %c0_i32_1 = arith.constant 0 : i32
    return %arg0, %c0_i32, %c0_i32_0 : i32, i32, i32
  }
}

module attributes {stable_mosaic.version = 11 : i64} {
  func.func @bn_relu_pool_kernel(%arg0: i32, %arg1: memref<1x16x128xbf16, #tpu.memory_space<vmem>>, %arg2: memref<1x128xf32, #tpu.memory_space<vmem>>, %arg3: memref<1x128xf32, #tpu.memory_space<vmem>>, %arg4: memref<1x16x128xbf16, #tpu.memory_space<vmem>>) attributes {dimension_semantics = [#tpu.dimension_semantics<parallel>], iteration_bounds = array<i64: 2>, scalar_prefetch = 0 : i64, scratch_operands = 0 : i64, tpu.core_type = #tpu.core_type<tc>, window_params = [{transform_indices = @transform_0, window_bounds = array<i64: 1, 16, 128>}, {pipeline_mode = #tpu.pipeline_mode<synchronous>, transform_indices = @transform_1, window_bounds = array<i64: 1, 128>}, {pipeline_mode = #tpu.pipeline_mode<synchronous>, transform_indices = @transform_2, window_bounds = array<i64: 1, 128>}, {transform_indices = @transform_3, window_bounds = array<i64: 1, 16, 128>}]} {
    %c0 = arith.constant 0 : index
    %c0_0 = arith.constant 0 : index
    %c0_1 = arith.constant 0 : index
    %0 = vector.load %arg1[%c0, %c0_0, %c0_1] : memref<1x16x128xbf16, #tpu.memory_space<vmem>>, vector<1x16x128xbf16>
    %1 = vector.shape_cast %0 : vector<1x16x128xbf16> to vector<16x128xbf16>
    %2 = arith.extf %1 : vector<16x128xbf16> to vector<16x128xf32>
    %c0_2 = arith.constant 0 : index
    %c0_3 = arith.constant 0 : index
    %3 = vector.load %arg2[%c0_2, %c0_3] : memref<1x128xf32, #tpu.memory_space<vmem>>, vector<1x128xf32>
    %4 = vector.broadcast %3 : vector<1x128xf32> to vector<16x128xf32>
    %5 = arith.mulf %2, %4 : vector<16x128xf32>
    %c0_4 = arith.constant 0 : index
    %c0_5 = arith.constant 0 : index
    %6 = vector.load %arg3[%c0_4, %c0_5] : memref<1x128xf32, #tpu.memory_space<vmem>>, vector<1x128xf32>
    %7 = vector.broadcast %6 : vector<1x128xf32> to vector<16x128xf32>
    %8 = arith.addf %5, %7 : vector<16x128xf32>
    %cst = arith.constant 0.000000e+00 : f32
    %9 = vector.broadcast %cst : f32 to vector<16x128xf32>
    %10 = arith.maximumf %8, %9 : vector<16x128xf32>
    %11 = arith.truncf %10 : vector<16x128xf32> to vector<16x128xbf16>
    %c0_6 = arith.constant 0 : index
    %c0_7 = arith.constant 0 : index
    %c0_8 = arith.constant 0 : index
    %12 = vector.load %arg4[%c0_6, %c0_7, %c0_8] : memref<1x16x128xbf16, #tpu.memory_space<vmem>>, vector<1x16x128xbf16>
    %13 = vector.shape_cast %12 : vector<1x16x128xbf16> to vector<16x128xbf16>
    %14 = vector.shape_cast %11 : vector<16x128xbf16> to vector<1x16x128xbf16>
    tpu.vector_store %arg4[%c0_6, %c0_7, %c0_8], %14 {strides = array<i32>} : memref<1x16x128xbf16, #tpu.memory_space<vmem>>, vector<1x16x128xbf16>,
    return
  }
  func.func @transform_0(%arg0: i32) -> (i32, i32, i32) {
    %c0_i32 = arith.constant 0 : i32
    %c0_i32_0 = arith.constant 0 : i32
    %c0_i32_1 = arith.constant 0 : i32
    return %arg0, %c0_i32, %c0_i32_0 : i32, i32, i32
  }
  func.func @transform_1(%arg0: i32) -> (i32, i32) {
    %c0_i32 = arith.constant 0 : i32
    %c0_i32_0 = arith.constant 0 : i32
    %c0_i32_1 = arith.constant 0 : i32
    return %c0_i32, %c0_i32_0 : i32, i32
  }
  func.func @transform_2(%arg0: i32) -> (i32, i32) {
    %c0_i32 = arith.constant 0 : i32
    %c0_i32_0 = arith.constant 0 : i32
    %c0_i32_1 = arith.constant 0 : i32
    return %c0_i32, %c0_i32_0 : i32, i32
  }
  func.func @transform_3(%arg0: i32) -> (i32, i32, i32) {
    %c0_i32 = arith.constant 0 : i32
    %c0_i32_0 = arith.constant 0 : i32
    %c0_i32_1 = arith.constant 0 : i32
    return %arg0, %c0_i32, %c0_i32_0 : i32, i32, i32
  }
}

module attributes {stable_mosaic.version = 11 : i64} {
  func.func @bn_relu_pool_kernel(%arg0: i32, %arg1: memref<1x16x128xbf16, #tpu.memory_space<vmem>>, %arg2: memref<1x128xf32, #tpu.memory_space<vmem>>, %arg3: memref<1x128xf32, #tpu.memory_space<vmem>>, %arg4: memref<1x2x2x128xbf16, #tpu.memory_space<vmem>>) attributes {dimension_semantics = [#tpu.dimension_semantics<parallel>], iteration_bounds = array<i64: 2>, scalar_prefetch = 0 : i64, scratch_operands = 0 : i64, tpu.core_type = #tpu.core_type<tc>, window_params = [{transform_indices = @transform_0, window_bounds = array<i64: 1, 16, 128>}, {pipeline_mode = #tpu.pipeline_mode<synchronous>, transform_indices = @transform_1, window_bounds = array<i64: 1, 128>}, {pipeline_mode = #tpu.pipeline_mode<synchronous>, transform_indices = @transform_2, window_bounds = array<i64: 1, 128>}, {transform_indices = @transform_3, window_bounds = array<i64: 1, 2, 2, 128>}]} {
    %c0 = arith.constant 0 : index
    %c0_0 = arith.constant 0 : index
    %c0_1 = arith.constant 0 : index
    %0 = vector.load %arg1[%c0, %c0_0, %c0_1] : memref<1x16x128xbf16, #tpu.memory_space<vmem>>, vector<1x16x128xbf16>
    %1 = vector.shape_cast %0 : vector<1x16x128xbf16> to vector<16x128xbf16>
    %2 = arith.extf %1 : vector<16x128xbf16> to vector<16x128xf32>
    %c0_2 = arith.constant 0 : index
    %c0_3 = arith.constant 0 : index
    %3 = vector.load %arg2[%c0_2, %c0_3] : memref<1x128xf32, #tpu.memory_space<vmem>>, vector<1x128xf32>
    %4 = vector.broadcast %3 : vector<1x128xf32> to vector<16x128xf32>
    %5 = arith.mulf %2, %4 : vector<16x128xf32>
    %c0_4 = arith.constant 0 : index
    %c0_5 = arith.constant 0 : index
    %6 = vector.load %arg3[%c0_4, %c0_5] : memref<1x128xf32, #tpu.memory_space<vmem>>, vector<1x128xf32>
    %7 = vector.broadcast %6 : vector<1x128xf32> to vector<16x128xf32>
    %8 = arith.addf %5, %7 : vector<16x128xf32>
    %cst = arith.constant 0.000000e+00 : f32
    %9 = vector.broadcast %cst : f32 to vector<16x128xf32>
    %10 = arith.maximumf %8, %9 : vector<16x128xf32>
    %11 = vector.shape_cast %10 : vector<16x128xf32> to vector<8x2x128xf32>
    %cst_6 = arith.constant dense<0xFF800000> : vector<8x128xf32>
    %12 = vector.multi_reduction <maximumf>, %11, %cst_6 [1] : vector<8x2x128xf32> to vector<8x128xf32>
    %13 = vector.shape_cast %12 : vector<8x128xf32> to vector<2x2x2x128xf32>
    %cst_7 = arith.constant dense<0xFF800000> : vector<2x2x128xf32>
    %14 = vector.multi_reduction <maximumf>, %13, %cst_7 [1] : vector<2x2x2x128xf32> to vector<2x2x128xf32>
    %15 = arith.truncf %14 : vector<2x2x128xf32> to vector<2x2x128xbf16>
    %c0_8 = arith.constant 0 : index
    %c0_9 = arith.constant 0 : index
    %c0_10 = arith.constant 0 : index
    %c0_11 = arith.constant 0 : index
    %16 = vector.load %arg4[%c0_8, %c0_9, %c0_10, %c0_11] : memref<1x2x2x128xbf16, #tpu.memory_space<vmem>>, vector<1x2x2x128xbf16>
    %17 = vector.shape_cast %16 : vector<1x2x2x128xbf16> to vector<2x2x128xbf16>
    %18 = vector.shape_cast %15 : vector<2x2x128xbf16> to vector<1x2x2x128xbf16>
    tpu.vector_store %arg4[%c0_8, %c0_9, %c0_10, %c0_11], %18 {strides = array<i32>} : memref<1x2x2x128xbf16, #tpu.memory_space<vmem>>, vector<1x2x2x128xbf16>,
    return
  }
  func.func @transform_0(%arg0: i32) -> (i32, i32, i32) {
    %c0_i32 = arith.constant 0 : i32
    %c0_i32_0 = arith.constant 0 : i32
    %c0_i32_1 = arith.constant 0 : i32
    return %arg0, %c0_i32, %c0_i32_0 : i32, i32, i32
  }
  func.func @transform_1(%arg0: i32) -> (i32, i32) {
    %c0_i32 = arith.constant 0 : i32
    %c0_i32_0 = arith.constant 0 : i32
    %c0_i32_1 = arith.constant 0 : i32
    return %c0_i32, %c0_i32_0 : i32, i32
  }
  func.func @transform_2(%arg0: i32) -> (i32, i32) {
    %c0_i32 = arith.constant 0 : i32
    %c0_i32_0 = arith.constant 0 : i32
    %c0_i32_1 = arith.constant 0 : i32
    return %c0_i32, %c0_i32_0 : i32, i32
  }
  func.func @transform_3(%arg0: i32) -> (i32, i32, i32, i32) {
    %c0_i32 = arith.constant 0 : i32
    %c0_i32_0 = arith.constant 0 : i32
    %c0_i32_1 = arith.constant 0 : i32
    %c0_i32_2 = arith.constant 0 : i32
    return %arg0, %c0_i32, %c0_i32_0, %c0_i32_1 : i32, i32, i32, i32
  }
}

module attributes {stable_mosaic.version = 11 : i64} {
  func.func @conv_stats_kernel(%arg0: i32, %arg1: memref<1x4x4x128xbf16, #tpu.memory_space<vmem>>, %arg2: memref<9x128x128xbf16, #tpu.memory_space<vmem>>, %arg3: memref<1x4x128xbf16, #tpu.memory_space<vmem>>, %arg4: memref<1x2x128xf32, #tpu.memory_space<vmem>>) attributes {dimension_semantics = [#tpu.dimension_semantics<parallel>], iteration_bounds = array<i64: 2>, scalar_prefetch = 0 : i64, scratch_operands = 0 : i64, tpu.core_type = #tpu.core_type<tc>, window_params = [{transform_indices = @transform_0, window_bounds = array<i64: 1, 4, 4, 128>}, {pipeline_mode = #tpu.pipeline_mode<synchronous>, transform_indices = @transform_1, window_bounds = array<i64: 9, 128, 128>}, {transform_indices = @transform_2, window_bounds = array<i64: 1, 4, 128>}, {transform_indices = @transform_3, window_bounds = array<i64: 1, 2, 128>}]} {
    %c0 = arith.constant 0 : index
    %c0_0 = arith.constant 0 : index
    %c0_1 = arith.constant 0 : index
    %c0_2 = arith.constant 0 : index
    %0 = vector.load %arg1[%c0, %c0_0, %c0_1, %c0_2] : memref<1x4x4x128xbf16, #tpu.memory_space<vmem>>, vector<1x2x2x128xbf16>
    %1 = vector.shape_cast %0 : vector<1x2x2x128xbf16> to vector<2x2x128xbf16>
    %2 = vector.shape_cast %1 : vector<2x2x128xbf16> to vector<4x128xbf16>
    %c0_3 = arith.constant 0 : index
    %c0_4 = arith.constant 0 : index
    %c0_5 = arith.constant 0 : index
    %3 = vector.load %arg2[%c0_3, %c0_4, %c0_5] : memref<9x128x128xbf16, #tpu.memory_space<vmem>>, vector<1x128x128xbf16>
    %4 = vector.shape_cast %3 : vector<1x128x128xbf16> to vector<128x128xbf16>
    %cst = arith.constant dense<0.000000e+00> : vector<4x128xf32>
    %5 = tpu.matmul %2, %4, %cst {dimension_numbers = #tpu.dot_dimension_numbers<[1], [0], [0], [1], [0, 0, 1, 1], [], []>} : vector<4x128xbf16>, vector<128x128xbf16>, vector<4x128xf32> -> vector<4x128xf32>
    %c0_6 = arith.constant 0 : index
    %c0_7 = arith.constant 0 : index
    %c1 = arith.constant 1 : index
    %c0_8 = arith.constant 0 : index
    %6 = vector.load %arg1[%c0_6, %c0_7, %c1, %c0_8] : memref<1x4x4x128xbf16, #tpu.memory_space<vmem>>, vector<1x2x2x128xbf16>
    %7 = vector.shape_cast %6 : vector<1x2x2x128xbf16> to vector<2x2x128xbf16>
    %8 = vector.shape_cast %7 : vector<2x2x128xbf16> to vector<4x128xbf16>
    %c1_9 = arith.constant 1 : index
    %c0_10 = arith.constant 0 : index
    %c0_11 = arith.constant 0 : index
    %9 = vector.load %arg2[%c1_9, %c0_10, %c0_11] : memref<9x128x128xbf16, #tpu.memory_space<vmem>>, vector<1x128x128xbf16>
    %10 = vector.shape_cast %9 : vector<1x128x128xbf16> to vector<128x128xbf16>
    %cst_12 = arith.constant dense<0.000000e+00> : vector<4x128xf32>
    %11 = tpu.matmul %8, %10, %cst_12 {dimension_numbers = #tpu.dot_dimension_numbers<[1], [0], [0], [1], [0, 0, 1, 1], [], []>} : vector<4x128xbf16>, vector<128x128xbf16>, vector<4x128xf32> -> vector<4x128xf32>
    %12 = arith.addf %5, %11 : vector<4x128xf32>
    %c0_13 = arith.constant 0 : index
    %c0_14 = arith.constant 0 : index
    %c2 = arith.constant 2 : index
    %c0_15 = arith.constant 0 : index
    %13 = vector.load %arg1[%c0_13, %c0_14, %c2, %c0_15] : memref<1x4x4x128xbf16, #tpu.memory_space<vmem>>, vector<1x2x2x128xbf16>
    %14 = vector.shape_cast %13 : vector<1x2x2x128xbf16> to vector<2x2x128xbf16>
    %15 = vector.shape_cast %14 : vector<2x2x128xbf16> to vector<4x128xbf16>
    %c2_16 = arith.constant 2 : index
    %c0_17 = arith.constant 0 : index
    %c0_18 = arith.constant 0 : index
    %16 = vector.load %arg2[%c2_16, %c0_17, %c0_18] : memref<9x128x128xbf16, #tpu.memory_space<vmem>>, vector<1x128x128xbf16>
    %17 = vector.shape_cast %16 : vector<1x128x128xbf16> to vector<128x128xbf16>
    %cst_19 = arith.constant dense<0.000000e+00> : vector<4x128xf32>
    %18 = tpu.matmul %15, %17, %cst_19 {dimension_numbers = #tpu.dot_dimension_numbers<[1], [0], [0], [1], [0, 0, 1, 1], [], []>} : vector<4x128xbf16>, vector<128x128xbf16>, vector<4x128xf32> -> vector<4x128xf32>
    %19 = arith.addf %12, %18 : vector<4x128xf32>
    %c0_20 = arith.constant 0 : index
    %c1_21 = arith.constant 1 : index
    %c0_22 = arith.constant 0 : index
    %c0_23 = arith.constant 0 : index
    %20 = vector.load %arg1[%c0_20, %c1_21, %c0_22, %c0_23] : memref<1x4x4x128xbf16, #tpu.memory_space<vmem>>, vector<1x2x2x128xbf16>
    %21 = vector.shape_cast %20 : vector<1x2x2x128xbf16> to vector<2x2x128xbf16>
    %22 = vector.shape_cast %21 : vector<2x2x128xbf16> to vector<4x128xbf16>
    %c3 = arith.constant 3 : index
    %c0_24 = arith.constant 0 : index
    %c0_25 = arith.constant 0 : index
    %23 = vector.load %arg2[%c3, %c0_24, %c0_25] : memref<9x128x128xbf16, #tpu.memory_space<vmem>>, vector<1x128x128xbf16>
    %24 = vector.shape_cast %23 : vector<1x128x128xbf16> to vector<128x128xbf16>
    %cst_26 = arith.constant dense<0.000000e+00> : vector<4x128xf32>
    %25 = tpu.matmul %22, %24, %cst_26 {dimension_numbers = #tpu.dot_dimension_numbers<[1], [0], [0], [1], [0, 0, 1, 1], [], []>} : vector<4x128xbf16>, vector<128x128xbf16>, vector<4x128xf32> -> vector<4x128xf32>
    %26 = arith.addf %19, %25 : vector<4x128xf32>
    %c0_27 = arith.constant 0 : index
    %c1_28 = arith.constant 1 : index
    %c1_29 = arith.constant 1 : index
    %c0_30 = arith.constant 0 : index
    %27 = vector.load %arg1[%c0_27, %c1_28, %c1_29, %c0_30] : memref<1x4x4x128xbf16, #tpu.memory_space<vmem>>, vector<1x2x2x128xbf16>
    %28 = vector.shape_cast %27 : vector<1x2x2x128xbf16> to vector<2x2x128xbf16>
    %29 = vector.shape_cast %28 : vector<2x2x128xbf16> to vector<4x128xbf16>
    %c4 = arith.constant 4 : index
    %c0_31 = arith.constant 0 : index
    %c0_32 = arith.constant 0 : index
    %30 = vector.load %arg2[%c4, %c0_31, %c0_32] : memref<9x128x128xbf16, #tpu.memory_space<vmem>>, vector<1x128x128xbf16>
    %31 = vector.shape_cast %30 : vector<1x128x128xbf16> to vector<128x128xbf16>
    %cst_33 = arith.constant dense<0.000000e+00> : vector<4x128xf32>
    %32 = tpu.matmul %29, %31, %cst_33 {dimension_numbers = #tpu.dot_dimension_numbers<[1], [0], [0], [1], [0, 0, 1, 1], [], []>} : vector<4x128xbf16>, vector<128x128xbf16>, vector<4x128xf32> -> vector<4x128xf32>
    %33 = arith.addf %26, %32 : vector<4x128xf32>
    %c0_34 = arith.constant 0 : index
    %c1_35 = arith.constant 1 : index
    %c2_36 = arith.constant 2 : index
    %c0_37 = arith.constant 0 : index
    %34 = vector.load %arg1[%c0_34, %c1_35, %c2_36, %c0_37] : memref<1x4x4x128xbf16, #tpu.memory_space<vmem>>, vector<1x2x2x128xbf16>
    %35 = vector.shape_cast %34 : vector<1x2x2x128xbf16> to vector<2x2x128xbf16>
    %36 = vector.shape_cast %35 : vector<2x2x128xbf16> to vector<4x128xbf16>
    %c5 = arith.constant 5 : index
    %c0_38 = arith.constant 0 : index
    %c0_39 = arith.constant 0 : index
    %37 = vector.load %arg2[%c5, %c0_38, %c0_39] : memref<9x128x128xbf16, #tpu.memory_space<vmem>>, vector<1x128x128xbf16>
    %38 = vector.shape_cast %37 : vector<1x128x128xbf16> to vector<128x128xbf16>
    %cst_40 = arith.constant dense<0.000000e+00> : vector<4x128xf32>
    %39 = tpu.matmul %36, %38, %cst_40 {dimension_numbers = #tpu.dot_dimension_numbers<[1], [0], [0], [1], [0, 0, 1, 1], [], []>} : vector<4x128xbf16>, vector<128x128xbf16>, vector<4x128xf32> -> vector<4x128xf32>
    %40 = arith.addf %33, %39 : vector<4x128xf32>
    %c0_41 = arith.constant 0 : index
    %c2_42 = arith.constant 2 : index
    %c0_43 = arith.constant 0 : index
    %c0_44 = arith.constant 0 : index
    %41 = vector.load %arg1[%c0_41, %c2_42, %c0_43, %c0_44] : memref<1x4x4x128xbf16, #tpu.memory_space<vmem>>, vector<1x2x2x128xbf16>
    %42 = vector.shape_cast %41 : vector<1x2x2x128xbf16> to vector<2x2x128xbf16>
    %43 = vector.shape_cast %42 : vector<2x2x128xbf16> to vector<4x128xbf16>
    %c6 = arith.constant 6 : index
    %c0_45 = arith.constant 0 : index
    %c0_46 = arith.constant 0 : index
    %44 = vector.load %arg2[%c6, %c0_45, %c0_46] : memref<9x128x128xbf16, #tpu.memory_space<vmem>>, vector<1x128x128xbf16>
    %45 = vector.shape_cast %44 : vector<1x128x128xbf16> to vector<128x128xbf16>
    %cst_47 = arith.constant dense<0.000000e+00> : vector<4x128xf32>
    %46 = tpu.matmul %43, %45, %cst_47 {dimension_numbers = #tpu.dot_dimension_numbers<[1], [0], [0], [1], [0, 0, 1, 1], [], []>} : vector<4x128xbf16>, vector<128x128xbf16>, vector<4x128xf32> -> vector<4x128xf32>
    %47 = arith.addf %40, %46 : vector<4x128xf32>
    %c0_48 = arith.constant 0 : index
    %c2_49 = arith.constant 2 : index
    %c1_50 = arith.constant 1 : index
    %c0_51 = arith.constant 0 : index
    %48 = vector.load %arg1[%c0_48, %c2_49, %c1_50, %c0_51] : memref<1x4x4x128xbf16, #tpu.memory_space<vmem>>, vector<1x2x2x128xbf16>
    %49 = vector.shape_cast %48 : vector<1x2x2x128xbf16> to vector<2x2x128xbf16>
    %50 = vector.shape_cast %49 : vector<2x2x128xbf16> to vector<4x128xbf16>
    %c7 = arith.constant 7 : index
    %c0_52 = arith.constant 0 : index
    %c0_53 = arith.constant 0 : index
    %51 = vector.load %arg2[%c7, %c0_52, %c0_53] : memref<9x128x128xbf16, #tpu.memory_space<vmem>>, vector<1x128x128xbf16>
    %52 = vector.shape_cast %51 : vector<1x128x128xbf16> to vector<128x128xbf16>
    %cst_54 = arith.constant dense<0.000000e+00> : vector<4x128xf32>
    %53 = tpu.matmul %50, %52, %cst_54 {dimension_numbers = #tpu.dot_dimension_numbers<[1], [0], [0], [1], [0, 0, 1, 1], [], []>} : vector<4x128xbf16>, vector<128x128xbf16>, vector<4x128xf32> -> vector<4x128xf32>
    %54 = arith.addf %47, %53 : vector<4x128xf32>
    %c0_55 = arith.constant 0 : index
    %c2_56 = arith.constant 2 : index
    %c2_57 = arith.constant 2 : index
    %c0_58 = arith.constant 0 : index
    %55 = vector.load %arg1[%c0_55, %c2_56, %c2_57, %c0_58] : memref<1x4x4x128xbf16, #tpu.memory_space<vmem>>, vector<1x2x2x128xbf16>
    %56 = vector.shape_cast %55 : vector<1x2x2x128xbf16> to vector<2x2x128xbf16>
    %57 = vector.shape_cast %56 : vector<2x2x128xbf16> to vector<4x128xbf16>
    %c8 = arith.constant 8 : index
    %c0_59 = arith.constant 0 : index
    %c0_60 = arith.constant 0 : index
    %58 = vector.load %arg2[%c8, %c0_59, %c0_60] : memref<9x128x128xbf16, #tpu.memory_space<vmem>>, vector<1x128x128xbf16>
    %59 = vector.shape_cast %58 : vector<1x128x128xbf16> to vector<128x128xbf16>
    %cst_61 = arith.constant dense<0.000000e+00> : vector<4x128xf32>
    %60 = tpu.matmul %57, %59, %cst_61 {dimension_numbers = #tpu.dot_dimension_numbers<[1], [0], [0], [1], [0, 0, 1, 1], [], []>} : vector<4x128xbf16>, vector<128x128xbf16>, vector<4x128xf32> -> vector<4x128xf32>
    %61 = arith.addf %54, %60 : vector<4x128xf32>
    %62 = arith.truncf %61 : vector<4x128xf32> to vector<4x128xbf16>
    %c0_62 = arith.constant 0 : index
    %c0_63 = arith.constant 0 : index
    %c0_64 = arith.constant 0 : index
    %63 = vector.load %arg3[%c0_62, %c0_63, %c0_64] : memref<1x4x128xbf16, #tpu.memory_space<vmem>>, vector<1x4x128xbf16>
    %64 = vector.shape_cast %63 : vector<1x4x128xbf16> to vector<4x128xbf16>
    %65 = vector.shape_cast %62 : vector<4x128xbf16> to vector<1x4x128xbf16>
    tpu.vector_store %arg3[%c0_62, %c0_63, %c0_64], %65 {strides = array<i32>} : memref<1x4x128xbf16, #tpu.memory_space<vmem>>, vector<1x4x128xbf16>,
    %cst_65 = arith.constant dense<0.000000e+00> : vector<128xf32>
    %66 = vector.multi_reduction <add>, %61, %cst_65 [0] : vector<4x128xf32> to vector<128xf32>
    %67 = vector.shape_cast %66 : vector<128xf32> to vector<1x128xf32>
    %c0_66 = arith.constant 0 : index
    %c0_67 = arith.constant 0 : index
    %c0_68 = arith.constant 0 : index
    %68 = vector.load %arg4[%c0_66, %c0_67, %c0_68] : memref<1x2x128xf32, #tpu.memory_space<vmem>>, vector<1x1x128xf32>
    %69 = vector.shape_cast %68 : vector<1x1x128xf32> to vector<1x128xf32>
    %70 = vector.shape_cast %67 : vector<1x128xf32> to vector<1x1x128xf32>
    tpu.vector_store %arg4[%c0_66, %c0_67, %c0_68], %70 {strides = array<i32>} : memref<1x2x128xf32, #tpu.memory_space<vmem>>, vector<1x1x128xf32>,
    %71 = arith.mulf %61, %61 : vector<4x128xf32>
    %cst_69 = arith.constant dense<0.000000e+00> : vector<128xf32>
    %72 = vector.multi_reduction <add>, %71, %cst_69 [0] : vector<4x128xf32> to vector<128xf32>
    %73 = vector.shape_cast %72 : vector<128xf32> to vector<1x128xf32>
    %c0_70 = arith.constant 0 : index
    %c1_71 = arith.constant 1 : index
    %c0_72 = arith.constant 0 : index
    %74 = vector.load %arg4[%c0_70, %c1_71, %c0_72] : memref<1x2x128xf32, #tpu.memory_space<vmem>>, vector<1x1x128xf32>
    %75 = vector.shape_cast %74 : vector<1x1x128xf32> to vector<1x128xf32>
    %76 = vector.shape_cast %73 : vector<1x128xf32> to vector<1x1x128xf32>
    tpu.vector_store %arg4[%c0_70, %c1_71, %c0_72], %76 {strides = array<i32>} : memref<1x2x128xf32, #tpu.memory_space<vmem>>, vector<1x1x128xf32>,
    return
  }
  func.func @transform_0(%arg0: i32) -> (i32, i32, i32, i32) {
    %c0_i32 = arith.constant 0 : i32
    %c0_i32_0 = arith.constant 0 : i32
    %c0_i32_1 = arith.constant 0 : i32
    %c0_i32_2 = arith.constant 0 : i32
    return %arg0, %c0_i32, %c0_i32_0, %c0_i32_1 : i32, i32, i32, i32
  }
  func.func @transform_1(%arg0: i32) -> (i32, i32, i32) {
    %c0_i32 = arith.constant 0 : i32
    %c0_i32_0 = arith.constant 0 : i32
    %c0_i32_1 = arith.constant 0 : i32
    %c0_i32_2 = arith.constant 0 : i32
    return %c0_i32, %c0_i32_0, %c0_i32_1 : i32, i32, i32
  }
  func.func @transform_2(%arg0: i32) -> (i32, i32, i32) {
    %c0_i32 = arith.constant 0 : i32
    %c0_i32_0 = arith.constant 0 : i32
    %c0_i32_1 = arith.constant 0 : i32
    return %arg0, %c0_i32, %c0_i32_0 : i32, i32, i32
  }
  func.func @transform_3(%arg0: i32) -> (i32, i32, i32) {
    %c0_i32 = arith.constant 0 : i32
    %c0_i32_0 = arith.constant 0 : i32
    %c0_i32_1 = arith.constant 0 : i32
    return %arg0, %c0_i32, %c0_i32_0 : i32, i32, i32
  }
}

module attributes {stable_mosaic.version = 11 : i64} {
  func.func @classifier_kernel(%arg0: memref<2x64xf32, #tpu.memory_space<vmem>>, %arg1: memref<64x32xf32, #tpu.memory_space<vmem>>, %arg2: memref<1x32xf32, #tpu.memory_space<vmem>>, %arg3: memref<1x32xf32, #tpu.memory_space<vmem>>, %arg4: memref<32x10xf32, #tpu.memory_space<vmem>>, %arg5: memref<1x10xf32, #tpu.memory_space<vmem>>, %arg6: memref<2x10xf32, #tpu.memory_space<vmem>>) attributes {dimension_semantics = [], scalar_prefetch = 0 : i64, scratch_operands = 0 : i64, tpu.core_type = #tpu.core_type<tc>} {
    %c0 = arith.constant 0 : index
    %c0_0 = arith.constant 0 : index
    %0 = vector.load %arg0[%c0, %c0_0] : memref<2x64xf32, #tpu.memory_space<vmem>>, vector<2x64xf32>
    %c0_1 = arith.constant 0 : index
    %c0_2 = arith.constant 0 : index
    %1 = vector.load %arg1[%c0_1, %c0_2] : memref<64x32xf32, #tpu.memory_space<vmem>>, vector<64x32xf32>
    %cst = arith.constant dense<0.000000e+00> : vector<2x32xf32>
    %2 = tpu.matmul %0, %1, %cst {dimension_numbers = #tpu.dot_dimension_numbers<[1], [0], [0], [1], [0, 0, 1, 1], [], []>} : vector<2x64xf32>, vector<64x32xf32>, vector<2x32xf32> -> vector<2x32xf32>
    %cst_3 = arith.constant dense<0.000000e+00> : vector<32xf32>
    %3 = vector.multi_reduction <add>, %2, %cst_3 [0] : vector<2x32xf32> to vector<32xf32>
    %4 = vector.shape_cast %3 : vector<32xf32> to vector<1x32xf32>
    %cst_4 = arith.constant 2.000000e+00 : f32
    %5 = vector.broadcast %cst_4 : f32 to vector<1x32xf32>
    %6 = arith.divf %4, %5 : vector<1x32xf32>
    %7 = arith.mulf %2, %2 : vector<2x32xf32>
    %cst_5 = arith.constant dense<0.000000e+00> : vector<32xf32>
    %8 = vector.multi_reduction <add>, %7, %cst_5 [0] : vector<2x32xf32> to vector<32xf32>
    %9 = vector.shape_cast %8 : vector<32xf32> to vector<1x32xf32>
    %cst_6 = arith.constant 2.000000e+00 : f32
    %10 = vector.broadcast %cst_6 : f32 to vector<1x32xf32>
    %11 = arith.divf %9, %10 : vector<1x32xf32>
    %12 = arith.mulf %6, %6 : vector<1x32xf32>
    %13 = arith.subf %11, %12 : vector<1x32xf32>
    %cst_7 = arith.constant 0.000000e+00 : f32
    %14 = vector.broadcast %cst_7 : f32 to vector<1x32xf32>
    %15 = arith.maximumf %13, %14 : vector<1x32xf32>
    %c0_8 = arith.constant 0 : index
    %c0_9 = arith.constant 0 : index
    %16 = vector.load %arg2[%c0_8, %c0_9] : memref<1x32xf32, #tpu.memory_space<vmem>>, vector<1x32xf32>
    %cst_10 = arith.constant 9.99999974E-6 : f32
    %17 = vector.broadcast %cst_10 : f32 to vector<1x32xf32>
    %18 = arith.addf %15, %17 : vector<1x32xf32>
    %19 = math.rsqrt %18 : vector<1x32xf32>
    %20 = arith.mulf %16, %19 : vector<1x32xf32>
    %c0_11 = arith.constant 0 : index
    %c0_12 = arith.constant 0 : index
    %21 = vector.load %arg3[%c0_11, %c0_12] : memref<1x32xf32, #tpu.memory_space<vmem>>, vector<1x32xf32>
    %22 = arith.mulf %6, %20 : vector<1x32xf32>
    %23 = arith.subf %21, %22 : vector<1x32xf32>
    %24 = vector.broadcast %20 : vector<1x32xf32> to vector<2x32xf32>
    %25 = arith.mulf %2, %24 : vector<2x32xf32>
    %26 = vector.broadcast %23 : vector<1x32xf32> to vector<2x32xf32>
    %27 = arith.addf %25, %26 : vector<2x32xf32>
    %cst_13 = arith.constant 0.000000e+00 : f32
    %28 = vector.broadcast %cst_13 : f32 to vector<2x32xf32>
    %29 = arith.maximumf %27, %28 : vector<2x32xf32>
    %c0_14 = arith.constant 0 : index
    %c0_15 = arith.constant 0 : index
    %30 = vector.load %arg4[%c0_14, %c0_15] : memref<32x10xf32, #tpu.memory_space<vmem>>, vector<32x10xf32>
    %cst_16 = arith.constant dense<0.000000e+00> : vector<2x10xf32>
    %31 = tpu.matmul %29, %30, %cst_16 {dimension_numbers = #tpu.dot_dimension_numbers<[1], [0], [0], [1], [0, 0, 1, 1], [], []>} : vector<2x32xf32>, vector<32x10xf32>, vector<2x10xf32> -> vector<2x10xf32>
    %c0_17 = arith.constant 0 : index
    %c0_18 = arith.constant 0 : index
    %32 = vector.load %arg5[%c0_17, %c0_18] : memref<1x10xf32, #tpu.memory_space<vmem>>, vector<1x10xf32>
    %33 = vector.broadcast %32 : vector<1x10xf32> to vector<2x10xf32>
    %34 = arith.addf %31, %33 : vector<2x10xf32>
    %c0_19 = arith.constant 0 : index
    %c0_20 = arith.constant 0 : index
    %35 = vector.load %arg6[%c0_19, %c0_20] : memref<2x10xf32, #tpu.memory_space<vmem>>, vector<2x10xf32>
    tpu.vector_store %arg6[%c0_19, %c0_20], %34 {strides = array<i32>} : memref<2x10xf32, #tpu.memory_space<vmem>>, vector<2x10xf32>,
    return
  }
}

module attributes {stable_mosaic.version = 11 : i64} {
  func.func @bn_relu_pool_kernel(%arg0: i32, %arg1: memref<1x4x128xbf16, #tpu.memory_space<vmem>>, %arg2: memref<1x128xf32, #tpu.memory_space<vmem>>, %arg3: memref<1x128xf32, #tpu.memory_space<vmem>>, %arg4: memref<1x1x1x128xbf16, #tpu.memory_space<vmem>>) attributes {dimension_semantics = [#tpu.dimension_semantics<parallel>], iteration_bounds = array<i64: 2>, scalar_prefetch = 0 : i64, scratch_operands = 0 : i64, tpu.core_type = #tpu.core_type<tc>, window_params = [{transform_indices = @transform_0, window_bounds = array<i64: 1, 4, 128>}, {pipeline_mode = #tpu.pipeline_mode<synchronous>, transform_indices = @transform_1, window_bounds = array<i64: 1, 128>}, {pipeline_mode = #tpu.pipeline_mode<synchronous>, transform_indices = @transform_2, window_bounds = array<i64: 1, 128>}, {transform_indices = @transform_3, window_bounds = array<i64: 1, 1, 1, 128>}]} {
    %c0 = arith.constant 0 : index
    %c0_0 = arith.constant 0 : index
    %c0_1 = arith.constant 0 : index
    %0 = vector.load %arg1[%c0, %c0_0, %c0_1] : memref<1x4x128xbf16, #tpu.memory_space<vmem>>, vector<1x4x128xbf16>
    %1 = vector.shape_cast %0 : vector<1x4x128xbf16> to vector<4x128xbf16>
    %2 = arith.extf %1 : vector<4x128xbf16> to vector<4x128xf32>
    %c0_2 = arith.constant 0 : index
    %c0_3 = arith.constant 0 : index
    %3 = vector.load %arg2[%c0_2, %c0_3] : memref<1x128xf32, #tpu.memory_space<vmem>>, vector<1x128xf32>
    %4 = vector.broadcast %3 : vector<1x128xf32> to vector<4x128xf32>
    %5 = arith.mulf %2, %4 : vector<4x128xf32>
    %c0_4 = arith.constant 0 : index
    %c0_5 = arith.constant 0 : index
    %6 = vector.load %arg3[%c0_4, %c0_5] : memref<1x128xf32, #tpu.memory_space<vmem>>, vector<1x128xf32>
    %7 = vector.broadcast %6 : vector<1x128xf32> to vector<4x128xf32>
    %8 = arith.addf %5, %7 : vector<4x128xf32>
    %cst = arith.constant 0.000000e+00 : f32
    %9 = vector.broadcast %cst : f32 to vector<4x128xf32>
    %10 = arith.maximumf %8, %9 : vector<4x128xf32>
    %11 = vector.shape_cast %10 : vector<4x128xf32> to vector<2x2x128xf32>
    %cst_6 = arith.constant dense<0.000000e+00> : vector<2x128xf32>
    %12 = vector.multi_reduction <add>, %11, %cst_6 [1] : vector<2x2x128xf32> to vector<2x128xf32>
    %13 = vector.shape_cast %12 : vector<2x128xf32> to vector<1x2x1x128xf32>
    %cst_7 = arith.constant dense<0.000000e+00> : vector<1x1x128xf32>
    %14 = vector.multi_reduction <add>, %13, %cst_7 [1] : vector<1x2x1x128xf32> to vector<1x1x128xf32>
    %cst_8 = arith.constant 2.500000e-01 : f32
    %15 = vector.broadcast %cst_8 : f32 to vector<1x1x128xf32>
    %16 = arith.mulf %14, %15 : vector<1x1x128xf32>
    %17 = arith.truncf %16 : vector<1x1x128xf32> to vector<1x1x128xbf16>
    %c0_9 = arith.constant 0 : index
    %c0_10 = arith.constant 0 : index
    %c0_11 = arith.constant 0 : index
    %c0_12 = arith.constant 0 : index
    %18 = vector.load %arg4[%c0_9, %c0_10, %c0_11, %c0_12] : memref<1x1x1x128xbf16, #tpu.memory_space<vmem>>, vector<1x1x1x128xbf16>
    %19 = vector.shape_cast %18 : vector<1x1x1x128xbf16> to vector<1x1x128xbf16>
    %20 = vector.shape_cast %17 : vector<1x1x128xbf16> to vector<1x1x1x128xbf16>
    tpu.vector_store %arg4[%c0_9, %c0_10, %c0_11, %c0_12], %20 {strides = array<i32>} : memref<1x1x1x128xbf16, #tpu.memory_space<vmem>>, vector<1x1x1x128xbf16>,
    return
  }
  func.func @transform_0(%arg0: i32) -> (i32, i32, i32) {
    %c0_i32 = arith.constant 0 : i32
    %c0_i32_0 = arith.constant 0 : i32
    %c0_i32_1 = arith.constant 0 : i32
    return %arg0, %c0_i32, %c0_i32_0 : i32, i32, i32
  }
  func.func @transform_1(%arg0: i32) -> (i32, i32) {
    %c0_i32 = arith.constant 0 : i32
    %c0_i32_0 = arith.constant 0 : i32
    %c0_i32_1 = arith.constant 0 : i32
    return %c0_i32, %c0_i32_0 : i32, i32
  }
  func.func @transform_2(%arg0: i32) -> (i32, i32) {
    %c0_i32 = arith.constant 0 : i32
    %c0_i32_0 = arith.constant 0 : i32
    %c0_i32_1 = arith.constant 0 : i32
    return %c0_i32, %c0_i32_0 : i32, i32
  }
  func.func @transform_3(%arg0: i32) -> (i32, i32, i32, i32) {
    %c0_i32 = arith.constant 0 : i32
    %c0_i32_0 = arith.constant 0 : i32
    %c0_i32_1 = arith.constant 0 : i32
    %c0_i32_2 = arith.constant 0 : i32
    return %arg0, %c0_i32, %c0_i32_0, %c0_i32_1 : i32, i32, i32, i32
  }
}

</mosaic_0001>

<llo_original>
// kernel: vgg_forward.12
$region0: #{vgg_forward.12}
  #allocation0 [shape = 'u32[]', space=smem, size = 0x4, offset = 0x4, fixed_abs, tag = 'smem constant byte address 0x4 - core index']
  #allocation1 [shape = 'u32[144,128]{1,0:T(1,128)}', space=vmem, size = 0x12000, scoped, tag = 'internal scratch']
  %s0 = inlined_call_operand.vmem [shape: bf16[2,64,128], index: 0, kind: input, shape index: {}]
  %s1 = inlined_call_operand.vmem [shape: f32[1,128], index: 1, kind: input, shape index: {}]
  %s2 = inlined_call_operand.vmem [shape: f32[1,128], index: 2, kind: input, shape index: {}]
  %s3 = inlined_call_operand.vmem [shape: bf16[2,64,128], index: 3, kind: output, shape index: {}]
  %s4 = sld [smem:[#allocation0]]
  $region45: #{vgg_forward.12} parent=0
    _
  %s6 = ssub.s32 1, %s4
  %s7 = scalar_select 0, %s6, %s4
  loop: start=0, step=1, limit=4
  $region2: #{vgg_forward.12} parent=0 // loop_pre_header
    _
  $region3: #{vgg_forward.12} parent=0 // loop_header
    %s9 = sphi 0, %s13
    %p10 = scmp.ge.s32.totalorder %s9, 4
    %s19 = sphi 0, %s21
    %s22 = sphi 0, %s19
    %s23 = sphi 0, %s22
    %s39 = sphi 0, %s23
    %s43 = sphi 0, %s43
    %s45 = sphi 0, %s43
    %s46 = sphi 0, %s45
    %s60 = sphi 0, %s46
    %s64 = sphi 0, %s64
    %s66 = sphi 0, %s64
    %s67 = sphi 0, %s66
    %s81 = sphi 0, %s67
    %s87 = sphi 0, %s89
    %s90 = sphi 0, %s87
    %s91 = sphi 0, %s90
    %s107 = sphi 0, %s91
  $region4: #{vgg_forward.12} parent=0 // loop_header_branch
    %12 = sbr.rel (%p10) target = $region8
  $region5: #{vgg_forward.12} parent=0 // loop_body
    %s14 = ssub.s32 %s9, 1
    %s15 = ssub.s32 %s9, 2
    %s16 = sadd.s32 %s9, 1
    %s17 = ssub.s32 %s9, %s16
    %p18 = scmp.eq.s32.totalorder %s17, 0
    %s20 = sadd.s32 %s19, 1
    %s21 = scalar_select %p18, %s19, %s20
    %p24 = pneg %p18
    %p25 = scmp.eq.s32.totalorder %s9, 1
    %p26 = por %p24, %p25
    %p27 = scmp.ne.s32.totalorder %s19, %s22
    %p28 = scmp.eq.s32.totalorder %s9, 0
    %p29 = por %p27, %p28
    %p30 = scmp.ne.s32.totalorder %s19, %s22
    %p31 = scmp.eq.s32.totalorder %s14, 1
    %p32 = por %p30, %p31
    %p33 = scmp.ne.s32.totalorder %s22, %s23
    %p34 = scmp.eq.s32.totalorder %s14, 0
    %p35 = por %p33, %p34
    %p36 = scmp.ne.s32.totalorder %s22, %s23
    %p37 = scmp.eq.s32.totalorder %s15, 1
    %p38 = por %p36, %p37
    %p40 = scmp.ne.s32.totalorder %s23, %s39
    %p41 = scmp.eq.s32.totalorder %s15, 0
    %p42 = por %p40, %p41
    %s44 = sadd.s32 %s43, 1
    %p47 = scmp.eq.s32.totalorder %s9, 1
    %p48 = scmp.ne.s32.totalorder %s43, %s45
    %p49 = scmp.eq.s32.totalorder %s9, 0
    %p50 = por %p48, %p49
    %p51 = scmp.ne.s32.totalorder %s43, %s45
    %p52 = scmp.eq.s32.totalorder %s14, 1
    %p53 = por %p51, %p52
    %p54 = scmp.ne.s32.totalorder %s45, %s46
    %p55 = scmp.eq.s32.totalorder %s14, 0
    %p56 = por %p54, %p55
    %p57 = scmp.ne.s32.totalorder %s45, %s46
    %p58 = scmp.eq.s32.totalorder %s15, 1
    %p59 = por %p57, %p58
    %p61 = scmp.ne.s32.totalorder %s46, %s60
    %p62 = scmp.eq.s32.totalorder %s15, 0
    %p63 = por %p61, %p62
    %s65 = sadd.s32 %s64, 1
    %p68 = scmp.eq.s32.totalorder %s9, 1
    %p69 = scmp.ne.s32.totalorder %s64, %s66
    %p70 = scmp.eq.s32.totalorder %s9, 0
    %p71 = por %p69, %p70
    %p72 = scmp.ne.s32.totalorder %s64, %s66
    %p73 = scmp.eq.s32.totalorder %s14, 1
    %p74 = por %p72, %p73
    %p75 = scmp.ne.s32.totalorder %s66, %s67
    %p76 = scmp.eq.s32.totalorder %s14, 0
    %p77 = por %p75, %p76
    %p78 = scmp.ne.s32.totalorder %s66, %s67
    %p79 = scmp.eq.s32.totalorder %s15, 1
    %p80 = por %p78, %p79
    %p82 = scmp.ne.s32.totalorder %s67, %s81
    %p83 = scmp.eq.s32.totalorder %s15, 0
    %p84 = por %p82, %p83
    %s85 = ssub.s32 %s9, %s16
    %p86 = scmp.eq.s32.totalorder %s85, 0
    %s88 = sadd.s32 %s87, 1
    %s89 = scalar_select %p86, %s87, %s88
    %p92 = pneg %p86
    %p93 = scmp.eq.s32.totalorder %s9, 1
    %p94 = por %p92, %p93
    %p95 = scmp.ne.s32.totalorder %s87, %s90
    %p96 = scmp.eq.s32.totalorder %s9, 0
    %p97 = por %p95, %p96
    %p98 = scmp.ne.s32.totalorder %s87, %s90
    %p99 = scmp.eq.s32.totalorder %s14, 1
    %p100 = por %p98, %p99
    %p101 = scmp.ne.s32.totalorder %s90, %s91
    %p102 = scmp.eq.s32.totalorder %s14, 0
    %p103 = por %p101, %p102
    %p104 = scmp.ne.s32.totalorder %s90, %s91
    %p105 = scmp.eq.s32.totalorder %s15, 1
    %p106 = por %p104, %p105
    %p108 = scmp.ne.s32.totalorder %s91, %s107
    %p109 = scmp.eq.s32.totalorder %s15, 0
    %p110 = por %p108, %p109
    %p111 = scmp.le.s32.totalorder 1, %s9
    %p112 = scmp.lt.s32.totalorder %s9, 3
    %p113 = pnand %p111, %p112
    %p114 = pneg %p113
    // Predicated region
    $region9: #{vgg_forward.12} parent=5 // pred_check
      _
    $region10: #{vgg_forward.12} parent=5 // pred_check_branch
      %116 = sbr.rel (%p113) target = $region12
    $region11: #{vgg_forward.12} parent=5 // pred_region
      %s117 = ssub.s32 %s9, 1
      // Predicated region
      $region13: #{vgg_forward.12} parent=11 // pred_check
        %p118 = pneg %p56
      $region14: #{vgg_forward.12} parent=11 // pred_check_branch
        %120 = sbr.rel (%p118) target = $region16
      $region15: #{vgg_forward.12} parent=11 // pred_region
        _
      $region16: #{vgg_forward.12} parent=11 // pred_fallthru
        _
      // Predicated region
      $region17: #{vgg_forward.12} parent=11 // pred_check
        %p121 = pneg %p77
      $region18: #{vgg_forward.12} parent=11 // pred_check_branch
        %123 = sbr.rel (%p121) target = $region20
      $region19: #{vgg_forward.12} parent=11 // pred_region
        _
      $region20: #{vgg_forward.12} parent=11 // pred_fallthru
        _
    $region12: #{vgg_forward.12} parent=5 // pred_fallthru
      _
    %p124 = scmp.lt.s32.totalorder %s9, 2
    // Predicated region
    $region21: #{vgg_forward.12} parent=5 // pred_check
      %p125 = pneg %p124
    $region22: #{vgg_forward.12} parent=5 // pred_check_branch
      %127 = sbr.rel (%p125) target = $region24
    $region23: #{vgg_forward.12} parent=5 // pred_region
      // Predicated region
      $region25: #{vgg_forward.12} parent=23 // pred_check
        %p128 = pneg %p29
      $region26: #{vgg_forward.12} parent=23 // pred_check_branch
        %130 = sbr.rel (%p128) target = $region28
      $region27: #{vgg_forward.12} parent=23 // pred_region
        %p131 = scmp.lt.s32.totalorder %s9, 1
        %s132 = scalar_select %p131, %s9, 1
        %s133 = smul.addr %s132, 8
        %s134 = smul.addr %s133, 4
        %s135 = scalar_lea.vmem %s0, %s134
      $region28: #{vgg_forward.12} parent=23 // pred_fallthru
        _
    $region24: #{vgg_forward.12} parent=5 // pred_fallthru
      _
    %p136 = scmp.le.s32.totalorder 1, %s9
    %p137 = scmp.lt.s32.totalorder %s9, 3
    %p138 = pnand %p136, %p137
    %p139 = pneg %p138
    // Predicated region
    $region29: #{vgg_forward.12} parent=5 // pred_check
      _
    $region30: #{vgg_forward.12} parent=5 // pred_check_branch
      %141 = sbr.rel (%p138) target = $region32
    $region31: #{vgg_forward.12} parent=5 // pred_region
      %s142 = ssub.s32 %s9, 1
      %p143 = scmp.lt.s32.totalorder %s14, 1
      %s144 = scalar_select %p143, %s14, 1
      %s145 = smul.addr %s144, 8
      %s146 = smul.addr %s145, 4
      %s147 = scalar_lea.vmem %s0, %s146
      %p148 = pneg %p35
      %p149 = pneg %p32
      %p150 = pneg %p56
      %p151 = pneg %p53
      %p152 = pneg %p77
      %p153 = pneg %p74
      %p154 = pneg %p103
      %p155 = pneg %p100
      %p156 = scmp.lt.s32.totalorder %s14, 1
      %s157 = scalar_select %p156, %s14, 1
      %s158 = smul.addr %s157, 8
      %s159 = smul.addr %s158, 4
      %s160 = scalar_lea.vmem %s3, %s159
      %p161 = scmp.lt.s32.totalorder %s14, 1
      %s162 = scalar_select %p161, %s14, 1
      %s163 = smul.addr %s162, 8
      %s164 = smul.addr %s163, 4
      %s165 = scalar_lea.vmem %s0, %s164
      %p166 = scmp.lt.s32.totalorder %s14, 1
      %s167 = scalar_select %p166, %s14, 1
      %s168 = smul.addr %s167, 8
      %s169 = smul.addr %s168, 4
      %s170 = scalar_lea.vmem %s3, %s169
      %v171 = vld [vmem:[%s165] sm:$0xf]
      %v172 = vld [vmem:[%s165 + $0x4] sm:$0xf]
      %v173 = vld [vmem:[%s165 + $0x8] sm:$0xf]
      %v174 = vld [vmem:[%s165 + $0xc] sm:$0xf]
      %v175 = vld [vmem:[%s165 + $0x10] sm:$0xf]
      %v176 = vld [vmem:[%s165 + $0x14] sm:$0xf]
      %v177 = vld [vmem:[%s165 + $0x18] sm:$0xf]
      %v178 = vld [vmem:[%s165 + $0x1c] sm:$0xf]
      %v179 = vunpack.c.l.bf16 %v171
      %v180 = vunpack.c.l.bf16 %v172
      %v181 = vunpack.c.l.bf16 %v173
      %v182 = vunpack.c.l.bf16 %v174
      %v183 = vunpack.c.l.bf16 %v175
      %v184 = vunpack.c.l.bf16 %v176
      %v185 = vunpack.c.l.bf16 %v177
      %v186 = vunpack.c.l.bf16 %v178
      %v187 = vld [vmem:[%s1] sm:$0x1]
      %v189 = vlaneseq
      %v190 = vshrl.u32 %v189, 7
      %v191 = vsub.s32 0, %v190
      %v192 = vrot.slane %v187, %v191
      %v194 = vmul.f32 %v179, %v192
      %v195 = vmul.f32 %v180, %v192
      %v196 = vmul.f32 %v181, %v192
      %v197 = vmul.f32 %v182, %v192
      %v198 = vmul.f32 %v183, %v192
      %v199 = vmul.f32 %v184, %v192
      %v200 = vmul.f32 %v185, %v192
      %v201 = vmul.f32 %v186, %v192
      %v202 = vld [vmem:[%s2] sm:$0x1]
      %v204 = vlaneseq
      %v205 = vshrl.u32 %v204, 7
      %v206 = vsub.s32 0, %v205
      %v207 = vrot.slane %v202, %v206
      %v209 = vadd.f32 %v194, %v207
      %v210 = vadd.f32 %v195, %v207
      %v211 = vadd.f32 %v196, %v207
      %v212 = vadd.f32 %v197, %v207
      %v213 = vadd.f32 %v198, %v207
      %v214 = vadd.f32 %v199, %v207
      %v215 = vadd.f32 %v200, %v207
      %v216 = vadd.f32 %v201, %v207
      %v217 = vmax.f32 %v209, 0.0
      %v218 = vmax.f32 %v210, 0.0
      %v219 = vmax.f32 %v211, 0.0
      %v220 = vmax.f32 %v212, 0.0
      %v221 = vmax.f32 %v213, 0.0
      %v222 = vmax.f32 %v214, 0.0
      %v223 = vmax.f32 %v215, 0.0
      %v224 = vmax.f32 %v216, 0.0
      %v225 = vpack.c.bf16 %v218, %v217
      %v226 = vpack.c.bf16 %v220, %v219
      %v227 = vpack.c.bf16 %v222, %v221
      %v228 = vpack.c.bf16 %v224, %v223
      %v233 = vunpack.c.l.b16 %v225
      %v234 = vunpack.c.h.b16 %v225
      %v235 = vunpack.c.l.b16 %v226
      %v236 = vunpack.c.h.b16 %v226
      %v237 = vunpack.c.l.b16 %v227
      %v238 = vunpack.c.h.b16 %v227
      %v239 = vunpack.c.l.b16 %v228
      %v240 = vunpack.c.h.b16 %v228
      %v241 = vpack.c.b16 %v233, %v233
      %v242 = vpack.c.b16 %v234, %v234
      %v243 = vpack.c.b16 %v235, %v235
      %v244 = vpack.c.b16 %v236, %v236
      %v245 = vpack.c.b16 %v237, %v237
      %v246 = vpack.c.b16 %v238, %v238
      %v247 = vpack.c.b16 %v239, %v239
      %v248 = vpack.c.b16 %v240, %v240
      %257 = vst [vmem:[%s170] sm:$0xf] %v241
      %258 = vst [vmem:[%s170 + $0x4] sm:$0xf] %v242
      %259 = vst [vmem:[%s170 + $0x8] sm:$0xf] %v243
      %260 = vst [vmem:[%s170 + $0xc] sm:$0xf] %v244
      %261 = vst [vmem:[%s170 + $0x10] sm:$0xf] %v245
      %262 = vst [vmem:[%s170 + $0x14] sm:$0xf] %v246
      %263 = vst [vmem:[%s170 + $0x18] sm:$0xf] %v247
      %264 = vst [vmem:[%s170 + $0x1c] sm:$0xf] %v248
      %p265 = scmp.lt.s32.totalorder %s14, 1
      %s266 = scalar_select %p265, %s14, 1
      %s267 = smul.addr %s266, 8
      %s268 = smul.addr %s267, 4
      %s269 = scalar_lea.vmem %s3, %s268
      // Predicated region
      $region33: #{vgg_forward.12} parent=31 // pred_check
        %p270 = pneg %p100
      $region34: #{vgg_forward.12} parent=31 // pred_check_branch
        %272 = sbr.rel (%p270) target = $region36
      $region35: #{vgg_forward.12} parent=31 // pred_region
        _
      $region36: #{vgg_forward.12} parent=31 // pred_fallthru
        _
    $region32: #{vgg_forward.12} parent=5 // pred_fallthru
      _
    %p273 = scmp.le.s32.totalorder 2, %s9
    // Predicated region
    $region37: #{vgg_forward.12} parent=5 // pred_check
      %p274 = pneg %p273
    $region38: #{vgg_forward.12} parent=5 // pred_check_branch
      %276 = sbr.rel (%p274) target = $region40
    $region39: #{vgg_forward.12} parent=5 // pred_region
      %s277 = ssub.s32 %s9, 2
      // Predicated region
      $region41: #{vgg_forward.12} parent=39 // pred_check
        %p278 = pneg %p106
      $region42: #{vgg_forward.12} parent=39 // pred_check_branch
        %280 = sbr.rel (%p278) target = $region44
      $region43: #{vgg_forward.12} parent=39 // pred_region
        %p281 = scmp.lt.s32.totalorder %s15, 1
        %s282 = scalar_select %p281, %s15, 1
        %s283 = smul.addr %s282, 8
        %s284 = smul.addr %s283, 4
        %s285 = scalar_lea.vmem %s3, %s284
      $region44: #{vgg_forward.12} parent=39 // pred_fallthru
        _
    $region40: #{vgg_forward.12} parent=5 // pred_fallthru
      _
  $region6: #{vgg_forward.12} parent=0 // loop_footer
    %s13 = sadd.s32 1, %s9
  $region7: #{vgg_forward.12} parent=0 // loop_footer_branch
    %8 = sbr.rel target = $region3
  $region8: #{vgg_forward.12} parent=0 // loop_exit
    _

// kernel: vgg_forward.14
$region0: #{vgg_forward.14}
  #allocation0 [shape = 'u32[]', space=smem, size = 0x4, offset = 0x4, fixed_abs, tag = 'smem constant byte address 0x4 - core index']
  #allocation1 [shape = 'u32[144,128]{1,0:T(1,128)}', space=vmem, size = 0x12000, scoped, tag = 'internal scratch']
  %s0 = inlined_call_operand.vmem [shape: bf16[2,64,128], index: 0, kind: input, shape index: {}]
  %s1 = inlined_call_operand.vmem [shape: f32[1,128], index: 1, kind: input, shape index: {}]
  %s2 = inlined_call_operand.vmem [shape: f32[1,128], index: 2, kind: input, shape index: {}]
  %s3 = inlined_call_operand.vmem [shape: bf16[2,4,4,128], index: 3, kind: output, shape index: {}]
  %s4 = sld [smem:[#allocation0]]
  $region45: #{vgg_forward.14} parent=0
    _
  %s6 = ssub.s32 1, %s4
  %s7 = scalar_select 0, %s6, %s4
  loop: start=0, step=1, limit=4
  $region2: #{vgg_forward.14} parent=0 // loop_pre_header
    _
  $region3: #{vgg_forward.14} parent=0 // loop_header
    %s9 = sphi 0, %s13
    %p10 = scmp.ge.s32.totalorder %s9, 4
    %s19 = sphi 0, %s21
    %s22 = sphi 0, %s19
    %s23 = sphi 0, %s22
    %s39 = sphi 0, %s23
    %s43 = sphi 0, %s43
    %s45 = sphi 0, %s43
    %s46 = sphi 0, %s45
    %s60 = sphi 0, %s46
    %s64 = sphi 0, %s64
    %s66 = sphi 0, %s64
    %s67 = sphi 0, %s66
    %s81 = sphi 0, %s67
    %s87 = sphi 0, %s89
    %s90 = sphi 0, %s87
    %s91 = sphi 0, %s90
    %s107 = sphi 0, %s91
  $region4: #{vgg_forward.14} parent=0 // loop_header_branch
    %12 = sbr.rel (%p10) target = $region8
  $region5: #{vgg_forward.14} parent=0 // loop_body
    %s14 = ssub.s32 %s9, 1
    %s15 = ssub.s32 %s9, 2
    %s16 = sadd.s32 %s9, 1
    %s17 = ssub.s32 %s9, %s16
    %p18 = scmp.eq.s32.totalorder %s17, 0
    %s20 = sadd.s32 %s19, 1
    %s21 = scalar_select %p18, %s19, %s20
    %p24 = pneg %p18
    %p25 = scmp.eq.s32.totalorder %s9, 1
    %p26 = por %p24, %p25
    %p27 = scmp.ne.s32.totalorder %s19, %s22
    %p28 = scmp.eq.s32.totalorder %s9, 0
    %p29 = por %p27, %p28
    %p30 = scmp.ne.s32.totalorder %s19, %s22
    %p31 = scmp.eq.s32.totalorder %s14, 1
    %p32 = por %p30, %p31
    %p33 = scmp.ne.s32.totalorder %s22, %s23
    %p34 = scmp.eq.s32.totalorder %s14, 0
    %p35 = por %p33, %p34
    %p36 = scmp.ne.s32.totalorder %s22, %s23
    %p37 = scmp.eq.s32.totalorder %s15, 1
    %p38 = por %p36, %p37
    %p40 = scmp.ne.s32.totalorder %s23, %s39
    %p41 = scmp.eq.s32.totalorder %s15, 0
    %p42 = por %p40, %p41
    %s44 = sadd.s32 %s43, 1
    %p47 = scmp.eq.s32.totalorder %s9, 1
    %p48 = scmp.ne.s32.totalorder %s43, %s45
    %p49 = scmp.eq.s32.totalorder %s9, 0
    %p50 = por %p48, %p49
    %p51 = scmp.ne.s32.totalorder %s43, %s45
    %p52 = scmp.eq.s32.totalorder %s14, 1
    %p53 = por %p51, %p52
    %p54 = scmp.ne.s32.totalorder %s45, %s46
    %p55 = scmp.eq.s32.totalorder %s14, 0
    %p56 = por %p54, %p55
    %p57 = scmp.ne.s32.totalorder %s45, %s46
    %p58 = scmp.eq.s32.totalorder %s15, 1
    %p59 = por %p57, %p58
    %p61 = scmp.ne.s32.totalorder %s46, %s60
    %p62 = scmp.eq.s32.totalorder %s15, 0
    %p63 = por %p61, %p62
    %s65 = sadd.s32 %s64, 1
    %p68 = scmp.eq.s32.totalorder %s9, 1
    %p69 = scmp.ne.s32.totalorder %s64, %s66
    %p70 = scmp.eq.s32.totalorder %s9, 0
    %p71 = por %p69, %p70
    %p72 = scmp.ne.s32.totalorder %s64, %s66
    %p73 = scmp.eq.s32.totalorder %s14, 1
    %p74 = por %p72, %p73
    %p75 = scmp.ne.s32.totalorder %s66, %s67
    %p76 = scmp.eq.s32.totalorder %s14, 0
    %p77 = por %p75, %p76
    %p78 = scmp.ne.s32.totalorder %s66, %s67
    %p79 = scmp.eq.s32.totalorder %s15, 1
    %p80 = por %p78, %p79
    %p82 = scmp.ne.s32.totalorder %s67, %s81
    %p83 = scmp.eq.s32.totalorder %s15, 0
    %p84 = por %p82, %p83
    %s85 = ssub.s32 %s9, %s16
    %p86 = scmp.eq.s32.totalorder %s85, 0
    %s88 = sadd.s32 %s87, 1
    %s89 = scalar_select %p86, %s87, %s88
    %p92 = pneg %p86
    %p93 = scmp.eq.s32.totalorder %s9, 1
    %p94 = por %p92, %p93
    %p95 = scmp.ne.s32.totalorder %s87, %s90
    %p96 = scmp.eq.s32.totalorder %s9, 0
    %p97 = por %p95, %p96
    %p98 = scmp.ne.s32.totalorder %s87, %s90
    %p99 = scmp.eq.s32.totalorder %s14, 1
    %p100 = por %p98, %p99
    %p101 = scmp.ne.s32.totalorder %s90, %s91
    %p102 = scmp.eq.s32.totalorder %s14, 0
    %p103 = por %p101, %p102
    %p104 = scmp.ne.s32.totalorder %s90, %s91
    %p105 = scmp.eq.s32.totalorder %s15, 1
    %p106 = por %p104, %p105
    %p108 = scmp.ne.s32.totalorder %s91, %s107
    %p109 = scmp.eq.s32.totalorder %s15, 0
    %p110 = por %p108, %p109
    %p111 = scmp.le.s32.totalorder 1, %s9
    %p112 = scmp.lt.s32.totalorder %s9, 3
    %p113 = pnand %p111, %p112
    %p114 = pneg %p113
    // Predicated region
    $region9: #{vgg_forward.14} parent=5 // pred_check
      _
    $region10: #{vgg_forward.14} parent=5 // pred_check_branch
      %116 = sbr.rel (%p113) target = $region12
    $region11: #{vgg_forward.14} parent=5 // pred_region
      %s117 = ssub.s32 %s9, 1
      // Predicated region
      $region13: #{vgg_forward.14} parent=11 // pred_check
        %p118 = pneg %p56
      $region14: #{vgg_forward.14} parent=11 // pred_check_branch
        %120 = sbr.rel (%p118) target = $region16
      $region15: #{vgg_forward.14} parent=11 // pred_region
        _
      $region16: #{vgg_forward.14} parent=11 // pred_fallthru
        _
      // Predicated region
      $region17: #{vgg_forward.14} parent=11 // pred_check
        %p121 = pneg %p77
      $region18: #{vgg_forward.14} parent=11 // pred_check_branch
        %123 = sbr.rel (%p121) target = $region20
      $region19: #{vgg_forward.14} parent=11 // pred_region
        _
      $region20: #{vgg_forward.14} parent=11 // pred_fallthru
        _
    $region12: #{vgg_forward.14} parent=5 // pred_fallthru
      _
    %p124 = scmp.lt.s32.totalorder %s9, 2
    // Predicated region
    $region21: #{vgg_forward.14} parent=5 // pred_check
      %p125 = pneg %p124
    $region22: #{vgg_forward.14} parent=5 // pred_check_branch
      %127 = sbr.rel (%p125) target = $region24
    $region23: #{vgg_forward.14} parent=5 // pred_region
      // Predicated region
      $region25: #{vgg_forward.14} parent=23 // pred_check
        %p128 = pneg %p29
      $region26: #{vgg_forward.14} parent=23 // pred_check_branch
        %130 = sbr.rel (%p128) target = $region28
      $region27: #{vgg_forward.14} parent=23 // pred_region
        %p131 = scmp.lt.s32.totalorder %s9, 1
        %s132 = scalar_select %p131, %s9, 1
        %s133 = smul.addr %s132, 8
        %s134 = smul.addr %s133, 4
        %s135 = scalar_lea.vmem %s0, %s134
      $region28: #{vgg_forward.14} parent=23 // pred_fallthru
        _
    $region24: #{vgg_forward.14} parent=5 // pred_fallthru
      _
    %p136 = scmp.le.s32.totalorder 1, %s9
    %p137 = scmp.lt.s32.totalorder %s9, 3
    %p138 = pnand %p136, %p137
    %p139 = pneg %p138
    // Predicated region
    $region29: #{vgg_forward.14} parent=5 // pred_check
      _
    $region30: #{vgg_forward.14} parent=5 // pred_check_branch
      %141 = sbr.rel (%p138) target = $region32
    $region31: #{vgg_forward.14} parent=5 // pred_region
      %s142 = ssub.s32 %s9, 1
      %p143 = scmp.lt.s32.totalorder %s14, 1
      %s144 = scalar_select %p143, %s14, 1
      %s145 = smul.addr %s144, 8
      %s146 = smul.addr %s145, 4
      %s147 = scalar_lea.vmem %s0, %s146
      %p148 = pneg %p35
      %p149 = pneg %p32
      %p150 = pneg %p56
      %p151 = pneg %p53
      %p152 = pneg %p77
      %p153 = pneg %p74
      %p154 = pneg %p103
      %p155 = pneg %p100
      %p156 = scmp.lt.s32.totalorder %s14, 1
      %s157 = scalar_select %p156, %s14, 1
      %s158 = smul.addr %s157, 4
      %s159 = smul.addr %s158, 2
      %s160 = scalar_lea.vmem %s3, %s159
      %p161 = scmp.lt.s32.totalorder %s14, 1
      %s162 = scalar_select %p161, %s14, 1
      %s163 = smul.addr %s162, 8
      %s164 = smul.addr %s163, 4
      %s165 = scalar_lea.vmem %s0, %s164
      %p166 = scmp.lt.s32.totalorder %s14, 1
      %s167 = scalar_select %p166, %s14, 1
      %s168 = smul.addr %s167, 4
      %s169 = smul.addr %s168, 2
      %s170 = scalar_lea.vmem %s3, %s169
      %v171 = vld [vmem:[%s165] sm:$0xf]
      %v172 = vld [vmem:[%s165 + $0x4] sm:$0xf]
      %v173 = vld [vmem:[%s165 + $0x8] sm:$0xf]
      %v174 = vld [vmem:[%s165 + $0xc] sm:$0xf]
      %v175 = vld [vmem:[%s165 + $0x10] sm:$0xf]
      %v176 = vld [vmem:[%s165 + $0x14] sm:$0xf]
      %v177 = vld [vmem:[%s165 + $0x18] sm:$0xf]
      %v178 = vld [vmem:[%s165 + $0x1c] sm:$0xf]
      %v179 = vunpack.c.l.bf16 %v171
      %v180 = vunpack.c.l.bf16 %v172
      %v181 = vunpack.c.l.bf16 %v173
      %v182 = vunpack.c.l.bf16 %v174
      %v183 = vunpack.c.l.bf16 %v175
      %v184 = vunpack.c.l.bf16 %v176
      %v185 = vunpack.c.l.bf16 %v177
      %v186 = vunpack.c.l.bf16 %v178
      %v187 = vld [vmem:[%s1] sm:$0x1]
      %v189 = vlaneseq
      %v190 = vshrl.u32 %v189, 7
      %v191 = vsub.s32 0, %v190
      %v192 = vrot.slane %v187, %v191
      %v194 = vmul.f32 %v179, %v192
      %v195 = vmul.f32 %v180, %v192
      %v196 = vmul.f32 %v181, %v192
      %v197 = vmul.f32 %v182, %v192
      %v198 = vmul.f32 %v183, %v192
      %v199 = vmul.f32 %v184, %v192
      %v200 = vmul.f32 %v185, %v192
      %v201 = vmul.f32 %v186, %v192
      %v202 = vld [vmem:[%s2] sm:$0x1]
      %v204 = vlaneseq
      %v205 = vshrl.u32 %v204, 7
      %v206 = vsub.s32 0, %v205
      %v207 = vrot.slane %v202, %v206
      %v209 = vadd.f32 %v194, %v207
      %v210 = vadd.f32 %v195, %v207
      %v211 = vadd.f32 %v196, %v207
      %v212 = vadd.f32 %v197, %v207
      %v213 = vadd.f32 %v198, %v207
      %v214 = vadd.f32 %v199, %v207
      %v215 = vadd.f32 %v200, %v207
      %v216 = vadd.f32 %v201, %v207
      %v217 = vmax.f32 %v209, 0.0
      %v218 = vmax.f32 %v210, 0.0
      %v219 = vmax.f32 %v211, 0.0
      %v220 = vmax.f32 %v212, 0.0
      %v221 = vmax.f32 %v213, 0.0
      %v222 = vmax.f32 %v214, 0.0
      %v223 = vmax.f32 %v215, 0.0
      %v224 = vmax.f32 %v216, 0.0
      %v233 = vcombine.high %v217, %v217
      %v235 = vunpack.c.l.s4 1983009808
      %v236 = vunpack.c.0.s8 %v235
      %v237 = vlaneseq
      %v238 = vshrl.u32 %v237, 7
      %v239 = vsub.s32 %v236, %v238
      %v240 = vrot.slane %v217, %v239
      %v242 = vunpack.c.l.s4 1983009808
      %v243 = vunpack.c.0.s8 %v242
      %v244 = vlaneseq
      %v245 = vshrl.u32 %v244, 7
      %v246 = vsub.s32 %v243, %v245
      %v247 = vrot.slane %v233, %v246
      %v248 = vcombine.high %v240, %v240
      %v249 = vcombine.high %v247, %v247
      %v250 = vcombine.high %v218, %v218
      %v252 = vunpack.c.l.s4 1983009808
      %v253 = vunpack.c.0.s8 %v252
      %v254 = vlaneseq
      %v255 = vshrl.u32 %v254, 7
      %v256 = vsub.s32 %v253, %v255
      %v257 = vrot.slane %v218, %v256
      %v259 = vunpack.c.l.s4 1983009808
      %v260 = vunpack.c.0.s8 %v259
      %v261 = vlaneseq
      %v262 = vshrl.u32 %v261, 7
      %v263 = vsub.s32 %v260, %v262
      %v264 = vrot.slane %v250, %v263
      %v265 = vcombine.high %v257, %v257
      %v266 = vcombine.high %v264, %v264
      %v267 = vcombine.high %v219, %v219
      %v269 = vunpack.c.l.s4 1983009808
      %v270 = vunpack.c.0.s8 %v269
      %v271 = vlaneseq
      %v272 = vshrl.u32 %v271, 7
      %v273 = vsub.s32 %v270, %v272
      %v274 = vrot.slane %v219, %v273
      %v276 = vunpack.c.l.s4 1983009808
      %v277 = vunpack.c.0.s8 %v276
      %v278 = vlaneseq
      %v279 = vshrl.u32 %v278, 7
      %v280 = vsub.s32 %v277, %v279
      %v281 = vrot.slane %v267, %v280
      %v282 = vcombine.high %v274, %v274
      %v283 = vcombine.high %v281, %v281
      %v284 = vcombine.high %v220, %v220
      %v286 = vunpack.c.l.s4 1983009808
      %v287 = vunpack.c.0.s8 %v286
      %v288 = vlaneseq
      %v289 = vshrl.u32 %v288, 7
      %v290 = vsub.s32 %v287, %v289
      %v291 = vrot.slane %v220, %v290
      %v293 = vunpack.c.l.s4 1983009808
      %v294 = vunpack.c.0.s8 %v293
      %v295 = vlaneseq
      %v296 = vshrl.u32 %v295, 7
      %v297 = vsub.s32 %v294, %v296
      %v298 = vrot.slane %v284, %v297
      %v299 = vcombine.high %v291, %v291
      %v300 = vcombine.high %v298, %v298
      %v301 = vcombine.high %v221, %v221
      %v303 = vunpack.c.l.s4 1983009808
      %v304 = vunpack.c.0.s8 %v303
      %v305 = vlaneseq
      %v306 = vshrl.u32 %v305, 7
      %v307 = vsub.s32 %v304, %v306
      %v308 = vrot.slane %v221, %v307
      %v310 = vunpack.c.l.s4 1983009808
      %v311 = vunpack.c.0.s8 %v310
      %v312 = vlaneseq
      %v313 = vshrl.u32 %v312, 7
      %v314 = vsub.s32 %v311, %v313
      %v315 = vrot.slane %v301, %v314
      %v316 = vcombine.high %v308, %v308
      %v317 = vcombine.high %v315, %v315
      %v318 = vcombine.high %v222, %v222
      %v320 = vunpack.c.l.s4 1983009808
      %v321 = vunpack.c.0.s8 %v320
      %v322 = vlaneseq
      %v323 = vshrl.u32 %v322, 7
      %v324 = vsub.s32 %v321, %v323
      %v325 = vrot.slane %v222, %v324
      %v327 = vunpack.c.l.s4 1983009808
      %v328 = vunpack.c.0.s8 %v327
      %v329 = vlaneseq
      %v330 = vshrl.u32 %v329, 7
      %v331 = vsub.s32 %v328, %v330
      %v332 = vrot.slane %v318, %v331
      %v333 = vcombine.high %v325, %v325
      %v334 = vcombine.high %v332, %v332
      %v335 = vcombine.high %v223, %v223
      %v337 = vunpack.c.l.s4 1983009808
      %v338 = vunpack.c.0.s8 %v337
      %v339 = vlaneseq
      %v340 = vshrl.u32 %v339, 7
      %v341 = vsub.s32 %v338, %v340
      %v342 = vrot.slane %v223, %v341
      %v344 = vunpack.c.l.s4 1983009808
      %v345 = vunpack.c.0.s8 %v344
      %v346 = vlaneseq
      %v347 = vshrl.u32 %v346, 7
      %v348 = vsub.s32 %v345, %v347
      %v349 = vrot.slane %v335, %v348
      %v350 = vcombine.high %v342, %v342
      %v351 = vcombine.high %v349, %v349
      %v352 = vcombine.high %v224, %v224
      %v354 = vunpack.c.l.s4 1983009808
      %v355 = vunpack.c.0.s8 %v354
      %v356 = vlaneseq
      %v357 = vshrl.u32 %v356, 7
      %v358 = vsub.s32 %v355, %v357
      %v359 = vrot.slane %v224, %v358
      %v361 = vunpack.c.l.s4 1983009808
      %v362 = vunpack.c.0.s8 %v361
      %v363 = vlaneseq
      %v364 = vshrl.u32 %v363, 7
      %v365 = vsub.s32 %v362, %v364
      %v366 = vrot.slane %v352, %v365
      %v367 = vcombine.high %v359, %v359
      %v368 = vcombine.high %v366, %v366
      %vm401 = vcmask 1041408
      %v402 = vsel %vm401, %v240, -inf
      %v403 = vrot.slane %v402, 4
      %v404 = vmax.f32 %v402, %v403
      %v405 = vrot.slane %v404, 2
      %v406 = vmax.f32 %v404, %v405
      %v407 = vrot.slane %v406, 1
      %v408 = vmax.f32 %v406, %v407
      %v409 = vsel %vm401, %v248, -inf
      %v410 = vrot.slane %v409, 4
      %v411 = vmax.f32 %v409, %v410
      %v412 = vrot.slane %v411, 2
      %v413 = vmax.f32 %v411, %v412
      %v414 = vrot.slane %v413, 1
      %v415 = vmax.f32 %v413, %v414
      %v416 = vsel %vm401, %v247, -inf
      %v417 = vrot.slane %v416, 4
      %v418 = vmax.f32 %v416, %v417
      %v419 = vrot.slane %v418, 2
      %v420 = vmax.f32 %v418, %v419
      %v421 = vrot.slane %v420, 1
      %v422 = vmax.f32 %v420, %v421
      %v423 = vsel %vm401, %v249, -inf
      %v424 = vrot.slane %v423, 4
      %v425 = vmax.f32 %v423, %v424
      %v426 = vrot.slane %v425, 2
      %v427 = vmax.f32 %v425, %v426
      %v428 = vrot.slane %v427, 1
      %v429 = vmax.f32 %v427, %v428
      %v430 = vsel %vm401, %v257, -inf
      %v431 = vrot.slane %v430, 4
      %v432 = vmax.f32 %v430, %v431
      %v433 = vrot.slane %v432, 2
      %v434 = vmax.f32 %v432, %v433
      %v435 = vrot.slane %v434, 1
      %v436 = vmax.f32 %v434, %v435
      %v437 = vsel %vm401, %v265, -inf
      %v438 = vrot.slane %v437, 4
      %v439 = vmax.f32 %v437, %v438
      %v440 = vrot.slane %v439, 2
      %v441 = vmax.f32 %v439, %v440
      %v442 = vrot.slane %v441, 1
      %v443 = vmax.f32 %v441, %v442
      %v444 = vsel %vm401, %v264, -inf
      %v445 = vrot.slane %v444, 4
      %v446 = vmax.f32 %v444, %v445
      %v447 = vrot.slane %v446, 2
      %v448 = vmax.f32 %v446, %v447
      %v449 = vrot.slane %v448, 1
      %v450 = vmax.f32 %v448, %v449
      %v451 = vsel %vm401, %v266, -inf
      %v452 = vrot.slane %v451, 4
      %v453 = vmax.f32 %v451, %v452
      %v454 = vrot.slane %v453, 2
      %v455 = vmax.f32 %v453, %v454
      %v456 = vrot.slane %v455, 1
      %v457 = vmax.f32 %v455, %v456
      %v458 = vsel %vm401, %v274, -inf
      %v459 = vrot.slane %v458, 4
      %v460 = vmax.f32 %v458, %v459
      %v461 = vrot.slane %v460, 2
      %v462 = vmax.f32 %v460, %v461
      %v463 = vrot.slane %v462, 1
      %v464 = vmax.f32 %v462, %v463
      %v465 = vsel %vm401, %v282, -inf
      %v466 = vrot.slane %v465, 4
      %v467 = vmax.f32 %v465, %v466
      %v468 = vrot.slane %v467, 2
      %v469 = vmax.f32 %v467, %v468
      %v470 = vrot.slane %v469, 1
      %v471 = vmax.f32 %v469, %v470
      %v472 = vsel %vm401, %v281, -inf
      %v473 = vrot.slane %v472, 4
      %v474 = vmax.f32 %v472, %v473
      %v475 = vrot.slane %v474, 2
      %v476 = vmax.f32 %v474, %v475
      %v477 = vrot.slane %v476, 1
      %v478 = vmax.f32 %v476, %v477
      %v479 = vsel %vm401, %v283, -inf
      %v480 = vrot.slane %v479, 4
      %v481 = vmax.f32 %v479, %v480
      %v482 = vrot.slane %v481, 2
      %v483 = vmax.f32 %v481, %v482
      %v484 = vrot.slane %v483, 1
      %v485 = vmax.f32 %v483, %v484
      %v486 = vsel %vm401, %v291, -inf
      %v487 = vrot.slane %v486, 4
      %v488 = vmax.f32 %v486, %v487
      %v489 = vrot.slane %v488, 2
      %v490 = vmax.f32 %v488, %v489
      %v491 = vrot.slane %v490, 1
      %v492 = vmax.f32 %v490, %v491
      %v493 = vsel %vm401, %v299, -inf
      %v494 = vrot.slane %v493, 4
      %v495 = vmax.f32 %v493, %v494
      %v496 = vrot.slane %v495, 2
      %v497 = vmax.f32 %v495, %v496
      %v498 = vrot.slane %v497, 1
      %v499 = vmax.f32 %v497, %v498
      %v500 = vsel %vm401, %v298, -inf
      %v501 = vrot.slane %v500, 4
      %v502 = vmax.f32 %v500, %v501
      %v503 = vrot.slane %v502, 2
      %v504 = vmax.f32 %v502, %v503
      %v505 = vrot.slane %v504, 1
      %v506 = vmax.f32 %v504, %v505
      %v507 = vsel %vm401, %v300, -inf
      %v508 = vrot.slane %v507, 4
      %v509 = vmax.f32 %v507, %v508
      %v510 = vrot.slane %v509, 2
      %v511 = vmax.f32 %v509, %v510
      %v512 = vrot.slane %v511, 1
      %v513 = vmax.f32 %v511, %v512
      %v514 = vsel %vm401, %v308, -inf
      %v515 = vrot.slane %v514, 4
      %v516 = vmax.f32 %v514, %v515
      %v517 = vrot.slane %v516, 2
      %v518 = vmax.f32 %v516, %v517
      %v519 = vrot.slane %v518, 1
      %v520 = vmax.f32 %v518, %v519
      %v521 = vsel %vm401, %v316, -inf
      %v522 = vrot.slane %v521, 4
      %v523 = vmax.f32 %v521, %v522
      %v524 = vrot.slane %v523, 2
      %v525 = vmax.f32 %v523, %v524
      %v526 = vrot.slane %v525, 1
      %v527 = vmax.f32 %v525, %v526
      %v528 = vsel %vm401, %v315, -inf
      %v529 = vrot.slane %v528, 4
      %v530 = vmax.f32 %v528, %v529
      %v531 = vrot.slane %v530, 2
      %v532 = vmax.f32 %v530, %v531
      %v533 = vrot.slane %v532, 1
      %v534 = vmax.f32 %v532, %v533
      %v535 = vsel %vm401, %v317, -inf
      %v536 = vrot.slane %v535, 4
      %v537 = vmax.f32 %v535, %v536
      %v538 = vrot.slane %v537, 2
      %v539 = vmax.f32 %v537, %v538
      %v540 = vrot.slane %v539, 1
      %v541 = vmax.f32 %v539, %v540
      %v542 = vsel %vm401, %v325, -inf
      %v543 = vrot.slane %v542, 4
      %v544 = vmax.f32 %v542, %v543
      %v545 = vrot.slane %v544, 2
      %v546 = vmax.f32 %v544, %v545
      %v547 = vrot.slane %v546, 1
      %v548 = vmax.f32 %v546, %v547
      %v549 = vsel %vm401, %v333, -inf
      %v550 = vrot.slane %v549, 4
      %v551 = vmax.f32 %v549, %v550
      %v552 = vrot.slane %v551, 2
      %v553 = vmax.f32 %v551, %v552
      %v554 = vrot.slane %v553, 1
      %v555 = vmax.f32 %v553, %v554
      %v556 = vsel %vm401, %v332, -inf
      %v557 = vrot.slane %v556, 4
      %v558 = vmax.f32 %v556, %v557
      %v559 = vrot.slane %v558, 2
      %v560 = vmax.f32 %v558, %v559
      %v561 = vrot.slane %v560, 1
      %v562 = vmax.f32 %v560, %v561
      %v563 = vsel %vm401, %v334, -inf
      %v564 = vrot.slane %v563, 4
      %v565 = vmax.f32 %v563, %v564
      %v566 = vrot.slane %v565, 2
      %v567 = vmax.f32 %v565, %v566
      %v568 = vrot.slane %v567, 1
      %v569 = vmax.f32 %v567, %v568
      %v570 = vsel %vm401, %v342, -inf
      %v571 = vrot.slane %v570, 4
      %v572 = vmax.f32 %v570, %v571
      %v573 = vrot.slane %v572, 2
      %v574 = vmax.f32 %v572, %v573
      %v575 = vrot.slane %v574, 1
      %v576 = vmax.f32 %v574, %v575
      %v577 = vsel %vm401, %v350, -inf
      %v578 = vrot.slane %v577, 4
      %v579 = vmax.f32 %v577, %v578
      %v580 = vrot.slane %v579, 2
      %v581 = vmax.f32 %v579, %v580
      %v582 = vrot.slane %v581, 1
      %v583 = vmax.f32 %v581, %v582
      %v584 = vsel %vm401, %v349, -inf
      %v585 = vrot.slane %v584, 4
      %v586 = vmax.f32 %v584, %v585
      %v587 = vrot.slane %v586, 2
      %v588 = vmax.f32 %v586, %v587
      %v589 = vrot.slane %v588, 1
      %v590 = vmax.f32 %v588, %v589
      %v591 = vsel %vm401, %v351, -inf
      %v592 = vrot.slane %v591, 4
      %v593 = vmax.f32 %v591, %v592
      %v594 = vrot.slane %v593, 2
      %v595 = vmax.f32 %v593, %v594
      %v596 = vrot.slane %v595, 1
      %v597 = vmax.f32 %v595, %v596
      %v598 = vsel %vm401, %v359, -inf
      %v599 = vrot.slane %v598, 4
      %v600 = vmax.f32 %v598, %v599
      %v601 = vrot.slane %v600, 2
      %v602 = vmax.f32 %v600, %v601
      %v603 = vrot.slane %v602, 1
      %v604 = vmax.f32 %v602, %v603
      %v605 = vsel %vm401, %v367, -inf
      %v606 = vrot.slane %v605, 4
      %v607 = vmax.f32 %v605, %v606
      %v608 = vrot.slane %v607, 2
      %v609 = vmax.f32 %v607, %v608
      %v610 = vrot.slane %v609, 1
      %v611 = vmax.f32 %v609, %v610
      %v612 = vsel %vm401, %v366, -inf
      %v613 = vrot.slane %v612, 4
      %v614 = vmax.f32 %v612, %v613
      %v615 = vrot.slane %v614, 2
      %v616 = vmax.f32 %v614, %v615
      %v617 = vrot.slane %v616, 1
      %v618 = vmax.f32 %v616, %v617
      %v619 = vsel %vm401, %v368, -inf
      %v620 = vrot.slane %v619, 4
      %v621 = vmax.f32 %v619, %v620
      %v622 = vrot.slane %v621, 2
      %v623 = vmax.f32 %v621, %v622
      %v624 = vrot.slane %v623, 1
      %v625 = vmax.f32 %v623, %v624
      %v626 = vmax.f32 %v408, %v436
      %v627 = vmax.f32 %v415, %v443
      %v628 = vmax.f32 %v422, %v450
      %v629 = vmax.f32 %v429, %v457
      %v630 = vmax.f32 %v464, %v492
      %v631 = vmax.f32 %v471, %v499
      %v632 = vmax.f32 %v478, %v506
      %v633 = vmax.f32 %v485, %v513
      %v634 = vmax.f32 %v520, %v548
      %v635 = vmax.f32 %v527, %v555
      %v636 = vmax.f32 %v534, %v562
      %v637 = vmax.f32 %v541, %v569
      %v638 = vmax.f32 %v576, %v604
      %v639 = vmax.f32 %v583, %v611
      %v640 = vmax.f32 %v590, %v618
      %v641 = vmax.f32 %v597, %v625
      %v642 = vpack.c.bf16 %v626, %v626
      %v643 = vpack.c.bf16 %v627, %v627
      %v644 = vpack.c.bf16 %v628, %v628
      %v645 = vpack.c.bf16 %v629, %v629
      %v646 = vpack.c.bf16 %v630, %v630
      %v647 = vpack.c.bf16 %v631, %v631
      %v648 = vpack.c.bf16 %v632, %v632
      %v649 = vpack.c.bf16 %v633, %v633
      %v650 = vpack.c.bf16 %v634, %v634
      %v651 = vpack.c.bf16 %v635, %v635
      %v652 = vpack.c.bf16 %v636, %v636
      %v653 = vpack.c.bf16 %v637, %v637
      %v654 = vpack.c.bf16 %v638, %v638
      %v655 = vpack.c.bf16 %v639, %v639
      %v656 = vpack.c.bf16 %v640, %v640
      %v657 = vpack.c.bf16 %v641, %v641
      %v675 = vunpack.c.l.s4 1983009808
      %v676 = vunpack.c.0.s8 %v675
      %v677 = vlaneseq
      %v678 = vshrl.u32 %v677, 7
      %v679 = vsub.s32 %v676, %v678
      %v680 = vrot.slane %v642, %v679
      %v682 = vunpack.c.l.s4 1983009808
      %v683 = vunpack.c.0.s8 %v682
      %v684 = vlaneseq
      %v685 = vshrl.u32 %v684, 7
      %v686 = vsub.s32 %v683, %v685
      %v687 = vrot.slane %v643, %v686
      %v689 = vunpack.c.l.s4 1983009808
      %v690 = vunpack.c.0.s8 %v689
      %v691 = vlaneseq
      %v692 = vshrl.u32 %v691, 7
      %v693 = vsub.s32 %v690, %v692
      %v694 = vrot.slane %v644, %v693
      %v696 = vunpack.c.l.s4 1983009808
      %v697 = vunpack.c.0.s8 %v696
      %v698 = vlaneseq
      %v699 = vshrl.u32 %v698, 7
      %v700 = vsub.s32 %v697, %v699
      %v701 = vrot.slane %v645, %v700
      %v703 = vunpack.c.l.s4 1983009808
      %v704 = vunpack.c.0.s8 %v703
      %v705 = vlaneseq
      %v706 = vshrl.u32 %v705, 7
      %v707 = vsub.s32 %v704, %v706
      %v708 = vrot.slane %v646, %v707
      %v710 = vunpack.c.l.s4 1983009808
      %v711 = vunpack.c.0.s8 %v710
      %v712 = vlaneseq
      %v713 = vshrl.u32 %v712, 7
      %v714 = vsub.s32 %v711, %v713
      %v715 = vrot.slane %v647, %v714
      %v717 = vunpack.c.l.s4 1983009808
      %v718 = vunpack.c.0.s8 %v717
      %v719 = vlaneseq
      %v720 = vshrl.u32 %v719, 7
      %v721 = vsub.s32 %v718, %v720
      %v722 = vrot.slane %v648, %v721
      %v724 = vunpack.c.l.s4 1983009808
      %v725 = vunpack.c.0.s8 %v724
      %v726 = vlaneseq
      %v727 = vshrl.u32 %v726, 7
      %v728 = vsub.s32 %v725, %v727
      %v729 = vrot.slane %v649, %v728
      %v731 = vunpack.c.l.s4 1983009808
      %v732 = vunpack.c.0.s8 %v731
      %v733 = vlaneseq
      %v734 = vshrl.u32 %v733, 7
      %v735 = vsub.s32 %v732, %v734
      %v736 = vrot.slane %v650, %v735
      %v738 = vunpack.c.l.s4 1983009808
      %v739 = vunpack.c.0.s8 %v738
      %v740 = vlaneseq
      %v741 = vshrl.u32 %v740, 7
      %v742 = vsub.s32 %v739, %v741
      %v743 = vrot.slane %v651, %v742
      %v745 = vunpack.c.l.s4 1983009808
      %v746 = vunpack.c.0.s8 %v745
      %v747 = vlaneseq
      %v748 = vshrl.u32 %v747, 7
      %v749 = vsub.s32 %v746, %v748
      %v750 = vrot.slane %v652, %v749
      %v752 = vunpack.c.l.s4 1983009808
      %v753 = vunpack.c.0.s8 %v752
      %v754 = vlaneseq
      %v755 = vshrl.u32 %v754, 7
      %v756 = vsub.s32 %v753, %v755
      %v757 = vrot.slane %v653, %v756
      %v759 = vunpack.c.l.s4 1983009808
      %v760 = vunpack.c.0.s8 %v759
      %v761 = vlaneseq
      %v762 = vshrl.u32 %v761, 7
      %v763 = vsub.s32 %v760, %v762
      %v764 = vrot.slane %v654, %v763
      %v766 = vunpack.c.l.s4 1983009808
      %v767 = vunpack.c.0.s8 %v766
      %v768 = vlaneseq
      %v769 = vshrl.u32 %v768, 7
      %v770 = vsub.s32 %v767, %v769
      %v771 = vrot.slane %v655, %v770
      %v773 = vunpack.c.l.s4 1983009808
      %v774 = vunpack.c.0.s8 %v773
      %v775 = vlaneseq
      %v776 = vshrl.u32 %v775, 7
      %v777 = vsub.s32 %v774, %v776
      %v778 = vrot.slane %v656, %v777
      %v780 = vunpack.c.l.s4 1983009808
      %v781 = vunpack.c.0.s8 %v780
      %v782 = vlaneseq
      %v783 = vshrl.u32 %v782, 7
      %v784 = vsub.s32 %v781, %v783
      %v785 = vrot.slane %v657, %v784
      %v787 = vunpack.c.l.s4 1983009808
      %v788 = vunpack.c.0.s8 %v787
      %v789 = vlaneseq
      %v790 = vshrl.u32 %v789, 7
      %v791 = vsub.s32 %v788, %v790
      %v792 = vrot.slane %v680, %v791
      %v794 = vunpack.c.l.s4 1983009808
      %v795 = vunpack.c.0.s8 %v794
      %v796 = vlaneseq
      %v797 = vshrl.u32 %v796, 7
      %v798 = vsub.s32 %v795, %v797
      %v799 = vrot.slane %v687, %v798
      %v801 = vunpack.c.l.s4 1983009808
      %v802 = vunpack.c.0.s8 %v801
      %v803 = vlaneseq
      %v804 = vshrl.u32 %v803, 7
      %v805 = vsub.s32 %v802, %v804
      %v806 = vrot.slane %v694, %v805
      %v808 = vunpack.c.l.s4 1983009808
      %v809 = vunpack.c.0.s8 %v808
      %v810 = vlaneseq
      %v811 = vshrl.u32 %v810, 7
      %v812 = vsub.s32 %v809, %v811
      %v813 = vrot.slane %v701, %v812
      %v815 = vunpack.c.l.s4 1983009808
      %v816 = vunpack.c.0.s8 %v815
      %v817 = vlaneseq
      %v818 = vshrl.u32 %v817, 7
      %v819 = vsub.s32 %v816, %v818
      %v820 = vrot.slane %v708, %v819
      %v822 = vunpack.c.l.s4 1983009808
      %v823 = vunpack.c.0.s8 %v822
      %v824 = vlaneseq
      %v825 = vshrl.u32 %v824, 7
      %v826 = vsub.s32 %v823, %v825
      %v827 = vrot.slane %v715, %v826
      %v829 = vunpack.c.l.s4 1983009808
      %v830 = vunpack.c.0.s8 %v829
      %v831 = vlaneseq
      %v832 = vshrl.u32 %v831, 7
      %v833 = vsub.s32 %v830, %v832
      %v834 = vrot.slane %v722, %v833
      %v836 = vunpack.c.l.s4 1983009808
      %v837 = vunpack.c.0.s8 %v836
      %v838 = vlaneseq
      %v839 = vshrl.u32 %v838, 7
      %v840 = vsub.s32 %v837, %v839
      %v841 = vrot.slane %v729, %v840
      %v843 = vunpack.c.l.s4 1983009808
      %v844 = vunpack.c.0.s8 %v843
      %v845 = vlaneseq
      %v846 = vshrl.u32 %v845, 7
      %v847 = vsub.s32 %v844, %v846
      %v848 = vrot.slane %v736, %v847
      %v850 = vunpack.c.l.s4 1983009808
      %v851 = vunpack.c.0.s8 %v850
      %v852 = vlaneseq
      %v853 = vshrl.u32 %v852, 7
      %v854 = vsub.s32 %v851, %v853
      %v855 = vrot.slane %v743, %v854
      %v857 = vunpack.c.l.s4 1983009808
      %v858 = vunpack.c.0.s8 %v857
      %v859 = vlaneseq
      %v860 = vshrl.u32 %v859, 7
      %v861 = vsub.s32 %v858, %v860
      %v862 = vrot.slane %v750, %v861
      %v864 = vunpack.c.l.s4 1983009808
      %v865 = vunpack.c.0.s8 %v864
      %v866 = vlaneseq
      %v867 = vshrl.u32 %v866, 7
      %v868 = vsub.s32 %v865, %v867
      %v869 = vrot.slane %v757, %v868
      %v871 = vunpack.c.l.s4 1983009808
      %v872 = vunpack.c.0.s8 %v871
      %v873 = vlaneseq
      %v874 = vshrl.u32 %v873, 7
      %v875 = vsub.s32 %v872, %v874
      %v876 = vrot.slane %v764, %v875
      %v878 = vunpack.c.l.s4 1983009808
      %v879 = vunpack.c.0.s8 %v878
      %v880 = vlaneseq
      %v881 = vshrl.u32 %v880, 7
      %v882 = vsub.s32 %v879, %v881
      %v883 = vrot.slane %v771, %v882
      %v885 = vunpack.c.l.s4 1983009808
      %v886 = vunpack.c.0.s8 %v885
      %v887 = vlaneseq
      %v888 = vshrl.u32 %v887, 7
      %v889 = vsub.s32 %v886, %v888
      %v890 = vrot.slane %v778, %v889
      %v892 = vunpack.c.l.s4 1983009808
      %v893 = vunpack.c.0.s8 %v892
      %v894 = vlaneseq
      %v895 = vshrl.u32 %v894, 7
      %v896 = vsub.s32 %v893, %v895
      %v897 = vrot.slane %v785, %v896
      %v898 = vunpack.c.l.b16 %v792
      %v899 = vunpack.c.l.b16 %v799
      %v900 = vunpack.c.l.b16 %v806
      %v901 = vunpack.c.l.b16 %v813
      %v902 = vunpack.c.l.b16 %v820
      %v903 = vunpack.c.l.b16 %v827
      %v904 = vunpack.c.l.b16 %v834
      %v905 = vunpack.c.l.b16 %v841
      %v906 = vunpack.c.l.b16 %v848
      %v907 = vunpack.c.l.b16 %v855
      %v908 = vunpack.c.l.b16 %v862
      %v909 = vunpack.c.l.b16 %v869
      %v910 = vunpack.c.l.b16 %v876
      %v911 = vunpack.c.l.b16 %v883
      %v912 = vunpack.c.l.b16 %v890
      %v913 = vunpack.c.l.b16 %v897
      %v914 = vrot.slane %v899, 7
      %vm915 = vcmask 1041409
      %v916 = vsel %vm915, %v914, %v898
      %v917 = vrot.slane %v900, 6
      %vm918 = vcmask 1042434
      %v919 = vsel %vm918, %v917, %v916
      %v920 = vrot.slane %v901, 5
      %vm921 = vcmask 1043459
      %v922 = vsel %vm921, %v920, %v919
      %v923 = vrot.slane %v903, 7
      %v924 = vsel %vm915, %v923, %v902
      %v925 = vrot.slane %v904, 6
      %v926 = vsel %vm918, %v925, %v924
      %v927 = vrot.slane %v905, 5
      %v928 = vsel %vm921, %v927, %v926
      %v929 = vrot.slane %v907, 7
      %v930 = vsel %vm915, %v929, %v906
      %v931 = vrot.slane %v908, 6
      %v932 = vsel %vm918, %v931, %v930
      %v933 = vrot.slane %v909, 5
      %v934 = vsel %vm921, %v933, %v932
      %v935 = vrot.slane %v911, 7
      %v936 = vsel %vm915, %v935, %v910
      %v937 = vrot.slane %v912, 6
      %v938 = vsel %vm918, %v937, %v936
      %v939 = vrot.slane %v913, 5
      %v940 = vsel %vm921, %v939, %v938
      %v941 = vpack.c.b16 %v922, %v922
      %v942 = vpack.c.b16 %v928, %v928
      %v943 = vpack.c.b16 %v934, %v934
      %v944 = vpack.c.b16 %v940, %v940
      %v946 = vunpack.c.l.s4 1983009808
      %v947 = vunpack.c.0.s8 %v946
      %v948 = vlaneseq
      %v949 = vshrl.u32 %v948, 7
      %v950 = vsub.s32 %v947, %v949
      %v951 = vrot.slane %v941, %v950
      %v953 = vunpack.c.l.s4 1983009808
      %v954 = vunpack.c.0.s8 %v953
      %v955 = vlaneseq
      %v956 = vshrl.u32 %v955, 7
      %v957 = vsub.s32 %v954, %v956
      %v958 = vrot.slane %v942, %v957
      %v960 = vunpack.c.l.s4 1983009808
      %v961 = vunpack.c.0.s8 %v960
      %v962 = vlaneseq
      %v963 = vshrl.u32 %v962, 7
      %v964 = vsub.s32 %v961, %v963
      %v965 = vrot.slane %v943, %v964
      %v967 = vunpack.c.l.s4 1983009808
      %v968 = vunpack.c.0.s8 %v967
      %v969 = vlaneseq
      %v970 = vshrl.u32 %v969, 7
      %v971 = vsub.s32 %v968, %v970
      %v972 = vrot.slane %v944, %v971
      %977 = vst [vmem:[%s170] sm:$0x3] %v951
      %978 = vst [vmem:[%s170 + $0x2] sm:$0x3] %v958
      %979 = vst [vmem:[%s170 + $0x4] sm:$0x3] %v965
      %980 = vst [vmem:[%s170 + $0x6] sm:$0x3] %v972
      %p981 = scmp.lt.s32.totalorder %s14, 1
      %s982 = scalar_select %p981, %s14, 1
      %s983 = smul.addr %s982, 4
      %s984 = smul.addr %s983, 2
      %s985 = scalar_lea.vmem %s3, %s984
      // Predicated region
      $region33: #{vgg_forward.14} parent=31 // pred_check
        %p986 = pneg %p100
      $region34: #{vgg_forward.14} parent=31 // pred_check_branch
        %988 = sbr.rel (%p986) target = $region36
      $region35: #{vgg_forward.14} parent=31 // pred_region
        _
      $region36: #{vgg_forward.14} parent=31 // pred_fallthru
        _
    $region32: #{vgg_forward.14} parent=5 // pred_fallthru
      _
    %p989 = scmp.le.s32.totalorder 2, %s9
    // Predicated region
    $region37: #{vgg_forward.14} parent=5 // pred_check
      %p990 = pneg %p989
    $region38: #{vgg_forward.14} parent=5 // pred_check_branch
      %992 = sbr.rel (%p990) target = $region40
    $region39: #{vgg_forward.14} parent=5 // pred_region
      %s993 = ssub.s32 %s9, 2
      // Predicated region
      $region41: #{vgg_forward.14} parent=39 // pred_check
        %p994 = pneg %p106
      $region42: #{vgg_forward.14} parent=39 // pred_check_branch
        %996 = sbr.rel (%p994) target = $region44
      $region43: #{vgg_forward.14} parent=39 // pred_region
        %p997 = scmp.lt.s32.totalorder %s15, 1
        %s998 = scalar_select %p997, %s15, 1
        %s999 = smul.addr %s998, 4
        %s1000 = smul.addr %s999, 2
        %s1001 = scalar_lea.vmem %s3, %s1000
      $region44: #{vgg_forward.14} parent=39 // pred_fallthru
        _
    $region40: #{vgg_forward.14} parent=5 // pred_fallthru
      _
  $region6: #{vgg_forward.14} parent=0 // loop_footer
    %s13 = sadd.s32 1, %s9
  $region7: #{vgg_forward.14} parent=0 // loop_footer_branch
    %8 = sbr.rel target = $region3
  $region8: #{vgg_forward.14} parent=0 // loop_exit
    _

// kernel: vgg_forward.16
$region0: #{vgg_forward.16}
  #allocation0 [shape = 'u32[]', space=smem, size = 0x4, offset = 0x4, fixed_abs, tag = 'smem constant byte address 0x4 - core index']
  #allocation1 [shape = 'u32[144,128]{1,0:T(1,128)}', space=vmem, size = 0x12000, scoped, tag = 'internal scratch']
  %s0 = inlined_call_operand.vmem [shape: bf16[2,16,128], index: 0, kind: input, shape index: {}]
  %s1 = inlined_call_operand.vmem [shape: f32[1,128], index: 1, kind: input, shape index: {}]
  %s2 = inlined_call_operand.vmem [shape: f32[1,128], index: 2, kind: input, shape index: {}]
  %s3 = inlined_call_operand.vmem [shape: bf16[2,16,128], index: 3, kind: output, shape index: {}]
  %s4 = sld [smem:[#allocation0]]
  $region45: #{vgg_forward.16} parent=0
    _
  %s6 = ssub.s32 1, %s4
  %s7 = scalar_select 0, %s6, %s4
  loop: start=0, step=1, limit=4
  $region2: #{vgg_forward.16} parent=0 // loop_pre_header
    _
  $region3: #{vgg_forward.16} parent=0 // loop_header
    %s9 = sphi 0, %s13
    %p10 = scmp.ge.s32.totalorder %s9, 4
    %s19 = sphi 0, %s21
    %s22 = sphi 0, %s19
    %s23 = sphi 0, %s22
    %s39 = sphi 0, %s23
    %s43 = sphi 0, %s43
    %s45 = sphi 0, %s43
    %s46 = sphi 0, %s45
    %s60 = sphi 0, %s46
    %s64 = sphi 0, %s64
    %s66 = sphi 0, %s64
    %s67 = sphi 0, %s66
    %s81 = sphi 0, %s67
    %s87 = sphi 0, %s89
    %s90 = sphi 0, %s87
    %s91 = sphi 0, %s90
    %s107 = sphi 0, %s91
  $region4: #{vgg_forward.16} parent=0 // loop_header_branch
    %12 = sbr.rel (%p10) target = $region8
  $region5: #{vgg_forward.16} parent=0 // loop_body
    %s14 = ssub.s32 %s9, 1
    %s15 = ssub.s32 %s9, 2
    %s16 = sadd.s32 %s9, 1
    %s17 = ssub.s32 %s9, %s16
    %p18 = scmp.eq.s32.totalorder %s17, 0
    %s20 = sadd.s32 %s19, 1
    %s21 = scalar_select %p18, %s19, %s20
    %p24 = pneg %p18
    %p25 = scmp.eq.s32.totalorder %s9, 1
    %p26 = por %p24, %p25
    %p27 = scmp.ne.s32.totalorder %s19, %s22
    %p28 = scmp.eq.s32.totalorder %s9, 0
    %p29 = por %p27, %p28
    %p30 = scmp.ne.s32.totalorder %s19, %s22
    %p31 = scmp.eq.s32.totalorder %s14, 1
    %p32 = por %p30, %p31
    %p33 = scmp.ne.s32.totalorder %s22, %s23
    %p34 = scmp.eq.s32.totalorder %s14, 0
    %p35 = por %p33, %p34
    %p36 = scmp.ne.s32.totalorder %s22, %s23
    %p37 = scmp.eq.s32.totalorder %s15, 1
    %p38 = por %p36, %p37
    %p40 = scmp.ne.s32.totalorder %s23, %s39
    %p41 = scmp.eq.s32.totalorder %s15, 0
    %p42 = por %p40, %p41
    %s44 = sadd.s32 %s43, 1
    %p47 = scmp.eq.s32.totalorder %s9, 1
    %p48 = scmp.ne.s32.totalorder %s43, %s45
    %p49 = scmp.eq.s32.totalorder %s9, 0
    %p50 = por %p48, %p49
    %p51 = scmp.ne.s32.totalorder %s43, %s45
    %p52 = scmp.eq.s32.totalorder %s14, 1
    %p53 = por %p51, %p52
    %p54 = scmp.ne.s32.totalorder %s45, %s46
    %p55 = scmp.eq.s32.totalorder %s14, 0
    %p56 = por %p54, %p55
    %p57 = scmp.ne.s32.totalorder %s45, %s46
    %p58 = scmp.eq.s32.totalorder %s15, 1
    %p59 = por %p57, %p58
    %p61 = scmp.ne.s32.totalorder %s46, %s60
    %p62 = scmp.eq.s32.totalorder %s15, 0
    %p63 = por %p61, %p62
    %s65 = sadd.s32 %s64, 1
    %p68 = scmp.eq.s32.totalorder %s9, 1
    %p69 = scmp.ne.s32.totalorder %s64, %s66
    %p70 = scmp.eq.s32.totalorder %s9, 0
    %p71 = por %p69, %p70
    %p72 = scmp.ne.s32.totalorder %s64, %s66
    %p73 = scmp.eq.s32.totalorder %s14, 1
    %p74 = por %p72, %p73
    %p75 = scmp.ne.s32.totalorder %s66, %s67
    %p76 = scmp.eq.s32.totalorder %s14, 0
    %p77 = por %p75, %p76
    %p78 = scmp.ne.s32.totalorder %s66, %s67
    %p79 = scmp.eq.s32.totalorder %s15, 1
    %p80 = por %p78, %p79
    %p82 = scmp.ne.s32.totalorder %s67, %s81
    %p83 = scmp.eq.s32.totalorder %s15, 0
    %p84 = por %p82, %p83
    %s85 = ssub.s32 %s9, %s16
    %p86 = scmp.eq.s32.totalorder %s85, 0
    %s88 = sadd.s32 %s87, 1
    %s89 = scalar_select %p86, %s87, %s88
    %p92 = pneg %p86
    %p93 = scmp.eq.s32.totalorder %s9, 1
    %p94 = por %p92, %p93
    %p95 = scmp.ne.s32.totalorder %s87, %s90
    %p96 = scmp.eq.s32.totalorder %s9, 0
    %p97 = por %p95, %p96
    %p98 = scmp.ne.s32.totalorder %s87, %s90
    %p99 = scmp.eq.s32.totalorder %s14, 1
    %p100 = por %p98, %p99
    %p101 = scmp.ne.s32.totalorder %s90, %s91
    %p102 = scmp.eq.s32.totalorder %s14, 0
    %p103 = por %p101, %p102
    %p104 = scmp.ne.s32.totalorder %s90, %s91
    %p105 = scmp.eq.s32.totalorder %s15, 1
    %p106 = por %p104, %p105
    %p108 = scmp.ne.s32.totalorder %s91, %s107
    %p109 = scmp.eq.s32.totalorder %s15, 0
    %p110 = por %p108, %p109
    %p111 = scmp.le.s32.totalorder 1, %s9
    %p112 = scmp.lt.s32.totalorder %s9, 3
    %p113 = pnand %p111, %p112
    %p114 = pneg %p113
    // Predicated region
    $region9: #{vgg_forward.16} parent=5 // pred_check
      _
    $region10: #{vgg_forward.16} parent=5 // pred_check_branch
      %116 = sbr.rel (%p113) target = $region12
    $region11: #{vgg_forward.16} parent=5 // pred_region
      %s117 = ssub.s32 %s9, 1
      // Predicated region
      $region13: #{vgg_forward.16} parent=11 // pred_check
        %p118 = pneg %p56
      $region14: #{vgg_forward.16} parent=11 // pred_check_branch
        %120 = sbr.rel (%p118) target = $region16
      $region15: #{vgg_forward.16} parent=11 // pred_region
        _
      $region16: #{vgg_forward.16} parent=11 // pred_fallthru
        _
      // Predicated region
      $region17: #{vgg_forward.16} parent=11 // pred_check
        %p121 = pneg %p77
      $region18: #{vgg_forward.16} parent=11 // pred_check_branch
        %123 = sbr.rel (%p121) target = $region20
      $region19: #{vgg_forward.16} parent=11 // pred_region
        _
      $region20: #{vgg_forward.16} parent=11 // pred_fallthru
        _
    $region12: #{vgg_forward.16} parent=5 // pred_fallthru
      _
    %p124 = scmp.lt.s32.totalorder %s9, 2
    // Predicated region
    $region21: #{vgg_forward.16} parent=5 // pred_check
      %p125 = pneg %p124
    $region22: #{vgg_forward.16} parent=5 // pred_check_branch
      %127 = sbr.rel (%p125) target = $region24
    $region23: #{vgg_forward.16} parent=5 // pred_region
      // Predicated region
      $region25: #{vgg_forward.16} parent=23 // pred_check
        %p128 = pneg %p29
      $region26: #{vgg_forward.16} parent=23 // pred_check_branch
        %130 = sbr.rel (%p128) target = $region28
      $region27: #{vgg_forward.16} parent=23 // pred_region
        %p131 = scmp.lt.s32.totalorder %s9, 1
        %s132 = scalar_select %p131, %s9, 1
        %s133 = smul.addr %s132, 2
        %s134 = smul.addr %s133, 4
        %s135 = scalar_lea.vmem %s0, %s134
      $region28: #{vgg_forward.16} parent=23 // pred_fallthru
        _
    $region24: #{vgg_forward.16} parent=5 // pred_fallthru
      _
    %p136 = scmp.le.s32.totalorder 1, %s9
    %p137 = scmp.lt.s32.totalorder %s9, 3
    %p138 = pnand %p136, %p137
    %p139 = pneg %p138
    // Predicated region
    $region29: #{vgg_forward.16} parent=5 // pred_check
      _
    $region30: #{vgg_forward.16} parent=5 // pred_check_branch
      %141 = sbr.rel (%p138) target = $region32
    $region31: #{vgg_forward.16} parent=5 // pred_region
      %s142 = ssub.s32 %s9, 1
      %p143 = scmp.lt.s32.totalorder %s14, 1
      %s144 = scalar_select %p143, %s14, 1
      %s145 = smul.addr %s144, 2
      %s146 = smul.addr %s145, 4
      %s147 = scalar_lea.vmem %s0, %s146
      %p148 = pneg %p35
      %p149 = pneg %p32
      %p150 = pneg %p56
      %p151 = pneg %p53
      %p152 = pneg %p77
      %p153 = pneg %p74
      %p154 = pneg %p103
      %p155 = pneg %p100
      %p156 = scmp.lt.s32.totalorder %s14, 1
      %s157 = scalar_select %p156, %s14, 1
      %s158 = smul.addr %s157, 2
      %s159 = smul.addr %s158, 4
      %s160 = scalar_lea.vmem %s3, %s159
      %p161 = scmp.lt.s32.totalorder %s14, 1
      %s162 = scalar_select %p161, %s14, 1
      %s163 = smul.addr %s162, 2
      %s164 = smul.addr %s163, 4
      %s165 = scalar_lea.vmem %s0, %s164
      %p166 = scmp.lt.s32.totalorder %s14, 1
      %s167 = scalar_select %p166, %s14, 1
      %s168 = smul.addr %s167, 2
      %s169 = smul.addr %s168, 4
      %s170 = scalar_lea.vmem %s3, %s169
      %v171 = vld [vmem:[%s165] sm:$0xf]
      %v172 = vld [vmem:[%s165 + $0x4] sm:$0xf]
      %v173 = vunpack.c.l.bf16 %v171
      %v174 = vunpack.c.l.bf16 %v172
      %v175 = vld [vmem:[%s1] sm:$0x1]
      %v177 = vlaneseq
      %v178 = vshrl.u32 %v177, 7
      %v179 = vsub.s32 0, %v178
      %v180 = vrot.slane %v175, %v179
      %v182 = vmul.f32 %v173, %v180
      %v183 = vmul.f32 %v174, %v180
      %v184 = vld [vmem:[%s2] sm:$0x1]
      %v186 = vlaneseq
      %v187 = vshrl.u32 %v186, 7
      %v188 = vsub.s32 0, %v187
      %v189 = vrot.slane %v184, %v188
      %v191 = vadd.f32 %v182, %v189
      %v192 = vadd.f32 %v183, %v189
      %v193 = vmax.f32 %v191, 0.0
      %v194 = vmax.f32 %v192, 0.0
      %v195 = vpack.c.bf16 %v194, %v193
      %v197 = vunpack.c.l.b16 %v195
      %v198 = vunpack.c.h.b16 %v195
      %v199 = vpack.c.b16 %v197, %v197
      %v200 = vpack.c.b16 %v198, %v198
      %203 = vst [vmem:[%s170] sm:$0xf] %v199
      %204 = vst [vmem:[%s170 + $0x4] sm:$0xf] %v200
      %p205 = scmp.lt.s32.totalorder %s14, 1
      %s206 = scalar_select %p205, %s14, 1
      %s207 = smul.addr %s206, 2
      %s208 = smul.addr %s207, 4
      %s209 = scalar_lea.vmem %s3, %s208
      // Predicated region
      $region33: #{vgg_forward.16} parent=31 // pred_check
        %p210 = pneg %p100
      $region34: #{vgg_forward.16} parent=31 // pred_check_branch
        %212 = sbr.rel (%p210) target = $region36
      $region35: #{vgg_forward.16} parent=31 // pred_region
        _
      $region36: #{vgg_forward.16} parent=31 // pred_fallthru
        _
    $region32: #{vgg_forward.16} parent=5 // pred_fallthru
      _
    %p213 = scmp.le.s32.totalorder 2, %s9
    // Predicated region
    $region37: #{vgg_forward.16} parent=5 // pred_check
      %p214 = pneg %p213
    $region38: #{vgg_forward.16} parent=5 // pred_check_branch
      %216 = sbr.rel (%p214) target = $region40
    $region39: #{vgg_forward.16} parent=5 // pred_region
      %s217 = ssub.s32 %s9, 2
      // Predicated region
      $region41: #{vgg_forward.16} parent=39 // pred_check
        %p218 = pneg %p106
      $region42: #{vgg_forward.16} parent=39 // pred_check_branch
        %220 = sbr.rel (%p218) target = $region44
      $region43: #{vgg_forward.16} parent=39 // pred_region
        %p221 = scmp.lt.s32.totalorder %s15, 1
        %s222 = scalar_select %p221, %s15, 1
        %s223 = smul.addr %s222, 2
        %s224 = smul.addr %s223, 4
        %s225 = scalar_lea.vmem %s3, %s224
      $region44: #{vgg_forward.16} parent=39 // pred_fallthru
        _
    $region40: #{vgg_forward.16} parent=5 // pred_fallthru
      _
  $region6: #{vgg_forward.16} parent=0 // loop_footer
    %s13 = sadd.s32 1, %s9
  $region7: #{vgg_forward.16} parent=0 // loop_footer_branch
    %8 = sbr.rel target = $region3
  $region8: #{vgg_forward.16} parent=0 // loop_exit
    _

// kernel: vgg_forward.11
$region0: #{vgg_forward.11}
  #allocation0 [shape = 'u32[]', space=smem, size = 0x4, offset = 0x4, fixed_abs, tag = 'smem constant byte address 0x4 - core index']
  #allocation1 [shape = 'u32[144,128]{1,0:T(1,128)}', space=vmem, size = 0x12000, scoped, tag = 'internal scratch']
  %s0 = inlined_call_operand.vmem [shape: bf16[2,10,10,128], index: 0, kind: input, shape index: {}]
  %s1 = inlined_call_operand.vmem [shape: bf16[9,128,128], index: 1, kind: input, shape index: {}]
  %s2 = inlined_call_operand.vmem [shape: bf16[2,64,128], index: 2, kind: output, shape index: {0}]
  %s3 = inlined_call_operand.vmem [shape: f32[2,2,128], index: 3, kind: output, shape index: {1}]
  %4 = xla_tuple %s2, %s3
  %s5 = sld [smem:[#allocation0]]
  $region49: #{vgg_forward.11} parent=0
    _
  %s7 = ssub.s32 1, %s5
  %s8 = scalar_select 0, %s7, %s5
  loop: start=0, step=1, limit=4
  $region2: #{vgg_forward.11} parent=0 // loop_pre_header
    _
  $region3: #{vgg_forward.11} parent=0 // loop_header
    %s10 = sphi 0, %s14
    %p11 = scmp.ge.s32.totalorder %s10, 4
    %s20 = sphi 0, %s22
    %s23 = sphi 0, %s20
    %s24 = sphi 0, %s23
    %s40 = sphi 0, %s24
    %s44 = sphi 0, %s44
    %s46 = sphi 0, %s44
    %s47 = sphi 0, %s46
    %s61 = sphi 0, %s47
    %s67 = sphi 0, %s69
    %s70 = sphi 0, %s67
    %s71 = sphi 0, %s70
    %s87 = sphi 0, %s71
    %s93 = sphi 0, %s95
    %s96 = sphi 0, %s93
    %s97 = sphi 0, %s96
    %s113 = sphi 0, %s97
  $region4: #{vgg_forward.11} parent=0 // loop_header_branch
    %13 = sbr.rel (%p11) target = $region8
  $region5: #{vgg_forward.11} parent=0 // loop_body
    %s15 = ssub.s32 %s10, 1
    %s16 = ssub.s32 %s10, 2
    %s17 = sadd.s32 %s10, 1
    %s18 = ssub.s32 %s10, %s17
    %p19 = scmp.eq.s32.totalorder %s18, 0
    %s21 = sadd.s32 %s20, 1
    %s22 = scalar_select %p19, %s20, %s21
    %p25 = pneg %p19
    %p26 = scmp.eq.s32.totalorder %s10, 1
    %p27 = por %p25, %p26
    %p28 = scmp.ne.s32.totalorder %s20, %s23
    %p29 = scmp.eq.s32.totalorder %s10, 0
    %p30 = por %p28, %p29
    %p31 = scmp.ne.s32.totalorder %s20, %s23
    %p32 = scmp.eq.s32.totalorder %s15, 1
    %p33 = por %p31, %p32
    %p34 = scmp.ne.s32.totalorder %s23, %s24
    %p35 = scmp.eq.s32.totalorder %s15, 0
    %p36 = por %p34, %p35
    %p37 = scmp.ne.s32.totalorder %s23, %s24
    %p38 = scmp.eq.s32.totalorder %s16, 1
    %p39 = por %p37, %p38
    %p41 = scmp.ne.s32.totalorder %s24, %s40
    %p42 = scmp.eq.s32.totalorder %s16, 0
    %p43 = por %p41, %p42
    %s45 = sadd.s32 %s44, 1
    %p48 = scmp.eq.s32.totalorder %s10, 1
    %p49 = scmp.ne.s32.totalorder %s44, %s46
    %p50 = scmp.eq.s32.totalorder %s10, 0
    %p51 = por %p49, %p50
    %p52 = scmp.ne.s32.totalorder %s44, %s46
    %p53 = scmp.eq.s32.totalorder %s15, 1
    %p54 = por %p52, %p53
    %p55 = scmp.ne.s32.totalorder %s46, %s47
    %p56 = scmp.eq.s32.totalorder %s15, 0
    %p57 = por %p55, %p56
    %p58 = scmp.ne.s32.totalorder %s46, %s47
    %p59 = scmp.eq.s32.totalorder %s16, 1
    %p60 = por %p58, %p59
    %p62 = scmp.ne.s32.totalorder %s47, %s61
    %p63 = scmp.eq.s32.totalorder %s16, 0
    %p64 = por %p62, %p63
    %s65 = ssub.s32 %s10, %s17
    %p66 = scmp.eq.s32.totalorder %s65, 0
    %s68 = sadd.s32 %s67, 1
    %s69 = scalar_select %p66, %s67, %s68
    %p72 = pneg %p66
    %p73 = scmp.eq.s32.totalorder %s10, 1
    %p74 = por %p72, %p73
    %p75 = scmp.ne.s32.totalorder %s67, %s70
    %p76 = scmp.eq.s32.totalorder %s10, 0
    %p77 = por %p75, %p76
    %p78 = scmp.ne.s32.totalorder %s67, %s70
    %p79 = scmp.eq.s32.totalorder %s15, 1
    %p80 = por %p78, %p79
    %p81 = scmp.ne.s32.totalorder %s70, %s71
    %p82 = scmp.eq.s32.totalorder %s15, 0
    %p83 = por %p81, %p82
    %p84 = scmp.ne.s32.totalorder %s70, %s71
    %p85 = scmp.eq.s32.totalorder %s16, 1
    %p86 = por %p84, %p85
    %p88 = scmp.ne.s32.totalorder %s71, %s87
    %p89 = scmp.eq.s32.totalorder %s16, 0
    %p90 = por %p88, %p89
    %s91 = ssub.s32 %s10, %s17
    %p92 = scmp.eq.s32.totalorder %s91, 0
    %s94 = sadd.s32 %s93, 1
    %s95 = scalar_select %p92, %s93, %s94
    %p98 = pneg %p92
    %p99 = scmp.eq.s32.totalorder %s10, 1
    %p100 = por %p98, %p99
    %p101 = scmp.ne.s32.totalorder %s93, %s96
    %p102 = scmp.eq.s32.totalorder %s10, 0
    %p103 = por %p101, %p102
    %p104 = scmp.ne.s32.totalorder %s93, %s96
    %p105 = scmp.eq.s32.totalorder %s15, 1
    %p106 = por %p104, %p105
    %p107 = scmp.ne.s32.totalorder %s96, %s97
    %p108 = scmp.eq.s32.totalorder %s15, 0
    %p109 = por %p107, %p108
    %p110 = scmp.ne.s32.totalorder %s96, %s97
    %p111 = scmp.eq.s32.totalorder %s16, 1
    %p112 = por %p110, %p111
    %p114 = scmp.ne.s32.totalorder %s97, %s113
    %p115 = scmp.eq.s32.totalorder %s16, 0
    %p116 = por %p114, %p115
    %p117 = scmp.le.s32.totalorder 1, %s10
    %p118 = scmp.lt.s32.totalorder %s10, 3
    %p119 = pnand %p117, %p118
    %p120 = pneg %p119
    // Predicated region
    $region9: #{vgg_forward.11} parent=5 // pred_check
      _
    $region10: #{vgg_forward.11} parent=5 // pred_check_branch
      %122 = sbr.rel (%p119) target = $region12
    $region11: #{vgg_forward.11} parent=5 // pred_region
      %s123 = ssub.s32 %s10, 1
      // Predicated region
      $region13: #{vgg_forward.11} parent=11 // pred_check
        %p124 = pneg %p57
      $region14: #{vgg_forward.11} parent=11 // pred_check_branch
        %126 = sbr.rel (%p124) target = $region16
      $region15: #{vgg_forward.11} parent=11 // pred_region
        _
      $region16: #{vgg_forward.11} parent=11 // pred_fallthru
        _
    $region12: #{vgg_forward.11} parent=5 // pred_fallthru
      _
    %p127 = scmp.lt.s32.totalorder %s10, 2
    // Predicated region
    $region17: #{vgg_forward.11} parent=5 // pred_check
      %p128 = pneg %p127
    $region18: #{vgg_forward.11} parent=5 // pred_check_branch
      %130 = sbr.rel (%p128) target = $region20
    $region19: #{vgg_forward.11} parent=5 // pred_region
      // Predicated region
      $region21: #{vgg_forward.11} parent=19 // pred_check
        %p131 = pneg %p30
      $region22: #{vgg_forward.11} parent=19 // pred_check_branch
        %133 = sbr.rel (%p131) target = $region24
      $region23: #{vgg_forward.11} parent=19 // pred_region
        %p134 = scmp.lt.s32.totalorder %s10, 1
        %s135 = scalar_select %p134, %s10, 1
        %s136 = smul.addr %s135, 20
        %s137 = smul.addr %s136, 4
        %s138 = scalar_lea.vmem %s0, %s137
      $region24: #{vgg_forward.11} parent=19 // pred_fallthru
        _
    $region20: #{vgg_forward.11} parent=5 // pred_fallthru
      _
    %p139 = scmp.le.s32.totalorder 1, %s10
    %p140 = scmp.lt.s32.totalorder %s10, 3
    %p141 = pnand %p139, %p140
    %p142 = pneg %p141
    // Predicated region
    $region25: #{vgg_forward.11} parent=5 // pred_check
      _
    $region26: #{vgg_forward.11} parent=5 // pred_check_branch
      %144 = sbr.rel (%p141) target = $region28
    $region27: #{vgg_forward.11} parent=5 // pred_region
      %s145 = ssub.s32 %s10, 1
      %p146 = scmp.lt.s32.totalorder %s15, 1
      %s147 = scalar_select %p146, %s15, 1
      %s148 = smul.addr %s147, 20
      %s149 = smul.addr %s148, 4
      %s150 = scalar_lea.vmem %s0, %s149
      %p151 = pneg %p36
      %p152 = pneg %p33
      %p153 = pneg %p57
      %p154 = pneg %p54
      %p155 = pneg %p83
      %p156 = pneg %p80
      %p157 = scmp.lt.s32.totalorder %s15, 1
      %s158 = scalar_select %p157, %s15, 1
      %s159 = smul.addr %s158, 8
      %s160 = smul.addr %s159, 4
      %s161 = scalar_lea.vmem %s2, %s160
      %p162 = pneg %p109
      %p163 = pneg %p106
      %p164 = scmp.lt.s32.totalorder %s15, 1
      %s165 = scalar_select %p164, %s15, 1
      %s166 = smul.addr %s165, 2
      %s167 = scalar_lea.vmem %s3, %s166
      %p168 = scmp.lt.s32.totalorder %s15, 1
      %s169 = scalar_select %p168, %s15, 1
      %s170 = smul.addr %s169, 20
      %s171 = smul.addr %s170, 4
      %s172 = scalar_lea.vmem %s0, %s171
      %p173 = scmp.lt.s32.totalorder %s15, 1
      %s174 = scalar_select %p173, %s15, 1
      %s175 = smul.addr %s174, 8
      %s176 = smul.addr %s175, 4
      %s177 = scalar_lea.vmem %s2, %s176
      %p178 = scmp.lt.s32.totalorder %s15, 1
      %s179 = scalar_select %p178, %s15, 1
      %s180 = smul.addr %s179, 2
      %s181 = scalar_lea.vmem %s3, %s180
      %v183 = vld [vmem:[%s172] sm:$0xf]
      %v184 = vld [vmem:[%s172 + $0x8] sm:$0xf]
      %v185 = vld [vmem:[%s172 + $0x10] sm:$0xf]
      %v186 = vld [vmem:[%s172 + $0x18] sm:$0xf]
      %v187 = vld [vmem:[%s172 + $0x20] sm:$0xf]
      %v188 = vld [vmem:[%s172 + $0x28] sm:$0xf]
      %v189 = vld [vmem:[%s172 + $0x30] sm:$0xf]
      %v190 = vld [vmem:[%s172 + $0x38] sm:$0xf]
      %v191 = vld [vmem:[%s1] sm:$0xf]
      %v192 = vld [vmem:[%s1 + $0x4] sm:$0xf]
      %v193 = vld [vmem:[%s1 + $0x8] sm:$0xf]
      %v194 = vld [vmem:[%s1 + $0xc] sm:$0xf]
      %v195 = vld [vmem:[%s1 + $0x10] sm:$0xf]
      %v196 = vld [vmem:[%s1 + $0x14] sm:$0xf]
      %v197 = vld [vmem:[%s1 + $0x18] sm:$0xf]
      %v198 = vld [vmem:[%s1 + $0x1c] sm:$0xf]
      %v199 = vld [vmem:[%s1 + $0x20] sm:$0xf]
      %v200 = vld [vmem:[%s1 + $0x24] sm:$0xf]
      %v201 = vld [vmem:[%s1 + $0x28] sm:$0xf]
      %v202 = vld [vmem:[%s1 + $0x2c] sm:$0xf]
      %v203 = vld [vmem:[%s1 + $0x30] sm:$0xf]
      %v204 = vld [vmem:[%s1 + $0x34] sm:$0xf]
      %v205 = vld [vmem:[%s1 + $0x38] sm:$0xf]
      %v206 = vld [vmem:[%s1 + $0x3c] sm:$0xf]
      %v207 = vld [vmem:[%s172 + $0x4] sm:$0x1]
      %v208 = vld [vmem:[%s172 + $0xc] sm:$0x1]
      %v209 = vld [vmem:[%s172 + $0x14] sm:$0x1]
      %v210 = vld [vmem:[%s172 + $0x1c] sm:$0x1]
      %v211 = vld [vmem:[%s172 + $0x24] sm:$0x1]
      %v212 = vld [vmem:[%s172 + $0x2c] sm:$0x1]
      %v213 = vld [vmem:[%s172 + $0x34] sm:$0x1]
      %v214 = vld [vmem:[%s172 + $0x3c] sm:$0x1]
      %vm215 = vsmask.f32 3328
      %vm216 = vsmask.f32 7440
      %vm217 = vmor %vm215, %vm216
      %v219 = vshrl.u32 %v183, 16
      %v221 = vrot.slane %v219, 4
      %v222 = vshll.u32 %v183, 16
      %v224 = vrot.slane %v222, 5
      %v225 = vor.u32 %v221, %v224
      %v226 = vrot.slane %v225, 4
      %v228 = vshll.u32 %v207, 16
      %v230 = vrot.slane %v228, 5
      %v231 = vsel %vm217, %v226, %v230
      %v233 = vshrl.u32 %v184, 16
      %v235 = vrot.slane %v233, 4
      %v236 = vshll.u32 %v184, 16
      %v238 = vrot.slane %v236, 5
      %v239 = vor.u32 %v235, %v238
      %v240 = vrot.slane %v239, 4
      %v242 = vshll.u32 %v208, 16
      %v244 = vrot.slane %v242, 5
      %v245 = vsel %vm217, %v240, %v244
      %v247 = vshrl.u32 %v185, 16
      %v249 = vrot.slane %v247, 4
      %v250 = vshll.u32 %v185, 16
      %v252 = vrot.slane %v250, 5
      %v253 = vor.u32 %v249, %v252
      %v254 = vrot.slane %v253, 4
      %v256 = vshll.u32 %v209, 16
      %v258 = vrot.slane %v256, 5
      %v259 = vsel %vm217, %v254, %v258
      %v261 = vshrl.u32 %v186, 16
      %v263 = vrot.slane %v261, 4
      %v264 = vshll.u32 %v186, 16
      %v266 = vrot.slane %v264, 5
      %v267 = vor.u32 %v263, %v266
      %v268 = vrot.slane %v267, 4
      %v270 = vshll.u32 %v210, 16
      %v272 = vrot.slane %v270, 5
      %v273 = vsel %vm217, %v268, %v272
      %v275 = vshrl.u32 %v187, 16
      %v277 = vrot.slane %v275, 4
      %v278 = vshll.u32 %v187, 16
      %v280 = vrot.slane %v278, 5
      %v281 = vor.u32 %v277, %v280
      %v282 = vrot.slane %v281, 4
      %v284 = vshll.u32 %v211, 16
      %v286 = vrot.slane %v284, 5
      %v287 = vsel %vm217, %v282, %v286
      %v289 = vshrl.u32 %v188, 16
      %v291 = vrot.slane %v289, 4
      %v292 = vshll.u32 %v188, 16
      %v294 = vrot.slane %v292, 5
      %v295 = vor.u32 %v291, %v294
      %v296 = vrot.slane %v295, 4
      %v298 = vshll.u32 %v212, 16
      %v300 = vrot.slane %v298, 5
      %v301 = vsel %vm217, %v296, %v300
      %v303 = vshrl.u32 %v189, 16
      %v305 = vrot.slane %v303, 4
      %v306 = vshll.u32 %v189, 16
      %v308 = vrot.slane %v306, 5
      %v309 = vor.u32 %v305, %v308
      %v310 = vrot.slane %v309, 4
      %v312 = vshll.u32 %v213, 16
      %v314 = vrot.slane %v312, 5
      %v315 = vsel %vm217, %v310, %v314
      %v317 = vshrl.u32 %v190, 16
      %v319 = vrot.slane %v317, 4
      %v320 = vshll.u32 %v190, 16
      %v322 = vrot.slane %v320, 5
      %v323 = vor.u32 %v319, %v322
      %v324 = vrot.slane %v323, 4
      %v326 = vshll.u32 %v214, 16
      %v328 = vrot.slane %v326, 5
      %v329 = vsel %vm217, %v324, %v328
      %s330 = scalar_lea.vmem %s1, 64
      %v331 = vld [vmem:[%s330] sm:$0xf]
      %v332 = vld [vmem:[%s330 + $0x4] sm:$0xf]
      %v333 = vld [vmem:[%s330 + $0x8] sm:$0xf]
      %v334 = vld [vmem:[%s330 + $0xc] sm:$0xf]
      %v335 = vld [vmem:[%s330 + $0x10] sm:$0xf]
      %v336 = vld [vmem:[%s330 + $0x14] sm:$0xf]
      %v337 = vld [vmem:[%s330 + $0x18] sm:$0xf]
      %v338 = vld [vmem:[%s330 + $0x1c] sm:$0xf]
      %v339 = vld [vmem:[%s330 + $0x20] sm:$0xf]
      %v340 = vld [vmem:[%s330 + $0x24] sm:$0xf]
      %v341 = vld [vmem:[%s330 + $0x28] sm:$0xf]
      %v342 = vld [vmem:[%s330 + $0x2c] sm:$0xf]
      %v343 = vld [vmem:[%s330 + $0x30] sm:$0xf]
      %v344 = vld [vmem:[%s330 + $0x34] sm:$0xf]
      %v345 = vld [vmem:[%s330 + $0x38] sm:$0xf]
      %v346 = vld [vmem:[%s330 + $0x3c] sm:$0xf]
      %v347 = vunpack.c.l.b16 %v231
      %v348 = vunpack.c.l.b16 %v245
      %v349 = vunpack.c.l.b16 %v259
      %v350 = vunpack.c.l.b16 %v273
      %v351 = vunpack.c.l.b16 %v287
      %v352 = vunpack.c.l.b16 %v301
      %v353 = vunpack.c.l.b16 %v315
      %v354 = vunpack.c.l.b16 %v329
      %v355 = vpack.c.b16 %v348, %v347
      %v356 = vpack.c.b16 %v350, %v349
      %v357 = vpack.c.b16 %v352, %v351
      %v358 = vpack.c.b16 %v354, %v353
      %v379 = vunpack.c.l.b16 %v331
      %v380 = vunpack.c.l.b16 %v332
      %v381 = vunpack.c.l.b16 %v333
      %v382 = vunpack.c.l.b16 %v334
      %v383 = vunpack.c.l.b16 %v335
      %v384 = vunpack.c.l.b16 %v336
      %v385 = vunpack.c.l.b16 %v337
      %v386 = vunpack.c.l.b16 %v338
      %v387 = vunpack.c.l.b16 %v339
      %v388 = vunpack.c.l.b16 %v340
      %v389 = vunpack.c.l.b16 %v341
      %v390 = vunpack.c.l.b16 %v342
      %v391 = vunpack.c.l.b16 %v343
      %v392 = vunpack.c.l.b16 %v344
      %v393 = vunpack.c.l.b16 %v345
      %v394 = vunpack.c.l.b16 %v346
      %v395 = vpack.c.b16 %v380, %v379
      %v396 = vpack.c.b16 %v382, %v381
      %v397 = vpack.c.b16 %v384, %v383
      %v398 = vpack.c.b16 %v386, %v385
      %v399 = vpack.c.b16 %v388, %v387
      %v400 = vpack.c.b16 %v390, %v389
      %v401 = vpack.c.b16 %v392, %v391
      %v402 = vpack.c.b16 %v394, %v393
      %411 = vmatprep.subr.bf16.mxu0 0
      %412 = vmatpush1.bf16.msra.mxu0 %v395
      %413 = vmatprep.subr.bf16.mxu0 0
      %414 = vmatpush1.bf16.msra.mxu0 %v396
      %415 = vmatprep.subr.bf16.mxu0 0
      %416 = vmatpush1.bf16.msra.mxu0 %v397
      %417 = vmatprep.subr.bf16.mxu0 0
      %418 = vmatpush1.bf16.msra.mxu0 %v398
      %419 = vmatprep.subr.bf16.mxu0 0
      %420 = vmatpush1.bf16.msra.mxu0 %v399
      %421 = vmatprep.subr.bf16.mxu0 0
      %422 = vmatpush1.bf16.msra.mxu0 %v400
      %423 = vmatprep.subr.bf16.mxu0 0
      %424 = vmatpush1.bf16.msra.mxu0 %v401
      %425 = vmatprep.subr.bf16.mxu0 0
      %426 = vmatpush1.bf16.msra.mxu0 %v402
      %427 = vmatprep.subr.bf16.mxu0 0
      %428 = vmatpush1.bf16.msra.mxu0 0
      %429 = vmatprep.subr.bf16.mxu0 0
      %430 = vmatpush1.bf16.msra.mxu0 0
      %431 = vmatprep.subr.bf16.mxu0 0
      %432 = vmatpush1.bf16.msra.mxu0 0
      %433 = vmatprep.subr.bf16.mxu0 0
      %434 = vmatpush1.bf16.msra.mxu0 0
      %435 = vmatprep.subr.bf16.mxu0 0
      %436 = vmatpush1.bf16.msra.mxu0 0
      %437 = vmatprep.subr.bf16.mxu0 0
      %438 = vmatpush1.bf16.msra.mxu0 0
      %439 = vmatprep.subr.bf16.mxu0 0
      %440 = vmatpush1.bf16.msra.mxu0 0
      %441 = vmatprep.subr.bf16.mxu0 0
      %442 = vmatpush1.bf16.msra.mxu0 0
      %443 = vmatprep.mubr.bf16.mxu0 0
      %444 = vmatmul.mubr.bf16.gmra.mrb[0].mxu0 %v355
      %v445 = vpop.f32.mrb[0].mxu0
      %v446 = vadd.f32 0.0, %v445
      %v447 = vpop.f32.mrb[0].mxu0
      %v448 = vpop.f32.mrb[0].mxu0
      %v449 = vadd.f32 0.0, %v448
      %v450 = vpop.f32.mrb[0].mxu0
      %451 = vmatprep.mubr.bf16.mxu0 0
      %452 = vmatmul.mubr.bf16.gmra.mrb[0].mxu0 %v356
      %v453 = vpop.f32.mrb[0].mxu0
      %v454 = vadd.f32 0.0, %v453
      %v455 = vpop.f32.mrb[0].mxu0
      %v456 = vpop.f32.mrb[0].mxu0
      %v457 = vadd.f32 0.0, %v456
      %v458 = vpop.f32.mrb[0].mxu0
      %459 = vmatprep.mubr.bf16.mxu0 0
      %460 = vmatmul.mubr.bf16.gmra.mrb[0].mxu0 %v357
      %v461 = vpop.f32.mrb[0].mxu0
      %v462 = vadd.f32 0.0, %v461
      %v463 = vpop.f32.mrb[0].mxu0
      %v464 = vpop.f32.mrb[0].mxu0
      %v465 = vadd.f32 0.0, %v464
      %v466 = vpop.f32.mrb[0].mxu0
      %467 = vmatprep.mubr.bf16.mxu0 0
      %468 = vmatmul.mubr.bf16.gmra.mrb[0].mxu0 %v358
      %v469 = vpop.f32.mrb[0].mxu0
      %v470 = vadd.f32 0.0, %v469
      %v471 = vpop.f32.mrb[0].mxu0
      %v472 = vpop.f32.mrb[0].mxu0
      %v473 = vadd.f32 0.0, %v472
      %v474 = vpop.f32.mrb[0].mxu0
      %475 = vdwg.mxu0
      %v484 = vunpack.c.l.b16 %v183
      %v485 = vunpack.c.l.b16 %v184
      %v486 = vunpack.c.l.b16 %v185
      %v487 = vunpack.c.l.b16 %v186
      %v488 = vunpack.c.l.b16 %v187
      %v489 = vunpack.c.l.b16 %v188
      %v490 = vunpack.c.l.b16 %v189
      %v491 = vunpack.c.l.b16 %v190
      %v492 = vpack.c.b16 %v485, %v484
      %v493 = vpack.c.b16 %v487, %v486
      %v494 = vpack.c.b16 %v489, %v488
      %v495 = vpack.c.b16 %v491, %v490
      %v516 = vunpack.c.l.b16 %v191
      %v517 = vunpack.c.l.b16 %v192
      %v518 = vunpack.c.l.b16 %v193
      %v519 = vunpack.c.l.b16 %v194
      %v520 = vunpack.c.l.b16 %v195
      %v521 = vunpack.c.l.b16 %v196
      %v522 = vunpack.c.l.b16 %v197
      %v523 = vunpack.c.l.b16 %v198
      %v524 = vunpack.c.l.b16 %v199
      %v525 = vunpack.c.l.b16 %v200
      %v526 = vunpack.c.l.b16 %v201
      %v527 = vunpack.c.l.b16 %v202
      %v528 = vunpack.c.l.b16 %v203
      %v529 = vunpack.c.l.b16 %v204
      %v530 = vunpack.c.l.b16 %v205
      %v531 = vunpack.c.l.b16 %v206
      %v532 = vpack.c.b16 %v517, %v516
      %v533 = vpack.c.b16 %v519, %v518
      %v534 = vpack.c.b16 %v521, %v520
      %v535 = vpack.c.b16 %v523, %v522
      %v536 = vpack.c.b16 %v525, %v524
      %v537 = vpack.c.b16 %v527, %v526
      %v538 = vpack.c.b16 %v529, %v528
      %v539 = vpack.c.b16 %v531, %v530
      %548 = vmatprep.subr.bf16.mxu0 0
      %549 = vmatpush1.bf16.msra.mxu0 %v532
      %550 = vmatprep.subr.bf16.mxu0 0
      %551 = vmatpush1.bf16.msra.mxu0 %v533
      %552 = vmatprep.subr.bf16.mxu0 0
      %553 = vmatpush1.bf16.msra.mxu0 %v534
      %554 = vmatprep.subr.bf16.mxu0 0
      %555 = vmatpush1.bf16.msra.mxu0 %v535
      %556 = vmatprep.subr.bf16.mxu0 0
      %557 = vmatpush1.bf16.msra.mxu0 %v536
      %558 = vmatprep.subr.bf16.mxu0 0
      %559 = vmatpush1.bf16.msra.mxu0 %v537
      %560 = vmatprep.subr.bf16.mxu0 0
      %561 = vmatpush1.bf16.msra.mxu0 %v538
      %562 = vmatprep.subr.bf16.mxu0 0
      %563 = vmatpush1.bf16.msra.mxu0 %v539
      %564 = vmatprep.subr.bf16.mxu0 0
      %565 = vmatpush1.bf16.msra.mxu0 0
      %566 = vmatprep.subr.bf16.mxu0 0
      %567 = vmatpush1.bf16.msra.mxu0 0
      %568 = vmatprep.subr.bf16.mxu0 0
      %569 = vmatpush1.bf16.msra.mxu0 0
      %570 = vmatprep.subr.bf16.mxu0 0
      %571 = vmatpush1.bf16.msra.mxu0 0
      %572 = vmatprep.subr.bf16.mxu0 0
      %573 = vmatpush1.bf16.msra.mxu0 0
      %574 = vmatprep.subr.bf16.mxu0 0
      %575 = vmatpush1.bf16.msra.mxu0 0
      %576 = vmatprep.subr.bf16.mxu0 0
      %577 = vmatpush1.bf16.msra.mxu0 0
      %578 = vmatprep.subr.bf16.mxu0 0
      %579 = vmatpush1.bf16.msra.mxu0 0
      %580 = vmatprep.mubr.bf16.mxu0 0
      %581 = vmatmul.mubr.bf16.gmra.mrb[0].mxu0 %v492
      %v582 = vpop.f32.mrb[0].mxu0
      %v583 = vadd.f32 %v446, %v582
      %v584 = vpop.f32.mrb[0].mxu0
      %v585 = vpop.f32.mrb[0].mxu0
      %v586 = vadd.f32 %v449, %v585
      %v587 = vpop.f32.mrb[0].mxu0
      %588 = vmatprep.mubr.bf16.mxu0 0
      %589 = vmatmul.mubr.bf16.gmra.mrb[0].mxu0 %v493
      %v590 = vpop.f32.mrb[0].mxu0
      %v591 = vadd.f32 %v454, %v590
      %v592 = vpop.f32.mrb[0].mxu0
      %v593 = vpop.f32.mrb[0].mxu0
      %v594 = vadd.f32 %v457, %v593
      %v595 = vpop.f32.mrb[0].mxu0
      %596 = vmatprep.mubr.bf16.mxu0 0
      %597 = vmatmul.mubr.bf16.gmra.mrb[0].mxu0 %v494
      %v598 = vpop.f32.mrb[0].mxu0
      %v599 = vadd.f32 %v462, %v598
      %v600 = vpop.f32.mrb[0].mxu0
      %v601 = vpop.f32.mrb[0].mxu0
      %v602 = vadd.f32 %v465, %v601
      %v603 = vpop.f32.mrb[0].mxu0
      %604 = vmatprep.mubr.bf16.mxu0 0
      %605 = vmatmul.mubr.bf16.gmra.mrb[0].mxu0 %v495
      %v606 = vpop.f32.mrb[0].mxu0
      %v607 = vadd.f32 %v470, %v606
      %v608 = vpop.f32.mrb[0].mxu0
      %v609 = vpop.f32.mrb[0].mxu0
      %v610 = vadd.f32 %v473, %v609
      %v611 = vpop.f32.mrb[0].mxu0
      %612 = vdwg.mxu0
      %v613 = vld [vmem:[%s172] sm:$0xe]
      %v614 = vld [vmem:[%s172 + $0x8] sm:$0xe]
      %v615 = vld [vmem:[%s172 + $0x10] sm:$0xe]
      %v616 = vld [vmem:[%s172 + $0x18] sm:$0xe]
      %v617 = vld [vmem:[%s172 + $0x20] sm:$0xe]
      %v618 = vld [vmem:[%s172 + $0x28] sm:$0xe]
      %v619 = vld [vmem:[%s172 + $0x30] sm:$0xe]
      %v620 = vld [vmem:[%s172 + $0x38] sm:$0xe]
      %vm637 = vcmask 1042432
      %vm638 = vcmask 1046532
      %vm639 = vmor %vm637, %vm638
      %v640 = vrot.slane %v613, 5
      %v641 = vrot.slane %v640, 4
      %v642 = vrot.slane %v207, 5
      %v643 = vsel %vm639, %v641, %v642
      %v644 = vrot.slane %v614, 5
      %v645 = vrot.slane %v644, 4
      %v646 = vrot.slane %v208, 5
      %v647 = vsel %vm639, %v645, %v646
      %v648 = vrot.slane %v615, 5
      %v649 = vrot.slane %v648, 4
      %v650 = vrot.slane %v209, 5
      %v651 = vsel %vm639, %v649, %v650
      %v652 = vrot.slane %v616, 5
      %v653 = vrot.slane %v652, 4
      %v654 = vrot.slane %v210, 5
      %v655 = vsel %vm639, %v653, %v654
      %v656 = vrot.slane %v617, 5
      %v657 = vrot.slane %v656, 4
      %v658 = vrot.slane %v211, 5
      %v659 = vsel %vm639, %v657, %v658
      %v660 = vrot.slane %v618, 5
      %v661 = vrot.slane %v660, 4
      %v662 = vrot.slane %v212, 5
      %v663 = vsel %vm639, %v661, %v662
      %v664 = vrot.slane %v619, 5
      %v665 = vrot.slane %v664, 4
      %v666 = vrot.slane %v213, 5
      %v667 = vsel %vm639, %v665, %v666
      %v668 = vrot.slane %v620, 5
      %v669 = vrot.slane %v668, 4
      %v670 = vrot.slane %v214, 5
      %v671 = vsel %vm639, %v669, %v670
      %s672 = scalar_lea.vmem %s1, 128
      %v673 = vld [vmem:[%s672] sm:$0xf]
      %v674 = vld [vmem:[%s672 + $0x4] sm:$0xf]
      %v675 = vld [vmem:[%s672 + $0x8] sm:$0xf]
      %v676 = vld [vmem:[%s672 + $0xc] sm:$0xf]
      %v677 = vld [vmem:[%s672 + $0x10] sm:$0xf]
      %v678 = vld [vmem:[%s672 + $0x14] sm:$0xf]
      %v679 = vld [vmem:[%s672 + $0x18] sm:$0xf]
      %v680 = vld [vmem:[%s672 + $0x1c] sm:$0xf]
      %v681 = vld [vmem:[%s672 + $0x20] sm:$0xf]
      %v682 = vld [vmem:[%s672 + $0x24] sm:$0xf]
      %v683 = vld [vmem:[%s672 + $0x28] sm:$0xf]
      %v684 = vld [vmem:[%s672 + $0x2c] sm:$0xf]
      %v685 = vld [vmem:[%s672 + $0x30] sm:$0xf]
      %v686 = vld [vmem:[%s672 + $0x34] sm:$0xf]
      %v687 = vld [vmem:[%s672 + $0x38] sm:$0xf]
      %v688 = vld [vmem:[%s672 + $0x3c] sm:$0xf]
      %v689 = vunpack.c.l.b16 %v643
      %v690 = vunpack.c.l.b16 %v647
      %v691 = vunpack.c.l.b16 %v651
      %v692 = vunpack.c.l.b16 %v655
      %v693 = vunpack.c.l.b16 %v659
      %v694 = vunpack.c.l.b16 %v663
      %v695 = vunpack.c.l.b16 %v667
      %v696 = vunpack.c.l.b16 %v671
      %v697 = vpack.c.b16 %v690, %v689
      %v698 = vpack.c.b16 %v692, %v691
      %v699 = vpack.c.b16 %v694, %v693
      %v700 = vpack.c.b16 %v696, %v695
      %v721 = vunpack.c.l.b16 %v673
      %v722 = vunpack.c.l.b16 %v674
      %v723 = vunpack.c.l.b16 %v675
      %v724 = vunpack.c.l.b16 %v676
      %v725 = vunpack.c.l.b16 %v677
      %v726 = vunpack.c.l.b16 %v678
      %v727 = vunpack.c.l.b16 %v679
      %v728 = vunpack.c.l.b16 %v680
      %v729 = vunpack.c.l.b16 %v681
      %v730 = vunpack.c.l.b16 %v682
      %v731 = vunpack.c.l.b16 %v683
      %v732 = vunpack.c.l.b16 %v684
      %v733 = vunpack.c.l.b16 %v685
      %v734 = vunpack.c.l.b16 %v686
      %v735 = vunpack.c.l.b16 %v687
      %v736 = vunpack.c.l.b16 %v688
      %v737 = vpack.c.b16 %v722, %v721
      %v738 = vpack.c.b16 %v724, %v723
      %v739 = vpack.c.b16 %v726, %v725
      %v740 = vpack.c.b16 %v728, %v727
      %v741 = vpack.c.b16 %v730, %v729
      %v742 = vpack.c.b16 %v732, %v731
      %v743 = vpack.c.b16 %v734, %v733
      %v744 = vpack.c.b16 %v736, %v735
      %753 = vmatprep.subr.bf16.mxu0 0
      %754 = vmatpush1.bf16.msra.mxu0 %v737
      %755 = vmatprep.subr.bf16.mxu0 0
      %756 = vmatpush1.bf16.msra.mxu0 %v738
      %757 = vmatprep.subr.bf16.mxu0 0
      %758 = vmatpush1.bf16.msra.mxu0 %v739
      %759 = vmatprep.subr.bf16.mxu0 0
      %760 = vmatpush1.bf16.msra.mxu0 %v740
      %761 = vmatprep.subr.bf16.mxu0 0
      %762 = vmatpush1.bf16.msra.mxu0 %v741
      %763 = vmatprep.subr.bf16.mxu0 0
      %764 = vmatpush1.bf16.msra.mxu0 %v742
      %765 = vmatprep.subr.bf16.mxu0 0
      %766 = vmatpush1.bf16.msra.mxu0 %v743
      %767 = vmatprep.subr.bf16.mxu0 0
      %768 = vmatpush1.bf16.msra.mxu0 %v744
      %769 = vmatprep.subr.bf16.mxu0 0
      %770 = vmatpush1.bf16.msra.mxu0 0
      %771 = vmatprep.subr.bf16.mxu0 0
      %772 = vmatpush1.bf16.msra.mxu0 0
      %773 = vmatprep.subr.bf16.mxu0 0
      %774 = vmatpush1.bf16.msra.mxu0 0
      %775 = vmatprep.subr.bf16.mxu0 0
      %776 = vmatpush1.bf16.msra.mxu0 0
      %777 = vmatprep.subr.bf16.mxu0 0
      %778 = vmatpush1.bf16.msra.mxu0 0
      %779 = vmatprep.subr.bf16.mxu0 0
      %780 = vmatpush1.bf16.msra.mxu0 0
      %781 = vmatprep.subr.bf16.mxu0 0
      %782 = vmatpush1.bf16.msra.mxu0 0
      %783 = vmatprep.subr.bf16.mxu0 0
      %784 = vmatpush1.bf16.msra.mxu0 0
      %785 = vmatprep.mubr.bf16.mxu0 0
      %786 = vmatmul.mubr.bf16.gmra.mrb[0].mxu0 %v697
      %v787 = vpop.f32.mrb[0].mxu0
      %v788 = vadd.f32 0.0, %v787
      %v789 = vpop.f32.mrb[0].mxu0
      %v790 = vpop.f32.mrb[0].mxu0
      %v791 = vadd.f32 0.0, %v790
      %v792 = vpop.f32.mrb[0].mxu0
      %793 = vmatprep.mubr.bf16.mxu0 0
      %794 = vmatmul.mubr.bf16.gmra.mrb[0].mxu0 %v698
      %v795 = vpop.f32.mrb[0].mxu0
      %v796 = vadd.f32 0.0, %v795
      %v797 = vpop.f32.mrb[0].mxu0
      %v798 = vpop.f32.mrb[0].mxu0
      %v799 = vadd.f32 0.0, %v798
      %v800 = vpop.f32.mrb[0].mxu0
      %801 = vmatprep.mubr.bf16.mxu0 0
      %802 = vmatmul.mubr.bf16.gmra.mrb[0].mxu0 %v699
      %v803 = vpop.f32.mrb[0].mxu0
      %v804 = vadd.f32 0.0, %v803
      %v805 = vpop.f32.mrb[0].mxu0
      %v806 = vpop.f32.mrb[0].mxu0
      %v807 = vadd.f32 0.0, %v806
      %v808 = vpop.f32.mrb[0].mxu0
      %809 = vmatprep.mubr.bf16.mxu0 0
      %810 = vmatmul.mubr.bf16.gmra.mrb[0].mxu0 %v700
      %v811 = vpop.f32.mrb[0].mxu0
      %v812 = vadd.f32 0.0, %v811
      %v813 = vpop.f32.mrb[0].mxu0
      %v814 = vpop.f32.mrb[0].mxu0
      %v815 = vadd.f32 0.0, %v814
      %v816 = vpop.f32.mrb[0].mxu0
      %817 = vdwg.mxu0
      %v818 = vadd.f32 %v583, %v788
      %v819 = vadd.f32 %v586, %v791
      %v820 = vadd.f32 %v591, %v796
      %v821 = vadd.f32 %v594, %v799
      %v822 = vadd.f32 %v599, %v804
      %v823 = vadd.f32 %v602, %v807
      %v824 = vadd.f32 %v607, %v812
      %v825 = vadd.f32 %v610, %v815
      %s826 = scalar_lea.vmem %s172, 8
      %v827 = vld [vmem:[%s826] sm:$0xf]
      %v828 = vld [vmem:[%s826 + $0x8] sm:$0xf]
      %v829 = vld [vmem:[%s826 + $0x10] sm:$0xf]
      %v830 = vld [vmem:[%s826 + $0x18] sm:$0xf]
      %v831 = vld [vmem:[%s826 + $0x20] sm:$0xf]
      %v832 = vld [vmem:[%s826 + $0x28] sm:$0xf]
      %v833 = vld [vmem:[%s826 + $0x30] sm:$0xf]
      %v834 = vld [vmem:[%s826 + $0x38] sm:$0xf]
      %s835 = scalar_lea.vmem %s1, 192
      %v836 = vld [vmem:[%s835] sm:$0xf]
      %v837 = vld [vmem:[%s835 + $0x4] sm:$0xf]
      %v838 = vld [vmem:[%s835 + $0x8] sm:$0xf]
      %v839 = vld [vmem:[%s835 + $0xc] sm:$0xf]
      %v840 = vld [vmem:[%s835 + $0x10] sm:$0xf]
      %v841 = vld [vmem:[%s835 + $0x14] sm:$0xf]
      %v842 = vld [vmem:[%s835 + $0x18] sm:$0xf]
      %v843 = vld [vmem:[%s835 + $0x1c] sm:$0xf]
      %v844 = vld [vmem:[%s835 + $0x20] sm:$0xf]
      %v845 = vld [vmem:[%s835 + $0x24] sm:$0xf]
      %v846 = vld [vmem:[%s835 + $0x28] sm:$0xf]
      %v847 = vld [vmem:[%s835 + $0x2c] sm:$0xf]
      %v848 = vld [vmem:[%s835 + $0x30] sm:$0xf]
      %v849 = vld [vmem:[%s835 + $0x34] sm:$0xf]
      %v850 = vld [vmem:[%s835 + $0x38] sm:$0xf]
      %v851 = vld [vmem:[%s835 + $0x3c] sm:$0xf]
      %v860 = vunpack.c.l.b16 %v827
      %v861 = vunpack.c.l.b16 %v828
      %v862 = vunpack.c.l.b16 %v829
      %v863 = vunpack.c.l.b16 %v830
      %v864 = vunpack.c.l.b16 %v831
      %v865 = vunpack.c.l.b16 %v832
      %v866 = vunpack.c.l.b16 %v833
      %v867 = vunpack.c.l.b16 %v834
      %v868 = vpack.c.b16 %v861, %v860
      %v869 = vpack.c.b16 %v863, %v862
      %v870 = vpack.c.b16 %v865, %v864
      %v871 = vpack.c.b16 %v867, %v866
      %v892 = vunpack.c.l.b16 %v836
      %v893 = vunpack.c.l.b16 %v837
      %v894 = vunpack.c.l.b16 %v838
      %v895 = vunpack.c.l.b16 %v839
      %v896 = vunpack.c.l.b16 %v840
      %v897 = vunpack.c.l.b16 %v841
      %v898 = vunpack.c.l.b16 %v842
      %v899 = vunpack.c.l.b16 %v843
      %v900 = vunpack.c.l.b16 %v844
      %v901 = vunpack.c.l.b16 %v845
      %v902 = vunpack.c.l.b16 %v846
      %v903 = vunpack.c.l.b16 %v847
      %v904 = vunpack.c.l.b16 %v848
      %v905 = vunpack.c.l.b16 %v849
      %v906 = vunpack.c.l.b16 %v850
      %v907 = vunpack.c.l.b16 %v851
      %v908 = vpack.c.b16 %v893, %v892
      %v909 = vpack.c.b16 %v895, %v894
      %v910 = vpack.c.b16 %v897, %v896
      %v911 = vpack.c.b16 %v899, %v898
      %v912 = vpack.c.b16 %v901, %v900
      %v913 = vpack.c.b16 %v903, %v902
      %v914 = vpack.c.b16 %v905, %v904
      %v915 = vpack.c.b16 %v907, %v906
      %924 = vmatprep.subr.bf16.mxu0 0
      %925 = vmatpush1.bf16.msra.mxu0 %v908
      %926 = vmatprep.subr.bf16.mxu0 0
      %927 = vmatpush1.bf16.msra.mxu0 %v909
      %928 = vmatprep.subr.bf16.mxu0 0
      %929 = vmatpush1.bf16.msra.mxu0 %v910
      %930 = vmatprep.subr.bf16.mxu0 0
      %931 = vmatpush1.bf16.msra.mxu0 %v911
      %932 = vmatprep.subr.bf16.mxu0 0
      %933 = vmatpush1.bf16.msra.mxu0 %v912
      %934 = vmatprep.subr.bf16.mxu0 0
      %935 = vmatpush1.bf16.msra.mxu0 %v913
      %936 = vmatprep.subr.bf16.mxu0 0
      %937 = vmatpush1.bf16.msra.mxu0 %v914
      %938 = vmatprep.subr.bf16.mxu0 0
      %939 = vmatpush1.bf16.msra.mxu0 %v915
      %940 = vmatprep.subr.bf16.mxu0 0
      %941 = vmatpush1.bf16.msra.mxu0 0
      %942 = vmatprep.subr.bf16.mxu0 0
      %943 = vmatpush1.bf16.msra.mxu0 0
      %944 = vmatprep.subr.bf16.mxu0 0
      %945 = vmatpush1.bf16.msra.mxu0 0
      %946 = vmatprep.subr.bf16.mxu0 0
      %947 = vmatpush1.bf16.msra.mxu0 0
      %948 = vmatprep.subr.bf16.mxu0 0
      %949 = vmatpush1.bf16.msra.mxu0 0
      %950 = vmatprep.subr.bf16.mxu0 0
      %951 = vmatpush1.bf16.msra.mxu0 0
      %952 = vmatprep.subr.bf16.mxu0 0
      %953 = vmatpush1.bf16.msra.mxu0 0
      %954 = vmatprep.subr.bf16.mxu0 0
      %955 = vmatpush1.bf16.msra.mxu0 0
      %956 = vmatprep.mubr.bf16.mxu0 0
      %957 = vmatmul.mubr.bf16.gmra.mrb[0].mxu0 %v868
      %v958 = vpop.f32.mrb[0].mxu0
      %v959 = vadd.f32 0.0, %v958
      %v960 = vpop.f32.mrb[0].mxu0
      %v961 = vpop.f32.mrb[0].mxu0
      %v962 = vadd.f32 0.0, %v961
      %v963 = vpop.f32.mrb[0].mxu0
      %964 = vmatprep.mubr.bf16.mxu0 0
      %965 = vmatmul.mubr.bf16.gmra.mrb[0].mxu0 %v869
      %v966 = vpop.f32.mrb[0].mxu0
      %v967 = vadd.f32 0.0, %v966
      %v968 = vpop.f32.mrb[0].mxu0
      %v969 = vpop.f32.mrb[0].mxu0
      %v970 = vadd.f32 0.0, %v969
      %v971 = vpop.f32.mrb[0].mxu0
      %972 = vmatprep.mubr.bf16.mxu0 0
      %973 = vmatmul.mubr.bf16.gmra.mrb[0].mxu0 %v870
      %v974 = vpop.f32.mrb[0].mxu0
      %v975 = vadd.f32 0.0, %v974
      %v976 = vpop.f32.mrb[0].mxu0
      %v977 = vpop.f32.mrb[0].mxu0
      %v978 = vadd.f32 0.0, %v977
      %v979 = vpop.f32.mrb[0].mxu0
      %980 = vmatprep.mubr.bf16.mxu0 0
      %981 = vmatmul.mubr.bf16.gmra.mrb[0].mxu0 %v871
      %v982 = vpop.f32.mrb[0].mxu0
      %v983 = vadd.f32 0.0, %v982
      %v984 = vpop.f32.mrb[0].mxu0
      %v985 = vpop.f32.mrb[0].mxu0
      %v986 = vadd.f32 0.0, %v985
      %v987 = vpop.f32.mrb[0].mxu0
      %988 = vdwg.mxu0
      %v989 = vadd.f32 %v818, %v959
      %v990 = vadd.f32 %v819, %v962
      %v991 = vadd.f32 %v820, %v967
      %v992 = vadd.f32 %v821, %v970
      %v993 = vadd.f32 %v822, %v975
      %v994 = vadd.f32 %v823, %v978
      %v995 = vadd.f32 %v824, %v983
      %v996 = vadd.f32 %v825, %v986
      %v997 = vld [vmem:[%s826] sm:$0xf]
      %v998 = vld [vmem:[%s826 + $0x4] sm:$0x1]
      %v999 = vld [vmem:[%s826 + $0x8] sm:$0xf]
      %v1000 = vld [vmem:[%s826 + $0xc] sm:$0x1]
      %v1001 = vld [vmem:[%s826 + $0x10] sm:$0xf]
      %v1002 = vld [vmem:[%s826 + $0x14] sm:$0x1]
      %v1003 = vld [vmem:[%s826 + $0x18] sm:$0xf]
      %v1004 = vld [vmem:[%s826 + $0x1c] sm:$0x1]
      %v1005 = vld [vmem:[%s826 + $0x20] sm:$0xf]
      %v1006 = vld [vmem:[%s826 + $0x24] sm:$0x1]
      %v1007 = vld [vmem:[%s826 + $0x28] sm:$0xf]
      %v1008 = vld [vmem:[%s826 + $0x2c] sm:$0x1]
      %v1009 = vld [vmem:[%s826 + $0x30] sm:$0xf]
      %v1010 = vld [vmem:[%s826 + $0x34] sm:$0x1]
      %v1011 = vld [vmem:[%s826 + $0x38] sm:$0xf]
      %v1012 = vld [vmem:[%s826 + $0x3c] sm:$0x1]
      %v1014 = vshrl.u32 %v997, 16
      %v1016 = vrot.slane %v1014, 4
      %v1017 = vshll.u32 %v997, 16
      %v1019 = vrot.slane %v1017, 5
      %v1020 = vor.u32 %v1016, %v1019
      %v1021 = vrot.slane %v1020, 4
      %v1023 = vshll.u32 %v998, 16
      %v1025 = vrot.slane %v1023, 5
      %v1026 = vsel %vm217, %v1021, %v1025
      %v1028 = vshrl.u32 %v999, 16
      %v1030 = vrot.slane %v1028, 4
      %v1031 = vshll.u32 %v999, 16
      %v1033 = vrot.slane %v1031, 5
      %v1034 = vor.u32 %v1030, %v1033
      %v1035 = vrot.slane %v1034, 4
      %v1037 = vshll.u32 %v1000, 16
      %v1039 = vrot.slane %v1037, 5
      %v1040 = vsel %vm217, %v1035, %v1039
      %v1042 = vshrl.u32 %v1001, 16
      %v1044 = vrot.slane %v1042, 4
      %v1045 = vshll.u32 %v1001, 16
      %v1047 = vrot.slane %v1045, 5
      %v1048 = vor.u32 %v1044, %v1047
      %v1049 = vrot.slane %v1048, 4
      %v1051 = vshll.u32 %v1002, 16
      %v1053 = vrot.slane %v1051, 5
      %v1054 = vsel %vm217, %v1049, %v1053
      %v1056 = vshrl.u32 %v1003, 16
      %v1058 = vrot.slane %v1056, 4
      %v1059 = vshll.u32 %v1003, 16
      %v1061 = vrot.slane %v1059, 5
      %v1062 = vor.u32 %v1058, %v1061
      %v1063 = vrot.slane %v1062, 4
      %v1065 = vshll.u32 %v1004, 16
      %v1067 = vrot.slane %v1065, 5
      %v1068 = vsel %vm217, %v1063, %v1067
      %v1070 = vshrl.u32 %v1005, 16
      %v1072 = vrot.slane %v1070, 4
      %v1073 = vshll.u32 %v1005, 16
      %v1075 = vrot.slane %v1073, 5
      %v1076 = vor.u32 %v1072, %v1075
      %v1077 = vrot.slane %v1076, 4
      %v1079 = vshll.u32 %v1006, 16
      %v1081 = vrot.slane %v1079, 5
      %v1082 = vsel %vm217, %v1077, %v1081
      %v1084 = vshrl.u32 %v1007, 16
      %v1086 = vrot.slane %v1084, 4
      %v1087 = vshll.u32 %v1007, 16
      %v1089 = vrot.slane %v1087, 5
      %v1090 = vor.u32 %v1086, %v1089
      %v1091 = vrot.slane %v1090, 4
      %v1093 = vshll.u32 %v1008, 16
      %v1095 = vrot.slane %v1093, 5
      %v1096 = vsel %vm217, %v1091, %v1095
      %v1098 = vshrl.u32 %v1009, 16
      %v1100 = vrot.slane %v1098, 4
      %v1101 = vshll.u32 %v1009, 16
      %v1103 = vrot.slane %v1101, 5
      %v1104 = vor.u32 %v1100, %v1103
      %v1105 = vrot.slane %v1104, 4
      %v1107 = vshll.u32 %v1010, 16
      %v1109 = vrot.slane %v1107, 5
      %v1110 = vsel %vm217, %v1105, %v1109
      %v1112 = vshrl.u32 %v1011, 16
      %v1114 = vrot.slane %v1112, 4
      %v1115 = vshll.u32 %v1011, 16
      %v1117 = vrot.slane %v1115, 5
      %v1118 = vor.u32 %v1114, %v1117
      %v1119 = vrot.slane %v1118, 4
      %v1121 = vshll.u32 %v1012, 16
      %v1123 = vrot.slane %v1121, 5
      %v1124 = vsel %vm217, %v1119, %v1123
      %s1125 = scalar_lea.vmem %s1, 256
      %v1126 = vld [vmem:[%s1125] sm:$0xf]
      %v1127 = vld [vmem:[%s1125 + $0x4] sm:$0xf]
      %v1128 = vld [vmem:[%s1125 + $0x8] sm:$0xf]
      %v1129 = vld [vmem:[%s1125 + $0xc] sm:$0xf]
      %v1130 = vld [vmem:[%s1125 + $0x10] sm:$0xf]
      %v1131 = vld [vmem:[%s1125 + $0x14] sm:$0xf]
      %v1132 = vld [vmem:[%s1125 + $0x18] sm:$0xf]
      %v1133 = vld [vmem:[%s1125 + $0x1c] sm:$0xf]
      %v1134 = vld [vmem:[%s1125 + $0x20] sm:$0xf]
      %v1135 = vld [vmem:[%s1125 + $0x24] sm:$0xf]
      %v1136 = vld [vmem:[%s1125 + $0x28] sm:$0xf]
      %v1137 = vld [vmem:[%s1125 + $0x2c] sm:$0xf]
      %v1138 = vld [vmem:[%s1125 + $0x30] sm:$0xf]
      %v1139 = vld [vmem:[%s1125 + $0x34] sm:$0xf]
      %v1140 = vld [vmem:[%s1125 + $0x38] sm:$0xf]
      %v1141 = vld [vmem:[%s1125 + $0x3c] sm:$0xf]
      %v1142 = vunpack.c.l.b16 %v1026
      %v1143 = vunpack.c.l.b16 %v1040
      %v1144 = vunpack.c.l.b16 %v1054
      %v1145 = vunpack.c.l.b16 %v1068
      %v1146 = vunpack.c.l.b16 %v1082
      %v1147 = vunpack.c.l.b16 %v1096
      %v1148 = vunpack.c.l.b16 %v1110
      %v1149 = vunpack.c.l.b16 %v1124
      %v1150 = vpack.c.b16 %v1143, %v1142
      %v1151 = vpack.c.b16 %v1145, %v1144
      %v1152 = vpack.c.b16 %v1147, %v1146
      %v1153 = vpack.c.b16 %v1149, %v1148
      %v1174 = vunpack.c.l.b16 %v1126
      %v1175 = vunpack.c.l.b16 %v1127
      %v1176 = vunpack.c.l.b16 %v1128
      %v1177 = vunpack.c.l.b16 %v1129
      %v1178 = vunpack.c.l.b16 %v1130
      %v1179 = vunpack.c.l.b16 %v1131
      %v1180 = vunpack.c.l.b16 %v1132
      %v1181 = vunpack.c.l.b16 %v1133
      %v1182 = vunpack.c.l.b16 %v1134
      %v1183 = vunpack.c.l.b16 %v1135
      %v1184 = vunpack.c.l.b16 %v1136
      %v1185 = vunpack.c.l.b16 %v1137
      %v1186 = vunpack.c.l.b16 %v1138
      %v1187 = vunpack.c.l.b16 %v1139
      %v1188 = vunpack.c.l.b16 %v1140
      %v1189 = vunpack.c.l.b16 %v1141
      %v1190 = vpack.c.b16 %v1175, %v1174
      %v1191 = vpack.c.b16 %v1177, %v1176
      %v1192 = vpack.c.b16 %v1179, %v1178
      %v1193 = vpack.c.b16 %v1181, %v1180
      %v1194 = vpack.c.b16 %v1183, %v1182
      %v1195 = vpack.c.b16 %v1185, %v1184
      %v1196 = vpack.c.b16 %v1187, %v1186
      %v1197 = vpack.c.b16 %v1189, %v1188
      %1206 = vmatprep.subr.bf16.mxu0 0
      %1207 = vmatpush1.bf16.msra.mxu0 %v1190
      %1208 = vmatprep.subr.bf16.mxu0 0
      %1209 = vmatpush1.bf16.msra.mxu0 %v1191
      %1210 = vmatprep.subr.bf16.mxu0 0
      %1211 = vmatpush1.bf16.msra.mxu0 %v1192
      %1212 = vmatprep.subr.bf16.mxu0 0
      %1213 = vmatpush1.bf16.msra.mxu0 %v1193
      %1214 = vmatprep.subr.bf16.mxu0 0
      %1215 = vmatpush1.bf16.msra.mxu0 %v1194
      %1216 = vmatprep.subr.bf16.mxu0 0
      %1217 = vmatpush1.bf16.msra.mxu0 %v1195
      %1218 = vmatprep.subr.bf16.mxu0 0
      %1219 = vmatpush1.bf16.msra.mxu0 %v1196
      %1220 = vmatprep.subr.bf16.mxu0 0
      %1221 = vmatpush1.bf16.msra.mxu0 %v1197
      %1222 = vmatprep.subr.bf16.mxu0 0
      %1223 = vmatpush1.bf16.msra.mxu0 0
      %1224 = vmatprep.subr.bf16.mxu0 0
      %1225 = vmatpush1.bf16.msra.mxu0 0
      %1226 = vmatprep.subr.bf16.mxu0 0
      %1227 = vmatpush1.bf16.msra.mxu0 0
      %1228 = vmatprep.subr.bf16.mxu0 0
      %1229 = vmatpush1.bf16.msra.mxu0 0
      %1230 = vmatprep.subr.bf16.mxu0 0
      %1231 = vmatpush1.bf16.msra.mxu0 0
      %1232 = vmatprep.subr.bf16.mxu0 0
      %1233 = vmatpush1.bf16.msra.mxu0 0
      %1234 = vmatprep.subr.bf16.mxu0 0
      %1235 = vmatpush1.bf16.msra.mxu0 0
      %1236 = vmatprep.subr.bf16.mxu0 0
      %1237 = vmatpush1.bf16.msra.mxu0 0
      %1238 = vmatprep.mubr.bf16.mxu0 0
      %1239 = vmatmul.mubr.bf16.gmra.mrb[0].mxu0 %v1150
      %v1240 = vpop.f32.mrb[0].mxu0
      %v1241 = vadd.f32 0.0, %v1240
      %v1242 = vpop.f32.mrb[0].mxu0
      %v1243 = vpop.f32.mrb[0].mxu0
      %v1244 = vadd.f32 0.0, %v1243
      %v1245 = vpop.f32.mrb[0].mxu0
      %1246 = vmatprep.mubr.bf16.mxu0 0
      %1247 = vmatmul.mubr.bf16.gmra.mrb[0].mxu0 %v1151
      %v1248 = vpop.f32.mrb[0].mxu0
      %v1249 = vadd.f32 0.0, %v1248
      %v1250 = vpop.f32.mrb[0].mxu0
      %v1251 = vpop.f32.mrb[0].mxu0
      %v1252 = vadd.f32 0.0, %v1251
      %v1253 = vpop.f32.mrb[0].mxu0
      %1254 = vmatprep.mubr.bf16.mxu0 0
      %1255 = vmatmul.mubr.bf16.gmra.mrb[0].mxu0 %v1152
      %v1256 = vpop.f32.mrb[0].mxu0
      %v1257 = vadd.f32 0.0, %v1256
      %v1258 = vpop.f32.mrb[0].mxu0
      %v1259 = vpop.f32.mrb[0].mxu0
      %v1260 = vadd.f32 0.0, %v1259
      %v1261 = vpop.f32.mrb[0].mxu0
      %1262 = vmatprep.mubr.bf16.mxu0 0
      %1263 = vmatmul.mubr.bf16.gmra.mrb[0].mxu0 %v1153
      %v1264 = vpop.f32.mrb[0].mxu0
      %v1265 = vadd.f32 0.0, %v1264
      %v1266 = vpop.f32.mrb[0].mxu0
      %v1267 = vpop.f32.mrb[0].mxu0
      %v1268 = vadd.f32 0.0, %v1267
      %v1269 = vpop.f32.mrb[0].mxu0
      %1270 = vdwg.mxu0
      %v1271 = vadd.f32 %v989, %v1241
      %v1272 = vadd.f32 %v990, %v1244
      %v1273 = vadd.f32 %v991, %v1249
      %v1274 = vadd.f32 %v992, %v1252
      %v1275 = vadd.f32 %v993, %v1257
      %v1276 = vadd.f32 %v994, %v1260
      %v1277 = vadd.f32 %v995, %v1265
      %v1278 = vadd.f32 %v996, %v1268
      %v1279 = vld [vmem:[%s826] sm:$0xe]
      %v1280 = vld [vmem:[%s826 + $0x8] sm:$0xe]
      %v1281 = vld [vmem:[%s826 + $0x10] sm:$0xe]
      %v1282 = vld [vmem:[%s826 + $0x18] sm:$0xe]
      %v1283 = vld [vmem:[%s826 + $0x20] sm:$0xe]
      %v1284 = vld [vmem:[%s826 + $0x28] sm:$0xe]
      %v1285 = vld [vmem:[%s826 + $0x30] sm:$0xe]
      %v1286 = vld [vmem:[%s826 + $0x38] sm:$0xe]
      %v1303 = vrot.slane %v1279, 5
      %v1304 = vrot.slane %v1303, 4
      %v1305 = vrot.slane %v998, 5
      %v1306 = vsel %vm639, %v1304, %v1305
      %v1307 = vrot.slane %v1280, 5
      %v1308 = vrot.slane %v1307, 4
      %v1309 = vrot.slane %v1000, 5
      %v1310 = vsel %vm639, %v1308, %v1309
      %v1311 = vrot.slane %v1281, 5
      %v1312 = vrot.slane %v1311, 4
      %v1313 = vrot.slane %v1002, 5
      %v1314 = vsel %vm639, %v1312, %v1313
      %v1315 = vrot.slane %v1282, 5
      %v1316 = vrot.slane %v1315, 4
      %v1317 = vrot.slane %v1004, 5
      %v1318 = vsel %vm639, %v1316, %v1317
      %v1319 = vrot.slane %v1283, 5
      %v1320 = vrot.slane %v1319, 4
      %v1321 = vrot.slane %v1006, 5
      %v1322 = vsel %vm639, %v1320, %v1321
      %v1323 = vrot.slane %v1284, 5
      %v1324 = vrot.slane %v1323, 4
      %v1325 = vrot.slane %v1008, 5
      %v1326 = vsel %vm639, %v1324, %v1325
      %v1327 = vrot.slane %v1285, 5
      %v1328 = vrot.slane %v1327, 4
      %v1329 = vrot.slane %v1010, 5
      %v1330 = vsel %vm639, %v1328, %v1329
      %v1331 = vrot.slane %v1286, 5
      %v1332 = vrot.slane %v1331, 4
      %v1333 = vrot.slane %v1012, 5
      %v1334 = vsel %vm639, %v1332, %v1333
      %s1335 = scalar_lea.vmem %s1, 320
      %v1336 = vld [vmem:[%s1335] sm:$0xf]
      %v1337 = vld [vmem:[%s1335 + $0x4] sm:$0xf]
      %v1338 = vld [vmem:[%s1335 + $0x8] sm:$0xf]
      %v1339 = vld [vmem:[%s1335 + $0xc] sm:$0xf]
      %v1340 = vld [vmem:[%s1335 + $0x10] sm:$0xf]
      %v1341 = vld [vmem:[%s1335 + $0x14] sm:$0xf]
      %v1342 = vld [vmem:[%s1335 + $0x18] sm:$0xf]
      %v1343 = vld [vmem:[%s1335 + $0x1c] sm:$0xf]
      %v1344 = vld [vmem:[%s1335 + $0x20] sm:$0xf]
      %v1345 = vld [vmem:[%s1335 + $0x24] sm:$0xf]
      %v1346 = vld [vmem:[%s1335 + $0x28] sm:$0xf]
      %v1347 = vld [vmem:[%s1335 + $0x2c] sm:$0xf]
      %v1348 = vld [vmem:[%s1335 + $0x30] sm:$0xf]
      %v1349 = vld [vmem:[%s1335 + $0x34] sm:$0xf]
      %v1350 = vld [vmem:[%s1335 + $0x38] sm:$0xf]
      %v1351 = vld [vmem:[%s1335 + $0x3c] sm:$0xf]
      %v1352 = vunpack.c.l.b16 %v1306
      %v1353 = vunpack.c.l.b16 %v1310
      %v1354 = vunpack.c.l.b16 %v1314
      %v1355 = vunpack.c.l.b16 %v1318
      %v1356 = vunpack.c.l.b16 %v1322
      %v1357 = vunpack.c.l.b16 %v1326
      %v1358 = vunpack.c.l.b16 %v1330
      %v1359 = vunpack.c.l.b16 %v1334
      %v1360 = vpack.c.b16 %v1353, %v1352
      %v1361 = vpack.c.b16 %v1355, %v1354
      %v1362 = vpack.c.b16 %v1357, %v1356
      %v1363 = vpack.c.b16 %v1359, %v1358
      %v1384 = vunpack.c.l.b16 %v1336
      %v1385 = vunpack.c.l.b16 %v1337
      %v1386 = vunpack.c.l.b16 %v1338
      %v1387 = vunpack.c.l.b16 %v1339
      %v1388 = vunpack.c.l.b16 %v1340
      %v1389 = vunpack.c.l.b16 %v1341
      %v1390 = vunpack.c.l.b16 %v1342
      %v1391 = vunpack.c.l.b16 %v1343
      %v1392 = vunpack.c.l.b16 %v1344
      %v1393 = vunpack.c.l.b16 %v1345
      %v1394 = vunpack.c.l.b16 %v1346
      %v1395 = vunpack.c.l.b16 %v1347
      %v1396 = vunpack.c.l.b16 %v1348
      %v1397 = vunpack.c.l.b16 %v1349
      %v1398 = vunpack.c.l.b16 %v1350
      %v1399 = vunpack.c.l.b16 %v1351
      %v1400 = vpack.c.b16 %v1385, %v1384
      %v1401 = vpack.c.b16 %v1387, %v1386
      %v1402 = vpack.c.b16 %v1389, %v1388
      %v1403 = vpack.c.b16 %v1391, %v1390
      %v1404 = vpack.c.b16 %v1393, %v1392
      %v1405 = vpack.c.b16 %v1395, %v1394
      %v1406 = vpack.c.b16 %v1397, %v1396
      %v1407 = vpack.c.b16 %v1399, %v1398
      %1416 = vmatprep.subr.bf16.mxu0 0
      %1417 = vmatpush1.bf16.msra.mxu0 %v1400
      %1418 = vmatprep.subr.bf16.mxu0 0
      %1419 = vmatpush1.bf16.msra.mxu0 %v1401
      %1420 = vmatprep.subr.bf16.mxu0 0
      %1421 = vmatpush1.bf16.msra.mxu0 %v1402
      %1422 = vmatprep.subr.bf16.mxu0 0
      %1423 = vmatpush1.bf16.msra.mxu0 %v1403
      %1424 = vmatprep.subr.bf16.mxu0 0
      %1425 = vmatpush1.bf16.msra.mxu0 %v1404
      %1426 = vmatprep.subr.bf16.mxu0 0
      %1427 = vmatpush1.bf16.msra.mxu0 %v1405
      %1428 = vmatprep.subr.bf16.mxu0 0
      %1429 = vmatpush1.bf16.msra.mxu0 %v1406
      %1430 = vmatprep.subr.bf16.mxu0 0
      %1431 = vmatpush1.bf16.msra.mxu0 %v1407
      %1432 = vmatprep.subr.bf16.mxu0 0
      %1433 = vmatpush1.bf16.msra.mxu0 0
      %1434 = vmatprep.subr.bf16.mxu0 0
      %1435 = vmatpush1.bf16.msra.mxu0 0
      %1436 = vmatprep.subr.bf16.mxu0 0
      %1437 = vmatpush1.bf16.msra.mxu0 0
      %1438 = vmatprep.subr.bf16.mxu0 0
      %1439 = vmatpush1.bf16.msra.mxu0 0
      %1440 = vmatprep.subr.bf16.mxu0 0
      %1441 = vmatpush1.bf16.msra.mxu0 0
      %1442 = vmatprep.subr.bf16.mxu0 0
      %1443 = vmatpush1.bf16.msra.mxu0 0
      %1444 = vmatprep.subr.bf16.mxu0 0
      %1445 = vmatpush1.bf16.msra.mxu0 0
      %1446 = vmatprep.subr.bf16.mxu0 0
      %1447 = vmatpush1.bf16.msra.mxu0 0
      %1448 = vmatprep.mubr.bf16.mxu0 0
      %1449 = vmatmul.mubr.bf16.gmra.mrb[0].mxu0 %v1360
      %v1450 = vpop.f32.mrb[0].mxu0
      %v1451 = vadd.f32 0.0, %v1450
      %v1452 = vpop.f32.mrb[0].mxu0
      %v1453 = vpop.f32.mrb[0].mxu0
      %v1454 = vadd.f32 0.0, %v1453
      %v1455 = vpop.f32.mrb[0].mxu0
      %1456 = vmatprep.mubr.bf16.mxu0 0
      %1457 = vmatmul.mubr.bf16.gmra.mrb[0].mxu0 %v1361
      %v1458 = vpop.f32.mrb[0].mxu0
      %v1459 = vadd.f32 0.0, %v1458
      %v1460 = vpop.f32.mrb[0].mxu0
      %v1461 = vpop.f32.mrb[0].mxu0
      %v1462 = vadd.f32 0.0, %v1461
      %v1463 = vpop.f32.mrb[0].mxu0
      %1464 = vmatprep.mubr.bf16.mxu0 0
      %1465 = vmatmul.mubr.bf16.gmra.mrb[0].mxu0 %v1362
      %v1466 = vpop.f32.mrb[0].mxu0
      %v1467 = vadd.f32 0.0, %v1466
      %v1468 = vpop.f32.mrb[0].mxu0
      %v1469 = vpop.f32.mrb[0].mxu0
      %v1470 = vadd.f32 0.0, %v1469
      %v1471 = vpop.f32.mrb[0].mxu0
      %1472 = vmatprep.mubr.bf16.mxu0 0
      %1473 = vmatmul.mubr.bf16.gmra.mrb[0].mxu0 %v1363
      %v1474 = vpop.f32.mrb[0].mxu0
      %v1475 = vadd.f32 0.0, %v1474
      %v1476 = vpop.f32.mrb[0].mxu0
      %v1477 = vpop.f32.mrb[0].mxu0
      %v1478 = vadd.f32 0.0, %v1477
      %v1479 = vpop.f32.mrb[0].mxu0
      %1480 = vdwg.mxu0
      %v1481 = vadd.f32 %v1271, %v1451
      %v1482 = vadd.f32 %v1272, %v1454
      %v1483 = vadd.f32 %v1273, %v1459
      %v1484 = vadd.f32 %v1274, %v1462
      %v1485 = vadd.f32 %v1275, %v1467
      %v1486 = vadd.f32 %v1276, %v1470
      %v1487 = vadd.f32 %v1277, %v1475
      %v1488 = vadd.f32 %v1278, %v1478
      %s1489 = scalar_lea.vmem %s172, 16
      %v1490 = vld [vmem:[%s1489] sm:$0xf]
      %v1491 = vld [vmem:[%s1489 + $0x8] sm:$0xf]
      %v1492 = vld [vmem:[%s1489 + $0x10] sm:$0xf]
      %v1493 = vld [vmem:[%s1489 + $0x18] sm:$0xf]
      %v1494 = vld [vmem:[%s1489 + $0x20] sm:$0xf]
      %v1495 = vld [vmem:[%s1489 + $0x28] sm:$0xf]
      %v1496 = vld [vmem:[%s1489 + $0x30] sm:$0xf]
      %v1497 = vld [vmem:[%s1489 + $0x38] sm:$0xf]
      %s1498 = scalar_lea.vmem %s1, 384
      %v1499 = vld [vmem:[%s1498] sm:$0xf]
      %v1500 = vld [vmem:[%s1498 + $0x4] sm:$0xf]
      %v1501 = vld [vmem:[%s1498 + $0x8] sm:$0xf]
      %v1502 = vld [vmem:[%s1498 + $0xc] sm:$0xf]
      %v1503 = vld [vmem:[%s1498 + $0x10] sm:$0xf]
      %v1504 = vld [vmem:[%s1498 + $0x14] sm:$0xf]
      %v1505 = vld [vmem:[%s1498 + $0x18] sm:$0xf]
      %v1506 = vld [vmem:[%s1498 + $0x1c] sm:$0xf]
      %v1507 = vld [vmem:[%s1498 + $0x20] sm:$0xf]
      %v1508 = vld [vmem:[%s1498 + $0x24] sm:$0xf]
      %v1509 = vld [vmem:[%s1498 + $0x28] sm:$0xf]
      %v1510 = vld [vmem:[%s1498 + $0x2c] sm:$0xf]
      %v1511 = vld [vmem:[%s1498 + $0x30] sm:$0xf]
      %v1512 = vld [vmem:[%s1498 + $0x34] sm:$0xf]
      %v1513 = vld [vmem:[%s1498 + $0x38] sm:$0xf]
      %v1514 = vld [vmem:[%s1498 + $0x3c] sm:$0xf]
      %v1523 = vunpack.c.l.b16 %v1490
      %v1524 = vunpack.c.l.b16 %v1491
      %v1525 = vunpack.c.l.b16 %v1492
      %v1526 = vunpack.c.l.b16 %v1493
      %v1527 = vunpack.c.l.b16 %v1494
      %v1528 = vunpack.c.l.b16 %v1495
      %v1529 = vunpack.c.l.b16 %v1496
      %v1530 = vunpack.c.l.b16 %v1497
      %v1531 = vpack.c.b16 %v1524, %v1523
      %v1532 = vpack.c.b16 %v1526, %v1525
      %v1533 = vpack.c.b16 %v1528, %v1527
      %v1534 = vpack.c.b16 %v1530, %v1529
      %v1555 = vunpack.c.l.b16 %v1499
      %v1556 = vunpack.c.l.b16 %v1500
      %v1557 = vunpack.c.l.b16 %v1501
      %v1558 = vunpack.c.l.b16 %v1502
      %v1559 = vunpack.c.l.b16 %v1503
      %v1560 = vunpack.c.l.b16 %v1504
      %v1561 = vunpack.c.l.b16 %v1505
      %v1562 = vunpack.c.l.b16 %v1506
      %v1563 = vunpack.c.l.b16 %v1507
      %v1564 = vunpack.c.l.b16 %v1508
      %v1565 = vunpack.c.l.b16 %v1509
      %v1566 = vunpack.c.l.b16 %v1510
      %v1567 = vunpack.c.l.b16 %v1511
      %v1568 = vunpack.c.l.b16 %v1512
      %v1569 = vunpack.c.l.b16 %v1513
      %v1570 = vunpack.c.l.b16 %v1514
      %v1571 = vpack.c.b16 %v1556, %v1555
      %v1572 = vpack.c.b16 %v1558, %v1557
      %v1573 = vpack.c.b16 %v1560, %v1559
      %v1574 = vpack.c.b16 %v1562, %v1561
      %v1575 = vpack.c.b16 %v1564, %v1563
      %v1576 = vpack.c.b16 %v1566, %v1565
      %v1577 = vpack.c.b16 %v1568, %v1567
      %v1578 = vpack.c.b16 %v1570, %v1569
      %1587 = vmatprep.subr.bf16.mxu0 0
      %1588 = vmatpush1.bf16.msra.mxu0 %v1571
      %1589 = vmatprep.subr.bf16.mxu0 0
      %1590 = vmatpush1.bf16.msra.mxu0 %v1572
      %1591 = vmatprep.subr.bf16.mxu0 0
      %1592 = vmatpush1.bf16.msra.mxu0 %v1573
      %1593 = vmatprep.subr.bf16.mxu0 0
      %1594 = vmatpush1.bf16.msra.mxu0 %v1574
      %1595 = vmatprep.subr.bf16.mxu0 0
      %1596 = vmatpush1.bf16.msra.mxu0 %v1575
      %1597 = vmatprep.subr.bf16.mxu0 0
      %1598 = vmatpush1.bf16.msra.mxu0 %v1576
      %1599 = vmatprep.subr.bf16.mxu0 0
      %1600 = vmatpush1.bf16.msra.mxu0 %v1577
      %1601 = vmatprep.subr.bf16.mxu0 0
      %1602 = vmatpush1.bf16.msra.mxu0 %v1578
      %1603 = vmatprep.subr.bf16.mxu0 0
      %1604 = vmatpush1.bf16.msra.mxu0 0
      %1605 = vmatprep.subr.bf16.mxu0 0
      %1606 = vmatpush1.bf16.msra.mxu0 0
      %1607 = vmatprep.subr.bf16.mxu0 0
      %1608 = vmatpush1.bf16.msra.mxu0 0
      %1609 = vmatprep.subr.bf16.mxu0 0
      %1610 = vmatpush1.bf16.msra.mxu0 0
      %1611 = vmatprep.subr.bf16.mxu0 0
      %1612 = vmatpush1.bf16.msra.mxu0 0
      %1613 = vmatprep.subr.bf16.mxu0 0
      %1614 = vmatpush1.bf16.msra.mxu0 0
      %1615 = vmatprep.subr.bf16.mxu0 0
      %1616 = vmatpush1.bf16.msra.mxu0 0
      %1617 = vmatprep.subr.bf16.mxu0 0
      %1618 = vmatpush1.bf16.msra.mxu0 0
      %1619 = vmatprep.mubr.bf16.mxu0 0
      %1620 = vmatmul.mubr.bf16.gmra.mrb[0].mxu0 %v1531
      %v1621 = vpop.f32.mrb[0].mxu0
      %v1622 = vadd.f32 0.0, %v1621
      %v1623 = vpop.f32.mrb[0].mxu0
      %v1624 = vpop.f32.mrb[0].mxu0
      %v1625 = vadd.f32 0.0, %v1624
      %v1626 = vpop.f32.mrb[0].mxu0
      %1627 = vmatprep.mubr.bf16.mxu0 0
      %1628 = vmatmul.mubr.bf16.gmra.mrb[0].mxu0 %v1532
      %v1629 = vpop.f32.mrb[0].mxu0
      %v1630 = vadd.f32 0.0, %v1629
      %v1631 = vpop.f32.mrb[0].mxu0
      %v1632 = vpop.f32.mrb[0].mxu0
      %v1633 = vadd.f32 0.0, %v1632
      %v1634 = vpop.f32.mrb[0].mxu0
      %1635 = vmatprep.mubr.bf16.mxu0 0
      %1636 = vmatmul.mubr.bf16.gmra.mrb[0].mxu0 %v1533
      %v1637 = vpop.f32.mrb[0].mxu0
      %v1638 = vadd.f32 0.0, %v1637
      %v1639 = vpop.f32.mrb[0].mxu0
      %v1640 = vpop.f32.mrb[0].mxu0
      %v1641 = vadd.f32 0.0, %v1640
      %v1642 = vpop.f32.mrb[0].mxu0
      %1643 = vmatprep.mubr.bf16.mxu0 0
      %1644 = vmatmul.mubr.bf16.gmra.mrb[0].mxu0 %v1534
      %v1645 = vpop.f32.mrb[0].mxu0
      %v1646 = vadd.f32 0.0, %v1645
      %v1647 = vpop.f32.mrb[0].mxu0
      %v1648 = vpop.f32.mrb[0].mxu0
      %v1649 = vadd.f32 0.0, %v1648
      %v1650 = vpop.f32.mrb[0].mxu0
      %1651 = vdwg.mxu0
      %v1652 = vadd.f32 %v1481, %v1622
      %v1653 = vadd.f32 %v1482, %v1625
      %v1654 = vadd.f32 %v1483, %v1630
      %v1655 = vadd.f32 %v1484, %v1633
      %v1656 = vadd.f32 %v1485, %v1638
      %v1657 = vadd.f32 %v1486, %v1641
      %v1658 = vadd.f32 %v1487, %v1646
      %v1659 = vadd.f32 %v1488, %v1649
      %v1660 = vld [vmem:[%s1489] sm:$0xf]
      %v1661 = vld [vmem:[%s1489 + $0x4] sm:$0x1]
      %v1662 = vld [vmem:[%s1489 + $0x8] sm:$0xf]
      %v1663 = vld [vmem:[%s1489 + $0xc] sm:$0x1]
      %v1664 = vld [vmem:[%s1489 + $0x10] sm:$0xf]
      %v1665 = vld [vmem:[%s1489 + $0x14] sm:$0x1]
      %v1666 = vld [vmem:[%s1489 + $0x18] sm:$0xf]
      %v1667 = vld [vmem:[%s1489 + $0x1c] sm:$0x1]
      %v1668 = vld [vmem:[%s1489 + $0x20] sm:$0xf]
      %v1669 = vld [vmem:[%s1489 + $0x24] sm:$0x1]
      %v1670 = vld [vmem:[%s1489 + $0x28] sm:$0xf]
      %v1671 = vld [vmem:[%s1489 + $0x2c] sm:$0x1]
      %v1672 = vld [vmem:[%s1489 + $0x30] sm:$0xf]
      %v1673 = vld [vmem:[%s1489 + $0x34] sm:$0x1]
      %v1674 = vld [vmem:[%s1489 + $0x38] sm:$0xf]
      %v1675 = vld [vmem:[%s1489 + $0x3c] sm:$0x1]
      %v1677 = vshrl.u32 %v1660, 16
      %v1679 = vrot.slane %v1677, 4
      %v1680 = vshll.u32 %v1660, 16
      %v1682 = vrot.slane %v1680, 5
      %v1683 = vor.u32 %v1679, %v1682
      %v1684 = vrot.slane %v1683, 4
      %v1686 = vshll.u32 %v1661, 16
      %v1688 = vrot.slane %v1686, 5
      %v1689 = vsel %vm217, %v1684, %v1688
      %v1691 = vshrl.u32 %v1662, 16
      %v1693 = vrot.slane %v1691, 4
      %v1694 = vshll.u32 %v1662, 16
      %v1696 = vrot.slane %v1694, 5
      %v1697 = vor.u32 %v1693, %v1696
      %v1698 = vrot.slane %v1697, 4
      %v1700 = vshll.u32 %v1663, 16
      %v1702 = vrot.slane %v1700, 5
      %v1703 = vsel %vm217, %v1698, %v1702
      %v1705 = vshrl.u32 %v1664, 16
      %v1707 = vrot.slane %v1705, 4
      %v1708 = vshll.u32 %v1664, 16
      %v1710 = vrot.slane %v1708, 5
      %v1711 = vor.u32 %v1707, %v1710
      %v1712 = vrot.slane %v1711, 4
      %v1714 = vshll.u32 %v1665, 16
      %v1716 = vrot.slane %v1714, 5
      %v1717 = vsel %vm217, %v1712, %v1716
      %v1719 = vshrl.u32 %v1666, 16
      %v1721 = vrot.slane %v1719, 4
      %v1722 = vshll.u32 %v1666, 16
      %v1724 = vrot.slane %v1722, 5
      %v1725 = vor.u32 %v1721, %v1724
      %v1726 = vrot.slane %v1725, 4
      %v1728 = vshll.u32 %v1667, 16
      %v1730 = vrot.slane %v1728, 5
      %v1731 = vsel %vm217, %v1726, %v1730
      %v1733 = vshrl.u32 %v1668, 16
      %v1735 = vrot.slane %v1733, 4
      %v1736 = vshll.u32 %v1668, 16
      %v1738 = vrot.slane %v1736, 5
      %v1739 = vor.u32 %v1735, %v1738
      %v1740 = vrot.slane %v1739, 4
      %v1742 = vshll.u32 %v1669, 16
      %v1744 = vrot.slane %v1742, 5
      %v1745 = vsel %vm217, %v1740, %v1744
      %v1747 = vshrl.u32 %v1670, 16
      %v1749 = vrot.slane %v1747, 4
      %v1750 = vshll.u32 %v1670, 16
      %v1752 = vrot.slane %v1750, 5
      %v1753 = vor.u32 %v1749, %v1752
      %v1754 = vrot.slane %v1753, 4
      %v1756 = vshll.u32 %v1671, 16
      %v1758 = vrot.slane %v1756, 5
      %v1759 = vsel %vm217, %v1754, %v1758
      %v1761 = vshrl.u32 %v1672, 16
      %v1763 = vrot.slane %v1761, 4
      %v1764 = vshll.u32 %v1672, 16
      %v1766 = vrot.slane %v1764, 5
      %v1767 = vor.u32 %v1763, %v1766
      %v1768 = vrot.slane %v1767, 4
      %v1770 = vshll.u32 %v1673, 16
      %v1772 = vrot.slane %v1770, 5
      %v1773 = vsel %vm217, %v1768, %v1772
      %v1775 = vshrl.u32 %v1674, 16
      %v1777 = vrot.slane %v1775, 4
      %v1778 = vshll.u32 %v1674, 16
      %v1780 = vrot.slane %v1778, 5
      %v1781 = vor.u32 %v1777, %v1780
      %v1782 = vrot.slane %v1781, 4
      %v1784 = vshll.u32 %v1675, 16
      %v1786 = vrot.slane %v1784, 5
      %v1787 = vsel %vm217, %v1782, %v1786
      %s1788 = scalar_lea.vmem %s1, 448
      %v1789 = vld [vmem:[%s1788] sm:$0xf]
      %v1790 = vld [vmem:[%s1788 + $0x4] sm:$0xf]
      %v1791 = vld [vmem:[%s1788 + $0x8] sm:$0xf]
      %v1792 = vld [vmem:[%s1788 + $0xc] sm:$0xf]
      %v1793 = vld [vmem:[%s1788 + $0x10] sm:$0xf]
      %v1794 = vld [vmem:[%s1788 + $0x14] sm:$0xf]
      %v1795 = vld [vmem:[%s1788 + $0x18] sm:$0xf]
      %v1796 = vld [vmem:[%s1788 + $0x1c] sm:$0xf]
      %v1797 = vld [vmem:[%s1788 + $0x20] sm:$0xf]
      %v1798 = vld [vmem:[%s1788 + $0x24] sm:$0xf]
      %v1799 = vld [vmem:[%s1788 + $0x28] sm:$0xf]
      %v1800 = vld [vmem:[%s1788 + $0x2c] sm:$0xf]
      %v1801 = vld [vmem:[%s1788 + $0x30] sm:$0xf]
      %v1802 = vld [vmem:[%s1788 + $0x34] sm:$0xf]
      %v1803 = vld [vmem:[%s1788 + $0x38] sm:$0xf]
      %v1804 = vld [vmem:[%s1788 + $0x3c] sm:$0xf]
      %v1805 = vunpack.c.l.b16 %v1689
      %v1806 = vunpack.c.l.b16 %v1703
      %v1807 = vunpack.c.l.b16 %v1717
      %v1808 = vunpack.c.l.b16 %v1731
      %v1809 = vunpack.c.l.b16 %v1745
      %v1810 = vunpack.c.l.b16 %v1759
      %v1811 = vunpack.c.l.b16 %v1773
      %v1812 = vunpack.c.l.b16 %v1787
      %v1813 = vpack.c.b16 %v1806, %v1805
      %v1814 = vpack.c.b16 %v1808, %v1807
      %v1815 = vpack.c.b16 %v1810, %v1809
      %v1816 = vpack.c.b16 %v1812, %v1811
      %v1837 = vunpack.c.l.b16 %v1789
      %v1838 = vunpack.c.l.b16 %v1790
      %v1839 = vunpack.c.l.b16 %v1791
      %v1840 = vunpack.c.l.b16 %v1792
      %v1841 = vunpack.c.l.b16 %v1793
      %v1842 = vunpack.c.l.b16 %v1794
      %v1843 = vunpack.c.l.b16 %v1795
      %v1844 = vunpack.c.l.b16 %v1796
      %v1845 = vunpack.c.l.b16 %v1797
      %v1846 = vunpack.c.l.b16 %v1798
      %v1847 = vunpack.c.l.b16 %v1799
      %v1848 = vunpack.c.l.b16 %v1800
      %v1849 = vunpack.c.l.b16 %v1801
      %v1850 = vunpack.c.l.b16 %v1802
      %v1851 = vunpack.c.l.b16 %v1803
      %v1852 = vunpack.c.l.b16 %v1804
      %v1853 = vpack.c.b16 %v1838, %v1837
      %v1854 = vpack.c.b16 %v1840, %v1839
      %v1855 = vpack.c.b16 %v1842, %v1841
      %v1856 = vpack.c.b16 %v1844, %v1843
      %v1857 = vpack.c.b16 %v1846, %v1845
      %v1858 = vpack.c.b16 %v1848, %v1847
      %v1859 = vpack.c.b16 %v1850, %v1849
      %v1860 = vpack.c.b16 %v1852, %v1851
      %1869 = vmatprep.subr.bf16.mxu0 0
      %1870 = vmatpush1.bf16.msra.mxu0 %v1853
      %1871 = vmatprep.subr.bf16.mxu0 0
      %1872 = vmatpush1.bf16.msra.mxu0 %v1854
      %1873 = vmatprep.subr.bf16.mxu0 0
      %1874 = vmatpush1.bf16.msra.mxu0 %v1855
      %1875 = vmatprep.subr.bf16.mxu0 0
      %1876 = vmatpush1.bf16.msra.mxu0 %v1856
      %1877 = vmatprep.subr.bf16.mxu0 0
      %1878 = vmatpush1.bf16.msra.mxu0 %v1857
      %1879 = vmatprep.subr.bf16.mxu0 0
      %1880 = vmatpush1.bf16.msra.mxu0 %v1858
      %1881 = vmatprep.subr.bf16.mxu0 0
      %1882 = vmatpush1.bf16.msra.mxu0 %v1859
      %1883 = vmatprep.subr.bf16.mxu0 0
      %1884 = vmatpush1.bf16.msra.mxu0 %v1860
      %1885 = vmatprep.subr.bf16.mxu0 0
      %1886 = vmatpush1.bf16.msra.mxu0 0
      %1887 = vmatprep.subr.bf16.mxu0 0
      %1888 = vmatpush1.bf16.msra.mxu0 0
      %1889 = vmatprep.subr.bf16.mxu0 0
      %1890 = vmatpush1.bf16.msra.mxu0 0
      %1891 = vmatprep.subr.bf16.mxu0 0
      %1892 = vmatpush1.bf16.msra.mxu0 0
      %1893 = vmatprep.subr.bf16.mxu0 0
      %1894 = vmatpush1.bf16.msra.mxu0 0
      %1895 = vmatprep.subr.bf16.mxu0 0
      %1896 = vmatpush1.bf16.msra.mxu0 0
      %1897 = vmatprep.subr.bf16.mxu0 0
      %1898 = vmatpush1.bf16.msra.mxu0 0
      %1899 = vmatprep.subr.bf16.mxu0 0
      %1900 = vmatpush1.bf16.msra.mxu0 0
      %1901 = vmatprep.mubr.bf16.mxu0 0
      %1902 = vmatmul.mubr.bf16.gmra.mrb[0].mxu0 %v1813
      %v1903 = vpop.f32.mrb[0].mxu0
      %v1904 = vadd.f32 0.0, %v1903
      %v1905 = vpop.f32.mrb[0].mxu0
      %v1906 = vpop.f32.mrb[0].mxu0
      %v1907 = vadd.f32 0.0, %v1906
      %v1908 = vpop.f32.mrb[0].mxu0
      %1909 = vmatprep.mubr.bf16.mxu0 0
      %1910 = vmatmul.mubr.bf16.gmra.mrb[0].mxu0 %v1814
      %v1911 = vpop.f32.mrb[0].mxu0
      %v1912 = vadd.f32 0.0, %v1911
      %v1913 = vpop.f32.mrb[0].mxu0
      %v1914 = vpop.f32.mrb[0].mxu0
      %v1915 = vadd.f32 0.0, %v1914
      %v1916 = vpop.f32.mrb[0].mxu0
      %1917 = vmatprep.mubr.bf16.mxu0 0
      %1918 = vmatmul.mubr.bf16.gmra.mrb[0].mxu0 %v1815
      %v1919 = vpop.f32.mrb[0].mxu0
      %v1920 = vadd.f32 0.0, %v1919
      %v1921 = vpop.f32.mrb[0].mxu0
      %v1922 = vpop.f32.mrb[0].mxu0
      %v1923 = vadd.f32 0.0, %v1922
      %v1924 = vpop.f32.mrb[0].mxu0
      %1925 = vmatprep.mubr.bf16.mxu0 0
      %1926 = vmatmul.mubr.bf16.gmra.mrb[0].mxu0 %v1816
      %v1927 = vpop.f32.mrb[0].mxu0
      %v1928 = vadd.f32 0.0, %v1927
      %v1929 = vpop.f32.mrb[0].mxu0
      %v1930 = vpop.f32.mrb[0].mxu0
      %v1931 = vadd.f32 0.0, %v1930
      %v1932 = vpop.f32.mrb[0].mxu0
      %1933 = vdwg.mxu0
      %v1934 = vadd.f32 %v1652, %v1904
      %v1935 = vadd.f32 %v1653, %v1907
      %v1936 = vadd.f32 %v1654, %v1912
      %v1937 = vadd.f32 %v1655, %v1915
      %v1938 = vadd.f32 %v1656, %v1920
      %v1939 = vadd.f32 %v1657, %v1923
      %v1940 = vadd.f32 %v1658, %v1928
      %v1941 = vadd.f32 %v1659, %v1931
      %v1942 = vld [vmem:[%s1489] sm:$0xe]
      %v1943 = vld [vmem:[%s1489 + $0x8] sm:$0xe]
      %v1944 = vld [vmem:[%s1489 + $0x10] sm:$0xe]
      %v1945 = vld [vmem:[%s1489 + $0x18] sm:$0xe]
      %v1946 = vld [vmem:[%s1489 + $0x20] sm:$0xe]
      %v1947 = vld [vmem:[%s1489 + $0x28] sm:$0xe]
      %v1948 = vld [vmem:[%s1489 + $0x30] sm:$0xe]
      %v1949 = vld [vmem:[%s1489 + $0x38] sm:$0xe]
      %v1966 = vrot.slane %v1942, 5
      %v1967 = vrot.slane %v1966, 4
      %v1968 = vrot.slane %v1661, 5
      %v1969 = vsel %vm639, %v1967, %v1968
      %v1970 = vrot.slane %v1943, 5
      %v1971 = vrot.slane %v1970, 4
      %v1972 = vrot.slane %v1663, 5
      %v1973 = vsel %vm639, %v1971, %v1972
      %v1974 = vrot.slane %v1944, 5
      %v1975 = vrot.slane %v1974, 4
      %v1976 = vrot.slane %v1665, 5
      %v1977 = vsel %vm639, %v1975, %v1976
      %v1978 = vrot.slane %v1945, 5
      %v1979 = vrot.slane %v1978, 4
      %v1980 = vrot.slane %v1667, 5
      %v1981 = vsel %vm639, %v1979, %v1980
      %v1982 = vrot.slane %v1946, 5
      %v1983 = vrot.slane %v1982, 4
      %v1984 = vrot.slane %v1669, 5
      %v1985 = vsel %vm639, %v1983, %v1984
      %v1986 = vrot.slane %v1947, 5
      %v1987 = vrot.slane %v1986, 4
      %v1988 = vrot.slane %v1671, 5
      %v1989 = vsel %vm639, %v1987, %v1988
      %v1990 = vrot.slane %v1948, 5
      %v1991 = vrot.slane %v1990, 4
      %v1992 = vrot.slane %v1673, 5
      %v1993 = vsel %vm639, %v1991, %v1992
      %v1994 = vrot.slane %v1949, 5
      %v1995 = vrot.slane %v1994, 4
      %v1996 = vrot.slane %v1675, 5
      %v1997 = vsel %vm639, %v1995, %v1996
      %s1998 = scalar_lea.vmem %s1, 512
      %v1999 = vld [vmem:[%s1998] sm:$0xf]
      %v2000 = vld [vmem:[%s1998 + $0x4] sm:$0xf]
      %v2001 = vld [vmem:[%s1998 + $0x8] sm:$0xf]
      %v2002 = vld [vmem:[%s1998 + $0xc] sm:$0xf]
      %v2003 = vld [vmem:[%s1998 + $0x10] sm:$0xf]
      %v2004 = vld [vmem:[%s1998 + $0x14] sm:$0xf]
      %v2005 = vld [vmem:[%s1998 + $0x18] sm:$0xf]
      %v2006 = vld [vmem:[%s1998 + $0x1c] sm:$0xf]
      %v2007 = vld [vmem:[%s1998 + $0x20] sm:$0xf]
      %v2008 = vld [vmem:[%s1998 + $0x24] sm:$0xf]
      %v2009 = vld [vmem:[%s1998 + $0x28] sm:$0xf]
      %v2010 = vld [vmem:[%s1998 + $0x2c] sm:$0xf]
      %v2011 = vld [vmem:[%s1998 + $0x30] sm:$0xf]
      %v2012 = vld [vmem:[%s1998 + $0x34] sm:$0xf]
      %v2013 = vld [vmem:[%s1998 + $0x38] sm:$0xf]
      %v2014 = vld [vmem:[%s1998 + $0x3c] sm:$0xf]
      %v2015 = vunpack.c.l.b16 %v1969
      %v2016 = vunpack.c.l.b16 %v1973
      %v2017 = vunpack.c.l.b16 %v1977
      %v2018 = vunpack.c.l.b16 %v1981
      %v2019 = vunpack.c.l.b16 %v1985
      %v2020 = vunpack.c.l.b16 %v1989
      %v2021 = vunpack.c.l.b16 %v1993
      %v2022 = vunpack.c.l.b16 %v1997
      %v2023 = vpack.c.b16 %v2016, %v2015
      %v2024 = vpack.c.b16 %v2018, %v2017
      %v2025 = vpack.c.b16 %v2020, %v2019
      %v2026 = vpack.c.b16 %v2022, %v2021
      %v2047 = vunpack.c.l.b16 %v1999
      %v2048 = vunpack.c.l.b16 %v2000
      %v2049 = vunpack.c.l.b16 %v2001
      %v2050 = vunpack.c.l.b16 %v2002
      %v2051 = vunpack.c.l.b16 %v2003
      %v2052 = vunpack.c.l.b16 %v2004
      %v2053 = vunpack.c.l.b16 %v2005
      %v2054 = vunpack.c.l.b16 %v2006
      %v2055 = vunpack.c.l.b16 %v2007
      %v2056 = vunpack.c.l.b16 %v2008
      %v2057 = vunpack.c.l.b16 %v2009
      %v2058 = vunpack.c.l.b16 %v2010
      %v2059 = vunpack.c.l.b16 %v2011
      %v2060 = vunpack.c.l.b16 %v2012
      %v2061 = vunpack.c.l.b16 %v2013
      %v2062 = vunpack.c.l.b16 %v2014
      %v2063 = vpack.c.b16 %v2048, %v2047
      %v2064 = vpack.c.b16 %v2050, %v2049
      %v2065 = vpack.c.b16 %v2052, %v2051
      %v2066 = vpack.c.b16 %v2054, %v2053
      %v2067 = vpack.c.b16 %v2056, %v2055
      %v2068 = vpack.c.b16 %v2058, %v2057
      %v2069 = vpack.c.b16 %v2060, %v2059
      %v2070 = vpack.c.b16 %v2062, %v2061
      %2079 = vmatprep.subr.bf16.mxu0 0
      %2080 = vmatpush1.bf16.msra.mxu0 %v2063
      %2081 = vmatprep.subr.bf16.mxu0 0
      %2082 = vmatpush1.bf16.msra.mxu0 %v2064
      %2083 = vmatprep.subr.bf16.mxu0 0
      %2084 = vmatpush1.bf16.msra.mxu0 %v2065
      %2085 = vmatprep.subr.bf16.mxu0 0
      %2086 = vmatpush1.bf16.msra.mxu0 %v2066
      %2087 = vmatprep.subr.bf16.mxu0 0
      %2088 = vmatpush1.bf16.msra.mxu0 %v2067
      %2089 = vmatprep.subr.bf16.mxu0 0
      %2090 = vmatpush1.bf16.msra.mxu0 %v2068
      %2091 = vmatprep.subr.bf16.mxu0 0
      %2092 = vmatpush1.bf16.msra.mxu0 %v2069
      %2093 = vmatprep.subr.bf16.mxu0 0
      %2094 = vmatpush1.bf16.msra.mxu0 %v2070
      %2095 = vmatprep.subr.bf16.mxu0 0
      %2096 = vmatpush1.bf16.msra.mxu0 0
      %2097 = vmatprep.subr.bf16.mxu0 0
      %2098 = vmatpush1.bf16.msra.mxu0 0
      %2099 = vmatprep.subr.bf16.mxu0 0
      %2100 = vmatpush1.bf16.msra.mxu0 0
      %2101 = vmatprep.subr.bf16.mxu0 0
      %2102 = vmatpush1.bf16.msra.mxu0 0
      %2103 = vmatprep.subr.bf16.mxu0 0
      %2104 = vmatpush1.bf16.msra.mxu0 0
      %2105 = vmatprep.subr.bf16.mxu0 0
      %2106 = vmatpush1.bf16.msra.mxu0 0
      %2107 = vmatprep.subr.bf16.mxu0 0
      %2108 = vmatpush1.bf16.msra.mxu0 0
      %2109 = vmatprep.subr.bf16.mxu0 0
      %2110 = vmatpush1.bf16.msra.mxu0 0
      %2111 = vmatprep.mubr.bf16.mxu0 0
      %2112 = vmatmul.mubr.bf16.gmra.mrb[0].mxu0 %v2023
      %v2113 = vpop.f32.mrb[0].mxu0
      %v2114 = vadd.f32 0.0, %v2113
      %v2115 = vpop.f32.mrb[0].mxu0
      %v2116 = vpop.f32.mrb[0].mxu0
      %v2117 = vadd.f32 0.0, %v2116
      %v2118 = vpop.f32.mrb[0].mxu0
      %2119 = vmatprep.mubr.bf16.mxu0 0
      %2120 = vmatmul.mubr.bf16.gmra.mrb[0].mxu0 %v2024
      %v2121 = vpop.f32.mrb[0].mxu0
      %v2122 = vadd.f32 0.0, %v2121
      %v2123 = vpop.f32.mrb[0].mxu0
      %v2124 = vpop.f32.mrb[0].mxu0
      %v2125 = vadd.f32 0.0, %v2124
      %v2126 = vpop.f32.mrb[0].mxu0
      %2127 = vmatprep.mubr.bf16.mxu0 0
      %2128 = vmatmul.mubr.bf16.gmra.mrb[0].mxu0 %v2025
      %v2129 = vpop.f32.mrb[0].mxu0
      %v2130 = vadd.f32 0.0, %v2129
      %v2131 = vpop.f32.mrb[0].mxu0
      %v2132 = vpop.f32.mrb[0].mxu0
      %v2133 = vadd.f32 0.0, %v2132
      %v2134 = vpop.f32.mrb[0].mxu0
      %2135 = vmatprep.mubr.bf16.mxu0 0
      %2136 = vmatmul.mubr.bf16.gmra.mrb[0].mxu0 %v2026
      %v2137 = vpop.f32.mrb[0].mxu0
      %v2138 = vadd.f32 0.0, %v2137
      %v2139 = vpop.f32.mrb[0].mxu0
      %v2140 = vpop.f32.mrb[0].mxu0
      %v2141 = vadd.f32 0.0, %v2140
      %v2142 = vpop.f32.mrb[0].mxu0
      %2143 = vdwg.mxu0
      %v2144 = vadd.f32 %v1934, %v2114
      %v2145 = vadd.f32 %v1935, %v2117
      %v2146 = vadd.f32 %v1936, %v2122
      %v2147 = vadd.f32 %v1937, %v2125
      %v2148 = vadd.f32 %v1938, %v2130
      %v2149 = vadd.f32 %v1939, %v2133
      %v2150 = vadd.f32 %v1940, %v2138
      %v2151 = vadd.f32 %v1941, %v2141
      %v2152 = vpack.c.bf16 %v2145, %v2144
      %v2153 = vpack.c.bf16 %v2147, %v2146
      %v2154 = vpack.c.bf16 %v2149, %v2148
      %v2155 = vpack.c.bf16 %v2151, %v2150
      %v2160 = vunpack.c.l.b16 %v2152
      %v2161 = vunpack.c.h.b16 %v2152
      %v2162 = vunpack.c.l.b16 %v2153
      %v2163 = vunpack.c.h.b16 %v2153
      %v2164 = vunpack.c.l.b16 %v2154
      %v2165 = vunpack.c.h.b16 %v2154
      %v2166 = vunpack.c.l.b16 %v2155
      %v2167 = vunpack.c.h.b16 %v2155
      %v2168 = vpack.c.b16 %v2160, %v2160
      %v2169 = vpack.c.b16 %v2161, %v2161
      %v2170 = vpack.c.b16 %v2162, %v2162
      %v2171 = vpack.c.b16 %v2163, %v2163
      %v2172 = vpack.c.b16 %v2164, %v2164
      %v2173 = vpack.c.b16 %v2165, %v2165
      %v2174 = vpack.c.b16 %v2166, %v2166
      %v2175 = vpack.c.b16 %v2167, %v2167
      %2184 = vst [vmem:[%s177] sm:$0xf] %v2168
      %2185 = vst [vmem:[%s177 + $0x4] sm:$0xf] %v2169
      %2186 = vst [vmem:[%s177 + $0x8] sm:$0xf] %v2170
      %2187 = vst [vmem:[%s177 + $0xc] sm:$0xf] %v2171
      %2188 = vst [vmem:[%s177 + $0x10] sm:$0xf] %v2172
      %2189 = vst [vmem:[%s177 + $0x14] sm:$0xf] %v2173
      %2190 = vst [vmem:[%s177 + $0x18] sm:$0xf] %v2174
      %2191 = vst [vmem:[%s177 + $0x1c] sm:$0xf] %v2175
      %v2192 = vadd.f32 %v2144, %v2145
      %v2193 = vadd.f32 %v2192, %v2146
      %v2194 = vadd.f32 %v2193, %v2147
      %v2195 = vadd.f32 %v2194, %v2148
      %v2196 = vadd.f32 %v2195, %v2149
      %v2197 = vadd.f32 %v2196, %v2150
      %v2198 = vadd.f32 %v2197, %v2151
      %v2199 = vrot.slane %v2198, 4
      %v2200 = vadd.f32 %v2198, %v2199
      %v2201 = vrot.slane %v2200, 2
      %v2202 = vadd.f32 %v2200, %v2201
      %v2203 = vrot.slane %v2202, 1
      %v2204 = vadd.f32 %v2202, %v2203
      %2205 = vst [vmem:[%s181] sm:$0x1] %v2204
      %v2206 = vmul.f32 %v2144, %v2144
      %v2207 = vmul.f32 %v2145, %v2145
      %v2208 = vmul.f32 %v2146, %v2146
      %v2209 = vmul.f32 %v2147, %v2147
      %v2210 = vmul.f32 %v2148, %v2148
      %v2211 = vmul.f32 %v2149, %v2149
      %v2212 = vmul.f32 %v2150, %v2150
      %v2213 = vmul.f32 %v2151, %v2151
      %v2214 = vadd.f32 %v2206, %v2207
      %v2215 = vadd.f32 %v2214, %v2208
      %v2216 = vadd.f32 %v2215, %v2209
      %v2217 = vadd.f32 %v2216, %v2210
      %v2218 = vadd.f32 %v2217, %v2211
      %v2219 = vadd.f32 %v2218, %v2212
      %v2220 = vadd.f32 %v2219, %v2213
      %v2221 = vrot.slane %v2220, 4
      %v2222 = vadd.f32 %v2220, %v2221
      %v2223 = vrot.slane %v2222, 2
      %v2224 = vadd.f32 %v2222, %v2223
      %v2225 = vrot.slane %v2224, 1
      %v2226 = vadd.f32 %v2224, %v2225
      %2227 = vst [vmem:[%s181 + $0x1] sm:$0x1] %v2226
      %p2228 = scmp.lt.s32.totalorder %s15, 1
      %s2229 = scalar_select %p2228, %s15, 1
      %s2230 = smul.addr %s2229, 8
      %s2231 = smul.addr %s2230, 4
      %s2232 = scalar_lea.vmem %s2, %s2231
      %p2233 = scmp.lt.s32.totalorder %s15, 1
      %s2234 = scalar_select %p2233, %s15, 1
      %s2235 = smul.addr %s2234, 2
      %s2236 = scalar_lea.vmem %s3, %s2235
      // Predicated region
      $region29: #{vgg_forward.11} parent=27 // pred_check
        %p2237 = pneg %p80
      $region30: #{vgg_forward.11} parent=27 // pred_check_branch
        %2239 = sbr.rel (%p2237) target = $region32
      $region31: #{vgg_forward.11} parent=27 // pred_region
        _
      $region32: #{vgg_forward.11} parent=27 // pred_fallthru
        _
      // Predicated region
      $region33: #{vgg_forward.11} parent=27 // pred_check
        %p2240 = pneg %p106
      $region34: #{vgg_forward.11} parent=27 // pred_check_branch
        %2242 = sbr.rel (%p2240) target = $region36
      $region35: #{vgg_forward.11} parent=27 // pred_region
        _
      $region36: #{vgg_forward.11} parent=27 // pred_fallthru
        _
    $region28: #{vgg_forward.11} parent=5 // pred_fallthru
      _
    %p2243 = scmp.le.s32.totalorder 2, %s10
    // Predicated region
    $region37: #{vgg_forward.11} parent=5 // pred_check
      %p2244 = pneg %p2243
    $region38: #{vgg_forward.11} parent=5 // pred_check_branch
      %2246 = sbr.rel (%p2244) target = $region40
    $region39: #{vgg_forward.11} parent=5 // pred_region
      %s2247 = ssub.s32 %s10, 2
      // Predicated region
      $region41: #{vgg_forward.11} parent=39 // pred_check
        %p2248 = pneg %p86
      $region42: #{vgg_forward.11} parent=39 // pred_check_branch
        %2250 = sbr.rel (%p2248) target = $region44
      $region43: #{vgg_forward.11} parent=39 // pred_region
        %p2251 = scmp.lt.s32.totalorder %s16, 1
        %s2252 = scalar_select %p2251, %s16, 1
        %s2253 = smul.addr %s2252, 8
        %s2254 = smul.addr %s2253, 4
        %s2255 = scalar_lea.vmem %s2, %s2254
      $region44: #{vgg_forward.11} parent=39 // pred_fallthru
        _
      // Predicated region
      $region45: #{vgg_forward.11} parent=39 // pred_check
        %p2256 = pneg %p112
      $region46: #{vgg_forward.11} parent=39 // pred_check_branch
        %2258 = sbr.rel (%p2256) target = $region48
      $region47: #{vgg_forward.11} parent=39 // pred_region
        %p2259 = scmp.lt.s32.totalorder %s16, 1
        %s2260 = scalar_select %p2259, %s16, 1
        %s2261 = smul.addr %s2260, 2
        %s2262 = scalar_lea.vmem %s3, %s2261
      $region48: #{vgg_forward.11} parent=39 // pred_fallthru
        _
    $region40: #{vgg_forward.11} parent=5 // pred_fallthru
      _
  $region6: #{vgg_forward.11} parent=0 // loop_footer
    %s14 = sadd.s32 1, %s10
  $region7: #{vgg_forward.11} parent=0 // loop_footer_branch
    %9 = sbr.rel target = $region3
  $region8: #{vgg_forward.11} parent=0 // loop_exit
    _

// kernel: vgg_forward.15
$region0: #{vgg_forward.15}
  #allocation0 [shape = 'u32[]', space=smem, size = 0x4, offset = 0x4, fixed_abs, tag = 'smem constant byte address 0x4 - core index']
  #allocation1 [shape = 'u32[144,128]{1,0:T(1,128)}', space=vmem, size = 0x12000, scoped, tag = 'internal scratch']
  %s0 = inlined_call_operand.vmem [shape: bf16[2,6,6,128], index: 0, kind: input, shape index: {}]
  %s1 = inlined_call_operand.vmem [shape: bf16[9,128,128], index: 1, kind: input, shape index: {}]
  %s2 = inlined_call_operand.vmem [shape: bf16[2,16,128], index: 2, kind: output, shape index: {0}]
  %s3 = inlined_call_operand.vmem [shape: f32[2,2,128], index: 3, kind: output, shape index: {1}]
  %4 = xla_tuple %s2, %s3
  %s5 = sld [smem:[#allocation0]]
  $region49: #{vgg_forward.15} parent=0
    _
  %s7 = ssub.s32 1, %s5
  %s8 = scalar_select 0, %s7, %s5
  loop: start=0, step=1, limit=4
  $region2: #{vgg_forward.15} parent=0 // loop_pre_header
    _
  $region3: #{vgg_forward.15} parent=0 // loop_header
    %s10 = sphi 0, %s14
    %p11 = scmp.ge.s32.totalorder %s10, 4
    %s20 = sphi 0, %s22
    %s23 = sphi 0, %s20
    %s24 = sphi 0, %s23
    %s40 = sphi 0, %s24
    %s44 = sphi 0, %s44
    %s46 = sphi 0, %s44
    %s47 = sphi 0, %s46
    %s61 = sphi 0, %s47
    %s67 = sphi 0, %s69
    %s70 = sphi 0, %s67
    %s71 = sphi 0, %s70
    %s87 = sphi 0, %s71
    %s93 = sphi 0, %s95
    %s96 = sphi 0, %s93
    %s97 = sphi 0, %s96
    %s113 = sphi 0, %s97
  $region4: #{vgg_forward.15} parent=0 // loop_header_branch
    %13 = sbr.rel (%p11) target = $region8
  $region5: #{vgg_forward.15} parent=0 // loop_body
    %s15 = ssub.s32 %s10, 1
    %s16 = ssub.s32 %s10, 2
    %s17 = sadd.s32 %s10, 1
    %s18 = ssub.s32 %s10, %s17
    %p19 = scmp.eq.s32.totalorder %s18, 0
    %s21 = sadd.s32 %s20, 1
    %s22 = scalar_select %p19, %s20, %s21
    %p25 = pneg %p19
    %p26 = scmp.eq.s32.totalorder %s10, 1
    %p27 = por %p25, %p26
    %p28 = scmp.ne.s32.totalorder %s20, %s23
    %p29 = scmp.eq.s32.totalorder %s10, 0
    %p30 = por %p28, %p29
    %p31 = scmp.ne.s32.totalorder %s20, %s23
    %p32 = scmp.eq.s32.totalorder %s15, 1
    %p33 = por %p31, %p32
    %p34 = scmp.ne.s32.totalorder %s23, %s24
    %p35 = scmp.eq.s32.totalorder %s15, 0
    %p36 = por %p34, %p35
    %p37 = scmp.ne.s32.totalorder %s23, %s24
    %p38 = scmp.eq.s32.totalorder %s16, 1
    %p39 = por %p37, %p38
    %p41 = scmp.ne.s32.totalorder %s24, %s40
    %p42 = scmp.eq.s32.totalorder %s16, 0
    %p43 = por %p41, %p42
    %s45 = sadd.s32 %s44, 1
    %p48 = scmp.eq.s32.totalorder %s10, 1
    %p49 = scmp.ne.s32.totalorder %s44, %s46
    %p50 = scmp.eq.s32.totalorder %s10, 0
    %p51 = por %p49, %p50
    %p52 = scmp.ne.s32.totalorder %s44, %s46
    %p53 = scmp.eq.s32.totalorder %s15, 1
    %p54 = por %p52, %p53
    %p55 = scmp.ne.s32.totalorder %s46, %s47
    %p56 = scmp.eq.s32.totalorder %s15, 0
    %p57 = por %p55, %p56
    %p58 = scmp.ne.s32.totalorder %s46, %s47
    %p59 = scmp.eq.s32.totalorder %s16, 1
    %p60 = por %p58, %p59
    %p62 = scmp.ne.s32.totalorder %s47, %s61
    %p63 = scmp.eq.s32.totalorder %s16, 0
    %p64 = por %p62, %p63
    %s65 = ssub.s32 %s10, %s17
    %p66 = scmp.eq.s32.totalorder %s65, 0
    %s68 = sadd.s32 %s67, 1
    %s69 = scalar_select %p66, %s67, %s68
    %p72 = pneg %p66
    %p73 = scmp.eq.s32.totalorder %s10, 1
    %p74 = por %p72, %p73
    %p75 = scmp.ne.s32.totalorder %s67, %s70
    %p76 = scmp.eq.s32.totalorder %s10, 0
    %p77 = por %p75, %p76
    %p78 = scmp.ne.s32.totalorder %s67, %s70
    %p79 = scmp.eq.s32.totalorder %s15, 1
    %p80 = por %p78, %p79
    %p81 = scmp.ne.s32.totalorder %s70, %s71
    %p82 = scmp.eq.s32.totalorder %s15, 0
    %p83 = por %p81, %p82
    %p84 = scmp.ne.s32.totalorder %s70, %s71
    %p85 = scmp.eq.s32.totalorder %s16, 1
    %p86 = por %p84, %p85
    %p88 = scmp.ne.s32.totalorder %s71, %s87
    %p89 = scmp.eq.s32.totalorder %s16, 0
    %p90 = por %p88, %p89
    %s91 = ssub.s32 %s10, %s17
    %p92 = scmp.eq.s32.totalorder %s91, 0
    %s94 = sadd.s32 %s93, 1
    %s95 = scalar_select %p92, %s93, %s94
    %p98 = pneg %p92
    %p99 = scmp.eq.s32.totalorder %s10, 1
    %p100 = por %p98, %p99
    %p101 = scmp.ne.s32.totalorder %s93, %s96
    %p102 = scmp.eq.s32.totalorder %s10, 0
    %p103 = por %p101, %p102
    %p104 = scmp.ne.s32.totalorder %s93, %s96
    %p105 = scmp.eq.s32.totalorder %s15, 1
    %p106 = por %p104, %p105
    %p107 = scmp.ne.s32.totalorder %s96, %s97
    %p108 = scmp.eq.s32.totalorder %s15, 0
    %p109 = por %p107, %p108
    %p110 = scmp.ne.s32.totalorder %s96, %s97
    %p111 = scmp.eq.s32.totalorder %s16, 1
    %p112 = por %p110, %p111
    %p114 = scmp.ne.s32.totalorder %s97, %s113
    %p115 = scmp.eq.s32.totalorder %s16, 0
    %p116 = por %p114, %p115
    %p117 = scmp.le.s32.totalorder 1, %s10
    %p118 = scmp.lt.s32.totalorder %s10, 3
    %p119 = pnand %p117, %p118
    %p120 = pneg %p119
    // Predicated region
    $region9: #{vgg_forward.15} parent=5 // pred_check
      _
    $region10: #{vgg_forward.15} parent=5 // pred_check_branch
      %122 = sbr.rel (%p119) target = $region12
    $region11: #{vgg_forward.15} parent=5 // pred_region
      %s123 = ssub.s32 %s10, 1
      // Predicated region
      $region13: #{vgg_forward.15} parent=11 // pred_check
        %p124 = pneg %p57
      $region14: #{vgg_forward.15} parent=11 // pred_check_branch
        %126 = sbr.rel (%p124) target = $region16
      $region15: #{vgg_forward.15} parent=11 // pred_region
        _
      $region16: #{vgg_forward.15} parent=11 // pred_fallthru
        _
    $region12: #{vgg_forward.15} parent=5 // pred_fallthru
      _
    %p127 = scmp.lt.s32.totalorder %s10, 2
    // Predicated region
    $region17: #{vgg_forward.15} parent=5 // pred_check
      %p128 = pneg %p127
    $region18: #{vgg_forward.15} parent=5 // pred_check_branch
      %130 = sbr.rel (%p128) target = $region20
    $region19: #{vgg_forward.15} parent=5 // pred_region
      // Predicated region
      $region21: #{vgg_forward.15} parent=19 // pred_check
        %p131 = pneg %p30
      $region22: #{vgg_forward.15} parent=19 // pred_check_branch
        %133 = sbr.rel (%p131) target = $region24
      $region23: #{vgg_forward.15} parent=19 // pred_region
        %p134 = scmp.lt.s32.totalorder %s10, 1
        %s135 = scalar_select %p134, %s10, 1
        %s136 = smul.addr %s135, 6
        %s137 = smul.addr %s136, 4
        %s138 = scalar_lea.vmem %s0, %s137
      $region24: #{vgg_forward.15} parent=19 // pred_fallthru
        _
    $region20: #{vgg_forward.15} parent=5 // pred_fallthru
      _
    %p139 = scmp.le.s32.totalorder 1, %s10
    %p140 = scmp.lt.s32.totalorder %s10, 3
    %p141 = pnand %p139, %p140
    %p142 = pneg %p141
    // Predicated region
    $region25: #{vgg_forward.15} parent=5 // pred_check
      _
    $region26: #{vgg_forward.15} parent=5 // pred_check_branch
      %144 = sbr.rel (%p141) target = $region28
    $region27: #{vgg_forward.15} parent=5 // pred_region
      %s145 = ssub.s32 %s10, 1
      %p146 = scmp.lt.s32.totalorder %s15, 1
      %s147 = scalar_select %p146, %s15, 1
      %s148 = smul.addr %s147, 6
      %s149 = smul.addr %s148, 4
      %s150 = scalar_lea.vmem %s0, %s149
      %p151 = pneg %p36
      %p152 = pneg %p33
      %p153 = pneg %p57
      %p154 = pneg %p54
      %p155 = pneg %p83
      %p156 = pneg %p80
      %p157 = scmp.lt.s32.totalorder %s15, 1
      %s158 = scalar_select %p157, %s15, 1
      %s159 = smul.addr %s158, 2
      %s160 = smul.addr %s159, 4
      %s161 = scalar_lea.vmem %s2, %s160
      %p162 = pneg %p109
      %p163 = pneg %p106
      %p164 = scmp.lt.s32.totalorder %s15, 1
      %s165 = scalar_select %p164, %s15, 1
      %s166 = smul.addr %s165, 2
      %s167 = scalar_lea.vmem %s3, %s166
      %p168 = scmp.lt.s32.totalorder %s15, 1
      %s169 = scalar_select %p168, %s15, 1
      %s170 = smul.addr %s169, 6
      %s171 = smul.addr %s170, 4
      %s172 = scalar_lea.vmem %s0, %s171
      %p173 = scmp.lt.s32.totalorder %s15, 1
      %s174 = scalar_select %p173, %s15, 1
      %s175 = smul.addr %s174, 2
      %s176 = smul.addr %s175, 4
      %s177 = scalar_lea.vmem %s2, %s176
      %p178 = scmp.lt.s32.totalorder %s15, 1
      %s179 = scalar_select %p178, %s15, 1
      %s180 = smul.addr %s179, 2
      %s181 = scalar_lea.vmem %s3, %s180
      %v183 = vld [vmem:[%s172] sm:$0x3]
      %v184 = vld [vmem:[%s172 + $0x4] sm:$0x3]
      %v185 = vld [vmem:[%s172 + $0x8] sm:$0x3]
      %v186 = vld [vmem:[%s172 + $0xc] sm:$0x3]
      %v187 = vld [vmem:[%s1] sm:$0xf]
      %v188 = vld [vmem:[%s1 + $0x4] sm:$0xf]
      %v189 = vld [vmem:[%s1 + $0x8] sm:$0xf]
      %v190 = vld [vmem:[%s1 + $0xc] sm:$0xf]
      %v191 = vld [vmem:[%s1 + $0x10] sm:$0xf]
      %v192 = vld [vmem:[%s1 + $0x14] sm:$0xf]
      %v193 = vld [vmem:[%s1 + $0x18] sm:$0xf]
      %v194 = vld [vmem:[%s1 + $0x1c] sm:$0xf]
      %v195 = vld [vmem:[%s1 + $0x20] sm:$0xf]
      %v196 = vld [vmem:[%s1 + $0x24] sm:$0xf]
      %v197 = vld [vmem:[%s1 + $0x28] sm:$0xf]
      %v198 = vld [vmem:[%s1 + $0x2c] sm:$0xf]
      %v199 = vld [vmem:[%s1 + $0x30] sm:$0xf]
      %v200 = vld [vmem:[%s1 + $0x34] sm:$0xf]
      %v201 = vld [vmem:[%s1 + $0x38] sm:$0xf]
      %v202 = vld [vmem:[%s1 + $0x3c] sm:$0xf]
      %v203 = vld [vmem:[%s172] sm:$0x7]
      %v204 = vld [vmem:[%s172 + $0x4] sm:$0x7]
      %v205 = vld [vmem:[%s172 + $0x8] sm:$0x7]
      %v206 = vld [vmem:[%s172 + $0xc] sm:$0x7]
      %v212 = vunpack.c.l.s4 1983009808
      %v213 = vunpack.c.0.s8 %v212
      %v214 = vlaneseq
      %v215 = vshrl.u32 %v214, 7
      %v216 = vsub.s32 %v213, %v215
      %v217 = vrot.slane %v203, %v216
      %v218 = vcombine.high %v217, %v217
      %v220 = vunpack.c.l.s4 1983009808
      %v221 = vunpack.c.0.s8 %v220
      %v222 = vlaneseq
      %v223 = vshrl.u32 %v222, 7
      %v224 = vsub.s32 %v221, %v223
      %v225 = vrot.slane %v204, %v224
      %v226 = vcombine.high %v225, %v225
      %v228 = vunpack.c.l.s4 1983009808
      %v229 = vunpack.c.0.s8 %v228
      %v230 = vlaneseq
      %v231 = vshrl.u32 %v230, 7
      %v232 = vsub.s32 %v229, %v231
      %v233 = vrot.slane %v205, %v232
      %v234 = vcombine.high %v233, %v233
      %v236 = vunpack.c.l.s4 1983009808
      %v237 = vunpack.c.0.s8 %v236
      %v238 = vlaneseq
      %v239 = vshrl.u32 %v238, 7
      %v240 = vsub.s32 %v237, %v239
      %v241 = vrot.slane %v206, %v240
      %v242 = vcombine.high %v241, %v241
      %vm243 = vsmask.f32 1280
      %vm244 = vsmask.f32 3336
      %vm245 = vmor %vm243, %vm244
      %vm246 = vsmask.f32 5392
      %vm247 = vmor %vm245, %vm246
      %vm248 = vsmask.f32 7448
      %vm249 = vmor %vm247, %vm248
      %v251 = vshrl.u32 %v217, 16
      %v253 = vrot.slane %v251, 6
      %v254 = vshll.u32 %v217, 16
      %v256 = vrot.slane %v254, 7
      %v257 = vor.u32 %v253, %v256
      %v258 = vrot.slane %v257, 2
      %v260 = vshll.u32 %v218, 16
      %v262 = vrot.slane %v260, 7
      %v263 = vsel %vm249, %v258, %v262
      %v265 = vshrl.u32 %v225, 16
      %v267 = vrot.slane %v265, 6
      %v268 = vshll.u32 %v225, 16
      %v270 = vrot.slane %v268, 7
      %v271 = vor.u32 %v267, %v270
      %v272 = vrot.slane %v271, 2
      %v274 = vshll.u32 %v226, 16
      %v276 = vrot.slane %v274, 7
      %v277 = vsel %vm249, %v272, %v276
      %v279 = vshrl.u32 %v233, 16
      %v281 = vrot.slane %v279, 6
      %v282 = vshll.u32 %v233, 16
      %v284 = vrot.slane %v282, 7
      %v285 = vor.u32 %v281, %v284
      %v286 = vrot.slane %v285, 2
      %v288 = vshll.u32 %v234, 16
      %v290 = vrot.slane %v288, 7
      %v291 = vsel %vm249, %v286, %v290
      %v293 = vshrl.u32 %v241, 16
      %v295 = vrot.slane %v293, 6
      %v296 = vshll.u32 %v241, 16
      %v298 = vrot.slane %v296, 7
      %v299 = vor.u32 %v295, %v298
      %v300 = vrot.slane %v299, 2
      %v302 = vshll.u32 %v242, 16
      %v304 = vrot.slane %v302, 7
      %v305 = vsel %vm249, %v300, %v304
      %s306 = scalar_lea.vmem %s1, 64
      %v307 = vld [vmem:[%s306] sm:$0xf]
      %v308 = vld [vmem:[%s306 + $0x4] sm:$0xf]
      %v309 = vld [vmem:[%s306 + $0x8] sm:$0xf]
      %v310 = vld [vmem:[%s306 + $0xc] sm:$0xf]
      %v311 = vld [vmem:[%s306 + $0x10] sm:$0xf]
      %v312 = vld [vmem:[%s306 + $0x14] sm:$0xf]
      %v313 = vld [vmem:[%s306 + $0x18] sm:$0xf]
      %v314 = vld [vmem:[%s306 + $0x1c] sm:$0xf]
      %v315 = vld [vmem:[%s306 + $0x20] sm:$0xf]
      %v316 = vld [vmem:[%s306 + $0x24] sm:$0xf]
      %v317 = vld [vmem:[%s306 + $0x28] sm:$0xf]
      %v318 = vld [vmem:[%s306 + $0x2c] sm:$0xf]
      %v319 = vld [vmem:[%s306 + $0x30] sm:$0xf]
      %v320 = vld [vmem:[%s306 + $0x34] sm:$0xf]
      %v321 = vld [vmem:[%s306 + $0x38] sm:$0xf]
      %v322 = vld [vmem:[%s306 + $0x3c] sm:$0xf]
      %v323 = vcombine.low %v263, %v277
      %v324 = vcombine.low %v291, %v305
      %v326 = vunpack.c.l.s4 1983009808
      %v327 = vunpack.c.0.s8 %v326
      %v328 = vlaneseq
      %v329 = vshrl.u32 %v328, 7
      %v330 = vsub.s32 %v327, %v329
      %v331 = vrot.slane %v323, %v330
      %v333 = vunpack.c.l.s4 1983009808
      %v334 = vunpack.c.0.s8 %v333
      %v335 = vlaneseq
      %v336 = vshrl.u32 %v335, 7
      %v337 = vsub.s32 %v334, %v336
      %v338 = vrot.slane %v324, %v337
      %v339 = vcombine.low %v331, %v338
      %v357 = vunpack.c.l.b16 %v307
      %v358 = vunpack.c.l.b16 %v308
      %v359 = vunpack.c.l.b16 %v309
      %v360 = vunpack.c.l.b16 %v310
      %v361 = vunpack.c.l.b16 %v311
      %v362 = vunpack.c.l.b16 %v312
      %v363 = vunpack.c.l.b16 %v313
      %v364 = vunpack.c.l.b16 %v314
      %v365 = vunpack.c.l.b16 %v315
      %v366 = vunpack.c.l.b16 %v316
      %v367 = vunpack.c.l.b16 %v317
      %v368 = vunpack.c.l.b16 %v318
      %v369 = vunpack.c.l.b16 %v319
      %v370 = vunpack.c.l.b16 %v320
      %v371 = vunpack.c.l.b16 %v321
      %v372 = vunpack.c.l.b16 %v322
      %v373 = vpack.c.b16 %v358, %v357
      %v374 = vpack.c.b16 %v360, %v359
      %v375 = vpack.c.b16 %v362, %v361
      %v376 = vpack.c.b16 %v364, %v363
      %v377 = vpack.c.b16 %v366, %v365
      %v378 = vpack.c.b16 %v368, %v367
      %v379 = vpack.c.b16 %v370, %v369
      %v380 = vpack.c.b16 %v372, %v371
      %389 = vmatprep.subr.bf16.mxu0 0
      %390 = vmatpush1.bf16.msra.mxu0 %v373
      %391 = vmatprep.subr.bf16.mxu0 0
      %392 = vmatpush1.bf16.msra.mxu0 %v374
      %393 = vmatprep.subr.bf16.mxu0 0
      %394 = vmatpush1.bf16.msra.mxu0 %v375
      %395 = vmatprep.subr.bf16.mxu0 0
      %396 = vmatpush1.bf16.msra.mxu0 %v376
      %397 = vmatprep.subr.bf16.mxu0 0
      %398 = vmatpush1.bf16.msra.mxu0 %v377
      %399 = vmatprep.subr.bf16.mxu0 0
      %400 = vmatpush1.bf16.msra.mxu0 %v378
      %401 = vmatprep.subr.bf16.mxu0 0
      %402 = vmatpush1.bf16.msra.mxu0 %v379
      %403 = vmatprep.subr.bf16.mxu0 0
      %404 = vmatpush1.bf16.msra.mxu0 %v380
      %405 = vmatprep.subr.bf16.mxu0 0
      %406 = vmatpush1.bf16.msra.mxu0 0
      %407 = vmatprep.subr.bf16.mxu0 0
      %408 = vmatpush1.bf16.msra.mxu0 0
      %409 = vmatprep.subr.bf16.mxu0 0
      %410 = vmatpush1.bf16.msra.mxu0 0
      %411 = vmatprep.subr.bf16.mxu0 0
      %412 = vmatpush1.bf16.msra.mxu0 0
      %413 = vmatprep.subr.bf16.mxu0 0
      %414 = vmatpush1.bf16.msra.mxu0 0
      %415 = vmatprep.subr.bf16.mxu0 0
      %416 = vmatpush1.bf16.msra.mxu0 0
      %417 = vmatprep.subr.bf16.mxu0 0
      %418 = vmatpush1.bf16.msra.mxu0 0
      %419 = vmatprep.subr.bf16.mxu0 0
      %420 = vmatpush1.bf16.msra.mxu0 0
      %421 = vmatprep.mubr.bf16.mxu0 0
      %422 = vmatmul.mubr.bf16.gmra.mrb[0].mxu0 %v339
      %v423 = vpop.f32.mrb[0].mxu0
      %v424 = vadd.f32 0.0, %v423
      %v425 = vpop.f32.mrb[0].mxu0
      %v426 = vpop.f32.mrb[0].mxu0
      %v427 = vadd.f32 0.0, %v426
      %v428 = vpop.f32.mrb[0].mxu0
      %429 = vdwg.mxu0
      %v434 = vcombine.low %v183, %v184
      %v435 = vcombine.low %v185, %v186
      %v437 = vunpack.c.l.s4 1983009808
      %v438 = vunpack.c.0.s8 %v437
      %v439 = vlaneseq
      %v440 = vshrl.u32 %v439, 7
      %v441 = vsub.s32 %v438, %v440
      %v442 = vrot.slane %v434, %v441
      %v444 = vunpack.c.l.s4 1983009808
      %v445 = vunpack.c.0.s8 %v444
      %v446 = vlaneseq
      %v447 = vshrl.u32 %v446, 7
      %v448 = vsub.s32 %v445, %v447
      %v449 = vrot.slane %v435, %v448
      %v450 = vcombine.low %v442, %v449
      %v468 = vunpack.c.l.b16 %v187
      %v469 = vunpack.c.l.b16 %v188
      %v470 = vunpack.c.l.b16 %v189
      %v471 = vunpack.c.l.b16 %v190
      %v472 = vunpack.c.l.b16 %v191
      %v473 = vunpack.c.l.b16 %v192
      %v474 = vunpack.c.l.b16 %v193
      %v475 = vunpack.c.l.b16 %v194
      %v476 = vunpack.c.l.b16 %v195
      %v477 = vunpack.c.l.b16 %v196
      %v478 = vunpack.c.l.b16 %v197
      %v479 = vunpack.c.l.b16 %v198
      %v480 = vunpack.c.l.b16 %v199
      %v481 = vunpack.c.l.b16 %v200
      %v482 = vunpack.c.l.b16 %v201
      %v483 = vunpack.c.l.b16 %v202
      %v484 = vpack.c.b16 %v469, %v468
      %v485 = vpack.c.b16 %v471, %v470
      %v486 = vpack.c.b16 %v473, %v472
      %v487 = vpack.c.b16 %v475, %v474
      %v488 = vpack.c.b16 %v477, %v476
      %v489 = vpack.c.b16 %v479, %v478
      %v490 = vpack.c.b16 %v481, %v480
      %v491 = vpack.c.b16 %v483, %v482
      %500 = vmatprep.subr.bf16.mxu0 0
      %501 = vmatpush1.bf16.msra.mxu0 %v484
      %502 = vmatprep.subr.bf16.mxu0 0
      %503 = vmatpush1.bf16.msra.mxu0 %v485
      %504 = vmatprep.subr.bf16.mxu0 0
      %505 = vmatpush1.bf16.msra.mxu0 %v486
      %506 = vmatprep.subr.bf16.mxu0 0
      %507 = vmatpush1.bf16.msra.mxu0 %v487
      %508 = vmatprep.subr.bf16.mxu0 0
      %509 = vmatpush1.bf16.msra.mxu0 %v488
      %510 = vmatprep.subr.bf16.mxu0 0
      %511 = vmatpush1.bf16.msra.mxu0 %v489
      %512 = vmatprep.subr.bf16.mxu0 0
      %513 = vmatpush1.bf16.msra.mxu0 %v490
      %514 = vmatprep.subr.bf16.mxu0 0
      %515 = vmatpush1.bf16.msra.mxu0 %v491
      %516 = vmatprep.subr.bf16.mxu0 0
      %517 = vmatpush1.bf16.msra.mxu0 0
      %518 = vmatprep.subr.bf16.mxu0 0
      %519 = vmatpush1.bf16.msra.mxu0 0
      %520 = vmatprep.subr.bf16.mxu0 0
      %521 = vmatpush1.bf16.msra.mxu0 0
      %522 = vmatprep.subr.bf16.mxu0 0
      %523 = vmatpush1.bf16.msra.mxu0 0
      %524 = vmatprep.subr.bf16.mxu0 0
      %525 = vmatpush1.bf16.msra.mxu0 0
      %526 = vmatprep.subr.bf16.mxu0 0
      %527 = vmatpush1.bf16.msra.mxu0 0
      %528 = vmatprep.subr.bf16.mxu0 0
      %529 = vmatpush1.bf16.msra.mxu0 0
      %530 = vmatprep.subr.bf16.mxu0 0
      %531 = vmatpush1.bf16.msra.mxu0 0
      %532 = vmatprep.mubr.bf16.mxu0 0
      %533 = vmatmul.mubr.bf16.gmra.mrb[0].mxu0 %v450
      %v534 = vpop.f32.mrb[0].mxu0
      %v535 = vadd.f32 %v424, %v534
      %v536 = vpop.f32.mrb[0].mxu0
      %v537 = vpop.f32.mrb[0].mxu0
      %v538 = vadd.f32 %v427, %v537
      %v539 = vpop.f32.mrb[0].mxu0
      %540 = vdwg.mxu0
      %v541 = vld [vmem:[%s172] sm:$0x6]
      %v542 = vld [vmem:[%s172 + $0x4] sm:$0x6]
      %v543 = vld [vmem:[%s172 + $0x8] sm:$0x6]
      %v544 = vld [vmem:[%s172 + $0xc] sm:$0x6]
      %v550 = vunpack.c.l.s4 1983009808
      %v551 = vunpack.c.0.s8 %v550
      %v552 = vlaneseq
      %v553 = vshrl.u32 %v552, 7
      %v554 = vsub.s32 %v551, %v553
      %v555 = vrot.slane %v541, %v554
      %v556 = vcombine.high %v555, %v555
      %v558 = vunpack.c.l.s4 1983009808
      %v559 = vunpack.c.0.s8 %v558
      %v560 = vlaneseq
      %v561 = vshrl.u32 %v560, 7
      %v562 = vsub.s32 %v559, %v561
      %v563 = vrot.slane %v542, %v562
      %v564 = vcombine.high %v563, %v563
      %v566 = vunpack.c.l.s4 1983009808
      %v567 = vunpack.c.0.s8 %v566
      %v568 = vlaneseq
      %v569 = vshrl.u32 %v568, 7
      %v570 = vsub.s32 %v567, %v569
      %v571 = vrot.slane %v543, %v570
      %v572 = vcombine.high %v571, %v571
      %v574 = vunpack.c.l.s4 1983009808
      %v575 = vunpack.c.0.s8 %v574
      %v576 = vlaneseq
      %v577 = vshrl.u32 %v576, 7
      %v578 = vsub.s32 %v575, %v577
      %v579 = vrot.slane %v544, %v578
      %v580 = vcombine.high %v579, %v579
      %vm581 = vcmask 1040384
      %vm582 = vcmask 1042434
      %vm583 = vmor %vm581, %vm582
      %vm584 = vcmask 1044484
      %vm585 = vmor %vm583, %vm584
      %vm586 = vcmask 1046534
      %vm587 = vmor %vm585, %vm586
      %v588 = vrot.slane %v555, 7
      %v589 = vrot.slane %v588, 2
      %v590 = vrot.slane %v556, 7
      %v591 = vsel %vm587, %v589, %v590
      %v592 = vrot.slane %v563, 7
      %v593 = vrot.slane %v592, 2
      %v594 = vrot.slane %v564, 7
      %v595 = vsel %vm587, %v593, %v594
      %v596 = vrot.slane %v571, 7
      %v597 = vrot.slane %v596, 2
      %v598 = vrot.slane %v572, 7
      %v599 = vsel %vm587, %v597, %v598
      %v600 = vrot.slane %v579, 7
      %v601 = vrot.slane %v600, 2
      %v602 = vrot.slane %v580, 7
      %v603 = vsel %vm587, %v601, %v602
      %s604 = scalar_lea.vmem %s1, 128
      %v605 = vld [vmem:[%s604] sm:$0xf]
      %v606 = vld [vmem:[%s604 + $0x4] sm:$0xf]
      %v607 = vld [vmem:[%s604 + $0x8] sm:$0xf]
      %v608 = vld [vmem:[%s604 + $0xc] sm:$0xf]
      %v609 = vld [vmem:[%s604 + $0x10] sm:$0xf]
      %v610 = vld [vmem:[%s604 + $0x14] sm:$0xf]
      %v611 = vld [vmem:[%s604 + $0x18] sm:$0xf]
      %v612 = vld [vmem:[%s604 + $0x1c] sm:$0xf]
      %v613 = vld [vmem:[%s604 + $0x20] sm:$0xf]
      %v614 = vld [vmem:[%s604 + $0x24] sm:$0xf]
      %v615 = vld [vmem:[%s604 + $0x28] sm:$0xf]
      %v616 = vld [vmem:[%s604 + $0x2c] sm:$0xf]
      %v617 = vld [vmem:[%s604 + $0x30] sm:$0xf]
      %v618 = vld [vmem:[%s604 + $0x34] sm:$0xf]
      %v619 = vld [vmem:[%s604 + $0x38] sm:$0xf]
      %v620 = vld [vmem:[%s604 + $0x3c] sm:$0xf]
      %v621 = vcombine.low %v591, %v595
      %v622 = vcombine.low %v599, %v603
      %v624 = vunpack.c.l.s4 1983009808
      %v625 = vunpack.c.0.s8 %v624
      %v626 = vlaneseq
      %v627 = vshrl.u32 %v626, 7
      %v628 = vsub.s32 %v625, %v627
      %v629 = vrot.slane %v621, %v628
      %v631 = vunpack.c.l.s4 1983009808
      %v632 = vunpack.c.0.s8 %v631
      %v633 = vlaneseq
      %v634 = vshrl.u32 %v633, 7
      %v635 = vsub.s32 %v632, %v634
      %v636 = vrot.slane %v622, %v635
      %v637 = vcombine.low %v629, %v636
      %v655 = vunpack.c.l.b16 %v605
      %v656 = vunpack.c.l.b16 %v606
      %v657 = vunpack.c.l.b16 %v607
      %v658 = vunpack.c.l.b16 %v608
      %v659 = vunpack.c.l.b16 %v609
      %v660 = vunpack.c.l.b16 %v610
      %v661 = vunpack.c.l.b16 %v611
      %v662 = vunpack.c.l.b16 %v612
      %v663 = vunpack.c.l.b16 %v613
      %v664 = vunpack.c.l.b16 %v614
      %v665 = vunpack.c.l.b16 %v615
      %v666 = vunpack.c.l.b16 %v616
      %v667 = vunpack.c.l.b16 %v617
      %v668 = vunpack.c.l.b16 %v618
      %v669 = vunpack.c.l.b16 %v619
      %v670 = vunpack.c.l.b16 %v620
      %v671 = vpack.c.b16 %v656, %v655
      %v672 = vpack.c.b16 %v658, %v657
      %v673 = vpack.c.b16 %v660, %v659
      %v674 = vpack.c.b16 %v662, %v661
      %v675 = vpack.c.b16 %v664, %v663
      %v676 = vpack.c.b16 %v666, %v665
      %v677 = vpack.c.b16 %v668, %v667
      %v678 = vpack.c.b16 %v670, %v669
      %687 = vmatprep.subr.bf16.mxu0 0
      %688 = vmatpush1.bf16.msra.mxu0 %v671
      %689 = vmatprep.subr.bf16.mxu0 0
      %690 = vmatpush1.bf16.msra.mxu0 %v672
      %691 = vmatprep.subr.bf16.mxu0 0
      %692 = vmatpush1.bf16.msra.mxu0 %v673
      %693 = vmatprep.subr.bf16.mxu0 0
      %694 = vmatpush1.bf16.msra.mxu0 %v674
      %695 = vmatprep.subr.bf16.mxu0 0
      %696 = vmatpush1.bf16.msra.mxu0 %v675
      %697 = vmatprep.subr.bf16.mxu0 0
      %698 = vmatpush1.bf16.msra.mxu0 %v676
      %699 = vmatprep.subr.bf16.mxu0 0
      %700 = vmatpush1.bf16.msra.mxu0 %v677
      %701 = vmatprep.subr.bf16.mxu0 0
      %702 = vmatpush1.bf16.msra.mxu0 %v678
      %703 = vmatprep.subr.bf16.mxu0 0
      %704 = vmatpush1.bf16.msra.mxu0 0
      %705 = vmatprep.subr.bf16.mxu0 0
      %706 = vmatpush1.bf16.msra.mxu0 0
      %707 = vmatprep.subr.bf16.mxu0 0
      %708 = vmatpush1.bf16.msra.mxu0 0
      %709 = vmatprep.subr.bf16.mxu0 0
      %710 = vmatpush1.bf16.msra.mxu0 0
      %711 = vmatprep.subr.bf16.mxu0 0
      %712 = vmatpush1.bf16.msra.mxu0 0
      %713 = vmatprep.subr.bf16.mxu0 0
      %714 = vmatpush1.bf16.msra.mxu0 0
      %715 = vmatprep.subr.bf16.mxu0 0
      %716 = vmatpush1.bf16.msra.mxu0 0
      %717 = vmatprep.subr.bf16.mxu0 0
      %718 = vmatpush1.bf16.msra.mxu0 0
      %719 = vmatprep.mubr.bf16.mxu0 0
      %720 = vmatmul.mubr.bf16.gmra.mrb[0].mxu0 %v637
      %v721 = vpop.f32.mrb[0].mxu0
      %v722 = vadd.f32 0.0, %v721
      %v723 = vpop.f32.mrb[0].mxu0
      %v724 = vpop.f32.mrb[0].mxu0
      %v725 = vadd.f32 0.0, %v724
      %v726 = vpop.f32.mrb[0].mxu0
      %727 = vdwg.mxu0
      %v728 = vadd.f32 %v535, %v722
      %v729 = vadd.f32 %v538, %v725
      %s730 = scalar_lea.vmem %s172, 4
      %v731 = vld [vmem:[%s730] sm:$0x3]
      %v732 = vld [vmem:[%s730 + $0x4] sm:$0x3]
      %v733 = vld [vmem:[%s730 + $0x8] sm:$0x3]
      %v734 = vld [vmem:[%s730 + $0xc] sm:$0x3]
      %s735 = scalar_lea.vmem %s1, 192
      %v736 = vld [vmem:[%s735] sm:$0xf]
      %v737 = vld [vmem:[%s735 + $0x4] sm:$0xf]
      %v738 = vld [vmem:[%s735 + $0x8] sm:$0xf]
      %v739 = vld [vmem:[%s735 + $0xc] sm:$0xf]
      %v740 = vld [vmem:[%s735 + $0x10] sm:$0xf]
      %v741 = vld [vmem:[%s735 + $0x14] sm:$0xf]
      %v742 = vld [vmem:[%s735 + $0x18] sm:$0xf]
      %v743 = vld [vmem:[%s735 + $0x1c] sm:$0xf]
      %v744 = vld [vmem:[%s735 + $0x20] sm:$0xf]
      %v745 = vld [vmem:[%s735 + $0x24] sm:$0xf]
      %v746 = vld [vmem:[%s735 + $0x28] sm:$0xf]
      %v747 = vld [vmem:[%s735 + $0x2c] sm:$0xf]
      %v748 = vld [vmem:[%s735 + $0x30] sm:$0xf]
      %v749 = vld [vmem:[%s735 + $0x34] sm:$0xf]
      %v750 = vld [vmem:[%s735 + $0x38] sm:$0xf]
      %v751 = vld [vmem:[%s735 + $0x3c] sm:$0xf]
      %v756 = vcombine.low %v731, %v732
      %v757 = vcombine.low %v733, %v734
      %v759 = vunpack.c.l.s4 1983009808
      %v760 = vunpack.c.0.s8 %v759
      %v761 = vlaneseq
      %v762 = vshrl.u32 %v761, 7
      %v763 = vsub.s32 %v760, %v762
      %v764 = vrot.slane %v756, %v763
      %v766 = vunpack.c.l.s4 1983009808
      %v767 = vunpack.c.0.s8 %v766
      %v768 = vlaneseq
      %v769 = vshrl.u32 %v768, 7
      %v770 = vsub.s32 %v767, %v769
      %v771 = vrot.slane %v757, %v770
      %v772 = vcombine.low %v764, %v771
      %v790 = vunpack.c.l.b16 %v736
      %v791 = vunpack.c.l.b16 %v737
      %v792 = vunpack.c.l.b16 %v738
      %v793 = vunpack.c.l.b16 %v739
      %v794 = vunpack.c.l.b16 %v740
      %v795 = vunpack.c.l.b16 %v741
      %v796 = vunpack.c.l.b16 %v742
      %v797 = vunpack.c.l.b16 %v743
      %v798 = vunpack.c.l.b16 %v744
      %v799 = vunpack.c.l.b16 %v745
      %v800 = vunpack.c.l.b16 %v746
      %v801 = vunpack.c.l.b16 %v747
      %v802 = vunpack.c.l.b16 %v748
      %v803 = vunpack.c.l.b16 %v749
      %v804 = vunpack.c.l.b16 %v750
      %v805 = vunpack.c.l.b16 %v751
      %v806 = vpack.c.b16 %v791, %v790
      %v807 = vpack.c.b16 %v793, %v792
      %v808 = vpack.c.b16 %v795, %v794
      %v809 = vpack.c.b16 %v797, %v796
      %v810 = vpack.c.b16 %v799, %v798
      %v811 = vpack.c.b16 %v801, %v800
      %v812 = vpack.c.b16 %v803, %v802
      %v813 = vpack.c.b16 %v805, %v804
      %822 = vmatprep.subr.bf16.mxu0 0
      %823 = vmatpush1.bf16.msra.mxu0 %v806
      %824 = vmatprep.subr.bf16.mxu0 0
      %825 = vmatpush1.bf16.msra.mxu0 %v807
      %826 = vmatprep.subr.bf16.mxu0 0
      %827 = vmatpush1.bf16.msra.mxu0 %v808
      %828 = vmatprep.subr.bf16.mxu0 0
      %829 = vmatpush1.bf16.msra.mxu0 %v809
      %830 = vmatprep.subr.bf16.mxu0 0
      %831 = vmatpush1.bf16.msra.mxu0 %v810
      %832 = vmatprep.subr.bf16.mxu0 0
      %833 = vmatpush1.bf16.msra.mxu0 %v811
      %834 = vmatprep.subr.bf16.mxu0 0
      %835 = vmatpush1.bf16.msra.mxu0 %v812
      %836 = vmatprep.subr.bf16.mxu0 0
      %837 = vmatpush1.bf16.msra.mxu0 %v813
      %838 = vmatprep.subr.bf16.mxu0 0
      %839 = vmatpush1.bf16.msra.mxu0 0
      %840 = vmatprep.subr.bf16.mxu0 0
      %841 = vmatpush1.bf16.msra.mxu0 0
      %842 = vmatprep.subr.bf16.mxu0 0
      %843 = vmatpush1.bf16.msra.mxu0 0
      %844 = vmatprep.subr.bf16.mxu0 0
      %845 = vmatpush1.bf16.msra.mxu0 0
      %846 = vmatprep.subr.bf16.mxu0 0
      %847 = vmatpush1.bf16.msra.mxu0 0
      %848 = vmatprep.subr.bf16.mxu0 0
      %849 = vmatpush1.bf16.msra.mxu0 0
      %850 = vmatprep.subr.bf16.mxu0 0
      %851 = vmatpush1.bf16.msra.mxu0 0
      %852 = vmatprep.subr.bf16.mxu0 0
      %853 = vmatpush1.bf16.msra.mxu0 0
      %854 = vmatprep.mubr.bf16.mxu0 0
      %855 = vmatmul.mubr.bf16.gmra.mrb[0].mxu0 %v772
      %v856 = vpop.f32.mrb[0].mxu0
      %v857 = vadd.f32 0.0, %v856
      %v858 = vpop.f32.mrb[0].mxu0
      %v859 = vpop.f32.mrb[0].mxu0
      %v860 = vadd.f32 0.0, %v859
      %v861 = vpop.f32.mrb[0].mxu0
      %862 = vdwg.mxu0
      %v863 = vadd.f32 %v728, %v857
      %v864 = vadd.f32 %v729, %v860
      %v865 = vld [vmem:[%s730] sm:$0x7]
      %v866 = vld [vmem:[%s730 + $0x4] sm:$0x7]
      %v867 = vld [vmem:[%s730 + $0x8] sm:$0x7]
      %v868 = vld [vmem:[%s730 + $0xc] sm:$0x7]
      %v874 = vunpack.c.l.s4 1983009808
      %v875 = vunpack.c.0.s8 %v874
      %v876 = vlaneseq
      %v877 = vshrl.u32 %v876, 7
      %v878 = vsub.s32 %v875, %v877
      %v879 = vrot.slane %v865, %v878
      %v880 = vcombine.high %v879, %v879
      %v882 = vunpack.c.l.s4 1983009808
      %v883 = vunpack.c.0.s8 %v882
      %v884 = vlaneseq
      %v885 = vshrl.u32 %v884, 7
      %v886 = vsub.s32 %v883, %v885
      %v887 = vrot.slane %v866, %v886
      %v888 = vcombine.high %v887, %v887
      %v890 = vunpack.c.l.s4 1983009808
      %v891 = vunpack.c.0.s8 %v890
      %v892 = vlaneseq
      %v893 = vshrl.u32 %v892, 7
      %v894 = vsub.s32 %v891, %v893
      %v895 = vrot.slane %v867, %v894
      %v896 = vcombine.high %v895, %v895
      %v898 = vunpack.c.l.s4 1983009808
      %v899 = vunpack.c.0.s8 %v898
      %v900 = vlaneseq
      %v901 = vshrl.u32 %v900, 7
      %v902 = vsub.s32 %v899, %v901
      %v903 = vrot.slane %v868, %v902
      %v904 = vcombine.high %v903, %v903
      %v906 = vshrl.u32 %v879, 16
      %v908 = vrot.slane %v906, 6
      %v909 = vshll.u32 %v879, 16
      %v911 = vrot.slane %v909, 7
      %v912 = vor.u32 %v908, %v911
      %v913 = vrot.slane %v912, 2
      %v915 = vshll.u32 %v880, 16
      %v917 = vrot.slane %v915, 7
      %v918 = vsel %vm249, %v913, %v917
      %v920 = vshrl.u32 %v887, 16
      %v922 = vrot.slane %v920, 6
      %v923 = vshll.u32 %v887, 16
      %v925 = vrot.slane %v923, 7
      %v926 = vor.u32 %v922, %v925
      %v927 = vrot.slane %v926, 2
      %v929 = vshll.u32 %v888, 16
      %v931 = vrot.slane %v929, 7
      %v932 = vsel %vm249, %v927, %v931
      %v934 = vshrl.u32 %v895, 16
      %v936 = vrot.slane %v934, 6
      %v937 = vshll.u32 %v895, 16
      %v939 = vrot.slane %v937, 7
      %v940 = vor.u32 %v936, %v939
      %v941 = vrot.slane %v940, 2
      %v943 = vshll.u32 %v896, 16
      %v945 = vrot.slane %v943, 7
      %v946 = vsel %vm249, %v941, %v945
      %v948 = vshrl.u32 %v903, 16
      %v950 = vrot.slane %v948, 6
      %v951 = vshll.u32 %v903, 16
      %v953 = vrot.slane %v951, 7
      %v954 = vor.u32 %v950, %v953
      %v955 = vrot.slane %v954, 2
      %v957 = vshll.u32 %v904, 16
      %v959 = vrot.slane %v957, 7
      %v960 = vsel %vm249, %v955, %v959
      %s961 = scalar_lea.vmem %s1, 256
      %v962 = vld [vmem:[%s961] sm:$0xf]
      %v963 = vld [vmem:[%s961 + $0x4] sm:$0xf]
      %v964 = vld [vmem:[%s961 + $0x8] sm:$0xf]
      %v965 = vld [vmem:[%s961 + $0xc] sm:$0xf]
      %v966 = vld [vmem:[%s961 + $0x10] sm:$0xf]
      %v967 = vld [vmem:[%s961 + $0x14] sm:$0xf]
      %v968 = vld [vmem:[%s961 + $0x18] sm:$0xf]
      %v969 = vld [vmem:[%s961 + $0x1c] sm:$0xf]
      %v970 = vld [vmem:[%s961 + $0x20] sm:$0xf]
      %v971 = vld [vmem:[%s961 + $0x24] sm:$0xf]
      %v972 = vld [vmem:[%s961 + $0x28] sm:$0xf]
      %v973 = vld [vmem:[%s961 + $0x2c] sm:$0xf]
      %v974 = vld [vmem:[%s961 + $0x30] sm:$0xf]
      %v975 = vld [vmem:[%s961 + $0x34] sm:$0xf]
      %v976 = vld [vmem:[%s961 + $0x38] sm:$0xf]
      %v977 = vld [vmem:[%s961 + $0x3c] sm:$0xf]
      %v978 = vcombine.low %v918, %v932
      %v979 = vcombine.low %v946, %v960
      %v981 = vunpack.c.l.s4 1983009808
      %v982 = vunpack.c.0.s8 %v981
      %v983 = vlaneseq
      %v984 = vshrl.u32 %v983, 7
      %v985 = vsub.s32 %v982, %v984
      %v986 = vrot.slane %v978, %v985
      %v988 = vunpack.c.l.s4 1983009808
      %v989 = vunpack.c.0.s8 %v988
      %v990 = vlaneseq
      %v991 = vshrl.u32 %v990, 7
      %v992 = vsub.s32 %v989, %v991
      %v993 = vrot.slane %v979, %v992
      %v994 = vcombine.low %v986, %v993
      %v1012 = vunpack.c.l.b16 %v962
      %v1013 = vunpack.c.l.b16 %v963
      %v1014 = vunpack.c.l.b16 %v964
      %v1015 = vunpack.c.l.b16 %v965
      %v1016 = vunpack.c.l.b16 %v966
      %v1017 = vunpack.c.l.b16 %v967
      %v1018 = vunpack.c.l.b16 %v968
      %v1019 = vunpack.c.l.b16 %v969
      %v1020 = vunpack.c.l.b16 %v970
      %v1021 = vunpack.c.l.b16 %v971
      %v1022 = vunpack.c.l.b16 %v972
      %v1023 = vunpack.c.l.b16 %v973
      %v1024 = vunpack.c.l.b16 %v974
      %v1025 = vunpack.c.l.b16 %v975
      %v1026 = vunpack.c.l.b16 %v976
      %v1027 = vunpack.c.l.b16 %v977
      %v1028 = vpack.c.b16 %v1013, %v1012
      %v1029 = vpack.c.b16 %v1015, %v1014
      %v1030 = vpack.c.b16 %v1017, %v1016
      %v1031 = vpack.c.b16 %v1019, %v1018
      %v1032 = vpack.c.b16 %v1021, %v1020
      %v1033 = vpack.c.b16 %v1023, %v1022
      %v1034 = vpack.c.b16 %v1025, %v1024
      %v1035 = vpack.c.b16 %v1027, %v1026
      %1044 = vmatprep.subr.bf16.mxu0 0
      %1045 = vmatpush1.bf16.msra.mxu0 %v1028
      %1046 = vmatprep.subr.bf16.mxu0 0
      %1047 = vmatpush1.bf16.msra.mxu0 %v1029
      %1048 = vmatprep.subr.bf16.mxu0 0
      %1049 = vmatpush1.bf16.msra.mxu0 %v1030
      %1050 = vmatprep.subr.bf16.mxu0 0
      %1051 = vmatpush1.bf16.msra.mxu0 %v1031
      %1052 = vmatprep.subr.bf16.mxu0 0
      %1053 = vmatpush1.bf16.msra.mxu0 %v1032
      %1054 = vmatprep.subr.bf16.mxu0 0
      %1055 = vmatpush1.bf16.msra.mxu0 %v1033
      %1056 = vmatprep.subr.bf16.mxu0 0
      %1057 = vmatpush1.bf16.msra.mxu0 %v1034
      %1058 = vmatprep.subr.bf16.mxu0 0
      %1059 = vmatpush1.bf16.msra.mxu0 %v1035
      %1060 = vmatprep.subr.bf16.mxu0 0
      %1061 = vmatpush1.bf16.msra.mxu0 0
      %1062 = vmatprep.subr.bf16.mxu0 0
      %1063 = vmatpush1.bf16.msra.mxu0 0
      %1064 = vmatprep.subr.bf16.mxu0 0
      %1065 = vmatpush1.bf16.msra.mxu0 0
      %1066 = vmatprep.subr.bf16.mxu0 0
      %1067 = vmatpush1.bf16.msra.mxu0 0
      %1068 = vmatprep.subr.bf16.mxu0 0
      %1069 = vmatpush1.bf16.msra.mxu0 0
      %1070 = vmatprep.subr.bf16.mxu0 0
      %1071 = vmatpush1.bf16.msra.mxu0 0
      %1072 = vmatprep.subr.bf16.mxu0 0
      %1073 = vmatpush1.bf16.msra.mxu0 0
      %1074 = vmatprep.subr.bf16.mxu0 0
      %1075 = vmatpush1.bf16.msra.mxu0 0
      %1076 = vmatprep.mubr.bf16.mxu0 0
      %1077 = vmatmul.mubr.bf16.gmra.mrb[0].mxu0 %v994
      %v1078 = vpop.f32.mrb[0].mxu0
      %v1079 = vadd.f32 0.0, %v1078
      %v1080 = vpop.f32.mrb[0].mxu0
      %v1081 = vpop.f32.mrb[0].mxu0
      %v1082 = vadd.f32 0.0, %v1081
      %v1083 = vpop.f32.mrb[0].mxu0
      %1084 = vdwg.mxu0
      %v1085 = vadd.f32 %v863, %v1079
      %v1086 = vadd.f32 %v864, %v1082
      %v1087 = vld [vmem:[%s730] sm:$0x6]
      %v1088 = vld [vmem:[%s730 + $0x4] sm:$0x6]
      %v1089 = vld [vmem:[%s730 + $0x8] sm:$0x6]
      %v1090 = vld [vmem:[%s730 + $0xc] sm:$0x6]
      %v1096 = vunpack.c.l.s4 1983009808
      %v1097 = vunpack.c.0.s8 %v1096
      %v1098 = vlaneseq
      %v1099 = vshrl.u32 %v1098, 7
      %v1100 = vsub.s32 %v1097, %v1099
      %v1101 = vrot.slane %v1087, %v1100
      %v1102 = vcombine.high %v1101, %v1101
      %v1104 = vunpack.c.l.s4 1983009808
      %v1105 = vunpack.c.0.s8 %v1104
      %v1106 = vlaneseq
      %v1107 = vshrl.u32 %v1106, 7
      %v1108 = vsub.s32 %v1105, %v1107
      %v1109 = vrot.slane %v1088, %v1108
      %v1110 = vcombine.high %v1109, %v1109
      %v1112 = vunpack.c.l.s4 1983009808
      %v1113 = vunpack.c.0.s8 %v1112
      %v1114 = vlaneseq
      %v1115 = vshrl.u32 %v1114, 7
      %v1116 = vsub.s32 %v1113, %v1115
      %v1117 = vrot.slane %v1089, %v1116
      %v1118 = vcombine.high %v1117, %v1117
      %v1120 = vunpack.c.l.s4 1983009808
      %v1121 = vunpack.c.0.s8 %v1120
      %v1122 = vlaneseq
      %v1123 = vshrl.u32 %v1122, 7
      %v1124 = vsub.s32 %v1121, %v1123
      %v1125 = vrot.slane %v1090, %v1124
      %v1126 = vcombine.high %v1125, %v1125
      %v1127 = vrot.slane %v1101, 7
      %v1128 = vrot.slane %v1127, 2
      %v1129 = vrot.slane %v1102, 7
      %v1130 = vsel %vm587, %v1128, %v1129
      %v1131 = vrot.slane %v1109, 7
      %v1132 = vrot.slane %v1131, 2
      %v1133 = vrot.slane %v1110, 7
      %v1134 = vsel %vm587, %v1132, %v1133
      %v1135 = vrot.slane %v1117, 7
      %v1136 = vrot.slane %v1135, 2
      %v1137 = vrot.slane %v1118, 7
      %v1138 = vsel %vm587, %v1136, %v1137
      %v1139 = vrot.slane %v1125, 7
      %v1140 = vrot.slane %v1139, 2
      %v1141 = vrot.slane %v1126, 7
      %v1142 = vsel %vm587, %v1140, %v1141
      %s1143 = scalar_lea.vmem %s1, 320
      %v1144 = vld [vmem:[%s1143] sm:$0xf]
      %v1145 = vld [vmem:[%s1143 + $0x4] sm:$0xf]
      %v1146 = vld [vmem:[%s1143 + $0x8] sm:$0xf]
      %v1147 = vld [vmem:[%s1143 + $0xc] sm:$0xf]
      %v1148 = vld [vmem:[%s1143 + $0x10] sm:$0xf]
      %v1149 = vld [vmem:[%s1143 + $0x14] sm:$0xf]
      %v1150 = vld [vmem:[%s1143 + $0x18] sm:$0xf]
      %v1151 = vld [vmem:[%s1143 + $0x1c] sm:$0xf]
      %v1152 = vld [vmem:[%s1143 + $0x20] sm:$0xf]
      %v1153 = vld [vmem:[%s1143 + $0x24] sm:$0xf]
      %v1154 = vld [vmem:[%s1143 + $0x28] sm:$0xf]
      %v1155 = vld [vmem:[%s1143 + $0x2c] sm:$0xf]
      %v1156 = vld [vmem:[%s1143 + $0x30] sm:$0xf]
      %v1157 = vld [vmem:[%s1143 + $0x34] sm:$0xf]
      %v1158 = vld [vmem:[%s1143 + $0x38] sm:$0xf]
      %v1159 = vld [vmem:[%s1143 + $0x3c] sm:$0xf]
      %v1160 = vcombine.low %v1130, %v1134
      %v1161 = vcombine.low %v1138, %v1142
      %v1163 = vunpack.c.l.s4 1983009808
      %v1164 = vunpack.c.0.s8 %v1163
      %v1165 = vlaneseq
      %v1166 = vshrl.u32 %v1165, 7
      %v1167 = vsub.s32 %v1164, %v1166
      %v1168 = vrot.slane %v1160, %v1167
      %v1170 = vunpack.c.l.s4 1983009808
      %v1171 = vunpack.c.0.s8 %v1170
      %v1172 = vlaneseq
      %v1173 = vshrl.u32 %v1172, 7
      %v1174 = vsub.s32 %v1171, %v1173
      %v1175 = vrot.slane %v1161, %v1174
      %v1176 = vcombine.low %v1168, %v1175
      %v1194 = vunpack.c.l.b16 %v1144
      %v1195 = vunpack.c.l.b16 %v1145
      %v1196 = vunpack.c.l.b16 %v1146
      %v1197 = vunpack.c.l.b16 %v1147
      %v1198 = vunpack.c.l.b16 %v1148
      %v1199 = vunpack.c.l.b16 %v1149
      %v1200 = vunpack.c.l.b16 %v1150
      %v1201 = vunpack.c.l.b16 %v1151
      %v1202 = vunpack.c.l.b16 %v1152
      %v1203 = vunpack.c.l.b16 %v1153
      %v1204 = vunpack.c.l.b16 %v1154
      %v1205 = vunpack.c.l.b16 %v1155
      %v1206 = vunpack.c.l.b16 %v1156
      %v1207 = vunpack.c.l.b16 %v1157
      %v1208 = vunpack.c.l.b16 %v1158
      %v1209 = vunpack.c.l.b16 %v1159
      %v1210 = vpack.c.b16 %v1195, %v1194
      %v1211 = vpack.c.b16 %v1197, %v1196
      %v1212 = vpack.c.b16 %v1199, %v1198
      %v1213 = vpack.c.b16 %v1201, %v1200
      %v1214 = vpack.c.b16 %v1203, %v1202
      %v1215 = vpack.c.b16 %v1205, %v1204
      %v1216 = vpack.c.b16 %v1207, %v1206
      %v1217 = vpack.c.b16 %v1209, %v1208
      %1226 = vmatprep.subr.bf16.mxu0 0
      %1227 = vmatpush1.bf16.msra.mxu0 %v1210
      %1228 = vmatprep.subr.bf16.mxu0 0
      %1229 = vmatpush1.bf16.msra.mxu0 %v1211
      %1230 = vmatprep.subr.bf16.mxu0 0
      %1231 = vmatpush1.bf16.msra.mxu0 %v1212
      %1232 = vmatprep.subr.bf16.mxu0 0
      %1233 = vmatpush1.bf16.msra.mxu0 %v1213
      %1234 = vmatprep.subr.bf16.mxu0 0
      %1235 = vmatpush1.bf16.msra.mxu0 %v1214
      %1236 = vmatprep.subr.bf16.mxu0 0
      %1237 = vmatpush1.bf16.msra.mxu0 %v1215
      %1238 = vmatprep.subr.bf16.mxu0 0
      %1239 = vmatpush1.bf16.msra.mxu0 %v1216
      %1240 = vmatprep.subr.bf16.mxu0 0
      %1241 = vmatpush1.bf16.msra.mxu0 %v1217
      %1242 = vmatprep.subr.bf16.mxu0 0
      %1243 = vmatpush1.bf16.msra.mxu0 0
      %1244 = vmatprep.subr.bf16.mxu0 0
      %1245 = vmatpush1.bf16.msra.mxu0 0
      %1246 = vmatprep.subr.bf16.mxu0 0
      %1247 = vmatpush1.bf16.msra.mxu0 0
      %1248 = vmatprep.subr.bf16.mxu0 0
      %1249 = vmatpush1.bf16.msra.mxu0 0
      %1250 = vmatprep.subr.bf16.mxu0 0
      %1251 = vmatpush1.bf16.msra.mxu0 0
      %1252 = vmatprep.subr.bf16.mxu0 0
      %1253 = vmatpush1.bf16.msra.mxu0 0
      %1254 = vmatprep.subr.bf16.mxu0 0
      %1255 = vmatpush1.bf16.msra.mxu0 0
      %1256 = vmatprep.subr.bf16.mxu0 0
      %1257 = vmatpush1.bf16.msra.mxu0 0
      %1258 = vmatprep.mubr.bf16.mxu0 0
      %1259 = vmatmul.mubr.bf16.gmra.mrb[0].mxu0 %v1176
      %v1260 = vpop.f32.mrb[0].mxu0
      %v1261 = vadd.f32 0.0, %v1260
      %v1262 = vpop.f32.mrb[0].mxu0
      %v1263 = vpop.f32.mrb[0].mxu0
      %v1264 = vadd.f32 0.0, %v1263
      %v1265 = vpop.f32.mrb[0].mxu0
      %1266 = vdwg.mxu0
      %v1267 = vadd.f32 %v1085, %v1261
      %v1268 = vadd.f32 %v1086, %v1264
      %s1269 = scalar_lea.vmem %s172, 8
      %v1270 = vld [vmem:[%s1269] sm:$0x3]
      %v1271 = vld [vmem:[%s1269 + $0x4] sm:$0x3]
      %v1272 = vld [vmem:[%s1269 + $0x8] sm:$0x3]
      %v1273 = vld [vmem:[%s1269 + $0xc] sm:$0x3]
      %s1274 = scalar_lea.vmem %s1, 384
      %v1275 = vld [vmem:[%s1274] sm:$0xf]
      %v1276 = vld [vmem:[%s1274 + $0x4] sm:$0xf]
      %v1277 = vld [vmem:[%s1274 + $0x8] sm:$0xf]
      %v1278 = vld [vmem:[%s1274 + $0xc] sm:$0xf]
      %v1279 = vld [vmem:[%s1274 + $0x10] sm:$0xf]
      %v1280 = vld [vmem:[%s1274 + $0x14] sm:$0xf]
      %v1281 = vld [vmem:[%s1274 + $0x18] sm:$0xf]
      %v1282 = vld [vmem:[%s1274 + $0x1c] sm:$0xf]
      %v1283 = vld [vmem:[%s1274 + $0x20] sm:$0xf]
      %v1284 = vld [vmem:[%s1274 + $0x24] sm:$0xf]
      %v1285 = vld [vmem:[%s1274 + $0x28] sm:$0xf]
      %v1286 = vld [vmem:[%s1274 + $0x2c] sm:$0xf]
      %v1287 = vld [vmem:[%s1274 + $0x30] sm:$0xf]
      %v1288 = vld [vmem:[%s1274 + $0x34] sm:$0xf]
      %v1289 = vld [vmem:[%s1274 + $0x38] sm:$0xf]
      %v1290 = vld [vmem:[%s1274 + $0x3c] sm:$0xf]
      %v1295 = vcombine.low %v1270, %v1271
      %v1296 = vcombine.low %v1272, %v1273
      %v1298 = vunpack.c.l.s4 1983009808
      %v1299 = vunpack.c.0.s8 %v1298
      %v1300 = vlaneseq
      %v1301 = vshrl.u32 %v1300, 7
      %v1302 = vsub.s32 %v1299, %v1301
      %v1303 = vrot.slane %v1295, %v1302
      %v1305 = vunpack.c.l.s4 1983009808
      %v1306 = vunpack.c.0.s8 %v1305
      %v1307 = vlaneseq
      %v1308 = vshrl.u32 %v1307, 7
      %v1309 = vsub.s32 %v1306, %v1308
      %v1310 = vrot.slane %v1296, %v1309
      %v1311 = vcombine.low %v1303, %v1310
      %v1329 = vunpack.c.l.b16 %v1275
      %v1330 = vunpack.c.l.b16 %v1276
      %v1331 = vunpack.c.l.b16 %v1277
      %v1332 = vunpack.c.l.b16 %v1278
      %v1333 = vunpack.c.l.b16 %v1279
      %v1334 = vunpack.c.l.b16 %v1280
      %v1335 = vunpack.c.l.b16 %v1281
      %v1336 = vunpack.c.l.b16 %v1282
      %v1337 = vunpack.c.l.b16 %v1283
      %v1338 = vunpack.c.l.b16 %v1284
      %v1339 = vunpack.c.l.b16 %v1285
      %v1340 = vunpack.c.l.b16 %v1286
      %v1341 = vunpack.c.l.b16 %v1287
      %v1342 = vunpack.c.l.b16 %v1288
      %v1343 = vunpack.c.l.b16 %v1289
      %v1344 = vunpack.c.l.b16 %v1290
      %v1345 = vpack.c.b16 %v1330, %v1329
      %v1346 = vpack.c.b16 %v1332, %v1331
      %v1347 = vpack.c.b16 %v1334, %v1333
      %v1348 = vpack.c.b16 %v1336, %v1335
      %v1349 = vpack.c.b16 %v1338, %v1337
      %v1350 = vpack.c.b16 %v1340, %v1339
      %v1351 = vpack.c.b16 %v1342, %v1341
      %v1352 = vpack.c.b16 %v1344, %v1343
      %1361 = vmatprep.subr.bf16.mxu0 0
      %1362 = vmatpush1.bf16.msra.mxu0 %v1345
      %1363 = vmatprep.subr.bf16.mxu0 0
      %1364 = vmatpush1.bf16.msra.mxu0 %v1346
      %1365 = vmatprep.subr.bf16.mxu0 0
      %1366 = vmatpush1.bf16.msra.mxu0 %v1347
      %1367 = vmatprep.subr.bf16.mxu0 0
      %1368 = vmatpush1.bf16.msra.mxu0 %v1348
      %1369 = vmatprep.subr.bf16.mxu0 0
      %1370 = vmatpush1.bf16.msra.mxu0 %v1349
      %1371 = vmatprep.subr.bf16.mxu0 0
      %1372 = vmatpush1.bf16.msra.mxu0 %v1350
      %1373 = vmatprep.subr.bf16.mxu0 0
      %1374 = vmatpush1.bf16.msra.mxu0 %v1351
      %1375 = vmatprep.subr.bf16.mxu0 0
      %1376 = vmatpush1.bf16.msra.mxu0 %v1352
      %1377 = vmatprep.subr.bf16.mxu0 0
      %1378 = vmatpush1.bf16.msra.mxu0 0
      %1379 = vmatprep.subr.bf16.mxu0 0
      %1380 = vmatpush1.bf16.msra.mxu0 0
      %1381 = vmatprep.subr.bf16.mxu0 0
      %1382 = vmatpush1.bf16.msra.mxu0 0
      %1383 = vmatprep.subr.bf16.mxu0 0
      %1384 = vmatpush1.bf16.msra.mxu0 0
      %1385 = vmatprep.subr.bf16.mxu0 0
      %1386 = vmatpush1.bf16.msra.mxu0 0
      %1387 = vmatprep.subr.bf16.mxu0 0
      %1388 = vmatpush1.bf16.msra.mxu0 0
      %1389 = vmatprep.subr.bf16.mxu0 0
      %1390 = vmatpush1.bf16.msra.mxu0 0
      %1391 = vmatprep.subr.bf16.mxu0 0
      %1392 = vmatpush1.bf16.msra.mxu0 0
      %1393 = vmatprep.mubr.bf16.mxu0 0
      %1394 = vmatmul.mubr.bf16.gmra.mrb[0].mxu0 %v1311
      %v1395 = vpop.f32.mrb[0].mxu0
      %v1396 = vadd.f32 0.0, %v1395
      %v1397 = vpop.f32.mrb[0].mxu0
      %v1398 = vpop.f32.mrb[0].mxu0
      %v1399 = vadd.f32 0.0, %v1398
      %v1400 = vpop.f32.mrb[0].mxu0
      %1401 = vdwg.mxu0
      %v1402 = vadd.f32 %v1267, %v1396
      %v1403 = vadd.f32 %v1268, %v1399
      %v1404 = vld [vmem:[%s1269] sm:$0x7]
      %v1405 = vld [vmem:[%s1269 + $0x4] sm:$0x7]
      %v1406 = vld [vmem:[%s1269 + $0x8] sm:$0x7]
      %v1407 = vld [vmem:[%s1269 + $0xc] sm:$0x7]
      %v1413 = vunpack.c.l.s4 1983009808
      %v1414 = vunpack.c.0.s8 %v1413
      %v1415 = vlaneseq
      %v1416 = vshrl.u32 %v1415, 7
      %v1417 = vsub.s32 %v1414, %v1416
      %v1418 = vrot.slane %v1404, %v1417
      %v1419 = vcombine.high %v1418, %v1418
      %v1421 = vunpack.c.l.s4 1983009808
      %v1422 = vunpack.c.0.s8 %v1421
      %v1423 = vlaneseq
      %v1424 = vshrl.u32 %v1423, 7
      %v1425 = vsub.s32 %v1422, %v1424
      %v1426 = vrot.slane %v1405, %v1425
      %v1427 = vcombine.high %v1426, %v1426
      %v1429 = vunpack.c.l.s4 1983009808
      %v1430 = vunpack.c.0.s8 %v1429
      %v1431 = vlaneseq
      %v1432 = vshrl.u32 %v1431, 7
      %v1433 = vsub.s32 %v1430, %v1432
      %v1434 = vrot.slane %v1406, %v1433
      %v1435 = vcombine.high %v1434, %v1434
      %v1437 = vunpack.c.l.s4 1983009808
      %v1438 = vunpack.c.0.s8 %v1437
      %v1439 = vlaneseq
      %v1440 = vshrl.u32 %v1439, 7
      %v1441 = vsub.s32 %v1438, %v1440
      %v1442 = vrot.slane %v1407, %v1441
      %v1443 = vcombine.high %v1442, %v1442
      %v1445 = vshrl.u32 %v1418, 16
      %v1447 = vrot.slane %v1445, 6
      %v1448 = vshll.u32 %v1418, 16
      %v1450 = vrot.slane %v1448, 7
      %v1451 = vor.u32 %v1447, %v1450
      %v1452 = vrot.slane %v1451, 2
      %v1454 = vshll.u32 %v1419, 16
      %v1456 = vrot.slane %v1454, 7
      %v1457 = vsel %vm249, %v1452, %v1456
      %v1459 = vshrl.u32 %v1426, 16
      %v1461 = vrot.slane %v1459, 6
      %v1462 = vshll.u32 %v1426, 16
      %v1464 = vrot.slane %v1462, 7
      %v1465 = vor.u32 %v1461, %v1464
      %v1466 = vrot.slane %v1465, 2
      %v1468 = vshll.u32 %v1427, 16
      %v1470 = vrot.slane %v1468, 7
      %v1471 = vsel %vm249, %v1466, %v1470
      %v1473 = vshrl.u32 %v1434, 16
      %v1475 = vrot.slane %v1473, 6
      %v1476 = vshll.u32 %v1434, 16
      %v1478 = vrot.slane %v1476, 7
      %v1479 = vor.u32 %v1475, %v1478
      %v1480 = vrot.slane %v1479, 2
      %v1482 = vshll.u32 %v1435, 16
      %v1484 = vrot.slane %v1482, 7
      %v1485 = vsel %vm249, %v1480, %v1484
      %v1487 = vshrl.u32 %v1442, 16
      %v1489 = vrot.slane %v1487, 6
      %v1490 = vshll.u32 %v1442, 16
      %v1492 = vrot.slane %v1490, 7
      %v1493 = vor.u32 %v1489, %v1492
      %v1494 = vrot.slane %v1493, 2
      %v1496 = vshll.u32 %v1443, 16
      %v1498 = vrot.slane %v1496, 7
      %v1499 = vsel %vm249, %v1494, %v1498
      %s1500 = scalar_lea.vmem %s1, 448
      %v1501 = vld [vmem:[%s1500] sm:$0xf]
      %v1502 = vld [vmem:[%s1500 + $0x4] sm:$0xf]
      %v1503 = vld [vmem:[%s1500 + $0x8] sm:$0xf]
      %v1504 = vld [vmem:[%s1500 + $0xc] sm:$0xf]
      %v1505 = vld [vmem:[%s1500 + $0x10] sm:$0xf]
      %v1506 = vld [vmem:[%s1500 + $0x14] sm:$0xf]
      %v1507 = vld [vmem:[%s1500 + $0x18] sm:$0xf]
      %v1508 = vld [vmem:[%s1500 + $0x1c] sm:$0xf]
      %v1509 = vld [vmem:[%s1500 + $0x20] sm:$0xf]
      %v1510 = vld [vmem:[%s1500 + $0x24] sm:$0xf]
      %v1511 = vld [vmem:[%s1500 + $0x28] sm:$0xf]
      %v1512 = vld [vmem:[%s1500 + $0x2c] sm:$0xf]
      %v1513 = vld [vmem:[%s1500 + $0x30] sm:$0xf]
      %v1514 = vld [vmem:[%s1500 + $0x34] sm:$0xf]
      %v1515 = vld [vmem:[%s1500 + $0x38] sm:$0xf]
      %v1516 = vld [vmem:[%s1500 + $0x3c] sm:$0xf]
      %v1517 = vcombine.low %v1457, %v1471
      %v1518 = vcombine.low %v1485, %v1499
      %v1520 = vunpack.c.l.s4 1983009808
      %v1521 = vunpack.c.0.s8 %v1520
      %v1522 = vlaneseq
      %v1523 = vshrl.u32 %v1522, 7
      %v1524 = vsub.s32 %v1521, %v1523
      %v1525 = vrot.slane %v1517, %v1524
      %v1527 = vunpack.c.l.s4 1983009808
      %v1528 = vunpack.c.0.s8 %v1527
      %v1529 = vlaneseq
      %v1530 = vshrl.u32 %v1529, 7
      %v1531 = vsub.s32 %v1528, %v1530
      %v1532 = vrot.slane %v1518, %v1531
      %v1533 = vcombine.low %v1525, %v1532
      %v1551 = vunpack.c.l.b16 %v1501
      %v1552 = vunpack.c.l.b16 %v1502
      %v1553 = vunpack.c.l.b16 %v1503
      %v1554 = vunpack.c.l.b16 %v1504
      %v1555 = vunpack.c.l.b16 %v1505
      %v1556 = vunpack.c.l.b16 %v1506
      %v1557 = vunpack.c.l.b16 %v1507
      %v1558 = vunpack.c.l.b16 %v1508
      %v1559 = vunpack.c.l.b16 %v1509
      %v1560 = vunpack.c.l.b16 %v1510
      %v1561 = vunpack.c.l.b16 %v1511
      %v1562 = vunpack.c.l.b16 %v1512
      %v1563 = vunpack.c.l.b16 %v1513
      %v1564 = vunpack.c.l.b16 %v1514
      %v1565 = vunpack.c.l.b16 %v1515
      %v1566 = vunpack.c.l.b16 %v1516
      %v1567 = vpack.c.b16 %v1552, %v1551
      %v1568 = vpack.c.b16 %v1554, %v1553
      %v1569 = vpack.c.b16 %v1556, %v1555
      %v1570 = vpack.c.b16 %v1558, %v1557
      %v1571 = vpack.c.b16 %v1560, %v1559
      %v1572 = vpack.c.b16 %v1562, %v1561
      %v1573 = vpack.c.b16 %v1564, %v1563
      %v1574 = vpack.c.b16 %v1566, %v1565
      %1583 = vmatprep.subr.bf16.mxu0 0
      %1584 = vmatpush1.bf16.msra.mxu0 %v1567
      %1585 = vmatprep.subr.bf16.mxu0 0
      %1586 = vmatpush1.bf16.msra.mxu0 %v1568
      %1587 = vmatprep.subr.bf16.mxu0 0
      %1588 = vmatpush1.bf16.msra.mxu0 %v1569
      %1589 = vmatprep.subr.bf16.mxu0 0
      %1590 = vmatpush1.bf16.msra.mxu0 %v1570
      %1591 = vmatprep.subr.bf16.mxu0 0
      %1592 = vmatpush1.bf16.msra.mxu0 %v1571
      %1593 = vmatprep.subr.bf16.mxu0 0
      %1594 = vmatpush1.bf16.msra.mxu0 %v1572
      %1595 = vmatprep.subr.bf16.mxu0 0
      %1596 = vmatpush1.bf16.msra.mxu0 %v1573
      %1597 = vmatprep.subr.bf16.mxu0 0
      %1598 = vmatpush1.bf16.msra.mxu0 %v1574
      %1599 = vmatprep.subr.bf16.mxu0 0
      %1600 = vmatpush1.bf16.msra.mxu0 0
      %1601 = vmatprep.subr.bf16.mxu0 0
      %1602 = vmatpush1.bf16.msra.mxu0 0
      %1603 = vmatprep.subr.bf16.mxu0 0
      %1604 = vmatpush1.bf16.msra.mxu0 0
      %1605 = vmatprep.subr.bf16.mxu0 0
      %1606 = vmatpush1.bf16.msra.mxu0 0
      %1607 = vmatprep.subr.bf16.mxu0 0
      %1608 = vmatpush1.bf16.msra.mxu0 0
      %1609 = vmatprep.subr.bf16.mxu0 0
      %1610 = vmatpush1.bf16.msra.mxu0 0
      %1611 = vmatprep.subr.bf16.mxu0 0
      %1612 = vmatpush1.bf16.msra.mxu0 0
      %1613 = vmatprep.subr.bf16.mxu0 0
      %1614 = vmatpush1.bf16.msra.mxu0 0
      %1615 = vmatprep.mubr.bf16.mxu0 0
      %1616 = vmatmul.mubr.bf16.gmra.mrb[0].mxu0 %v1533
      %v1617 = vpop.f32.mrb[0].mxu0
      %v1618 = vadd.f32 0.0, %v1617
      %v1619 = vpop.f32.mrb[0].mxu0
      %v1620 = vpop.f32.mrb[0].mxu0
      %v1621 = vadd.f32 0.0, %v1620
      %v1622 = vpop.f32.mrb[0].mxu0
      %1623 = vdwg.mxu0
      %v1624 = vadd.f32 %v1402, %v1618
      %v1625 = vadd.f32 %v1403, %v1621
      %v1626 = vld [vmem:[%s1269] sm:$0x6]
      %v1627 = vld [vmem:[%s1269 + $0x4] sm:$0x6]
      %v1628 = vld [vmem:[%s1269 + $0x8] sm:$0x6]
      %v1629 = vld [vmem:[%s1269 + $0xc] sm:$0x6]
      %v1635 = vunpack.c.l.s4 1983009808
      %v1636 = vunpack.c.0.s8 %v1635
      %v1637 = vlaneseq
      %v1638 = vshrl.u32 %v1637, 7
      %v1639 = vsub.s32 %v1636, %v1638
      %v1640 = vrot.slane %v1626, %v1639
      %v1641 = vcombine.high %v1640, %v1640
      %v1643 = vunpack.c.l.s4 1983009808
      %v1644 = vunpack.c.0.s8 %v1643
      %v1645 = vlaneseq
      %v1646 = vshrl.u32 %v1645, 7
      %v1647 = vsub.s32 %v1644, %v1646
      %v1648 = vrot.slane %v1627, %v1647
      %v1649 = vcombine.high %v1648, %v1648
      %v1651 = vunpack.c.l.s4 1983009808
      %v1652 = vunpack.c.0.s8 %v1651
      %v1653 = vlaneseq
      %v1654 = vshrl.u32 %v1653, 7
      %v1655 = vsub.s32 %v1652, %v1654
      %v1656 = vrot.slane %v1628, %v1655
      %v1657 = vcombine.high %v1656, %v1656
      %v1659 = vunpack.c.l.s4 1983009808
      %v1660 = vunpack.c.0.s8 %v1659
      %v1661 = vlaneseq
      %v1662 = vshrl.u32 %v1661, 7
      %v1663 = vsub.s32 %v1660, %v1662
      %v1664 = vrot.slane %v1629, %v1663
      %v1665 = vcombine.high %v1664, %v1664
      %v1666 = vrot.slane %v1640, 7
      %v1667 = vrot.slane %v1666, 2
      %v1668 = vrot.slane %v1641, 7
      %v1669 = vsel %vm587, %v1667, %v1668
      %v1670 = vrot.slane %v1648, 7
      %v1671 = vrot.slane %v1670, 2
      %v1672 = vrot.slane %v1649, 7
      %v1673 = vsel %vm587, %v1671, %v1672
      %v1674 = vrot.slane %v1656, 7
      %v1675 = vrot.slane %v1674, 2
      %v1676 = vrot.slane %v1657, 7
      %v1677 = vsel %vm587, %v1675, %v1676
      %v1678 = vrot.slane %v1664, 7
      %v1679 = vrot.slane %v1678, 2
      %v1680 = vrot.slane %v1665, 7
      %v1681 = vsel %vm587, %v1679, %v1680
      %s1682 = scalar_lea.vmem %s1, 512
      %v1683 = vld [vmem:[%s1682] sm:$0xf]
      %v1684 = vld [vmem:[%s1682 + $0x4] sm:$0xf]
      %v1685 = vld [vmem:[%s1682 + $0x8] sm:$0xf]
      %v1686 = vld [vmem:[%s1682 + $0xc] sm:$0xf]
      %v1687 = vld [vmem:[%s1682 + $0x10] sm:$0xf]
      %v1688 = vld [vmem:[%s1682 + $0x14] sm:$0xf]
      %v1689 = vld [vmem:[%s1682 + $0x18] sm:$0xf]
      %v1690 = vld [vmem:[%s1682 + $0x1c] sm:$0xf]
      %v1691 = vld [vmem:[%s1682 + $0x20] sm:$0xf]
      %v1692 = vld [vmem:[%s1682 + $0x24] sm:$0xf]
      %v1693 = vld [vmem:[%s1682 + $0x28] sm:$0xf]
      %v1694 = vld [vmem:[%s1682 + $0x2c] sm:$0xf]
      %v1695 = vld [vmem:[%s1682 + $0x30] sm:$0xf]
      %v1696 = vld [vmem:[%s1682 + $0x34] sm:$0xf]
      %v1697 = vld [vmem:[%s1682 + $0x38] sm:$0xf]
      %v1698 = vld [vmem:[%s1682 + $0x3c] sm:$0xf]
      %v1699 = vcombine.low %v1669, %v1673
      %v1700 = vcombine.low %v1677, %v1681
      %v1702 = vunpack.c.l.s4 1983009808
      %v1703 = vunpack.c.0.s8 %v1702
      %v1704 = vlaneseq
      %v1705 = vshrl.u32 %v1704, 7
      %v1706 = vsub.s32 %v1703, %v1705
      %v1707 = vrot.slane %v1699, %v1706
      %v1709 = vunpack.c.l.s4 1983009808
      %v1710 = vunpack.c.0.s8 %v1709
      %v1711 = vlaneseq
      %v1712 = vshrl.u32 %v1711, 7
      %v1713 = vsub.s32 %v1710, %v1712
      %v1714 = vrot.slane %v1700, %v1713
      %v1715 = vcombine.low %v1707, %v1714
      %v1733 = vunpack.c.l.b16 %v1683
      %v1734 = vunpack.c.l.b16 %v1684
      %v1735 = vunpack.c.l.b16 %v1685
      %v1736 = vunpack.c.l.b16 %v1686
      %v1737 = vunpack.c.l.b16 %v1687
      %v1738 = vunpack.c.l.b16 %v1688
      %v1739 = vunpack.c.l.b16 %v1689
      %v1740 = vunpack.c.l.b16 %v1690
      %v1741 = vunpack.c.l.b16 %v1691
      %v1742 = vunpack.c.l.b16 %v1692
      %v1743 = vunpack.c.l.b16 %v1693
      %v1744 = vunpack.c.l.b16 %v1694
      %v1745 = vunpack.c.l.b16 %v1695
      %v1746 = vunpack.c.l.b16 %v1696
      %v1747 = vunpack.c.l.b16 %v1697
      %v1748 = vunpack.c.l.b16 %v1698
      %v1749 = vpack.c.b16 %v1734, %v1733
      %v1750 = vpack.c.b16 %v1736, %v1735
      %v1751 = vpack.c.b16 %v1738, %v1737
      %v1752 = vpack.c.b16 %v1740, %v1739
      %v1753 = vpack.c.b16 %v1742, %v1741
      %v1754 = vpack.c.b16 %v1744, %v1743
      %v1755 = vpack.c.b16 %v1746, %v1745
      %v1756 = vpack.c.b16 %v1748, %v1747
      %1765 = vmatprep.subr.bf16.mxu0 0
      %1766 = vmatpush1.bf16.msra.mxu0 %v1749
      %1767 = vmatprep.subr.bf16.mxu0 0
      %1768 = vmatpush1.bf16.msra.mxu0 %v1750
      %1769 = vmatprep.subr.bf16.mxu0 0
      %1770 = vmatpush1.bf16.msra.mxu0 %v1751
      %1771 = vmatprep.subr.bf16.mxu0 0
      %1772 = vmatpush1.bf16.msra.mxu0 %v1752
      %1773 = vmatprep.subr.bf16.mxu0 0
      %1774 = vmatpush1.bf16.msra.mxu0 %v1753
      %1775 = vmatprep.subr.bf16.mxu0 0
      %1776 = vmatpush1.bf16.msra.mxu0 %v1754
      %1777 = vmatprep.subr.bf16.mxu0 0
      %1778 = vmatpush1.bf16.msra.mxu0 %v1755
      %1779 = vmatprep.subr.bf16.mxu0 0
      %1780 = vmatpush1.bf16.msra.mxu0 %v1756
      %1781 = vmatprep.subr.bf16.mxu0 0
      %1782 = vmatpush1.bf16.msra.mxu0 0
      %1783 = vmatprep.subr.bf16.mxu0 0
      %1784 = vmatpush1.bf16.msra.mxu0 0
      %1785 = vmatprep.subr.bf16.mxu0 0
      %1786 = vmatpush1.bf16.msra.mxu0 0
      %1787 = vmatprep.subr.bf16.mxu0 0
      %1788 = vmatpush1.bf16.msra.mxu0 0
      %1789 = vmatprep.subr.bf16.mxu0 0
      %1790 = vmatpush1.bf16.msra.mxu0 0
      %1791 = vmatprep.subr.bf16.mxu0 0
      %1792 = vmatpush1.bf16.msra.mxu0 0
      %1793 = vmatprep.subr.bf16.mxu0 0
      %1794 = vmatpush1.bf16.msra.mxu0 0
      %1795 = vmatprep.subr.bf16.mxu0 0
      %1796 = vmatpush1.bf16.msra.mxu0 0
      %1797 = vmatprep.mubr.bf16.mxu0 0
      %1798 = vmatmul.mubr.bf16.gmra.mrb[0].mxu0 %v1715
      %v1799 = vpop.f32.mrb[0].mxu0
      %v1800 = vadd.f32 0.0, %v1799
      %v1801 = vpop.f32.mrb[0].mxu0
      %v1802 = vpop.f32.mrb[0].mxu0
      %v1803 = vadd.f32 0.0, %v1802
      %v1804 = vpop.f32.mrb[0].mxu0
      %1805 = vdwg.mxu0
      %v1806 = vadd.f32 %v1624, %v1800
      %v1807 = vadd.f32 %v1625, %v1803
      %v1808 = vpack.c.bf16 %v1807, %v1806
      %v1810 = vunpack.c.l.b16 %v1808
      %v1811 = vunpack.c.h.b16 %v1808
      %v1812 = vpack.c.b16 %v1810, %v1810
      %v1813 = vpack.c.b16 %v1811, %v1811
      %1816 = vst [vmem:[%s177] sm:$0xf] %v1812
      %1817 = vst [vmem:[%s177 + $0x4] sm:$0xf] %v1813
      %v1818 = vadd.f32 %v1806, %v1807
      %v1819 = vrot.slane %v1818, 4
      %v1820 = vadd.f32 %v1818, %v1819
      %v1821 = vrot.slane %v1820, 2
      %v1822 = vadd.f32 %v1820, %v1821
      %v1823 = vrot.slane %v1822, 1
      %v1824 = vadd.f32 %v1822, %v1823
      %1825 = vst [vmem:[%s181] sm:$0x1] %v1824
      %v1826 = vmul.f32 %v1806, %v1806
      %v1827 = vmul.f32 %v1807, %v1807
      %v1828 = vadd.f32 %v1826, %v1827
      %v1829 = vrot.slane %v1828, 4
      %v1830 = vadd.f32 %v1828, %v1829
      %v1831 = vrot.slane %v1830, 2
      %v1832 = vadd.f32 %v1830, %v1831
      %v1833 = vrot.slane %v1832, 1
      %v1834 = vadd.f32 %v1832, %v1833
      %1835 = vst [vmem:[%s181 + $0x1] sm:$0x1] %v1834
      %p1836 = scmp.lt.s32.totalorder %s15, 1
      %s1837 = scalar_select %p1836, %s15, 1
      %s1838 = smul.addr %s1837, 2
      %s1839 = smul.addr %s1838, 4
      %s1840 = scalar_lea.vmem %s2, %s1839
      %p1841 = scmp.lt.s32.totalorder %s15, 1
      %s1842 = scalar_select %p1841, %s15, 1
      %s1843 = smul.addr %s1842, 2
      %s1844 = scalar_lea.vmem %s3, %s1843
      // Predicated region
      $region29: #{vgg_forward.15} parent=27 // pred_check
        %p1845 = pneg %p80
      $region30: #{vgg_forward.15} parent=27 // pred_check_branch
        %1847 = sbr.rel (%p1845) target = $region32
      $region31: #{vgg_forward.15} parent=27 // pred_region
        _
      $region32: #{vgg_forward.15} parent=27 // pred_fallthru
        _
      // Predicated region
      $region33: #{vgg_forward.15} parent=27 // pred_check
        %p1848 = pneg %p106
      $region34: #{vgg_forward.15} parent=27 // pred_check_branch
        %1850 = sbr.rel (%p1848) target = $region36
      $region35: #{vgg_forward.15} parent=27 // pred_region
        _
      $region36: #{vgg_forward.15} parent=27 // pred_fallthru
        _
    $region28: #{vgg_forward.15} parent=5 // pred_fallthru
      _
    %p1851 = scmp.le.s32.totalorder 2, %s10
    // Predicated region
    $region37: #{vgg_forward.15} parent=5 // pred_check
      %p1852 = pneg %p1851
    $region38: #{vgg_forward.15} parent=5 // pred_check_branch
      %1854 = sbr.rel (%p1852) target = $region40
    $region39: #{vgg_forward.15} parent=5 // pred_region
      %s1855 = ssub.s32 %s10, 2
      // Predicated region
      $region41: #{vgg_forward.15} parent=39 // pred_check
        %p1856 = pneg %p86
      $region42: #{vgg_forward.15} parent=39 // pred_check_branch
        %1858 = sbr.rel (%p1856) target = $region44
      $region43: #{vgg_forward.15} parent=39 // pred_region
        %p1859 = scmp.lt.s32.totalorder %s16, 1
        %s1860 = scalar_select %p1859, %s16, 1
        %s1861 = smul.addr %s1860, 2
        %s1862 = smul.addr %s1861, 4
        %s1863 = scalar_lea.vmem %s2, %s1862
      $region44: #{vgg_forward.15} parent=39 // pred_fallthru
        _
      // Predicated region
      $region45: #{vgg_forward.15} parent=39 // pred_check
        %p1864 = pneg %p112
      $region46: #{vgg_forward.15} parent=39 // pred_check_branch
        %1866 = sbr.rel (%p1864) target = $region48
      $region47: #{vgg_forward.15} parent=39 // pred_region
        %p1867 = scmp.lt.s32.totalorder %s16, 1
        %s1868 = scalar_select %p1867, %s16, 1
        %s1869 = smul.addr %s1868, 2
        %s1870 = scalar_lea.vmem %s3, %s1869
      $region48: #{vgg_forward.15} parent=39 // pred_fallthru
        _
    $region40: #{vgg_forward.15} parent=5 // pred_fallthru
      _
  $region6: #{vgg_forward.15} parent=0 // loop_footer
    %s14 = sadd.s32 1, %s10
  $region7: #{vgg_forward.15} parent=0 // loop_footer_branch
    %9 = sbr.rel target = $region3
  $region8: #{vgg_forward.15} parent=0 // loop_exit
    _

// kernel: vgg_forward.18
$region0: #{vgg_forward.18}
  #allocation0 [shape = 'u32[]', space=smem, size = 0x4, offset = 0x4, fixed_abs, tag = 'smem constant byte address 0x4 - core index']
  #allocation1 [shape = 'u32[144,128]{1,0:T(1,128)}', space=vmem, size = 0x12000, scoped, tag = 'internal scratch']
  %s0 = inlined_call_operand.vmem [shape: bf16[2,16,128], index: 0, kind: input, shape index: {}]
  %s1 = inlined_call_operand.vmem [shape: f32[1,128], index: 1, kind: input, shape index: {}]
  %s2 = inlined_call_operand.vmem [shape: f32[1,128], index: 2, kind: input, shape index: {}]
  %s3 = inlined_call_operand.vmem [shape: bf16[2,2,2,128], index: 3, kind: output, shape index: {}]
  %s4 = sld [smem:[#allocation0]]
  $region45: #{vgg_forward.18} parent=0
    _
  %s6 = ssub.s32 1, %s4
  %s7 = scalar_select 0, %s6, %s4
  loop: start=0, step=1, limit=4
  $region2: #{vgg_forward.18} parent=0 // loop_pre_header
    _
  $region3: #{vgg_forward.18} parent=0 // loop_header
    %s9 = sphi 0, %s13
    %p10 = scmp.ge.s32.totalorder %s9, 4
    %s19 = sphi 0, %s21
    %s22 = sphi 0, %s19
    %s23 = sphi 0, %s22
    %s39 = sphi 0, %s23
    %s43 = sphi 0, %s43
    %s45 = sphi 0, %s43
    %s46 = sphi 0, %s45
    %s60 = sphi 0, %s46
    %s64 = sphi 0, %s64
    %s66 = sphi 0, %s64
    %s67 = sphi 0, %s66
    %s81 = sphi 0, %s67
    %s87 = sphi 0, %s89
    %s90 = sphi 0, %s87
    %s91 = sphi 0, %s90
    %s107 = sphi 0, %s91
  $region4: #{vgg_forward.18} parent=0 // loop_header_branch
    %12 = sbr.rel (%p10) target = $region8
  $region5: #{vgg_forward.18} parent=0 // loop_body
    %s14 = ssub.s32 %s9, 1
    %s15 = ssub.s32 %s9, 2
    %s16 = sadd.s32 %s9, 1
    %s17 = ssub.s32 %s9, %s16
    %p18 = scmp.eq.s32.totalorder %s17, 0
    %s20 = sadd.s32 %s19, 1
    %s21 = scalar_select %p18, %s19, %s20
    %p24 = pneg %p18
    %p25 = scmp.eq.s32.totalorder %s9, 1
    %p26 = por %p24, %p25
    %p27 = scmp.ne.s32.totalorder %s19, %s22
    %p28 = scmp.eq.s32.totalorder %s9, 0
    %p29 = por %p27, %p28
    %p30 = scmp.ne.s32.totalorder %s19, %s22
    %p31 = scmp.eq.s32.totalorder %s14, 1
    %p32 = por %p30, %p31
    %p33 = scmp.ne.s32.totalorder %s22, %s23
    %p34 = scmp.eq.s32.totalorder %s14, 0
    %p35 = por %p33, %p34
    %p36 = scmp.ne.s32.totalorder %s22, %s23
    %p37 = scmp.eq.s32.totalorder %s15, 1
    %p38 = por %p36, %p37
    %p40 = scmp.ne.s32.totalorder %s23, %s39
    %p41 = scmp.eq.s32.totalorder %s15, 0
    %p42 = por %p40, %p41
    %s44 = sadd.s32 %s43, 1
    %p47 = scmp.eq.s32.totalorder %s9, 1
    %p48 = scmp.ne.s32.totalorder %s43, %s45
    %p49 = scmp.eq.s32.totalorder %s9, 0
    %p50 = por %p48, %p49
    %p51 = scmp.ne.s32.totalorder %s43, %s45
    %p52 = scmp.eq.s32.totalorder %s14, 1
    %p53 = por %p51, %p52
    %p54 = scmp.ne.s32.totalorder %s45, %s46
    %p55 = scmp.eq.s32.totalorder %s14, 0
    %p56 = por %p54, %p55
    %p57 = scmp.ne.s32.totalorder %s45, %s46
    %p58 = scmp.eq.s32.totalorder %s15, 1
    %p59 = por %p57, %p58
    %p61 = scmp.ne.s32.totalorder %s46, %s60
    %p62 = scmp.eq.s32.totalorder %s15, 0
    %p63 = por %p61, %p62
    %s65 = sadd.s32 %s64, 1
    %p68 = scmp.eq.s32.totalorder %s9, 1
    %p69 = scmp.ne.s32.totalorder %s64, %s66
    %p70 = scmp.eq.s32.totalorder %s9, 0
    %p71 = por %p69, %p70
    %p72 = scmp.ne.s32.totalorder %s64, %s66
    %p73 = scmp.eq.s32.totalorder %s14, 1
    %p74 = por %p72, %p73
    %p75 = scmp.ne.s32.totalorder %s66, %s67
    %p76 = scmp.eq.s32.totalorder %s14, 0
    %p77 = por %p75, %p76
    %p78 = scmp.ne.s32.totalorder %s66, %s67
    %p79 = scmp.eq.s32.totalorder %s15, 1
    %p80 = por %p78, %p79
    %p82 = scmp.ne.s32.totalorder %s67, %s81
    %p83 = scmp.eq.s32.totalorder %s15, 0
    %p84 = por %p82, %p83
    %s85 = ssub.s32 %s9, %s16
    %p86 = scmp.eq.s32.totalorder %s85, 0
    %s88 = sadd.s32 %s87, 1
    %s89 = scalar_select %p86, %s87, %s88
    %p92 = pneg %p86
    %p93 = scmp.eq.s32.totalorder %s9, 1
    %p94 = por %p92, %p93
    %p95 = scmp.ne.s32.totalorder %s87, %s90
    %p96 = scmp.eq.s32.totalorder %s9, 0
    %p97 = por %p95, %p96
    %p98 = scmp.ne.s32.totalorder %s87, %s90
    %p99 = scmp.eq.s32.totalorder %s14, 1
    %p100 = por %p98, %p99
    %p101 = scmp.ne.s32.totalorder %s90, %s91
    %p102 = scmp.eq.s32.totalorder %s14, 0
    %p103 = por %p101, %p102
    %p104 = scmp.ne.s32.totalorder %s90, %s91
    %p105 = scmp.eq.s32.totalorder %s15, 1
    %p106 = por %p104, %p105
    %p108 = scmp.ne.s32.totalorder %s91, %s107
    %p109 = scmp.eq.s32.totalorder %s15, 0
    %p110 = por %p108, %p109
    %p111 = scmp.le.s32.totalorder 1, %s9
    %p112 = scmp.lt.s32.totalorder %s9, 3
    %p113 = pnand %p111, %p112
    %p114 = pneg %p113
    // Predicated region
    $region9: #{vgg_forward.18} parent=5 // pred_check
      _
    $region10: #{vgg_forward.18} parent=5 // pred_check_branch
      %116 = sbr.rel (%p113) target = $region12
    $region11: #{vgg_forward.18} parent=5 // pred_region
      %s117 = ssub.s32 %s9, 1
      // Predicated region
      $region13: #{vgg_forward.18} parent=11 // pred_check
        %p118 = pneg %p56
      $region14: #{vgg_forward.18} parent=11 // pred_check_branch
        %120 = sbr.rel (%p118) target = $region16
      $region15: #{vgg_forward.18} parent=11 // pred_region
        _
      $region16: #{vgg_forward.18} parent=11 // pred_fallthru
        _
      // Predicated region
      $region17: #{vgg_forward.18} parent=11 // pred_check
        %p121 = pneg %p77
      $region18: #{vgg_forward.18} parent=11 // pred_check_branch
        %123 = sbr.rel (%p121) target = $region20
      $region19: #{vgg_forward.18} parent=11 // pred_region
        _
      $region20: #{vgg_forward.18} parent=11 // pred_fallthru
        _
    $region12: #{vgg_forward.18} parent=5 // pred_fallthru
      _
    %p124 = scmp.lt.s32.totalorder %s9, 2
    // Predicated region
    $region21: #{vgg_forward.18} parent=5 // pred_check
      %p125 = pneg %p124
    $region22: #{vgg_forward.18} parent=5 // pred_check_branch
      %127 = sbr.rel (%p125) target = $region24
    $region23: #{vgg_forward.18} parent=5 // pred_region
      // Predicated region
      $region25: #{vgg_forward.18} parent=23 // pred_check
        %p128 = pneg %p29
      $region26: #{vgg_forward.18} parent=23 // pred_check_branch
        %130 = sbr.rel (%p128) target = $region28
      $region27: #{vgg_forward.18} parent=23 // pred_region
        %p131 = scmp.lt.s32.totalorder %s9, 1
        %s132 = scalar_select %p131, %s9, 1
        %s133 = smul.addr %s132, 2
        %s134 = smul.addr %s133, 4
        %s135 = scalar_lea.vmem %s0, %s134
      $region28: #{vgg_forward.18} parent=23 // pred_fallthru
        _
    $region24: #{vgg_forward.18} parent=5 // pred_fallthru
      _
    %p136 = scmp.le.s32.totalorder 1, %s9
    %p137 = scmp.lt.s32.totalorder %s9, 3
    %p138 = pnand %p136, %p137
    %p139 = pneg %p138
    // Predicated region
    $region29: #{vgg_forward.18} parent=5 // pred_check
      _
    $region30: #{vgg_forward.18} parent=5 // pred_check_branch
      %141 = sbr.rel (%p138) target = $region32
    $region31: #{vgg_forward.18} parent=5 // pred_region
      %s142 = ssub.s32 %s9, 1
      %p143 = scmp.lt.s32.totalorder %s14, 1
      %s144 = scalar_select %p143, %s14, 1
      %s145 = smul.addr %s144, 2
      %s146 = smul.addr %s145, 4
      %s147 = scalar_lea.vmem %s0, %s146
      %p148 = pneg %p35
      %p149 = pneg %p32
      %p150 = pneg %p56
      %p151 = pneg %p53
      %p152 = pneg %p77
      %p153 = pneg %p74
      %p154 = pneg %p103
      %p155 = pneg %p100
      %p156 = scmp.lt.s32.totalorder %s14, 1
      %s157 = scalar_select %p156, %s14, 1
      %s158 = smul.addr %s157, 2
      %s159 = scalar_lea.vmem %s3, %s158
      %p160 = scmp.lt.s32.totalorder %s14, 1
      %s161 = scalar_select %p160, %s14, 1
      %s162 = smul.addr %s161, 2
      %s163 = smul.addr %s162, 4
      %s164 = scalar_lea.vmem %s0, %s163
      %p165 = scmp.lt.s32.totalorder %s14, 1
      %s166 = scalar_select %p165, %s14, 1
      %s167 = smul.addr %s166, 2
      %s168 = scalar_lea.vmem %s3, %s167
      %v169 = vld [vmem:[%s164] sm:$0xf]
      %v170 = vld [vmem:[%s164 + $0x4] sm:$0xf]
      %v171 = vunpack.c.l.bf16 %v169
      %v172 = vunpack.c.l.bf16 %v170
      %v173 = vld [vmem:[%s1] sm:$0x1]
      %v175 = vlaneseq
      %v176 = vshrl.u32 %v175, 7
      %v177 = vsub.s32 0, %v176
      %v178 = vrot.slane %v173, %v177
      %v180 = vmul.f32 %v171, %v178
      %v181 = vmul.f32 %v172, %v178
      %v182 = vld [vmem:[%s2] sm:$0x1]
      %v184 = vlaneseq
      %v185 = vshrl.u32 %v184, 7
      %v186 = vsub.s32 0, %v185
      %v187 = vrot.slane %v182, %v186
      %v189 = vadd.f32 %v180, %v187
      %v190 = vadd.f32 %v181, %v187
      %v191 = vmax.f32 %v189, 0.0
      %v192 = vmax.f32 %v190, 0.0
      %v195 = vcombine.high %v191, %v191
      %v197 = vunpack.c.l.s4 1983009808
      %v198 = vunpack.c.0.s8 %v197
      %v199 = vlaneseq
      %v200 = vshrl.u32 %v199, 7
      %v201 = vsub.s32 %v198, %v200
      %v202 = vrot.slane %v191, %v201
      %v204 = vunpack.c.l.s4 1983009808
      %v205 = vunpack.c.0.s8 %v204
      %v206 = vlaneseq
      %v207 = vshrl.u32 %v206, 7
      %v208 = vsub.s32 %v205, %v207
      %v209 = vrot.slane %v195, %v208
      %v210 = vcombine.high %v202, %v202
      %v211 = vcombine.high %v209, %v209
      %v212 = vcombine.high %v192, %v192
      %v214 = vunpack.c.l.s4 1983009808
      %v215 = vunpack.c.0.s8 %v214
      %v216 = vlaneseq
      %v217 = vshrl.u32 %v216, 7
      %v218 = vsub.s32 %v215, %v217
      %v219 = vrot.slane %v192, %v218
      %v221 = vunpack.c.l.s4 1983009808
      %v222 = vunpack.c.0.s8 %v221
      %v223 = vlaneseq
      %v224 = vshrl.u32 %v223, 7
      %v225 = vsub.s32 %v222, %v224
      %v226 = vrot.slane %v212, %v225
      %v227 = vcombine.high %v219, %v219
      %v228 = vcombine.high %v226, %v226
      %vm237 = vcmask 1041408
      %v238 = vsel %vm237, %v202, -inf
      %v239 = vrot.slane %v238, 4
      %v240 = vmax.f32 %v238, %v239
      %v241 = vrot.slane %v240, 2
      %v242 = vmax.f32 %v240, %v241
      %v243 = vrot.slane %v242, 1
      %v244 = vmax.f32 %v242, %v243
      %v245 = vsel %vm237, %v210, -inf
      %v246 = vrot.slane %v245, 4
      %v247 = vmax.f32 %v245, %v246
      %v248 = vrot.slane %v247, 2
      %v249 = vmax.f32 %v247, %v248
      %v250 = vrot.slane %v249, 1
      %v251 = vmax.f32 %v249, %v250
      %v252 = vsel %vm237, %v209, -inf
      %v253 = vrot.slane %v252, 4
      %v254 = vmax.f32 %v252, %v253
      %v255 = vrot.slane %v254, 2
      %v256 = vmax.f32 %v254, %v255
      %v257 = vrot.slane %v256, 1
      %v258 = vmax.f32 %v256, %v257
      %v259 = vsel %vm237, %v211, -inf
      %v260 = vrot.slane %v259, 4
      %v261 = vmax.f32 %v259, %v260
      %v262 = vrot.slane %v261, 2
      %v263 = vmax.f32 %v261, %v262
      %v264 = vrot.slane %v263, 1
      %v265 = vmax.f32 %v263, %v264
      %v266 = vsel %vm237, %v219, -inf
      %v267 = vrot.slane %v266, 4
      %v268 = vmax.f32 %v266, %v267
      %v269 = vrot.slane %v268, 2
      %v270 = vmax.f32 %v268, %v269
      %v271 = vrot.slane %v270, 1
      %v272 = vmax.f32 %v270, %v271
      %v273 = vsel %vm237, %v227, -inf
      %v274 = vrot.slane %v273, 4
      %v275 = vmax.f32 %v273, %v274
      %v276 = vrot.slane %v275, 2
      %v277 = vmax.f32 %v275, %v276
      %v278 = vrot.slane %v277, 1
      %v279 = vmax.f32 %v277, %v278
      %v280 = vsel %vm237, %v226, -inf
      %v281 = vrot.slane %v280, 4
      %v282 = vmax.f32 %v280, %v281
      %v283 = vrot.slane %v282, 2
      %v284 = vmax.f32 %v282, %v283
      %v285 = vrot.slane %v284, 1
      %v286 = vmax.f32 %v284, %v285
      %v287 = vsel %vm237, %v228, -inf
      %v288 = vrot.slane %v287, 4
      %v289 = vmax.f32 %v287, %v288
      %v290 = vrot.slane %v289, 2
      %v291 = vmax.f32 %v289, %v290
      %v292 = vrot.slane %v291, 1
      %v293 = vmax.f32 %v291, %v292
      %v294 = vmax.f32 %v244, %v258
      %v295 = vmax.f32 %v251, %v265
      %v296 = vmax.f32 %v272, %v286
      %v297 = vmax.f32 %v279, %v293
      %v298 = vpack.c.bf16 %v294, %v294
      %v299 = vpack.c.bf16 %v295, %v295
      %v300 = vpack.c.bf16 %v296, %v296
      %v301 = vpack.c.bf16 %v297, %v297
      %v307 = vunpack.c.l.s4 1966171168
      %v308 = vunpack.c.0.s8 %v307
      %v309 = vlaneseq
      %v310 = vshrl.u32 %v309, 7
      %v311 = vsub.s32 %v308, %v310
      %v312 = vrot.slane %v298, %v311
      %v314 = vunpack.c.l.s4 1966171168
      %v315 = vunpack.c.0.s8 %v314
      %v316 = vlaneseq
      %v317 = vshrl.u32 %v316, 7
      %v318 = vsub.s32 %v315, %v317
      %v319 = vrot.slane %v312, %v318
      %v321 = vunpack.c.l.s4 1966171168
      %v322 = vunpack.c.0.s8 %v321
      %v323 = vlaneseq
      %v324 = vshrl.u32 %v323, 7
      %v325 = vsub.s32 %v322, %v324
      %v326 = vrot.slane %v299, %v325
      %v328 = vunpack.c.l.s4 1966171168
      %v329 = vunpack.c.0.s8 %v328
      %v330 = vlaneseq
      %v331 = vshrl.u32 %v330, 7
      %v332 = vsub.s32 %v329, %v331
      %v333 = vrot.slane %v326, %v332
      %v335 = vunpack.c.l.s4 1966171168
      %v336 = vunpack.c.0.s8 %v335
      %v337 = vlaneseq
      %v338 = vshrl.u32 %v337, 7
      %v339 = vsub.s32 %v336, %v338
      %v340 = vrot.slane %v300, %v339
      %v342 = vunpack.c.l.s4 1966171168
      %v343 = vunpack.c.0.s8 %v342
      %v344 = vlaneseq
      %v345 = vshrl.u32 %v344, 7
      %v346 = vsub.s32 %v343, %v345
      %v347 = vrot.slane %v340, %v346
      %v349 = vunpack.c.l.s4 1966171168
      %v350 = vunpack.c.0.s8 %v349
      %v351 = vlaneseq
      %v352 = vshrl.u32 %v351, 7
      %v353 = vsub.s32 %v350, %v352
      %v354 = vrot.slane %v301, %v353
      %v356 = vunpack.c.l.s4 1966171168
      %v357 = vunpack.c.0.s8 %v356
      %v358 = vlaneseq
      %v359 = vshrl.u32 %v358, 7
      %v360 = vsub.s32 %v357, %v359
      %v361 = vrot.slane %v354, %v360
      %v363 = vunpack.c.l.s4 1935823168
      %v364 = vunpack.c.0.s8 %v363
      %v365 = vlaneseq
      %v366 = vshrl.u32 %v365, 7
      %v367 = vsub.s32 %v364, %v366
      %v368 = vrot.slane %v319, %v367
      %v370 = vunpack.c.l.s4 1935823168
      %v371 = vunpack.c.0.s8 %v370
      %v372 = vlaneseq
      %v373 = vshrl.u32 %v372, 7
      %v374 = vsub.s32 %v371, %v373
      %v375 = vrot.slane %v368, %v374
      %v377 = vunpack.c.l.s4 1935823168
      %v378 = vunpack.c.0.s8 %v377
      %v379 = vlaneseq
      %v380 = vshrl.u32 %v379, 7
      %v381 = vsub.s32 %v378, %v380
      %v382 = vrot.slane %v333, %v381
      %v384 = vunpack.c.l.s4 1935823168
      %v385 = vunpack.c.0.s8 %v384
      %v386 = vlaneseq
      %v387 = vshrl.u32 %v386, 7
      %v388 = vsub.s32 %v385, %v387
      %v389 = vrot.slane %v382, %v388
      %v391 = vunpack.c.l.s4 1935823168
      %v392 = vunpack.c.0.s8 %v391
      %v393 = vlaneseq
      %v394 = vshrl.u32 %v393, 7
      %v395 = vsub.s32 %v392, %v394
      %v396 = vrot.slane %v347, %v395
      %v398 = vunpack.c.l.s4 1935823168
      %v399 = vunpack.c.0.s8 %v398
      %v400 = vlaneseq
      %v401 = vshrl.u32 %v400, 7
      %v402 = vsub.s32 %v399, %v401
      %v403 = vrot.slane %v396, %v402
      %v405 = vunpack.c.l.s4 1935823168
      %v406 = vunpack.c.0.s8 %v405
      %v407 = vlaneseq
      %v408 = vshrl.u32 %v407, 7
      %v409 = vsub.s32 %v406, %v408
      %v410 = vrot.slane %v361, %v409
      %v412 = vunpack.c.l.s4 1935823168
      %v413 = vunpack.c.0.s8 %v412
      %v414 = vlaneseq
      %v415 = vshrl.u32 %v414, 7
      %v416 = vsub.s32 %v413, %v415
      %v417 = vrot.slane %v410, %v416
      %v418 = vunpack.c.l.b16 %v375
      %v419 = vunpack.c.l.b16 %v389
      %v420 = vunpack.c.l.b16 %v403
      %v421 = vunpack.c.l.b16 %v417
      %v422 = vrot.slane %v419, 7
      %vm423 = vcmask 1041409
      %v424 = vsel %vm423, %v422, %v418
      %v425 = vrot.slane %v421, 7
      %v426 = vsel %vm423, %v425, %v420
      %v427 = vpack.c.b16 %v424, %v424
      %v428 = vpack.c.b16 %v426, %v426
      %v430 = vunpack.c.l.s4 1966171168
      %v431 = vunpack.c.0.s8 %v430
      %v432 = vlaneseq
      %v433 = vshrl.u32 %v432, 7
      %v434 = vsub.s32 %v431, %v433
      %v435 = vrot.slane %v427, %v434
      %v437 = vunpack.c.l.s4 1966171168
      %v438 = vunpack.c.0.s8 %v437
      %v439 = vlaneseq
      %v440 = vshrl.u32 %v439, 7
      %v441 = vsub.s32 %v438, %v440
      %v442 = vrot.slane %v435, %v441
      %v444 = vunpack.c.l.s4 1966171168
      %v445 = vunpack.c.0.s8 %v444
      %v446 = vlaneseq
      %v447 = vshrl.u32 %v446, 7
      %v448 = vsub.s32 %v445, %v447
      %v449 = vrot.slane %v428, %v448
      %v451 = vunpack.c.l.s4 1966171168
      %v452 = vunpack.c.0.s8 %v451
      %v453 = vlaneseq
      %v454 = vshrl.u32 %v453, 7
      %v455 = vsub.s32 %v452, %v454
      %v456 = vrot.slane %v449, %v455
      %459 = vst [vmem:[%s168] sm:$0x1] %v442
      %460 = vst [vmem:[%s168 + $0x1] sm:$0x1] %v456
      %p461 = scmp.lt.s32.totalorder %s14, 1
      %s462 = scalar_select %p461, %s14, 1
      %s463 = smul.addr %s462, 2
      %s464 = scalar_lea.vmem %s3, %s463
      // Predicated region
      $region33: #{vgg_forward.18} parent=31 // pred_check
        %p465 = pneg %p100
      $region34: #{vgg_forward.18} parent=31 // pred_check_branch
        %467 = sbr.rel (%p465) target = $region36
      $region35: #{vgg_forward.18} parent=31 // pred_region
        _
      $region36: #{vgg_forward.18} parent=31 // pred_fallthru
        _
    $region32: #{vgg_forward.18} parent=5 // pred_fallthru
      _
    %p468 = scmp.le.s32.totalorder 2, %s9
    // Predicated region
    $region37: #{vgg_forward.18} parent=5 // pred_check
      %p469 = pneg %p468
    $region38: #{vgg_forward.18} parent=5 // pred_check_branch
      %471 = sbr.rel (%p469) target = $region40
    $region39: #{vgg_forward.18} parent=5 // pred_region
      %s472 = ssub.s32 %s9, 2
      // Predicated region
      $region41: #{vgg_forward.18} parent=39 // pred_check
        %p473 = pneg %p106
      $region42: #{vgg_forward.18} parent=39 // pred_check_branch
        %475 = sbr.rel (%p473) target = $region44
      $region43: #{vgg_forward.18} parent=39 // pred_region
        %p476 = scmp.lt.s32.totalorder %s15, 1
        %s477 = scalar_select %p476, %s15, 1
        %s478 = smul.addr %s477, 2
        %s479 = scalar_lea.vmem %s3, %s478
      $region44: #{vgg_forward.18} parent=39 // pred_fallthru
        _
    $region40: #{vgg_forward.18} parent=5 // pred_fallthru
      _
  $region6: #{vgg_forward.18} parent=0 // loop_footer
    %s13 = sadd.s32 1, %s9
  $region7: #{vgg_forward.18} parent=0 // loop_footer_branch
    %8 = sbr.rel target = $region3
  $region8: #{vgg_forward.18} parent=0 // loop_exit
    _

// kernel: vgg_forward.21
$region0: #{vgg_forward.21}
  #allocation0 [shape = 'u32[]', space=smem, size = 0x4, offset = 0x4, fixed_abs, tag = 'smem constant byte address 0x4 - core index']
  #allocation1 [shape = 'u32[144,128]{1,0:T(1,128)}', space=vmem, size = 0x12000, scoped, tag = 'internal scratch']
  %s0 = inlined_call_operand.vmem [shape: f32[2,64], index: 0, kind: input, shape index: {}]
  %s1 = inlined_call_operand.vmem [shape: f32[64,32], index: 1, kind: input, shape index: {}]
  %s2 = inlined_call_operand.vmem [shape: f32[1,32], index: 2, kind: input, shape index: {}]
  %s3 = inlined_call_operand.vmem [shape: f32[1,32], index: 3, kind: input, shape index: {}]
  %s4 = inlined_call_operand.vmem [shape: f32[32,10], index: 4, kind: input, shape index: {}]
  %s5 = inlined_call_operand.vmem [shape: f32[1,10], index: 5, kind: input, shape index: {}]
  %s6 = inlined_call_operand.hbm [shape: f32[2,10], index: 6, kind: output, shape index: {}]
  %s7 = sld [smem:[#allocation0]]
  $region34: #{vgg_forward.21} parent=0
    _
  %s9 = ssub.s32 1, %s7
  %s10 = scalar_select 0, %s9, %s7
  $region1: #{vgg_forward.21} parent=0
    #allocation2 [shape = 'u8[1024]{0}', space=vmem, size = 0x400, scoped, tag = 'output window, operand 0, single buffered']
    #allocation3 [shape = 's32[1]{0}', space=sflag, size = 0x4, scoped, tag = 'scoped memory for vgg_forward.21']
    %11 = vsyncpa [#allocation3], 0
    // Predicated region
    $region2: #{vgg_forward.21} parent=1 // pred_check
      _
    $region3: #{vgg_forward.21} parent=1 // pred_check_branch
      %13 = sbr.rel (0) target = $region5
    $region4: #{vgg_forward.21} parent=1 // pred_region
      _
    $region5: #{vgg_forward.21} parent=1 // pred_fallthru
      _
    // Predicated region
    $region6: #{vgg_forward.21} parent=1 // pred_check
      _
    $region7: #{vgg_forward.21} parent=1 // pred_check_branch
      %15 = sbr.rel (0) target = $region9
    $region8: #{vgg_forward.21} parent=1 // pred_region
      _
    $region9: #{vgg_forward.21} parent=1 // pred_fallthru
      _
    // Predicated region
    $region10: #{vgg_forward.21} parent=1 // pred_check
      _
    $region11: #{vgg_forward.21} parent=1 // pred_check_branch
      %17 = sbr.rel (0) target = $region13
    $region12: #{vgg_forward.21} parent=1 // pred_region
      _
    $region13: #{vgg_forward.21} parent=1 // pred_fallthru
      _
    // Predicated region
    $region14: #{vgg_forward.21} parent=1 // pred_check
      _
    $region15: #{vgg_forward.21} parent=1 // pred_check_branch
      %19 = sbr.rel (0) target = $region17
    $region16: #{vgg_forward.21} parent=1 // pred_region
      _
    $region17: #{vgg_forward.21} parent=1 // pred_fallthru
      _
    // Predicated region
    $region18: #{vgg_forward.21} parent=1 // pred_check
      _
    $region19: #{vgg_forward.21} parent=1 // pred_check_branch
      %21 = sbr.rel (0) target = $region21
    $region20: #{vgg_forward.21} parent=1 // pred_region
      _
    $region21: #{vgg_forward.21} parent=1 // pred_fallthru
      _
    // Predicated region
    $region22: #{vgg_forward.21} parent=1 // pred_check
      _
    $region23: #{vgg_forward.21} parent=1 // pred_check_branch
      %23 = sbr.rel (0) target = $region25
    $region24: #{vgg_forward.21} parent=1 // pred_region
      _
    $region25: #{vgg_forward.21} parent=1 // pred_fallthru
      _
    %v24 = vld [vmem:[%s0] sm:$0x3]
    %v25 = vld [vmem:[%s1] sm:$0xff]
    %v26 = vld [vmem:[%s1 + $0x8] sm:$0xff]
    %v27 = vld [vmem:[%s1 + $0x10] sm:$0xff]
    %v28 = vld [vmem:[%s1 + $0x18] sm:$0xff]
    %v29 = vld [vmem:[%s1 + $0x20] sm:$0xff]
    %v30 = vld [vmem:[%s1 + $0x28] sm:$0xff]
    %v31 = vld [vmem:[%s1 + $0x30] sm:$0xff]
    %v32 = vld [vmem:[%s1 + $0x38] sm:$0xff]
    %vm33 = vcmask 523264
    %v35 = vsel %vm33, %v24, 0
    %37 = vmatprep.subr.mxu0 0.0
    %38 = vmatpush1.msra.mxu0 %v25
    %39 = vmatprep.subr.mxu0 0.0
    %40 = vmatpush1.msra.mxu0 %v26
    %41 = vmatprep.subr.mxu0 0.0
    %42 = vmatpush1.msra.mxu0 %v27
    %43 = vmatprep.subr.mxu0 0.0
    %44 = vmatpush1.msra.mxu0 %v28
    %45 = vmatprep.subr.mxu0 0.0
    %46 = vmatpush1.msra.mxu0 %v29
    %47 = vmatprep.subr.mxu0 0.0
    %48 = vmatpush1.msra.mxu0 %v30
    %49 = vmatprep.subr.mxu0 0.0
    %50 = vmatpush1.msra.mxu0 %v31
    %51 = vmatprep.subr.mxu0 0.0
    %52 = vmatpush1.msra.mxu0 %v32
    %53 = vmatprep.subr.mxu0 0.0
    %54 = vmatpush1.msra.mxu0 0.0
    %55 = vmatprep.subr.mxu0 0.0
    %56 = vmatpush1.msra.mxu0 0.0
    %57 = vmatprep.subr.mxu0 0.0
    %58 = vmatpush1.msra.mxu0 0.0
    %59 = vmatprep.subr.mxu0 0.0
    %60 = vmatpush1.msra.mxu0 0.0
    %61 = vmatprep.subr.mxu0 0.0
    %62 = vmatpush1.msra.mxu0 0.0
    %63 = vmatprep.subr.mxu0 0.0
    %64 = vmatpush1.msra.mxu0 0.0
    %65 = vmatprep.subr.mxu0 0.0
    %66 = vmatpush1.msra.mxu0 0.0
    %67 = vmatprep.subr.mxu0 0.0
    %68 = vmatpush1.msra.mxu0 0.0
    %69 = vmatprep.subr.mxu0 0.0
    %70 = vmatpush1.msra.mxu0 0.0
    %71 = vmatprep.subr.mxu0 0.0
    %72 = vmatpush1.msra.mxu0 0.0
    %73 = vmatprep.subr.mxu0 0.0
    %74 = vmatpush1.msra.mxu0 0.0
    %75 = vmatprep.subr.mxu0 0.0
    %76 = vmatpush1.msra.mxu0 0.0
    %77 = vmatprep.subr.mxu0 0.0
    %78 = vmatpush1.msra.mxu0 0.0
    %79 = vmatprep.subr.mxu0 0.0
    %80 = vmatpush1.msra.mxu0 0.0
    %81 = vmatprep.subr.mxu0 0.0
    %82 = vmatpush1.msra.mxu0 0.0
    %83 = vmatprep.subr.mxu0 0.0
    %84 = vmatpush1.msra.mxu0 0.0
    %85 = vmatprep.subr.mxu0 0.0
    %86 = vmatpush1.msra.mxu0 0.0
    %87 = vmatprep.subr.mxu0 0.0
    %88 = vmatpush1.msra.mxu0 0.0
    %89 = vmatprep.subr.mxu0 0.0
    %90 = vmatpush1.msra.mxu0 0.0
    %91 = vmatprep.subr.mxu0 0.0
    %92 = vmatpush1.msra.mxu0 0.0
    %93 = vmatprep.subr.mxu0 0.0
    %94 = vmatpush1.msra.mxu0 0.0
    %95 = vmatprep.subr.mxu0 0.0
    %96 = vmatpush1.msra.mxu0 0.0
    %97 = vmatprep.subr.mxu0 0.0
    %98 = vmatpush1.msra.mxu0 0.0
    %99 = vmatprep.subr.mxu0 0.0
    %100 = vmatpush1.msra.mxu0 0.0
    %101 = vmatprep.mubr.f32.mxu0 0.0
    %102 = vmatmul.mubr.f32.gmra.mrb[0].mxu0 %v35
    %v103 = vpop.f32.mrb[0].mxu0
    %v104 = vadd.f32 0.0, %v103
    %v105 = vpop.f32.mrb[0].mxu0
    %106 = vdwg.mxu0
    %vm107 = vcmask 254976
    %v108 = vsel %vm107, %v104, 0.0
    %v109 = vrot.slane %v108, 4
    %v110 = vadd.f32 %v108, %v109
    %v111 = vrot.slane %v110, 2
    %v112 = vadd.f32 %v110, %v111
    %v113 = vrot.slane %v112, 1
    %v114 = vadd.f32 %v112, %v113
    %v115 = vrcp.pop 2.0
    %v116 = vmul.f32 %v114, %v115
    %v117 = vmul.f32 %v104, %v104
    %v118 = vsel %vm107, %v117, 0.0
    %v119 = vrot.slane %v118, 4
    %v120 = vadd.f32 %v118, %v119
    %v121 = vrot.slane %v120, 2
    %v122 = vadd.f32 %v120, %v121
    %v123 = vrot.slane %v122, 1
    %v124 = vadd.f32 %v122, %v123
    %v125 = vmul.f32 %v124, %v115
    %v126 = vmul.f32 %v116, %v116
    %v127 = vsub.f32 %v125, %v126
    %v128 = vmax.f32 %v127, 0.0
    %v129 = vld [vmem:[%s2] sm:$0x1]
    %v130 = vadd.f32 %v128, 1e-05
    %v131 = vrsqrt.pop %v130
    %v132 = vmul.f32 %v129, %v131
    %v133 = vld [vmem:[%s3] sm:$0x1]
    %v134 = vmul.f32 %v116, %v132
    %v135 = vsub.f32 %v133, %v134
    %v137 = vlaneseq
    %v138 = vshrl.u32 %v137, 7
    %v139 = vsub.s32 0, %v138
    %v140 = vrot.slane %v132, %v139
    %v142 = vmul.f32 %v104, %v140
    %v144 = vlaneseq
    %v145 = vshrl.u32 %v144, 7
    %v146 = vsub.s32 0, %v145
    %v147 = vrot.slane %v135, %v146
    %v149 = vadd.f32 %v142, %v147
    %v150 = vmax.f32 %v149, 0.0
    %v151 = vld [vmem:[%s4] sm:$0xff]
    %v152 = vld [vmem:[%s4 + $0x8] sm:$0xff]
    %v153 = vld [vmem:[%s4 + $0x10] sm:$0xff]
    %v154 = vld [vmem:[%s4 + $0x18] sm:$0xff]
    %v155 = vld [vmem:[%s5] sm:$0x1]
    %v157 = vlaneseq
    %v158 = vshrl.u32 %v157, 7
    %v159 = vsub.s32 0, %v158
    %v160 = vrot.slane %v155, %v159
    %vm162 = vcmask 261120
    %v164 = vsel %vm162, %v150, 0
    %166 = vmatprep.subr.mxu0 0.0
    %167 = vmatpush1.msra.mxu0 %v151
    %168 = vmatprep.subr.mxu0 0.0
    %169 = vmatpush1.msra.mxu0 %v152
    %170 = vmatprep.subr.mxu0 0.0
    %171 = vmatpush1.msra.mxu0 %v153
    %172 = vmatprep.subr.mxu0 0.0
    %173 = vmatpush1.msra.mxu0 %v154
    %174 = vmatprep.subr.mxu0 0.0
    %175 = vmatpush1.msra.mxu0 0.0
    %176 = vmatprep.subr.mxu0 0.0
    %177 = vmatpush1.msra.mxu0 0.0
    %178 = vmatprep.subr.mxu0 0.0
    %179 = vmatpush1.msra.mxu0 0.0
    %180 = vmatprep.subr.mxu0 0.0
    %181 = vmatpush1.msra.mxu0 0.0
    %182 = vmatprep.subr.mxu0 0.0
    %183 = vmatpush1.msra.mxu0 0.0
    %184 = vmatprep.subr.mxu0 0.0
    %185 = vmatpush1.msra.mxu0 0.0
    %186 = vmatprep.subr.mxu0 0.0
    %187 = vmatpush1.msra.mxu0 0.0
    %188 = vmatprep.subr.mxu0 0.0
    %189 = vmatpush1.msra.mxu0 0.0
    %190 = vmatprep.subr.mxu0 0.0
    %191 = vmatpush1.msra.mxu0 0.0
    %192 = vmatprep.subr.mxu0 0.0
    %193 = vmatpush1.msra.mxu0 0.0
    %194 = vmatprep.subr.mxu0 0.0
    %195 = vmatpush1.msra.mxu0 0.0
    %196 = vmatprep.subr.mxu0 0.0
    %197 = vmatpush1.msra.mxu0 0.0
    %198 = vmatprep.subr.mxu0 0.0
    %199 = vmatpush1.msra.mxu0 0.0
    %200 = vmatprep.subr.mxu0 0.0
    %201 = vmatpush1.msra.mxu0 0.0
    %202 = vmatprep.subr.mxu0 0.0
    %203 = vmatpush1.msra.mxu0 0.0
    %204 = vmatprep.subr.mxu0 0.0
    %205 = vmatpush1.msra.mxu0 0.0
    %206 = vmatprep.subr.mxu0 0.0
    %207 = vmatpush1.msra.mxu0 0.0
    %208 = vmatprep.subr.mxu0 0.0
    %209 = vmatpush1.msra.mxu0 0.0
    %210 = vmatprep.subr.mxu0 0.0
    %211 = vmatpush1.msra.mxu0 0.0
    %212 = vmatprep.subr.mxu0 0.0
    %213 = vmatpush1.msra.mxu0 0.0
    %214 = vmatprep.subr.mxu0 0.0
    %215 = vmatpush1.msra.mxu0 0.0
    %216 = vmatprep.subr.mxu0 0.0
    %217 = vmatpush1.msra.mxu0 0.0
    %218 = vmatprep.subr.mxu0 0.0
    %219 = vmatpush1.msra.mxu0 0.0
    %220 = vmatprep.subr.mxu0 0.0
    %221 = vmatpush1.msra.mxu0 0.0
    %222 = vmatprep.subr.mxu0 0.0
    %223 = vmatpush1.msra.mxu0 0.0
    %224 = vmatprep.subr.mxu0 0.0
    %225 = vmatpush1.msra.mxu0 0.0
    %226 = vmatprep.subr.mxu0 0.0
    %227 = vmatpush1.msra.mxu0 0.0
    %228 = vmatprep.subr.mxu0 0.0
    %229 = vmatpush1.msra.mxu0 0.0
    %230 = vmatprep.mubr.f32.mxu0 0.0
    %231 = vmatmul.mubr.f32.gmra.mrb[0].mxu0 %v164
    %v232 = vpop.f32.mrb[0].mxu0
    %v233 = vadd.f32 %v160, %v232
    %v234 = vpop.f32.mrb[0].mxu0
    %235 = vdwg.mxu0
    %vm236 = vcmask 74752
    %237 = vst.msk [vmem:[#allocation2] sm:$0x3] %vm236, %v233
    // Predicated region
    $region26: #{vgg_forward.21} parent=1 // pred_check
      _
    $region27: #{vgg_forward.21} parent=1 // pred_check_branch
      %239 = sbr.rel (0) target = $region29
    $region28: #{vgg_forward.21} parent=1 // pred_region
      %s241 = ssub.s32 32, 32
      %242 = vsyncadd [#allocation3], %s241
      %s244 = sshll.u32 [#allocation2], 4
      %s245 = int_to_ptr.vmem [resolvable:$true] %s244
      %247 = dma.vmem_to_hbm [thread:$0]  %s245, 32, %s6, [#allocation3]
    $region29: #{vgg_forward.21} parent=1 // pred_fallthru
      _
    // Predicated region
    $region30: #{vgg_forward.21} parent=1 // pred_check
      _
    $region31: #{vgg_forward.21} parent=1 // pred_check_branch
      %249 = sbr.rel (0) target = $region33
    $region32: #{vgg_forward.21} parent=1 // pred_region
      %250 = dma.done [#allocation3], 32
    $region33: #{vgg_forward.21} parent=1 // pred_fallthru
      _
    %251 = vsyncpa [#allocation3], 1

// kernel: vgg_forward.20
$region0: #{vgg_forward.20}
  #allocation0 [shape = 'u32[]', space=smem, size = 0x4, offset = 0x4, fixed_abs, tag = 'smem constant byte address 0x4 - core index']
  #allocation1 [shape = 'u32[144,128]{1,0:T(1,128)}', space=vmem, size = 0x12000, scoped, tag = 'internal scratch']
  %s0 = inlined_call_operand.vmem [shape: bf16[2,4,128], index: 0, kind: input, shape index: {}]
  %s1 = inlined_call_operand.vmem [shape: f32[1,128], index: 1, kind: input, shape index: {}]
  %s2 = inlined_call_operand.vmem [shape: f32[1,128], index: 2, kind: input, shape index: {}]
  %s3 = inlined_call_operand.vmem [shape: bf16[2,1,1,128], index: 3, kind: output, shape index: {}]
  %s4 = sld [smem:[#allocation0]]
  $region45: #{vgg_forward.20} parent=0
    _
  %s6 = ssub.s32 1, %s4
  %s7 = scalar_select 0, %s6, %s4
  loop: start=0, step=1, limit=4
  $region2: #{vgg_forward.20} parent=0 // loop_pre_header
    _
  $region3: #{vgg_forward.20} parent=0 // loop_header
    %s9 = sphi 0, %s13
    %p10 = scmp.ge.s32.totalorder %s9, 4
    %s19 = sphi 0, %s21
    %s22 = sphi 0, %s19
    %s23 = sphi 0, %s22
    %s39 = sphi 0, %s23
    %s43 = sphi 0, %s43
    %s45 = sphi 0, %s43
    %s46 = sphi 0, %s45
    %s60 = sphi 0, %s46
    %s64 = sphi 0, %s64
    %s66 = sphi 0, %s64
    %s67 = sphi 0, %s66
    %s81 = sphi 0, %s67
    %s87 = sphi 0, %s89
    %s90 = sphi 0, %s87
    %s91 = sphi 0, %s90
    %s107 = sphi 0, %s91
  $region4: #{vgg_forward.20} parent=0 // loop_header_branch
    %12 = sbr.rel (%p10) target = $region8
  $region5: #{vgg_forward.20} parent=0 // loop_body
    %s14 = ssub.s32 %s9, 1
    %s15 = ssub.s32 %s9, 2
    %s16 = sadd.s32 %s9, 1
    %s17 = ssub.s32 %s9, %s16
    %p18 = scmp.eq.s32.totalorder %s17, 0
    %s20 = sadd.s32 %s19, 1
    %s21 = scalar_select %p18, %s19, %s20
    %p24 = pneg %p18
    %p25 = scmp.eq.s32.totalorder %s9, 1
    %p26 = por %p24, %p25
    %p27 = scmp.ne.s32.totalorder %s19, %s22
    %p28 = scmp.eq.s32.totalorder %s9, 0
    %p29 = por %p27, %p28
    %p30 = scmp.ne.s32.totalorder %s19, %s22
    %p31 = scmp.eq.s32.totalorder %s14, 1
    %p32 = por %p30, %p31
    %p33 = scmp.ne.s32.totalorder %s22, %s23
    %p34 = scmp.eq.s32.totalorder %s14, 0
    %p35 = por %p33, %p34
    %p36 = scmp.ne.s32.totalorder %s22, %s23
    %p37 = scmp.eq.s32.totalorder %s15, 1
    %p38 = por %p36, %p37
    %p40 = scmp.ne.s32.totalorder %s23, %s39
    %p41 = scmp.eq.s32.totalorder %s15, 0
    %p42 = por %p40, %p41
    %s44 = sadd.s32 %s43, 1
    %p47 = scmp.eq.s32.totalorder %s9, 1
    %p48 = scmp.ne.s32.totalorder %s43, %s45
    %p49 = scmp.eq.s32.totalorder %s9, 0
    %p50 = por %p48, %p49
    %p51 = scmp.ne.s32.totalorder %s43, %s45
    %p52 = scmp.eq.s32.totalorder %s14, 1
    %p53 = por %p51, %p52
    %p54 = scmp.ne.s32.totalorder %s45, %s46
    %p55 = scmp.eq.s32.totalorder %s14, 0
    %p56 = por %p54, %p55
    %p57 = scmp.ne.s32.totalorder %s45, %s46
    %p58 = scmp.eq.s32.totalorder %s15, 1
    %p59 = por %p57, %p58
    %p61 = scmp.ne.s32.totalorder %s46, %s60
    %p62 = scmp.eq.s32.totalorder %s15, 0
    %p63 = por %p61, %p62
    %s65 = sadd.s32 %s64, 1
    %p68 = scmp.eq.s32.totalorder %s9, 1
    %p69 = scmp.ne.s32.totalorder %s64, %s66
    %p70 = scmp.eq.s32.totalorder %s9, 0
    %p71 = por %p69, %p70
    %p72 = scmp.ne.s32.totalorder %s64, %s66
    %p73 = scmp.eq.s32.totalorder %s14, 1
    %p74 = por %p72, %p73
    %p75 = scmp.ne.s32.totalorder %s66, %s67
    %p76 = scmp.eq.s32.totalorder %s14, 0
    %p77 = por %p75, %p76
    %p78 = scmp.ne.s32.totalorder %s66, %s67
    %p79 = scmp.eq.s32.totalorder %s15, 1
    %p80 = por %p78, %p79
    %p82 = scmp.ne.s32.totalorder %s67, %s81
    %p83 = scmp.eq.s32.totalorder %s15, 0
    %p84 = por %p82, %p83
    %s85 = ssub.s32 %s9, %s16
    %p86 = scmp.eq.s32.totalorder %s85, 0
    %s88 = sadd.s32 %s87, 1
    %s89 = scalar_select %p86, %s87, %s88
    %p92 = pneg %p86
    %p93 = scmp.eq.s32.totalorder %s9, 1
    %p94 = por %p92, %p93
    %p95 = scmp.ne.s32.totalorder %s87, %s90
    %p96 = scmp.eq.s32.totalorder %s9, 0
    %p97 = por %p95, %p96
    %p98 = scmp.ne.s32.totalorder %s87, %s90
    %p99 = scmp.eq.s32.totalorder %s14, 1
    %p100 = por %p98, %p99
    %p101 = scmp.ne.s32.totalorder %s90, %s91
    %p102 = scmp.eq.s32.totalorder %s14, 0
    %p103 = por %p101, %p102
    %p104 = scmp.ne.s32.totalorder %s90, %s91
    %p105 = scmp.eq.s32.totalorder %s15, 1
    %p106 = por %p104, %p105
    %p108 = scmp.ne.s32.totalorder %s91, %s107
    %p109 = scmp.eq.s32.totalorder %s15, 0
    %p110 = por %p108, %p109
    %p111 = scmp.le.s32.totalorder 1, %s9
    %p112 = scmp.lt.s32.totalorder %s9, 3
    %p113 = pnand %p111, %p112
    %p114 = pneg %p113
    // Predicated region
    $region9: #{vgg_forward.20} parent=5 // pred_check
      _
    $region10: #{vgg_forward.20} parent=5 // pred_check_branch
      %116 = sbr.rel (%p113) target = $region12
    $region11: #{vgg_forward.20} parent=5 // pred_region
      %s117 = ssub.s32 %s9, 1
      // Predicated region
      $region13: #{vgg_forward.20} parent=11 // pred_check
        %p118 = pneg %p56
      $region14: #{vgg_forward.20} parent=11 // pred_check_branch
        %120 = sbr.rel (%p118) target = $region16
      $region15: #{vgg_forward.20} parent=11 // pred_region
        _
      $region16: #{vgg_forward.20} parent=11 // pred_fallthru
        _
      // Predicated region
      $region17: #{vgg_forward.20} parent=11 // pred_check
        %p121 = pneg %p77
      $region18: #{vgg_forward.20} parent=11 // pred_check_branch
        %123 = sbr.rel (%p121) target = $region20
      $region19: #{vgg_forward.20} parent=11 // pred_region
        _
      $region20: #{vgg_forward.20} parent=11 // pred_fallthru
        _
    $region12: #{vgg_forward.20} parent=5 // pred_fallthru
      _
    %p124 = scmp.lt.s32.totalorder %s9, 2
    // Predicated region
    $region21: #{vgg_forward.20} parent=5 // pred_check
      %p125 = pneg %p124
    $region22: #{vgg_forward.20} parent=5 // pred_check_branch
      %127 = sbr.rel (%p125) target = $region24
    $region23: #{vgg_forward.20} parent=5 // pred_region
      // Predicated region
      $region25: #{vgg_forward.20} parent=23 // pred_check
        %p128 = pneg %p29
      $region26: #{vgg_forward.20} parent=23 // pred_check_branch
        %130 = sbr.rel (%p128) target = $region28
      $region27: #{vgg_forward.20} parent=23 // pred_region
        %p131 = scmp.lt.s32.totalorder %s9, 1
        %s132 = scalar_select %p131, %s9, 1
        %s133 = smul.addr %s132, 2
        %s134 = scalar_lea.vmem %s0, %s133
      $region28: #{vgg_forward.20} parent=23 // pred_fallthru
        _
    $region24: #{vgg_forward.20} parent=5 // pred_fallthru
      _
    %p135 = scmp.le.s32.totalorder 1, %s9
    %p136 = scmp.lt.s32.totalorder %s9, 3
    %p137 = pnand %p135, %p136
    %p138 = pneg %p137
    // Predicated region
    $region29: #{vgg_forward.20} parent=5 // pred_check
      _
    $region30: #{vgg_forward.20} parent=5 // pred_check_branch
      %140 = sbr.rel (%p137) target = $region32
    $region31: #{vgg_forward.20} parent=5 // pred_region
      %s141 = ssub.s32 %s9, 1
      %p142 = scmp.lt.s32.totalorder %s14, 1
      %s143 = scalar_select %p142, %s14, 1
      %s144 = smul.addr %s143, 2
      %s145 = scalar_lea.vmem %s0, %s144
      %p146 = pneg %p35
      %p147 = pneg %p32
      %p148 = pneg %p56
      %p149 = pneg %p53
      %p150 = pneg %p77
      %p151 = pneg %p74
      %p152 = pneg %p103
      %p153 = pneg %p100
      %p154 = scmp.lt.s32.totalorder %s14, 1
      %s155 = scalar_select %p154, %s14, 1
      %s156 = scalar_lea.vmem %s3, %s155
      %p157 = scmp.lt.s32.totalorder %s14, 1
      %s158 = scalar_select %p157, %s14, 1
      %s159 = smul.addr %s158, 2
      %s160 = scalar_lea.vmem %s0, %s159
      %p161 = scmp.lt.s32.totalorder %s14, 1
      %s162 = scalar_select %p161, %s14, 1
      %s163 = scalar_lea.vmem %s3, %s162
      %v164 = vld [vmem:[%s160] sm:$0x3]
      %v165 = vunpack.c.l.bf16 %v164
      %v166 = vld [vmem:[%s1] sm:$0x1]
      %v168 = vlaneseq
      %v169 = vshrl.u32 %v168, 7
      %v170 = vsub.s32 0, %v169
      %v171 = vrot.slane %v166, %v170
      %v173 = vmul.f32 %v165, %v171
      %v174 = vld [vmem:[%s2] sm:$0x1]
      %v176 = vlaneseq
      %v177 = vshrl.u32 %v176, 7
      %v178 = vsub.s32 0, %v177
      %v179 = vrot.slane %v174, %v178
      %v181 = vadd.f32 %v173, %v179
      %v182 = vmax.f32 %v181, 0.0
      %v185 = vunpack.c.l.s4 1983009808
      %v186 = vunpack.c.0.s8 %v185
      %v187 = vlaneseq
      %v188 = vshrl.u32 %v187, 7
      %v189 = vsub.s32 %v186, %v188
      %v190 = vrot.slane %v182, %v189
      %v191 = vcombine.high %v190, %v190
      %vm194 = vcmask 1041408
      %v195 = vsel %vm194, %v190, 0.0
      %v196 = vrot.slane %v195, 4
      %v197 = vadd.f32 %v195, %v196
      %v198 = vrot.slane %v197, 2
      %v199 = vadd.f32 %v197, %v198
      %v200 = vrot.slane %v199, 1
      %v201 = vadd.f32 %v199, %v200
      %v202 = vsel %vm194, %v191, 0.0
      %v203 = vrot.slane %v202, 4
      %v204 = vadd.f32 %v202, %v203
      %v205 = vrot.slane %v204, 2
      %v206 = vadd.f32 %v204, %v205
      %v207 = vrot.slane %v206, 1
      %v208 = vadd.f32 %v206, %v207
      %v209 = vadd.f32 %v201, %v208
      %v210 = vmul.f32 %v209, 0.25
      %v211 = vpack.c.bf16 %v210, %v210
      %vm212 = vcmask 1040384
      %vm213 = vsmask.f32 256
      %vm214 = vmand %vm212, %vm213
      %v215 = vld [vmem:[%s163] sm:$0x1]
      %v216 = vsel %vm214, %v211, %v215
      %217 = vst [vmem:[%s163] sm:$0x1] %v216
      %p218 = scmp.lt.s32.totalorder %s14, 1
      %s219 = scalar_select %p218, %s14, 1
      %s220 = scalar_lea.vmem %s3, %s219
      // Predicated region
      $region33: #{vgg_forward.20} parent=31 // pred_check
        %p221 = pneg %p100
      $region34: #{vgg_forward.20} parent=31 // pred_check_branch
        %223 = sbr.rel (%p221) target = $region36
      $region35: #{vgg_forward.20} parent=31 // pred_region
        _
      $region36: #{vgg_forward.20} parent=31 // pred_fallthru
        _
    $region32: #{vgg_forward.20} parent=5 // pred_fallthru
      _
    %p224 = scmp.le.s32.totalorder 2, %s9
    // Predicated region
    $region37: #{vgg_forward.20} parent=5 // pred_check
      %p225 = pneg %p224
    $region38: #{vgg_forward.20} parent=5 // pred_check_branch
      %227 = sbr.rel (%p225) target = $region40
    $region39: #{vgg_forward.20} parent=5 // pred_region
      %s228 = ssub.s32 %s9, 2
      // Predicated region
      $region41: #{vgg_forward.20} parent=39 // pred_check
        %p229 = pneg %p106
      $region42: #{vgg_forward.20} parent=39 // pred_check_branch
        %231 = sbr.rel (%p229) target = $region44
      $region43: #{vgg_forward.20} parent=39 // pred_region
        %p232 = scmp.lt.s32.totalorder %s15, 1
        %s233 = scalar_select %p232, %s15, 1
        %s234 = scalar_lea.vmem %s3, %s233
      $region44: #{vgg_forward.20} parent=39 // pred_fallthru
        _
    $region40: #{vgg_forward.20} parent=5 // pred_fallthru
      _
  $region6: #{vgg_forward.20} parent=0 // loop_footer
    %s13 = sadd.s32 1, %s9
  $region7: #{vgg_forward.20} parent=0 // loop_footer_branch
    %8 = sbr.rel target = $region3
  $region8: #{vgg_forward.20} parent=0 // loop_exit
    _

// kernel: vgg_forward.19
$region0: #{vgg_forward.19}
  #allocation0 [shape = 'u32[]', space=smem, size = 0x4, offset = 0x4, fixed_abs, tag = 'smem constant byte address 0x4 - core index']
  #allocation1 [shape = 'u32[144,128]{1,0:T(1,128)}', space=vmem, size = 0x12000, scoped, tag = 'internal scratch']
  %s0 = inlined_call_operand.vmem [shape: bf16[2,4,4,128], index: 0, kind: input, shape index: {}]
  %s1 = inlined_call_operand.vmem [shape: bf16[9,128,128], index: 1, kind: input, shape index: {}]
  %s2 = inlined_call_operand.vmem [shape: bf16[2,4,128], index: 2, kind: output, shape index: {0}]
  %s3 = inlined_call_operand.vmem [shape: f32[2,2,128], index: 3, kind: output, shape index: {1}]
  %4 = xla_tuple %s2, %s3
  %s5 = sld [smem:[#allocation0]]
  $region49: #{vgg_forward.19} parent=0
    _
  %s7 = ssub.s32 1, %s5
  %s8 = scalar_select 0, %s7, %s5
  loop: start=0, step=1, limit=4
  $region2: #{vgg_forward.19} parent=0 // loop_pre_header
    _
  $region3: #{vgg_forward.19} parent=0 // loop_header
    %s10 = sphi 0, %s14
    %p11 = scmp.ge.s32.totalorder %s10, 4
    %s20 = sphi 0, %s22
    %s23 = sphi 0, %s20
    %s24 = sphi 0, %s23
    %s40 = sphi 0, %s24
    %s44 = sphi 0, %s44
    %s46 = sphi 0, %s44
    %s47 = sphi 0, %s46
    %s61 = sphi 0, %s47
    %s67 = sphi 0, %s69
    %s70 = sphi 0, %s67
    %s71 = sphi 0, %s70
    %s87 = sphi 0, %s71
    %s93 = sphi 0, %s95
    %s96 = sphi 0, %s93
    %s97 = sphi 0, %s96
    %s113 = sphi 0, %s97
  $region4: #{vgg_forward.19} parent=0 // loop_header_branch
    %13 = sbr.rel (%p11) target = $region8
  $region5: #{vgg_forward.19} parent=0 // loop_body
    %s15 = ssub.s32 %s10, 1
    %s16 = ssub.s32 %s10, 2
    %s17 = sadd.s32 %s10, 1
    %s18 = ssub.s32 %s10, %s17
    %p19 = scmp.eq.s32.totalorder %s18, 0
    %s21 = sadd.s32 %s20, 1
    %s22 = scalar_select %p19, %s20, %s21
    %p25 = pneg %p19
    %p26 = scmp.eq.s32.totalorder %s10, 1
    %p27 = por %p25, %p26
    %p28 = scmp.ne.s32.totalorder %s20, %s23
    %p29 = scmp.eq.s32.totalorder %s10, 0
    %p30 = por %p28, %p29
    %p31 = scmp.ne.s32.totalorder %s20, %s23
    %p32 = scmp.eq.s32.totalorder %s15, 1
    %p33 = por %p31, %p32
    %p34 = scmp.ne.s32.totalorder %s23, %s24
    %p35 = scmp.eq.s32.totalorder %s15, 0
    %p36 = por %p34, %p35
    %p37 = scmp.ne.s32.totalorder %s23, %s24
    %p38 = scmp.eq.s32.totalorder %s16, 1
    %p39 = por %p37, %p38
    %p41 = scmp.ne.s32.totalorder %s24, %s40
    %p42 = scmp.eq.s32.totalorder %s16, 0
    %p43 = por %p41, %p42
    %s45 = sadd.s32 %s44, 1
    %p48 = scmp.eq.s32.totalorder %s10, 1
    %p49 = scmp.ne.s32.totalorder %s44, %s46
    %p50 = scmp.eq.s32.totalorder %s10, 0
    %p51 = por %p49, %p50
    %p52 = scmp.ne.s32.totalorder %s44, %s46
    %p53 = scmp.eq.s32.totalorder %s15, 1
    %p54 = por %p52, %p53
    %p55 = scmp.ne.s32.totalorder %s46, %s47
    %p56 = scmp.eq.s32.totalorder %s15, 0
    %p57 = por %p55, %p56
    %p58 = scmp.ne.s32.totalorder %s46, %s47
    %p59 = scmp.eq.s32.totalorder %s16, 1
    %p60 = por %p58, %p59
    %p62 = scmp.ne.s32.totalorder %s47, %s61
    %p63 = scmp.eq.s32.totalorder %s16, 0
    %p64 = por %p62, %p63
    %s65 = ssub.s32 %s10, %s17
    %p66 = scmp.eq.s32.totalorder %s65, 0
    %s68 = sadd.s32 %s67, 1
    %s69 = scalar_select %p66, %s67, %s68
    %p72 = pneg %p66
    %p73 = scmp.eq.s32.totalorder %s10, 1
    %p74 = por %p72, %p73
    %p75 = scmp.ne.s32.totalorder %s67, %s70
    %p76 = scmp.eq.s32.totalorder %s10, 0
    %p77 = por %p75, %p76
    %p78 = scmp.ne.s32.totalorder %s67, %s70
    %p79 = scmp.eq.s32.totalorder %s15, 1
    %p80 = por %p78, %p79
    %p81 = scmp.ne.s32.totalorder %s70, %s71
    %p82 = scmp.eq.s32.totalorder %s15, 0
    %p83 = por %p81, %p82
    %p84 = scmp.ne.s32.totalorder %s70, %s71
    %p85 = scmp.eq.s32.totalorder %s16, 1
    %p86 = por %p84, %p85
    %p88 = scmp.ne.s32.totalorder %s71, %s87
    %p89 = scmp.eq.s32.totalorder %s16, 0
    %p90 = por %p88, %p89
    %s91 = ssub.s32 %s10, %s17
    %p92 = scmp.eq.s32.totalorder %s91, 0
    %s94 = sadd.s32 %s93, 1
    %s95 = scalar_select %p92, %s93, %s94
    %p98 = pneg %p92
    %p99 = scmp.eq.s32.totalorder %s10, 1
    %p100 = por %p98, %p99
    %p101 = scmp.ne.s32.totalorder %s93, %s96
    %p102 = scmp.eq.s32.totalorder %s10, 0
    %p103 = por %p101, %p102
    %p104 = scmp.ne.s32.totalorder %s93, %s96
    %p105 = scmp.eq.s32.totalorder %s15, 1
    %p106 = por %p104, %p105
    %p107 = scmp.ne.s32.totalorder %s96, %s97
    %p108 = scmp.eq.s32.totalorder %s15, 0
    %p109 = por %p107, %p108
    %p110 = scmp.ne.s32.totalorder %s96, %s97
    %p111 = scmp.eq.s32.totalorder %s16, 1
    %p112 = por %p110, %p111
    %p114 = scmp.ne.s32.totalorder %s97, %s113
    %p115 = scmp.eq.s32.totalorder %s16, 0
    %p116 = por %p114, %p115
    %p117 = scmp.le.s32.totalorder 1, %s10
    %p118 = scmp.lt.s32.totalorder %s10, 3
    %p119 = pnand %p117, %p118
    %p120 = pneg %p119
    // Predicated region
    $region9: #{vgg_forward.19} parent=5 // pred_check
      _
    $region10: #{vgg_forward.19} parent=5 // pred_check_branch
      %122 = sbr.rel (%p119) target = $region12
    $region11: #{vgg_forward.19} parent=5 // pred_region
      %s123 = ssub.s32 %s10, 1
      // Predicated region
      $region13: #{vgg_forward.19} parent=11 // pred_check
        %p124 = pneg %p57
      $region14: #{vgg_forward.19} parent=11 // pred_check_branch
        %126 = sbr.rel (%p124) target = $region16
      $region15: #{vgg_forward.19} parent=11 // pred_region
        _
      $region16: #{vgg_forward.19} parent=11 // pred_fallthru
        _
    $region12: #{vgg_forward.19} parent=5 // pred_fallthru
      _
    %p127 = scmp.lt.s32.totalorder %s10, 2
    // Predicated region
    $region17: #{vgg_forward.19} parent=5 // pred_check
      %p128 = pneg %p127
    $region18: #{vgg_forward.19} parent=5 // pred_check_branch
      %130 = sbr.rel (%p128) target = $region20
    $region19: #{vgg_forward.19} parent=5 // pred_region
      // Predicated region
      $region21: #{vgg_forward.19} parent=19 // pred_check
        %p131 = pneg %p30
      $region22: #{vgg_forward.19} parent=19 // pred_check_branch
        %133 = sbr.rel (%p131) target = $region24
      $region23: #{vgg_forward.19} parent=19 // pred_region
        %p134 = scmp.lt.s32.totalorder %s10, 1
        %s135 = scalar_select %p134, %s10, 1
        %s136 = smul.addr %s135, 4
        %s137 = smul.addr %s136, 2
        %s138 = scalar_lea.vmem %s0, %s137
      $region24: #{vgg_forward.19} parent=19 // pred_fallthru
        _
    $region20: #{vgg_forward.19} parent=5 // pred_fallthru
      _
    %p139 = scmp.le.s32.totalorder 1, %s10
    %p140 = scmp.lt.s32.totalorder %s10, 3
    %p141 = pnand %p139, %p140
    %p142 = pneg %p141
    // Predicated region
    $region25: #{vgg_forward.19} parent=5 // pred_check
      _
    $region26: #{vgg_forward.19} parent=5 // pred_check_branch
      %144 = sbr.rel (%p141) target = $region28
    $region27: #{vgg_forward.19} parent=5 // pred_region
      %s145 = ssub.s32 %s10, 1
      %p146 = scmp.lt.s32.totalorder %s15, 1
      %s147 = scalar_select %p146, %s15, 1
      %s148 = smul.addr %s147, 4
      %s149 = smul.addr %s148, 2
      %s150 = scalar_lea.vmem %s0, %s149
      %p151 = pneg %p36
      %p152 = pneg %p33
      %p153 = pneg %p57
      %p154 = pneg %p54
      %p155 = pneg %p83
      %p156 = pneg %p80
      %p157 = scmp.lt.s32.totalorder %s15, 1
      %s158 = scalar_select %p157, %s15, 1
      %s159 = smul.addr %s158, 2
      %s160 = scalar_lea.vmem %s2, %s159
      %p161 = pneg %p109
      %p162 = pneg %p106
      %p163 = scmp.lt.s32.totalorder %s15, 1
      %s164 = scalar_select %p163, %s15, 1
      %s165 = smul.addr %s164, 2
      %s166 = scalar_lea.vmem %s3, %s165
      %p167 = scmp.lt.s32.totalorder %s15, 1
      %s168 = scalar_select %p167, %s15, 1
      %s169 = smul.addr %s168, 4
      %s170 = smul.addr %s169, 2
      %s171 = scalar_lea.vmem %s0, %s170
      %p172 = scmp.lt.s32.totalorder %s15, 1
      %s173 = scalar_select %p172, %s15, 1
      %s174 = smul.addr %s173, 2
      %s175 = scalar_lea.vmem %s2, %s174
      %p176 = scmp.lt.s32.totalorder %s15, 1
      %s177 = scalar_select %p176, %s15, 1
      %s178 = smul.addr %s177, 2
      %s179 = scalar_lea.vmem %s3, %s178
      %v181 = vld [vmem:[%s171] sm:$0x1]
      %v182 = vld [vmem:[%s171 + $0x2] sm:$0x1]
      %v183 = vld [vmem:[%s1] sm:$0xf]
      %v184 = vld [vmem:[%s1 + $0x4] sm:$0xf]
      %v185 = vld [vmem:[%s1 + $0x8] sm:$0xf]
      %v186 = vld [vmem:[%s1 + $0xc] sm:$0xf]
      %v187 = vld [vmem:[%s1 + $0x10] sm:$0xf]
      %v188 = vld [vmem:[%s1 + $0x14] sm:$0xf]
      %v189 = vld [vmem:[%s1 + $0x18] sm:$0xf]
      %v190 = vld [vmem:[%s1 + $0x1c] sm:$0xf]
      %v191 = vld [vmem:[%s1 + $0x20] sm:$0xf]
      %v192 = vld [vmem:[%s1 + $0x24] sm:$0xf]
      %v193 = vld [vmem:[%s1 + $0x28] sm:$0xf]
      %v194 = vld [vmem:[%s1 + $0x2c] sm:$0xf]
      %v195 = vld [vmem:[%s1 + $0x30] sm:$0xf]
      %v196 = vld [vmem:[%s1 + $0x34] sm:$0xf]
      %v197 = vld [vmem:[%s1 + $0x38] sm:$0xf]
      %v198 = vld [vmem:[%s1 + $0x3c] sm:$0xf]
      %v199 = vld [vmem:[%s171] sm:$0x3]
      %v200 = vld [vmem:[%s171 + $0x2] sm:$0x3]
      %v204 = vunpack.c.l.s4 1966171168
      %v205 = vunpack.c.0.s8 %v204
      %v206 = vlaneseq
      %v207 = vshrl.u32 %v206, 7
      %v208 = vsub.s32 %v205, %v207
      %v209 = vrot.slane %v199, %v208
      %v210 = vcombine.high %v209, %v209
      %v212 = vunpack.c.l.s4 1966171168
      %v213 = vunpack.c.0.s8 %v212
      %v214 = vlaneseq
      %v215 = vshrl.u32 %v214, 7
      %v216 = vsub.s32 %v213, %v215
      %v217 = vrot.slane %v200, %v216
      %v218 = vcombine.high %v217, %v217
      %vm219 = vsmask.f32 256
      %vm220 = vsmask.f32 1284
      %vm221 = vmor %vm219, %vm220
      %vm222 = vsmask.f32 2312
      %vm223 = vmor %vm221, %vm222
      %vm224 = vsmask.f32 3340
      %vm225 = vmor %vm223, %vm224
      %vm226 = vsmask.f32 4368
      %vm227 = vmor %vm225, %vm226
      %vm228 = vsmask.f32 5396
      %vm229 = vmor %vm227, %vm228
      %vm230 = vsmask.f32 6424
      %vm231 = vmor %vm229, %vm230
      %vm232 = vsmask.f32 7452
      %vm233 = vmor %vm231, %vm232
      %v235 = vshrl.u32 %v209, 16
      %v237 = vrot.slane %v235, 7
      %v238 = vrot.slane %v237, 1
      %v240 = vshll.u32 %v210, 16
      %v242 = vsel %vm233, %v238, %v240
      %v244 = vshrl.u32 %v217, 16
      %v246 = vrot.slane %v244, 7
      %v247 = vrot.slane %v246, 1
      %v249 = vshll.u32 %v218, 16
      %v251 = vsel %vm233, %v247, %v249
      %s252 = scalar_lea.vmem %s1, 64
      %v253 = vld [vmem:[%s252] sm:$0xf]
      %v254 = vld [vmem:[%s252 + $0x4] sm:$0xf]
      %v255 = vld [vmem:[%s252 + $0x8] sm:$0xf]
      %v256 = vld [vmem:[%s252 + $0xc] sm:$0xf]
      %v257 = vld [vmem:[%s252 + $0x10] sm:$0xf]
      %v258 = vld [vmem:[%s252 + $0x14] sm:$0xf]
      %v259 = vld [vmem:[%s252 + $0x18] sm:$0xf]
      %v260 = vld [vmem:[%s252 + $0x1c] sm:$0xf]
      %v261 = vld [vmem:[%s252 + $0x20] sm:$0xf]
      %v262 = vld [vmem:[%s252 + $0x24] sm:$0xf]
      %v263 = vld [vmem:[%s252 + $0x28] sm:$0xf]
      %v264 = vld [vmem:[%s252 + $0x2c] sm:$0xf]
      %v265 = vld [vmem:[%s252 + $0x30] sm:$0xf]
      %v266 = vld [vmem:[%s252 + $0x34] sm:$0xf]
      %v267 = vld [vmem:[%s252 + $0x38] sm:$0xf]
      %v268 = vld [vmem:[%s252 + $0x3c] sm:$0xf]
      %v269 = vcombine.low %v242, %v251
      %v271 = vunpack.c.l.s4 1966171168
      %v272 = vunpack.c.0.s8 %v271
      %v273 = vlaneseq
      %v274 = vshrl.u32 %v273, 7
      %v275 = vsub.s32 %v272, %v274
      %v276 = vrot.slane %v269, %v275
      %v278 = vunpack.c.l.s4 1966171168
      %v279 = vunpack.c.0.s8 %v278
      %v280 = vlaneseq
      %v281 = vshrl.u32 %v280, 7
      %v282 = vsub.s32 %v279, %v281
      %v283 = vrot.slane %v276, %v282
      %v301 = vunpack.c.l.b16 %v253
      %v302 = vunpack.c.l.b16 %v254
      %v303 = vunpack.c.l.b16 %v255
      %v304 = vunpack.c.l.b16 %v256
      %v305 = vunpack.c.l.b16 %v257
      %v306 = vunpack.c.l.b16 %v258
      %v307 = vunpack.c.l.b16 %v259
      %v308 = vunpack.c.l.b16 %v260
      %v309 = vunpack.c.l.b16 %v261
      %v310 = vunpack.c.l.b16 %v262
      %v311 = vunpack.c.l.b16 %v263
      %v312 = vunpack.c.l.b16 %v264
      %v313 = vunpack.c.l.b16 %v265
      %v314 = vunpack.c.l.b16 %v266
      %v315 = vunpack.c.l.b16 %v267
      %v316 = vunpack.c.l.b16 %v268
      %v317 = vpack.c.b16 %v302, %v301
      %v318 = vpack.c.b16 %v304, %v303
      %v319 = vpack.c.b16 %v306, %v305
      %v320 = vpack.c.b16 %v308, %v307
      %v321 = vpack.c.b16 %v310, %v309
      %v322 = vpack.c.b16 %v312, %v311
      %v323 = vpack.c.b16 %v314, %v313
      %v324 = vpack.c.b16 %v316, %v315
      %333 = vmatprep.subr.bf16.mxu0 0
      %334 = vmatpush1.bf16.msra.mxu0 %v317
      %335 = vmatprep.subr.bf16.mxu0 0
      %336 = vmatpush1.bf16.msra.mxu0 %v318
      %337 = vmatprep.subr.bf16.mxu0 0
      %338 = vmatpush1.bf16.msra.mxu0 %v319
      %339 = vmatprep.subr.bf16.mxu0 0
      %340 = vmatpush1.bf16.msra.mxu0 %v320
      %341 = vmatprep.subr.bf16.mxu0 0
      %342 = vmatpush1.bf16.msra.mxu0 %v321
      %343 = vmatprep.subr.bf16.mxu0 0
      %344 = vmatpush1.bf16.msra.mxu0 %v322
      %345 = vmatprep.subr.bf16.mxu0 0
      %346 = vmatpush1.bf16.msra.mxu0 %v323
      %347 = vmatprep.subr.bf16.mxu0 0
      %348 = vmatpush1.bf16.msra.mxu0 %v324
      %349 = vmatprep.subr.bf16.mxu0 0
      %350 = vmatpush1.bf16.msra.mxu0 0
      %351 = vmatprep.subr.bf16.mxu0 0
      %352 = vmatpush1.bf16.msra.mxu0 0
      %353 = vmatprep.subr.bf16.mxu0 0
      %354 = vmatpush1.bf16.msra.mxu0 0
      %355 = vmatprep.subr.bf16.mxu0 0
      %356 = vmatpush1.bf16.msra.mxu0 0
      %357 = vmatprep.subr.bf16.mxu0 0
      %358 = vmatpush1.bf16.msra.mxu0 0
      %359 = vmatprep.subr.bf16.mxu0 0
      %360 = vmatpush1.bf16.msra.mxu0 0
      %361 = vmatprep.subr.bf16.mxu0 0
      %362 = vmatpush1.bf16.msra.mxu0 0
      %363 = vmatprep.subr.bf16.mxu0 0
      %364 = vmatpush1.bf16.msra.mxu0 0
      %365 = vmatprep.mubr.bf16.mxu0 0
      %366 = vmatmul.mubr.bf16.gmra.mrb[0].mxu0 %v283
      %v367 = vpop.f32.mrb[0].mxu0
      %v368 = vadd.f32 0.0, %v367
      %v369 = vpop.f32.mrb[0].mxu0
      %v370 = vpop.f32.mrb[0].mxu0
      %v371 = vpop.f32.mrb[0].mxu0
      %372 = vdwg.mxu0
      %v375 = vcombine.low %v181, %v182
      %v377 = vunpack.c.l.s4 1966171168
      %v378 = vunpack.c.0.s8 %v377
      %v379 = vlaneseq
      %v380 = vshrl.u32 %v379, 7
      %v381 = vsub.s32 %v378, %v380
      %v382 = vrot.slane %v375, %v381
      %v384 = vunpack.c.l.s4 1966171168
      %v385 = vunpack.c.0.s8 %v384
      %v386 = vlaneseq
      %v387 = vshrl.u32 %v386, 7
      %v388 = vsub.s32 %v385, %v387
      %v389 = vrot.slane %v382, %v388
      %v407 = vunpack.c.l.b16 %v183
      %v408 = vunpack.c.l.b16 %v184
      %v409 = vunpack.c.l.b16 %v185
      %v410 = vunpack.c.l.b16 %v186
      %v411 = vunpack.c.l.b16 %v187
      %v412 = vunpack.c.l.b16 %v188
      %v413 = vunpack.c.l.b16 %v189
      %v414 = vunpack.c.l.b16 %v190
      %v415 = vunpack.c.l.b16 %v191
      %v416 = vunpack.c.l.b16 %v192
      %v417 = vunpack.c.l.b16 %v193
      %v418 = vunpack.c.l.b16 %v194
      %v419 = vunpack.c.l.b16 %v195
      %v420 = vunpack.c.l.b16 %v196
      %v421 = vunpack.c.l.b16 %v197
      %v422 = vunpack.c.l.b16 %v198
      %v423 = vpack.c.b16 %v408, %v407
      %v424 = vpack.c.b16 %v410, %v409
      %v425 = vpack.c.b16 %v412, %v411
      %v426 = vpack.c.b16 %v414, %v413
      %v427 = vpack.c.b16 %v416, %v415
      %v428 = vpack.c.b16 %v418, %v417
      %v429 = vpack.c.b16 %v420, %v419
      %v430 = vpack.c.b16 %v422, %v421
      %439 = vmatprep.subr.bf16.mxu0 0
      %440 = vmatpush1.bf16.msra.mxu0 %v423
      %441 = vmatprep.subr.bf16.mxu0 0
      %442 = vmatpush1.bf16.msra.mxu0 %v424
      %443 = vmatprep.subr.bf16.mxu0 0
      %444 = vmatpush1.bf16.msra.mxu0 %v425
      %445 = vmatprep.subr.bf16.mxu0 0
      %446 = vmatpush1.bf16.msra.mxu0 %v426
      %447 = vmatprep.subr.bf16.mxu0 0
      %448 = vmatpush1.bf16.msra.mxu0 %v427
      %449 = vmatprep.subr.bf16.mxu0 0
      %450 = vmatpush1.bf16.msra.mxu0 %v428
      %451 = vmatprep.subr.bf16.mxu0 0
      %452 = vmatpush1.bf16.msra.mxu0 %v429
      %453 = vmatprep.subr.bf16.mxu0 0
      %454 = vmatpush1.bf16.msra.mxu0 %v430
      %455 = vmatprep.subr.bf16.mxu0 0
      %456 = vmatpush1.bf16.msra.mxu0 0
      %457 = vmatprep.subr.bf16.mxu0 0
      %458 = vmatpush1.bf16.msra.mxu0 0
      %459 = vmatprep.subr.bf16.mxu0 0
      %460 = vmatpush1.bf16.msra.mxu0 0
      %461 = vmatprep.subr.bf16.mxu0 0
      %462 = vmatpush1.bf16.msra.mxu0 0
      %463 = vmatprep.subr.bf16.mxu0 0
      %464 = vmatpush1.bf16.msra.mxu0 0
      %465 = vmatprep.subr.bf16.mxu0 0
      %466 = vmatpush1.bf16.msra.mxu0 0
      %467 = vmatprep.subr.bf16.mxu0 0
      %468 = vmatpush1.bf16.msra.mxu0 0
      %469 = vmatprep.subr.bf16.mxu0 0
      %470 = vmatpush1.bf16.msra.mxu0 0
      %471 = vmatprep.mubr.bf16.mxu0 0
      %472 = vmatmul.mubr.bf16.gmra.mrb[0].mxu0 %v389
      %v473 = vpop.f32.mrb[0].mxu0
      %v474 = vadd.f32 %v368, %v473
      %v475 = vpop.f32.mrb[0].mxu0
      %v476 = vpop.f32.mrb[0].mxu0
      %v477 = vpop.f32.mrb[0].mxu0
      %478 = vdwg.mxu0
      %v479 = vld [vmem:[%s171] sm:$0x2]
      %v480 = vld [vmem:[%s171 + $0x2] sm:$0x2]
      %v484 = vunpack.c.l.s4 1966171168
      %v485 = vunpack.c.0.s8 %v484
      %v486 = vlaneseq
      %v487 = vshrl.u32 %v486, 7
      %v488 = vsub.s32 %v485, %v487
      %v489 = vrot.slane %v479, %v488
      %v490 = vcombine.high %v489, %v489
      %v492 = vunpack.c.l.s4 1966171168
      %v493 = vunpack.c.0.s8 %v492
      %v494 = vlaneseq
      %v495 = vshrl.u32 %v494, 7
      %v496 = vsub.s32 %v493, %v495
      %v497 = vrot.slane %v480, %v496
      %v498 = vcombine.high %v497, %v497
      %s499 = scalar_lea.vmem %s1, 128
      %v500 = vld [vmem:[%s499] sm:$0xf]
      %v501 = vld [vmem:[%s499 + $0x4] sm:$0xf]
      %v502 = vld [vmem:[%s499 + $0x8] sm:$0xf]
      %v503 = vld [vmem:[%s499 + $0xc] sm:$0xf]
      %v504 = vld [vmem:[%s499 + $0x10] sm:$0xf]
      %v505 = vld [vmem:[%s499 + $0x14] sm:$0xf]
      %v506 = vld [vmem:[%s499 + $0x18] sm:$0xf]
      %v507 = vld [vmem:[%s499 + $0x1c] sm:$0xf]
      %v508 = vld [vmem:[%s499 + $0x20] sm:$0xf]
      %v509 = vld [vmem:[%s499 + $0x24] sm:$0xf]
      %v510 = vld [vmem:[%s499 + $0x28] sm:$0xf]
      %v511 = vld [vmem:[%s499 + $0x2c] sm:$0xf]
      %v512 = vld [vmem:[%s499 + $0x30] sm:$0xf]
      %v513 = vld [vmem:[%s499 + $0x34] sm:$0xf]
      %v514 = vld [vmem:[%s499 + $0x38] sm:$0xf]
      %v515 = vld [vmem:[%s499 + $0x3c] sm:$0xf]
      %v516 = vcombine.low %v490, %v498
      %v518 = vunpack.c.l.s4 1966171168
      %v519 = vunpack.c.0.s8 %v518
      %v520 = vlaneseq
      %v521 = vshrl.u32 %v520, 7
      %v522 = vsub.s32 %v519, %v521
      %v523 = vrot.slane %v516, %v522
      %v525 = vunpack.c.l.s4 1966171168
      %v526 = vunpack.c.0.s8 %v525
      %v527 = vlaneseq
      %v528 = vshrl.u32 %v527, 7
      %v529 = vsub.s32 %v526, %v528
      %v530 = vrot.slane %v523, %v529
      %v548 = vunpack.c.l.b16 %v500
      %v549 = vunpack.c.l.b16 %v501
      %v550 = vunpack.c.l.b16 %v502
      %v551 = vunpack.c.l.b16 %v503
      %v552 = vunpack.c.l.b16 %v504
      %v553 = vunpack.c.l.b16 %v505
      %v554 = vunpack.c.l.b16 %v506
      %v555 = vunpack.c.l.b16 %v507
      %v556 = vunpack.c.l.b16 %v508
      %v557 = vunpack.c.l.b16 %v509
      %v558 = vunpack.c.l.b16 %v510
      %v559 = vunpack.c.l.b16 %v511
      %v560 = vunpack.c.l.b16 %v512
      %v561 = vunpack.c.l.b16 %v513
      %v562 = vunpack.c.l.b16 %v514
      %v563 = vunpack.c.l.b16 %v515
      %v564 = vpack.c.b16 %v549, %v548
      %v565 = vpack.c.b16 %v551, %v550
      %v566 = vpack.c.b16 %v553, %v552
      %v567 = vpack.c.b16 %v555, %v554
      %v568 = vpack.c.b16 %v557, %v556
      %v569 = vpack.c.b16 %v559, %v558
      %v570 = vpack.c.b16 %v561, %v560
      %v571 = vpack.c.b16 %v563, %v562
      %580 = vmatprep.subr.bf16.mxu0 0
      %581 = vmatpush1.bf16.msra.mxu0 %v564
      %582 = vmatprep.subr.bf16.mxu0 0
      %583 = vmatpush1.bf16.msra.mxu0 %v565
      %584 = vmatprep.subr.bf16.mxu0 0
      %585 = vmatpush1.bf16.msra.mxu0 %v566
      %586 = vmatprep.subr.bf16.mxu0 0
      %587 = vmatpush1.bf16.msra.mxu0 %v567
      %588 = vmatprep.subr.bf16.mxu0 0
      %589 = vmatpush1.bf16.msra.mxu0 %v568
      %590 = vmatprep.subr.bf16.mxu0 0
      %591 = vmatpush1.bf16.msra.mxu0 %v569
      %592 = vmatprep.subr.bf16.mxu0 0
      %593 = vmatpush1.bf16.msra.mxu0 %v570
      %594 = vmatprep.subr.bf16.mxu0 0
      %595 = vmatpush1.bf16.msra.mxu0 %v571
      %596 = vmatprep.subr.bf16.mxu0 0
      %597 = vmatpush1.bf16.msra.mxu0 0
      %598 = vmatprep.subr.bf16.mxu0 0
      %599 = vmatpush1.bf16.msra.mxu0 0
      %600 = vmatprep.subr.bf16.mxu0 0
      %601 = vmatpush1.bf16.msra.mxu0 0
      %602 = vmatprep.subr.bf16.mxu0 0
      %603 = vmatpush1.bf16.msra.mxu0 0
      %604 = vmatprep.subr.bf16.mxu0 0
      %605 = vmatpush1.bf16.msra.mxu0 0
      %606 = vmatprep.subr.bf16.mxu0 0
      %607 = vmatpush1.bf16.msra.mxu0 0
      %608 = vmatprep.subr.bf16.mxu0 0
      %609 = vmatpush1.bf16.msra.mxu0 0
      %610 = vmatprep.subr.bf16.mxu0 0
      %611 = vmatpush1.bf16.msra.mxu0 0
      %612 = vmatprep.mubr.bf16.mxu0 0
      %613 = vmatmul.mubr.bf16.gmra.mrb[0].mxu0 %v530
      %v614 = vpop.f32.mrb[0].mxu0
      %v615 = vadd.f32 0.0, %v614
      %v616 = vpop.f32.mrb[0].mxu0
      %v617 = vpop.f32.mrb[0].mxu0
      %v618 = vpop.f32.mrb[0].mxu0
      %619 = vdwg.mxu0
      %v620 = vadd.f32 %v474, %v615
      %s621 = scalar_lea.vmem %s171, 2
      %v622 = vld [vmem:[%s621] sm:$0x1]
      %v623 = vld [vmem:[%s621 + $0x2] sm:$0x1]
      %s624 = scalar_lea.vmem %s1, 192
      %v625 = vld [vmem:[%s624] sm:$0xf]
      %v626 = vld [vmem:[%s624 + $0x4] sm:$0xf]
      %v627 = vld [vmem:[%s624 + $0x8] sm:$0xf]
      %v628 = vld [vmem:[%s624 + $0xc] sm:$0xf]
      %v629 = vld [vmem:[%s624 + $0x10] sm:$0xf]
      %v630 = vld [vmem:[%s624 + $0x14] sm:$0xf]
      %v631 = vld [vmem:[%s624 + $0x18] sm:$0xf]
      %v632 = vld [vmem:[%s624 + $0x1c] sm:$0xf]
      %v633 = vld [vmem:[%s624 + $0x20] sm:$0xf]
      %v634 = vld [vmem:[%s624 + $0x24] sm:$0xf]
      %v635 = vld [vmem:[%s624 + $0x28] sm:$0xf]
      %v636 = vld [vmem:[%s624 + $0x2c] sm:$0xf]
      %v637 = vld [vmem:[%s624 + $0x30] sm:$0xf]
      %v638 = vld [vmem:[%s624 + $0x34] sm:$0xf]
      %v639 = vld [vmem:[%s624 + $0x38] sm:$0xf]
      %v640 = vld [vmem:[%s624 + $0x3c] sm:$0xf]
      %v643 = vcombine.low %v622, %v623
      %v645 = vunpack.c.l.s4 1966171168
      %v646 = vunpack.c.0.s8 %v645
      %v647 = vlaneseq
      %v648 = vshrl.u32 %v647, 7
      %v649 = vsub.s32 %v646, %v648
      %v650 = vrot.slane %v643, %v649
      %v652 = vunpack.c.l.s4 1966171168
      %v653 = vunpack.c.0.s8 %v652
      %v654 = vlaneseq
      %v655 = vshrl.u32 %v654, 7
      %v656 = vsub.s32 %v653, %v655
      %v657 = vrot.slane %v650, %v656
      %v675 = vunpack.c.l.b16 %v625
      %v676 = vunpack.c.l.b16 %v626
      %v677 = vunpack.c.l.b16 %v627
      %v678 = vunpack.c.l.b16 %v628
      %v679 = vunpack.c.l.b16 %v629
      %v680 = vunpack.c.l.b16 %v630
      %v681 = vunpack.c.l.b16 %v631
      %v682 = vunpack.c.l.b16 %v632
      %v683 = vunpack.c.l.b16 %v633
      %v684 = vunpack.c.l.b16 %v634
      %v685 = vunpack.c.l.b16 %v635
      %v686 = vunpack.c.l.b16 %v636
      %v687 = vunpack.c.l.b16 %v637
      %v688 = vunpack.c.l.b16 %v638
      %v689 = vunpack.c.l.b16 %v639
      %v690 = vunpack.c.l.b16 %v640
      %v691 = vpack.c.b16 %v676, %v675
      %v692 = vpack.c.b16 %v678, %v677
      %v693 = vpack.c.b16 %v680, %v679
      %v694 = vpack.c.b16 %v682, %v681
      %v695 = vpack.c.b16 %v684, %v683
      %v696 = vpack.c.b16 %v686, %v685
      %v697 = vpack.c.b16 %v688, %v687
      %v698 = vpack.c.b16 %v690, %v689
      %707 = vmatprep.subr.bf16.mxu0 0
      %708 = vmatpush1.bf16.msra.mxu0 %v691
      %709 = vmatprep.subr.bf16.mxu0 0
      %710 = vmatpush1.bf16.msra.mxu0 %v692
      %711 = vmatprep.subr.bf16.mxu0 0
      %712 = vmatpush1.bf16.msra.mxu0 %v693
      %713 = vmatprep.subr.bf16.mxu0 0
      %714 = vmatpush1.bf16.msra.mxu0 %v694
      %715 = vmatprep.subr.bf16.mxu0 0
      %716 = vmatpush1.bf16.msra.mxu0 %v695
      %717 = vmatprep.subr.bf16.mxu0 0
      %718 = vmatpush1.bf16.msra.mxu0 %v696
      %719 = vmatprep.subr.bf16.mxu0 0
      %720 = vmatpush1.bf16.msra.mxu0 %v697
      %721 = vmatprep.subr.bf16.mxu0 0
      %722 = vmatpush1.bf16.msra.mxu0 %v698
      %723 = vmatprep.subr.bf16.mxu0 0
      %724 = vmatpush1.bf16.msra.mxu0 0
      %725 = vmatprep.subr.bf16.mxu0 0
      %726 = vmatpush1.bf16.msra.mxu0 0
      %727 = vmatprep.subr.bf16.mxu0 0
      %728 = vmatpush1.bf16.msra.mxu0 0
      %729 = vmatprep.subr.bf16.mxu0 0
      %730 = vmatpush1.bf16.msra.mxu0 0
      %731 = vmatprep.subr.bf16.mxu0 0
      %732 = vmatpush1.bf16.msra.mxu0 0
      %733 = vmatprep.subr.bf16.mxu0 0
      %734 = vmatpush1.bf16.msra.mxu0 0
      %735 = vmatprep.subr.bf16.mxu0 0
      %736 = vmatpush1.bf16.msra.mxu0 0
      %737 = vmatprep.subr.bf16.mxu0 0
      %738 = vmatpush1.bf16.msra.mxu0 0
      %739 = vmatprep.mubr.bf16.mxu0 0
      %740 = vmatmul.mubr.bf16.gmra.mrb[0].mxu0 %v657
      %v741 = vpop.f32.mrb[0].mxu0
      %v742 = vadd.f32 0.0, %v741
      %v743 = vpop.f32.mrb[0].mxu0
      %v744 = vpop.f32.mrb[0].mxu0
      %v745 = vpop.f32.mrb[0].mxu0
      %746 = vdwg.mxu0
      %v747 = vadd.f32 %v620, %v742
      %v748 = vld [vmem:[%s621] sm:$0x3]
      %v749 = vld [vmem:[%s621 + $0x2] sm:$0x3]
      %v753 = vunpack.c.l.s4 1966171168
      %v754 = vunpack.c.0.s8 %v753
      %v755 = vlaneseq
      %v756 = vshrl.u32 %v755, 7
      %v757 = vsub.s32 %v754, %v756
      %v758 = vrot.slane %v748, %v757
      %v759 = vcombine.high %v758, %v758
      %v761 = vunpack.c.l.s4 1966171168
      %v762 = vunpack.c.0.s8 %v761
      %v763 = vlaneseq
      %v764 = vshrl.u32 %v763, 7
      %v765 = vsub.s32 %v762, %v764
      %v766 = vrot.slane %v749, %v765
      %v767 = vcombine.high %v766, %v766
      %v769 = vshrl.u32 %v758, 16
      %v771 = vrot.slane %v769, 7
      %v772 = vrot.slane %v771, 1
      %v774 = vshll.u32 %v759, 16
      %v776 = vsel %vm233, %v772, %v774
      %v778 = vshrl.u32 %v766, 16
      %v780 = vrot.slane %v778, 7
      %v781 = vrot.slane %v780, 1
      %v783 = vshll.u32 %v767, 16
      %v785 = vsel %vm233, %v781, %v783
      %s786 = scalar_lea.vmem %s1, 256
      %v787 = vld [vmem:[%s786] sm:$0xf]
      %v788 = vld [vmem:[%s786 + $0x4] sm:$0xf]
      %v789 = vld [vmem:[%s786 + $0x8] sm:$0xf]
      %v790 = vld [vmem:[%s786 + $0xc] sm:$0xf]
      %v791 = vld [vmem:[%s786 + $0x10] sm:$0xf]
      %v792 = vld [vmem:[%s786 + $0x14] sm:$0xf]
      %v793 = vld [vmem:[%s786 + $0x18] sm:$0xf]
      %v794 = vld [vmem:[%s786 + $0x1c] sm:$0xf]
      %v795 = vld [vmem:[%s786 + $0x20] sm:$0xf]
      %v796 = vld [vmem:[%s786 + $0x24] sm:$0xf]
      %v797 = vld [vmem:[%s786 + $0x28] sm:$0xf]
      %v798 = vld [vmem:[%s786 + $0x2c] sm:$0xf]
      %v799 = vld [vmem:[%s786 + $0x30] sm:$0xf]
      %v800 = vld [vmem:[%s786 + $0x34] sm:$0xf]
      %v801 = vld [vmem:[%s786 + $0x38] sm:$0xf]
      %v802 = vld [vmem:[%s786 + $0x3c] sm:$0xf]
      %v803 = vcombine.low %v776, %v785
      %v805 = vunpack.c.l.s4 1966171168
      %v806 = vunpack.c.0.s8 %v805
      %v807 = vlaneseq
      %v808 = vshrl.u32 %v807, 7
      %v809 = vsub.s32 %v806, %v808
      %v810 = vrot.slane %v803, %v809
      %v812 = vunpack.c.l.s4 1966171168
      %v813 = vunpack.c.0.s8 %v812
      %v814 = vlaneseq
      %v815 = vshrl.u32 %v814, 7
      %v816 = vsub.s32 %v813, %v815
      %v817 = vrot.slane %v810, %v816
      %v835 = vunpack.c.l.b16 %v787
      %v836 = vunpack.c.l.b16 %v788
      %v837 = vunpack.c.l.b16 %v789
      %v838 = vunpack.c.l.b16 %v790
      %v839 = vunpack.c.l.b16 %v791
      %v840 = vunpack.c.l.b16 %v792
      %v841 = vunpack.c.l.b16 %v793
      %v842 = vunpack.c.l.b16 %v794
      %v843 = vunpack.c.l.b16 %v795
      %v844 = vunpack.c.l.b16 %v796
      %v845 = vunpack.c.l.b16 %v797
      %v846 = vunpack.c.l.b16 %v798
      %v847 = vunpack.c.l.b16 %v799
      %v848 = vunpack.c.l.b16 %v800
      %v849 = vunpack.c.l.b16 %v801
      %v850 = vunpack.c.l.b16 %v802
      %v851 = vpack.c.b16 %v836, %v835
      %v852 = vpack.c.b16 %v838, %v837
      %v853 = vpack.c.b16 %v840, %v839
      %v854 = vpack.c.b16 %v842, %v841
      %v855 = vpack.c.b16 %v844, %v843
      %v856 = vpack.c.b16 %v846, %v845
      %v857 = vpack.c.b16 %v848, %v847
      %v858 = vpack.c.b16 %v850, %v849
      %867 = vmatprep.subr.bf16.mxu0 0
      %868 = vmatpush1.bf16.msra.mxu0 %v851
      %869 = vmatprep.subr.bf16.mxu0 0
      %870 = vmatpush1.bf16.msra.mxu0 %v852
      %871 = vmatprep.subr.bf16.mxu0 0
      %872 = vmatpush1.bf16.msra.mxu0 %v853
      %873 = vmatprep.subr.bf16.mxu0 0
      %874 = vmatpush1.bf16.msra.mxu0 %v854
      %875 = vmatprep.subr.bf16.mxu0 0
      %876 = vmatpush1.bf16.msra.mxu0 %v855
      %877 = vmatprep.subr.bf16.mxu0 0
      %878 = vmatpush1.bf16.msra.mxu0 %v856
      %879 = vmatprep.subr.bf16.mxu0 0
      %880 = vmatpush1.bf16.msra.mxu0 %v857
      %881 = vmatprep.subr.bf16.mxu0 0
      %882 = vmatpush1.bf16.msra.mxu0 %v858
      %883 = vmatprep.subr.bf16.mxu0 0
      %884 = vmatpush1.bf16.msra.mxu0 0
      %885 = vmatprep.subr.bf16.mxu0 0
      %886 = vmatpush1.bf16.msra.mxu0 0
      %887 = vmatprep.subr.bf16.mxu0 0
      %888 = vmatpush1.bf16.msra.mxu0 0
      %889 = vmatprep.subr.bf16.mxu0 0
      %890 = vmatpush1.bf16.msra.mxu0 0
      %891 = vmatprep.subr.bf16.mxu0 0
      %892 = vmatpush1.bf16.msra.mxu0 0
      %893 = vmatprep.subr.bf16.mxu0 0
      %894 = vmatpush1.bf16.msra.mxu0 0
      %895 = vmatprep.subr.bf16.mxu0 0
      %896 = vmatpush1.bf16.msra.mxu0 0
      %897 = vmatprep.subr.bf16.mxu0 0
      %898 = vmatpush1.bf16.msra.mxu0 0
      %899 = vmatprep.mubr.bf16.mxu0 0
      %900 = vmatmul.mubr.bf16.gmra.mrb[0].mxu0 %v817
      %v901 = vpop.f32.mrb[0].mxu0
      %v902 = vadd.f32 0.0, %v901
      %v903 = vpop.f32.mrb[0].mxu0
      %v904 = vpop.f32.mrb[0].mxu0
      %v905 = vpop.f32.mrb[0].mxu0
      %906 = vdwg.mxu0
      %v907 = vadd.f32 %v747, %v902
      %v908 = vld [vmem:[%s621] sm:$0x2]
      %v909 = vld [vmem:[%s621 + $0x2] sm:$0x2]
      %v913 = vunpack.c.l.s4 1966171168
      %v914 = vunpack.c.0.s8 %v913
      %v915 = vlaneseq
      %v916 = vshrl.u32 %v915, 7
      %v917 = vsub.s32 %v914, %v916
      %v918 = vrot.slane %v908, %v917
      %v919 = vcombine.high %v918, %v918
      %v921 = vunpack.c.l.s4 1966171168
      %v922 = vunpack.c.0.s8 %v921
      %v923 = vlaneseq
      %v924 = vshrl.u32 %v923, 7
      %v925 = vsub.s32 %v922, %v924
      %v926 = vrot.slane %v909, %v925
      %v927 = vcombine.high %v926, %v926
      %s928 = scalar_lea.vmem %s1, 320
      %v929 = vld [vmem:[%s928] sm:$0xf]
      %v930 = vld [vmem:[%s928 + $0x4] sm:$0xf]
      %v931 = vld [vmem:[%s928 + $0x8] sm:$0xf]
      %v932 = vld [vmem:[%s928 + $0xc] sm:$0xf]
      %v933 = vld [vmem:[%s928 + $0x10] sm:$0xf]
      %v934 = vld [vmem:[%s928 + $0x14] sm:$0xf]
      %v935 = vld [vmem:[%s928 + $0x18] sm:$0xf]
      %v936 = vld [vmem:[%s928 + $0x1c] sm:$0xf]
      %v937 = vld [vmem:[%s928 + $0x20] sm:$0xf]
      %v938 = vld [vmem:[%s928 + $0x24] sm:$0xf]
      %v939 = vld [vmem:[%s928 + $0x28] sm:$0xf]
      %v940 = vld [vmem:[%s928 + $0x2c] sm:$0xf]
      %v941 = vld [vmem:[%s928 + $0x30] sm:$0xf]
      %v942 = vld [vmem:[%s928 + $0x34] sm:$0xf]
      %v943 = vld [vmem:[%s928 + $0x38] sm:$0xf]
      %v944 = vld [vmem:[%s928 + $0x3c] sm:$0xf]
      %v945 = vcombine.low %v919, %v927
      %v947 = vunpack.c.l.s4 1966171168
      %v948 = vunpack.c.0.s8 %v947
      %v949 = vlaneseq
      %v950 = vshrl.u32 %v949, 7
      %v951 = vsub.s32 %v948, %v950
      %v952 = vrot.slane %v945, %v951
      %v954 = vunpack.c.l.s4 1966171168
      %v955 = vunpack.c.0.s8 %v954
      %v956 = vlaneseq
      %v957 = vshrl.u32 %v956, 7
      %v958 = vsub.s32 %v955, %v957
      %v959 = vrot.slane %v952, %v958
      %v977 = vunpack.c.l.b16 %v929
      %v978 = vunpack.c.l.b16 %v930
      %v979 = vunpack.c.l.b16 %v931
      %v980 = vunpack.c.l.b16 %v932
      %v981 = vunpack.c.l.b16 %v933
      %v982 = vunpack.c.l.b16 %v934
      %v983 = vunpack.c.l.b16 %v935
      %v984 = vunpack.c.l.b16 %v936
      %v985 = vunpack.c.l.b16 %v937
      %v986 = vunpack.c.l.b16 %v938
      %v987 = vunpack.c.l.b16 %v939
      %v988 = vunpack.c.l.b16 %v940
      %v989 = vunpack.c.l.b16 %v941
      %v990 = vunpack.c.l.b16 %v942
      %v991 = vunpack.c.l.b16 %v943
      %v992 = vunpack.c.l.b16 %v944
      %v993 = vpack.c.b16 %v978, %v977
      %v994 = vpack.c.b16 %v980, %v979
      %v995 = vpack.c.b16 %v982, %v981
      %v996 = vpack.c.b16 %v984, %v983
      %v997 = vpack.c.b16 %v986, %v985
      %v998 = vpack.c.b16 %v988, %v987
      %v999 = vpack.c.b16 %v990, %v989
      %v1000 = vpack.c.b16 %v992, %v991
      %1009 = vmatprep.subr.bf16.mxu0 0
      %1010 = vmatpush1.bf16.msra.mxu0 %v993
      %1011 = vmatprep.subr.bf16.mxu0 0
      %1012 = vmatpush1.bf16.msra.mxu0 %v994
      %1013 = vmatprep.subr.bf16.mxu0 0
      %1014 = vmatpush1.bf16.msra.mxu0 %v995
      %1015 = vmatprep.subr.bf16.mxu0 0
      %1016 = vmatpush1.bf16.msra.mxu0 %v996
      %1017 = vmatprep.subr.bf16.mxu0 0
      %1018 = vmatpush1.bf16.msra.mxu0 %v997
      %1019 = vmatprep.subr.bf16.mxu0 0
      %1020 = vmatpush1.bf16.msra.mxu0 %v998
      %1021 = vmatprep.subr.bf16.mxu0 0
      %1022 = vmatpush1.bf16.msra.mxu0 %v999
      %1023 = vmatprep.subr.bf16.mxu0 0
      %1024 = vmatpush1.bf16.msra.mxu0 %v1000
      %1025 = vmatprep.subr.bf16.mxu0 0
      %1026 = vmatpush1.bf16.msra.mxu0 0
      %1027 = vmatprep.subr.bf16.mxu0 0
      %1028 = vmatpush1.bf16.msra.mxu0 0
      %1029 = vmatprep.subr.bf16.mxu0 0
      %1030 = vmatpush1.bf16.msra.mxu0 0
      %1031 = vmatprep.subr.bf16.mxu0 0
      %1032 = vmatpush1.bf16.msra.mxu0 0
      %1033 = vmatprep.subr.bf16.mxu0 0
      %1034 = vmatpush1.bf16.msra.mxu0 0
      %1035 = vmatprep.subr.bf16.mxu0 0
      %1036 = vmatpush1.bf16.msra.mxu0 0
      %1037 = vmatprep.subr.bf16.mxu0 0
      %1038 = vmatpush1.bf16.msra.mxu0 0
      %1039 = vmatprep.subr.bf16.mxu0 0
      %1040 = vmatpush1.bf16.msra.mxu0 0
      %1041 = vmatprep.mubr.bf16.mxu0 0
      %1042 = vmatmul.mubr.bf16.gmra.mrb[0].mxu0 %v959
      %v1043 = vpop.f32.mrb[0].mxu0
      %v1044 = vadd.f32 0.0, %v1043
      %v1045 = vpop.f32.mrb[0].mxu0
      %v1046 = vpop.f32.mrb[0].mxu0
      %v1047 = vpop.f32.mrb[0].mxu0
      %1048 = vdwg.mxu0
      %v1049 = vadd.f32 %v907, %v1044
      %s1050 = scalar_lea.vmem %s171, 4
      %v1051 = vld [vmem:[%s1050] sm:$0x1]
      %v1052 = vld [vmem:[%s1050 + $0x2] sm:$0x1]
      %s1053 = scalar_lea.vmem %s1, 384
      %v1054 = vld [vmem:[%s1053] sm:$0xf]
      %v1055 = vld [vmem:[%s1053 + $0x4] sm:$0xf]
      %v1056 = vld [vmem:[%s1053 + $0x8] sm:$0xf]
      %v1057 = vld [vmem:[%s1053 + $0xc] sm:$0xf]
      %v1058 = vld [vmem:[%s1053 + $0x10] sm:$0xf]
      %v1059 = vld [vmem:[%s1053 + $0x14] sm:$0xf]
      %v1060 = vld [vmem:[%s1053 + $0x18] sm:$0xf]
      %v1061 = vld [vmem:[%s1053 + $0x1c] sm:$0xf]
      %v1062 = vld [vmem:[%s1053 + $0x20] sm:$0xf]
      %v1063 = vld [vmem:[%s1053 + $0x24] sm:$0xf]
      %v1064 = vld [vmem:[%s1053 + $0x28] sm:$0xf]
      %v1065 = vld [vmem:[%s1053 + $0x2c] sm:$0xf]
      %v1066 = vld [vmem:[%s1053 + $0x30] sm:$0xf]
      %v1067 = vld [vmem:[%s1053 + $0x34] sm:$0xf]
      %v1068 = vld [vmem:[%s1053 + $0x38] sm:$0xf]
      %v1069 = vld [vmem:[%s1053 + $0x3c] sm:$0xf]
      %v1072 = vcombine.low %v1051, %v1052
      %v1074 = vunpack.c.l.s4 1966171168
      %v1075 = vunpack.c.0.s8 %v1074
      %v1076 = vlaneseq
      %v1077 = vshrl.u32 %v1076, 7
      %v1078 = vsub.s32 %v1075, %v1077
      %v1079 = vrot.slane %v1072, %v1078
      %v1081 = vunpack.c.l.s4 1966171168
      %v1082 = vunpack.c.0.s8 %v1081
      %v1083 = vlaneseq
      %v1084 = vshrl.u32 %v1083, 7
      %v1085 = vsub.s32 %v1082, %v1084
      %v1086 = vrot.slane %v1079, %v1085
      %v1104 = vunpack.c.l.b16 %v1054
      %v1105 = vunpack.c.l.b16 %v1055
      %v1106 = vunpack.c.l.b16 %v1056
      %v1107 = vunpack.c.l.b16 %v1057
      %v1108 = vunpack.c.l.b16 %v1058
      %v1109 = vunpack.c.l.b16 %v1059
      %v1110 = vunpack.c.l.b16 %v1060
      %v1111 = vunpack.c.l.b16 %v1061
      %v1112 = vunpack.c.l.b16 %v1062
      %v1113 = vunpack.c.l.b16 %v1063
      %v1114 = vunpack.c.l.b16 %v1064
      %v1115 = vunpack.c.l.b16 %v1065
      %v1116 = vunpack.c.l.b16 %v1066
      %v1117 = vunpack.c.l.b16 %v1067
      %v1118 = vunpack.c.l.b16 %v1068
      %v1119 = vunpack.c.l.b16 %v1069
      %v1120 = vpack.c.b16 %v1105, %v1104
      %v1121 = vpack.c.b16 %v1107, %v1106
      %v1122 = vpack.c.b16 %v1109, %v1108
      %v1123 = vpack.c.b16 %v1111, %v1110
      %v1124 = vpack.c.b16 %v1113, %v1112
      %v1125 = vpack.c.b16 %v1115, %v1114
      %v1126 = vpack.c.b16 %v1117, %v1116
      %v1127 = vpack.c.b16 %v1119, %v1118
      %1136 = vmatprep.subr.bf16.mxu0 0
      %1137 = vmatpush1.bf16.msra.mxu0 %v1120
      %1138 = vmatprep.subr.bf16.mxu0 0
      %1139 = vmatpush1.bf16.msra.mxu0 %v1121
      %1140 = vmatprep.subr.bf16.mxu0 0
      %1141 = vmatpush1.bf16.msra.mxu0 %v1122
      %1142 = vmatprep.subr.bf16.mxu0 0
      %1143 = vmatpush1.bf16.msra.mxu0 %v1123
      %1144 = vmatprep.subr.bf16.mxu0 0
      %1145 = vmatpush1.bf16.msra.mxu0 %v1124
      %1146 = vmatprep.subr.bf16.mxu0 0
      %1147 = vmatpush1.bf16.msra.mxu0 %v1125
      %1148 = vmatprep.subr.bf16.mxu0 0
      %1149 = vmatpush1.bf16.msra.mxu0 %v1126
      %1150 = vmatprep.subr.bf16.mxu0 0
      %1151 = vmatpush1.bf16.msra.mxu0 %v1127
      %1152 = vmatprep.subr.bf16.mxu0 0
      %1153 = vmatpush1.bf16.msra.mxu0 0
      %1154 = vmatprep.subr.bf16.mxu0 0
      %1155 = vmatpush1.bf16.msra.mxu0 0
      %1156 = vmatprep.subr.bf16.mxu0 0
      %1157 = vmatpush1.bf16.msra.mxu0 0
      %1158 = vmatprep.subr.bf16.mxu0 0
      %1159 = vmatpush1.bf16.msra.mxu0 0
      %1160 = vmatprep.subr.bf16.mxu0 0
      %1161 = vmatpush1.bf16.msra.mxu0 0
      %1162 = vmatprep.subr.bf16.mxu0 0
      %1163 = vmatpush1.bf16.msra.mxu0 0
      %1164 = vmatprep.subr.bf16.mxu0 0
      %1165 = vmatpush1.bf16.msra.mxu0 0
      %1166 = vmatprep.subr.bf16.mxu0 0
      %1167 = vmatpush1.bf16.msra.mxu0 0
      %1168 = vmatprep.mubr.bf16.mxu0 0
      %1169 = vmatmul.mubr.bf16.gmra.mrb[0].mxu0 %v1086
      %v1170 = vpop.f32.mrb[0].mxu0
      %v1171 = vadd.f32 0.0, %v1170
      %v1172 = vpop.f32.mrb[0].mxu0
      %v1173 = vpop.f32.mrb[0].mxu0
      %v1174 = vpop.f32.mrb[0].mxu0
      %1175 = vdwg.mxu0
      %v1176 = vadd.f32 %v1049, %v1171
      %v1177 = vld [vmem:[%s1050] sm:$0x3]
      %v1178 = vld [vmem:[%s1050 + $0x2] sm:$0x3]
      %v1182 = vunpack.c.l.s4 1966171168
      %v1183 = vunpack.c.0.s8 %v1182
      %v1184 = vlaneseq
      %v1185 = vshrl.u32 %v1184, 7
      %v1186 = vsub.s32 %v1183, %v1185
      %v1187 = vrot.slane %v1177, %v1186
      %v1188 = vcombine.high %v1187, %v1187
      %v1190 = vunpack.c.l.s4 1966171168
      %v1191 = vunpack.c.0.s8 %v1190
      %v1192 = vlaneseq
      %v1193 = vshrl.u32 %v1192, 7
      %v1194 = vsub.s32 %v1191, %v1193
      %v1195 = vrot.slane %v1178, %v1194
      %v1196 = vcombine.high %v1195, %v1195
      %v1198 = vshrl.u32 %v1187, 16
      %v1200 = vrot.slane %v1198, 7
      %v1201 = vrot.slane %v1200, 1
      %v1203 = vshll.u32 %v1188, 16
      %v1205 = vsel %vm233, %v1201, %v1203
      %v1207 = vshrl.u32 %v1195, 16
      %v1209 = vrot.slane %v1207, 7
      %v1210 = vrot.slane %v1209, 1
      %v1212 = vshll.u32 %v1196, 16
      %v1214 = vsel %vm233, %v1210, %v1212
      %s1215 = scalar_lea.vmem %s1, 448
      %v1216 = vld [vmem:[%s1215] sm:$0xf]
      %v1217 = vld [vmem:[%s1215 + $0x4] sm:$0xf]
      %v1218 = vld [vmem:[%s1215 + $0x8] sm:$0xf]
      %v1219 = vld [vmem:[%s1215 + $0xc] sm:$0xf]
      %v1220 = vld [vmem:[%s1215 + $0x10] sm:$0xf]
      %v1221 = vld [vmem:[%s1215 + $0x14] sm:$0xf]
      %v1222 = vld [vmem:[%s1215 + $0x18] sm:$0xf]
      %v1223 = vld [vmem:[%s1215 + $0x1c] sm:$0xf]
      %v1224 = vld [vmem:[%s1215 + $0x20] sm:$0xf]
      %v1225 = vld [vmem:[%s1215 + $0x24] sm:$0xf]
      %v1226 = vld [vmem:[%s1215 + $0x28] sm:$0xf]
      %v1227 = vld [vmem:[%s1215 + $0x2c] sm:$0xf]
      %v1228 = vld [vmem:[%s1215 + $0x30] sm:$0xf]
      %v1229 = vld [vmem:[%s1215 + $0x34] sm:$0xf]
      %v1230 = vld [vmem:[%s1215 + $0x38] sm:$0xf]
      %v1231 = vld [vmem:[%s1215 + $0x3c] sm:$0xf]
      %v1232 = vcombine.low %v1205, %v1214
      %v1234 = vunpack.c.l.s4 1966171168
      %v1235 = vunpack.c.0.s8 %v1234
      %v1236 = vlaneseq
      %v1237 = vshrl.u32 %v1236, 7
      %v1238 = vsub.s32 %v1235, %v1237
      %v1239 = vrot.slane %v1232, %v1238
      %v1241 = vunpack.c.l.s4 1966171168
      %v1242 = vunpack.c.0.s8 %v1241
      %v1243 = vlaneseq
      %v1244 = vshrl.u32 %v1243, 7
      %v1245 = vsub.s32 %v1242, %v1244
      %v1246 = vrot.slane %v1239, %v1245
      %v1264 = vunpack.c.l.b16 %v1216
      %v1265 = vunpack.c.l.b16 %v1217
      %v1266 = vunpack.c.l.b16 %v1218
      %v1267 = vunpack.c.l.b16 %v1219
      %v1268 = vunpack.c.l.b16 %v1220
      %v1269 = vunpack.c.l.b16 %v1221
      %v1270 = vunpack.c.l.b16 %v1222
      %v1271 = vunpack.c.l.b16 %v1223
      %v1272 = vunpack.c.l.b16 %v1224
      %v1273 = vunpack.c.l.b16 %v1225
      %v1274 = vunpack.c.l.b16 %v1226
      %v1275 = vunpack.c.l.b16 %v1227
      %v1276 = vunpack.c.l.b16 %v1228
      %v1277 = vunpack.c.l.b16 %v1229
      %v1278 = vunpack.c.l.b16 %v1230
      %v1279 = vunpack.c.l.b16 %v1231
      %v1280 = vpack.c.b16 %v1265, %v1264
      %v1281 = vpack.c.b16 %v1267, %v1266
      %v1282 = vpack.c.b16 %v1269, %v1268
      %v1283 = vpack.c.b16 %v1271, %v1270
      %v1284 = vpack.c.b16 %v1273, %v1272
      %v1285 = vpack.c.b16 %v1275, %v1274
      %v1286 = vpack.c.b16 %v1277, %v1276
      %v1287 = vpack.c.b16 %v1279, %v1278
      %1296 = vmatprep.subr.bf16.mxu0 0
      %1297 = vmatpush1.bf16.msra.mxu0 %v1280
      %1298 = vmatprep.subr.bf16.mxu0 0
      %1299 = vmatpush1.bf16.msra.mxu0 %v1281
      %1300 = vmatprep.subr.bf16.mxu0 0
      %1301 = vmatpush1.bf16.msra.mxu0 %v1282
      %1302 = vmatprep.subr.bf16.mxu0 0
      %1303 = vmatpush1.bf16.msra.mxu0 %v1283
      %1304 = vmatprep.subr.bf16.mxu0 0
      %1305 = vmatpush1.bf16.msra.mxu0 %v1284
      %1306 = vmatprep.subr.bf16.mxu0 0
      %1307 = vmatpush1.bf16.msra.mxu0 %v1285
      %1308 = vmatprep.subr.bf16.mxu0 0
      %1309 = vmatpush1.bf16.msra.mxu0 %v1286
      %1310 = vmatprep.subr.bf16.mxu0 0
      %1311 = vmatpush1.bf16.msra.mxu0 %v1287
      %1312 = vmatprep.subr.bf16.mxu0 0
      %1313 = vmatpush1.bf16.msra.mxu0 0
      %1314 = vmatprep.subr.bf16.mxu0 0
      %1315 = vmatpush1.bf16.msra.mxu0 0
      %1316 = vmatprep.subr.bf16.mxu0 0
      %1317 = vmatpush1.bf16.msra.mxu0 0
      %1318 = vmatprep.subr.bf16.mxu0 0
      %1319 = vmatpush1.bf16.msra.mxu0 0
      %1320 = vmatprep.subr.bf16.mxu0 0
      %1321 = vmatpush1.bf16.msra.mxu0 0
      %1322 = vmatprep.subr.bf16.mxu0 0
      %1323 = vmatpush1.bf16.msra.mxu0 0
      %1324 = vmatprep.subr.bf16.mxu0 0
      %1325 = vmatpush1.bf16.msra.mxu0 0
      %1326 = vmatprep.subr.bf16.mxu0 0
      %1327 = vmatpush1.bf16.msra.mxu0 0
      %1328 = vmatprep.mubr.bf16.mxu0 0
      %1329 = vmatmul.mubr.bf16.gmra.mrb[0].mxu0 %v1246
      %v1330 = vpop.f32.mrb[0].mxu0
      %v1331 = vadd.f32 0.0, %v1330
      %v1332 = vpop.f32.mrb[0].mxu0
      %v1333 = vpop.f32.mrb[0].mxu0
      %v1334 = vpop.f32.mrb[0].mxu0
      %1335 = vdwg.mxu0
      %v1336 = vadd.f32 %v1176, %v1331
      %v1337 = vld [vmem:[%s1050] sm:$0x2]
      %v1338 = vld [vmem:[%s1050 + $0x2] sm:$0x2]
      %v1342 = vunpack.c.l.s4 1966171168
      %v1343 = vunpack.c.0.s8 %v1342
      %v1344 = vlaneseq
      %v1345 = vshrl.u32 %v1344, 7
      %v1346 = vsub.s32 %v1343, %v1345
      %v1347 = vrot.slane %v1337, %v1346
      %v1348 = vcombine.high %v1347, %v1347
      %v1350 = vunpack.c.l.s4 1966171168
      %v1351 = vunpack.c.0.s8 %v1350
      %v1352 = vlaneseq
      %v1353 = vshrl.u32 %v1352, 7
      %v1354 = vsub.s32 %v1351, %v1353
      %v1355 = vrot.slane %v1338, %v1354
      %v1356 = vcombine.high %v1355, %v1355
      %s1357 = scalar_lea.vmem %s1, 512
      %v1358 = vld [vmem:[%s1357] sm:$0xf]
      %v1359 = vld [vmem:[%s1357 + $0x4] sm:$0xf]
      %v1360 = vld [vmem:[%s1357 + $0x8] sm:$0xf]
      %v1361 = vld [vmem:[%s1357 + $0xc] sm:$0xf]
      %v1362 = vld [vmem:[%s1357 + $0x10] sm:$0xf]
      %v1363 = vld [vmem:[%s1357 + $0x14] sm:$0xf]
      %v1364 = vld [vmem:[%s1357 + $0x18] sm:$0xf]
      %v1365 = vld [vmem:[%s1357 + $0x1c] sm:$0xf]
      %v1366 = vld [vmem:[%s1357 + $0x20] sm:$0xf]
      %v1367 = vld [vmem:[%s1357 + $0x24] sm:$0xf]
      %v1368 = vld [vmem:[%s1357 + $0x28] sm:$0xf]
      %v1369 = vld [vmem:[%s1357 + $0x2c] sm:$0xf]
      %v1370 = vld [vmem:[%s1357 + $0x30] sm:$0xf]
      %v1371 = vld [vmem:[%s1357 + $0x34] sm:$0xf]
      %v1372 = vld [vmem:[%s1357 + $0x38] sm:$0xf]
      %v1373 = vld [vmem:[%s1357 + $0x3c] sm:$0xf]
      %v1374 = vcombine.low %v1348, %v1356
      %v1376 = vunpack.c.l.s4 1966171168
      %v1377 = vunpack.c.0.s8 %v1376
      %v1378 = vlaneseq
      %v1379 = vshrl.u32 %v1378, 7
      %v1380 = vsub.s32 %v1377, %v1379
      %v1381 = vrot.slane %v1374, %v1380
      %v1383 = vunpack.c.l.s4 1966171168
      %v1384 = vunpack.c.0.s8 %v1383
      %v1385 = vlaneseq
      %v1386 = vshrl.u32 %v1385, 7
      %v1387 = vsub.s32 %v1384, %v1386
      %v1388 = vrot.slane %v1381, %v1387
      %v1406 = vunpack.c.l.b16 %v1358
      %v1407 = vunpack.c.l.b16 %v1359
      %v1408 = vunpack.c.l.b16 %v1360
      %v1409 = vunpack.c.l.b16 %v1361
      %v1410 = vunpack.c.l.b16 %v1362
      %v1411 = vunpack.c.l.b16 %v1363
      %v1412 = vunpack.c.l.b16 %v1364
      %v1413 = vunpack.c.l.b16 %v1365
      %v1414 = vunpack.c.l.b16 %v1366
      %v1415 = vunpack.c.l.b16 %v1367
      %v1416 = vunpack.c.l.b16 %v1368
      %v1417 = vunpack.c.l.b16 %v1369
      %v1418 = vunpack.c.l.b16 %v1370
      %v1419 = vunpack.c.l.b16 %v1371
      %v1420 = vunpack.c.l.b16 %v1372
      %v1421 = vunpack.c.l.b16 %v1373
      %v1422 = vpack.c.b16 %v1407, %v1406
      %v1423 = vpack.c.b16 %v1409, %v1408
      %v1424 = vpack.c.b16 %v1411, %v1410
      %v1425 = vpack.c.b16 %v1413, %v1412
      %v1426 = vpack.c.b16 %v1415, %v1414
      %v1427 = vpack.c.b16 %v1417, %v1416
      %v1428 = vpack.c.b16 %v1419, %v1418
      %v1429 = vpack.c.b16 %v1421, %v1420
      %1438 = vmatprep.subr.bf16.mxu0 0
      %1439 = vmatpush1.bf16.msra.mxu0 %v1422
      %1440 = vmatprep.subr.bf16.mxu0 0
      %1441 = vmatpush1.bf16.msra.mxu0 %v1423
      %1442 = vmatprep.subr.bf16.mxu0 0
      %1443 = vmatpush1.bf16.msra.mxu0 %v1424
      %1444 = vmatprep.subr.bf16.mxu0 0
      %1445 = vmatpush1.bf16.msra.mxu0 %v1425
      %1446 = vmatprep.subr.bf16.mxu0 0
      %1447 = vmatpush1.bf16.msra.mxu0 %v1426
      %1448 = vmatprep.subr.bf16.mxu0 0
      %1449 = vmatpush1.bf16.msra.mxu0 %v1427
      %1450 = vmatprep.subr.bf16.mxu0 0
      %1451 = vmatpush1.bf16.msra.mxu0 %v1428
      %1452 = vmatprep.subr.bf16.mxu0 0
      %1453 = vmatpush1.bf16.msra.mxu0 %v1429
      %1454 = vmatprep.subr.bf16.mxu0 0
      %1455 = vmatpush1.bf16.msra.mxu0 0
      %1456 = vmatprep.subr.bf16.mxu0 0
      %1457 = vmatpush1.bf16.msra.mxu0 0
      %1458 = vmatprep.subr.bf16.mxu0 0
      %1459 = vmatpush1.bf16.msra.mxu0 0
      %1460 = vmatprep.subr.bf16.mxu0 0
      %1461 = vmatpush1.bf16.msra.mxu0 0
      %1462 = vmatprep.subr.bf16.mxu0 0
      %1463 = vmatpush1.bf16.msra.mxu0 0
      %1464 = vmatprep.subr.bf16.mxu0 0
      %1465 = vmatpush1.bf16.msra.mxu0 0
      %1466 = vmatprep.subr.bf16.mxu0 0
      %1467 = vmatpush1.bf16.msra.mxu0 0
      %1468 = vmatprep.subr.bf16.mxu0 0
      %1469 = vmatpush1.bf16.msra.mxu0 0
      %1470 = vmatprep.mubr.bf16.mxu0 0
      %1471 = vmatmul.mubr.bf16.gmra.mrb[0].mxu0 %v1388
      %v1472 = vpop.f32.mrb[0].mxu0
      %v1473 = vadd.f32 0.0, %v1472
      %v1474 = vpop.f32.mrb[0].mxu0
      %v1475 = vpop.f32.mrb[0].mxu0
      %v1476 = vpop.f32.mrb[0].mxu0
      %1477 = vdwg.mxu0
      %v1478 = vadd.f32 %v1336, %v1473
      %v1479 = vpack.c.bf16 %v1478, %v1478
      %1480 = vst [vmem:[%s175] sm:$0x3] %v1479
      %vm1481 = vcmask 1043456
      %v1482 = vsel %vm1481, %v1478, 0.0
      %v1483 = vrot.slane %v1482, 4
      %v1484 = vadd.f32 %v1482, %v1483
      %v1485 = vrot.slane %v1484, 2
      %v1486 = vadd.f32 %v1484, %v1485
      %v1487 = vrot.slane %v1486, 1
      %v1488 = vadd.f32 %v1486, %v1487
      %1489 = vst [vmem:[%s179] sm:$0x1] %v1488
      %v1490 = vmul.f32 %v1478, %v1478
      %v1491 = vsel %vm1481, %v1490, 0.0
      %v1492 = vrot.slane %v1491, 4
      %v1493 = vadd.f32 %v1491, %v1492
      %v1494 = vrot.slane %v1493, 2
      %v1495 = vadd.f32 %v1493, %v1494
      %v1496 = vrot.slane %v1495, 1
      %v1497 = vadd.f32 %v1495, %v1496
      %1498 = vst [vmem:[%s179 + $0x1] sm:$0x1] %v1497
      %p1499 = scmp.lt.s32.totalorder %s15, 1
      %s1500 = scalar_select %p1499, %s15, 1
      %s1501 = smul.addr %s1500, 2
      %s1502 = scalar_lea.vmem %s2, %s1501
      %p1503 = scmp.lt.s32.totalorder %s15, 1
      %s1504 = scalar_select %p1503, %s15, 1
      %s1505 = smul.addr %s1504, 2
      %s1506 = scalar_lea.vmem %s3, %s1505
      // Predicated region
      $region29: #{vgg_forward.19} parent=27 // pred_check
        %p1507 = pneg %p80
      $region30: #{vgg_forward.19} parent=27 // pred_check_branch
        %1509 = sbr.rel (%p1507) target = $region32
      $region31: #{vgg_forward.19} parent=27 // pred_region
        _
      $region32: #{vgg_forward.19} parent=27 // pred_fallthru
        _
      // Predicated region
      $region33: #{vgg_forward.19} parent=27 // pred_check
        %p1510 = pneg %p106
      $region34: #{vgg_forward.19} parent=27 // pred_check_branch
        %1512 = sbr.rel (%p1510) target = $region36
      $region35: #{vgg_forward.19} parent=27 // pred_region
        _
      $region36: #{vgg_forward.19} parent=27 // pred_fallthru
        _
    $region28: #{vgg_forward.19} parent=5 // pred_fallthru
      _
    %p1513 = scmp.le.s32.totalorder 2, %s10
    // Predicated region
    $region37: #{vgg_forward.19} parent=5 // pred_check
      %p1514 = pneg %p1513
    $region38: #{vgg_forward.19} parent=5 // pred_check_branch
      %1516 = sbr.rel (%p1514) target = $region40
    $region39: #{vgg_forward.19} parent=5 // pred_region
      %s1517 = ssub.s32 %s10, 2
      // Predicated region
      $region41: #{vgg_forward.19} parent=39 // pred_check
        %p1518 = pneg %p86
      $region42: #{vgg_forward.19} parent=39 // pred_check_branch
        %1520 = sbr.rel (%p1518) target = $region44
      $region43: #{vgg_forward.19} parent=39 // pred_region
        %p1521 = scmp.lt.s32.totalorder %s16, 1
        %s1522 = scalar_select %p1521, %s16, 1
        %s1523 = smul.addr %s1522, 2
        %s1524 = scalar_lea.vmem %s2, %s1523
      $region44: #{vgg_forward.19} parent=39 // pred_fallthru
        _
      // Predicated region
      $region45: #{vgg_forward.19} parent=39 // pred_check
        %p1525 = pneg %p112
      $region46: #{vgg_forward.19} parent=39 // pred_check_branch
        %1527 = sbr.rel (%p1525) target = $region48
      $region47: #{vgg_forward.19} parent=39 // pred_region
        %p1528 = scmp.lt.s32.totalorder %s16, 1
        %s1529 = scalar_select %p1528, %s16, 1
        %s1530 = smul.addr %s1529, 2
        %s1531 = scalar_lea.vmem %s3, %s1530
      $region48: #{vgg_forward.19} parent=39 // pred_fallthru
        _
    $region40: #{vgg_forward.19} parent=5 // pred_fallthru
      _
  $region6: #{vgg_forward.19} parent=0 // loop_footer
    %s14 = sadd.s32 1, %s10
  $region7: #{vgg_forward.19} parent=0 // loop_footer_branch
    %9 = sbr.rel target = $region3
  $region8: #{vgg_forward.19} parent=0 // loop_exit
    _

</llo_original>
